<compile_context>
chip_gen: v7x
topology: tpu7x:2x2x1
jax: 0.10.0
libtpu: 0.0.40
codegen_flags: <defaults>
</compile_context>

<pallas_src>
import jax
import jax.numpy as jnp
from jax.experimental import pallas as pl
from jax.experimental.pallas import tpu as pltpu


# ----------------------------------------------------------------------------
# Hardware-aware knobs (correctness-safe fallbacks if detection fails).
# ----------------------------------------------------------------------------
def _device_kind():
    try:
        return jax.devices()[0].device_kind.lower()
    except Exception:
        return ""


def _bf16_gating():
    # v6e / v7x have bf16 VPU + EUP -> do tanh/sigmoid gating in bf16 there.
    # v5e and earlier keep gating in f32 (no bf16 EUP); a wrong guess is still
    # numerically/compile safe, only the EUP-slot saving changes.
    kind = _device_kind()
    return bool(kind) and not any(t in kind for t in ("v2", "v3", "v4", "v5"))


def _vmem_limit_bytes():
    kind = _device_kind()
    if "v7" in kind:
        return 48 * 1024 * 1024      # 64 MiB physical per TC -> leave headroom
    if any(t in kind for t in ("v4", "v5", "v6")):
        return 96 * 1024 * 1024      # 128 MiB physical
    return 32 * 1024 * 1024          # scoped default for unknown chips


# ----------------------------------------------------------------------------
# Fused whole-network kernel: one grid step == one batch tile through all
# 4 Wave_Blocks + pool + fc (activations never round-trip through HBM).
# ----------------------------------------------------------------------------
def make_wavenet_kernel(block_cfg, b_tile, L, num_classes, pool_out=4,
                        bf16_gate=False):
    assert L % pool_out == 0, \
        "AdaptiveAvgPool1d(4) == uniform pooling only if L % 4 == 0"
    bin_sz = L // pool_out
    M = b_tile * L
    n_params = 6 * len(block_cfg) + 2

    def kernel(x_ref, *refs):
        prefs = refs[:n_params]
        out_ref = refs[n_params]
        scr_refs = refs[n_params + 1:]   # one zero-padded bf16 scratch per block

        # bf16 activations feed the MXU; accumulation / residual math stays f32.
        cur_b = x_ref[...].reshape(M, block_cfg[0][0]).astype(jnp.bfloat16)
        cur_f = None

        idx = 0
        for bi, (Cin, Cout, R) in enumerate(block_cfg):
            w0, b0, wfg, bfg, wr, br = prefs[idx:idx + 6]
            idx += 6
            scr = scr_refs[bi]           # (b_tile, L + 2*pad, Cout) bf16
            pad = 2 ** (R - 1)           # max dilation used in this block

            # Zero the halo slabs once per grid step: they are the implicit
            # zeros of the "same"-padded dilated conv.  (Scratch persists but
            # is uninitialized, and each TensorCore has its own copy, so this
            # must not be gated on program_id == 0.)
            scr[:, :pad, :] = jnp.zeros((b_tile, pad, Cout), jnp.bfloat16)
            scr[:, pad + L:, :] = jnp.zeros((b_tile, pad, Cout), jnp.bfloat16)

            # First 1x1 conv of the block:  (M, Cin) @ (Cin, Cout)
            h = jnp.dot(cur_b, w0[...], preferred_element_type=jnp.float32) + b0[...]
            res = h                      # running residual, f32
            cur_f = h

            for r in range(R):
                d = 2 ** r
                # One bf16 cast per stage, BEFORE building the shifted taps.
                curb = cur_f.astype(jnp.bfloat16)
                # Stage into the zero-padded scratch; the two shifted taps are
                # then free static views (no concatenate, no f32 copies).
                scr[:, pad:pad + L, :] = curb.reshape(b_tile, L, Cout)
                xm = scr[:, pad - d:pad - d + L, :].reshape(M, Cout)   # x[t-d]
                xp = scr[:, pad + d:pad + d + L, :].reshape(M, Cout)   # x[t+d]

                # Fused filter|gate conv as three accumulated MXU matmuls
                # against (Cout, 2*Cout) weight slabs (one per tap).
                z = (jnp.dot(xm, wfg[r, 0], preferred_element_type=jnp.float32)
                     + jnp.dot(curb, wfg[r, 1], preferred_element_type=jnp.float32)
                     + jnp.dot(xp, wfg[r, 2], preferred_element_type=jnp.float32)
                     + bfg[r])           # (M, 2*Cout) f32

                if bf16_gate:
                    # v6e/v7x: tanh/sigmoid on the bf16 EUP path (EUP is the
                    # binding slot for every block with C < ~170).
                    f = jnp.tanh(z[:, :Cout].astype(jnp.bfloat16))
                    g = jax.nn.sigmoid(z[:, Cout:].astype(jnp.bfloat16))
                    gated = f * g        # bf16, feeds the next matmul directly
                else:
                    f = jnp.tanh(z[:, :Cout])
                    g = jax.nn.sigmoid(z[:, Cout:])
                    gated = (f * g).astype(jnp.bfloat16)

                # Residual 1x1 conv
                h1 = jnp.dot(gated, wr[r], preferred_element_type=jnp.float32) + br[r]
                res = res + h1
                cur_f = h1

            # Wave_Block output is the residual sum.
            cur_f = res
            cur_b = cur_f.astype(jnp.bfloat16)

        # ---------------- head: avg-pool(4) + single fc matmul ----------------
        wfc, bfc = prefs[idx], prefs[idx + 1]
        C_last = block_cfg[-1][1]
        # Single reduction over a (b_tile, 4, L/4, C) reshape; flattened order
        # is p*C + c, which is folded into the fc weight layout.
        pooled = jnp.mean(cur_f.reshape(b_tile, pool_out, bin_sz, C_last), axis=2)
        pooled = pooled.reshape(b_tile, pool_out * C_last)
        logits = jnp.dot(pooled.astype(jnp.bfloat16), wfc[...],
                         preferred_element_type=jnp.float32) + bfc[...]
        out_ref[...] = logits.reshape(b_tile, 1, num_classes)

    return kernel


def wavenet_apply(x_nlc, params_flat, block_cfg, num_classes, b_tile=1):
    B, L, Cin0 = x_nlc.shape
    assert B % b_tile == 0
    kernel = make_wavenet_kernel(block_cfg, b_tile, L, num_classes,
                                 bf16_gate=_bf16_gating())

    def _const(nd):
        return lambda b, _nd=nd: (0,) * _nd

    # x: batch-tiled.  Weights: full-array blocks with constant index maps so
    # they are fetched once and stay VMEM-resident across the grid (~0.5 MB).
    in_specs = [pl.BlockSpec((b_tile, L, Cin0), lambda b: (b, 0, 0))]
    in_specs += [pl.BlockSpec(p.shape, _const(p.ndim)) for p in params_flat]
    out_specs = pl.BlockSpec((b_tile, 1, num_classes), lambda b: (b, 0, 0))

    # One tight, lane-dense zero-padded tap scratch per block.
    scratch_shapes = [
        pltpu.VMEM((b_tile, L + 2 * (2 ** (R - 1)), Cout), jnp.bfloat16)
        for (_, Cout, R) in block_cfg
    ]

    out = pl.pallas_call(
        kernel,
        out_shape=jax.ShapeDtypeStruct((B, 1, num_classes), jnp.float32),
        grid_spec=pltpu.PrefetchScalarGridSpec(
            num_scalar_prefetch=0,
            grid=(B // b_tile,),
            in_specs=in_specs,
            out_specs=out_specs,
            scratch_shapes=scratch_shapes,
        ),
        compiler_params=pltpu.CompilerParams(
            dimension_semantics=("parallel",),   # shards across v7x's 2 TCs
            vmem_limit_bytes=_vmem_limit_bytes(),
        ),
    )(x_nlc, *params_flat)
    return out[:, 0, :]


def wavenet_forward(x_ncl, params_flat, block_cfg, num_classes):
    # PyTorch NCL (B, C, L) -> kernel layout NLC (B, L, C), transposed once.
    return wavenet_apply(jnp.transpose(x_ncl, (0, 2, 1)),
                         params_flat, block_cfg, num_classes)


# ----------------------------------------------------------------------------
# Deterministic synthetic parameter init, stored directly in the fused,
# kernel-friendly layouts described at the top of the file.
# ----------------------------------------------------------------------------
def init_block_params(key, Cin, Cout, R):
    ks = jax.random.split(key, 8)
    s = 0.1
    # per-tap filter/gate weights: [r, tap, c_in, c_out];
    # tap 0 = x[t-d], tap 1 = x[t], tap 2 = x[t+d]
    wf = jax.random.normal(ks[2], (R, 3, Cout, Cout), jnp.float32) * s
    wg = jax.random.normal(ks[4], (R, 3, Cout, Cout), jnp.float32) * s
    wfg = jnp.concatenate([wf, wg], axis=-1)                 # (R, 3, Cout, 2*Cout)
    bf = jax.random.normal(ks[3], (R, 1, Cout), jnp.float32) * s
    bg = jax.random.normal(ks[5], (R, 1, Cout), jnp.float32) * s
    bfg = jnp.concatenate([bf, bg], axis=-1)                 # (R, 1, 2*Cout)
    return [
        (jax.random.normal(ks[0], (Cin, Cout), jnp.float32) * s).astype(jnp.bfloat16),     # w0
        jax.random.normal(ks[1], (1, Cout), jnp.float32) * s,                              # b0
        wfg.astype(jnp.bfloat16),                                                          # wfg
        bfg,                                                                               # bfg
        (jax.random.normal(ks[6], (R, Cout, Cout), jnp.float32) * s).astype(jnp.bfloat16), # wr
        jax.random.normal(ks[7], (R, 1, Cout), jnp.float32) * s,                           # br
    ]


if __name__ == "__main__":
    key = jax.random.PRNGKey(0)
    B, inch, L = 2, 16, 16
    num_classes = 3

    kx, kp = jax.random.split(key)
    x = jax.random.normal(kx, (B, inch, L), jnp.float32)     # PyTorch NCL input

    # (in_channels, out_channels, num_dilation_rates) per Wave_Block
    block_cfg = [(inch, 16, 4), (16, 32, 4), (32, 64, 2), (64, 128, 1)]

    params_flat = []
    for i, (ci, co, r) in enumerate(block_cfg):
        params_flat += init_block_params(jax.random.fold_in(kp, i), ci, co, r)

    C_last = block_cfg[-1][1]
    # fc: Linear(512, num_classes); rows ordered p*C + c so that
    # W_ours[p*C + c, n] == W_pt[n, c*4 + p] (matches torch.flatten order).
    w_fc = (jax.random.normal(jax.random.fold_in(kp, 100),
                              (4 * C_last, num_classes), jnp.float32) * 0.05
            ).astype(jnp.bfloat16)
    b_fc = jax.random.normal(jax.random.fold_in(kp, 101),
                             (1, num_classes), jnp.float32) * 0.05
    params_flat += [w_fc, b_fc]

    out = wavenet_forward(x, params_flat, block_cfg, num_classes)
    out = jax.block_until_ready(out)
    assert out.shape == (B, num_classes)
    assert bool(jnp.all(jnp.isfinite(out)))
    print("KERNEL_OK")
</pallas_src>

<mosaic_0001>
module attributes {stable_mosaic.version = 11 : i64} {
  func.func @kernel(%arg0: i32, %arg1: memref<1x16x16xf32, #tpu.memory_space<vmem>>, %arg2: memref<16x16xbf16, #tpu.memory_space<vmem>>, %arg3: memref<1x16xf32, #tpu.memory_space<vmem>>, %arg4: memref<4x3x16x32xbf16, #tpu.memory_space<vmem>>, %arg5: memref<4x1x32xf32, #tpu.memory_space<vmem>>, %arg6: memref<4x16x16xbf16, #tpu.memory_space<vmem>>, %arg7: memref<4x1x16xf32, #tpu.memory_space<vmem>>, %arg8: memref<16x32xbf16, #tpu.memory_space<vmem>>, %arg9: memref<1x32xf32, #tpu.memory_space<vmem>>, %arg10: memref<4x3x32x64xbf16, #tpu.memory_space<vmem>>, %arg11: memref<4x1x64xf32, #tpu.memory_space<vmem>>, %arg12: memref<4x32x32xbf16, #tpu.memory_space<vmem>>, %arg13: memref<4x1x32xf32, #tpu.memory_space<vmem>>, %arg14: memref<32x64xbf16, #tpu.memory_space<vmem>>, %arg15: memref<1x64xf32, #tpu.memory_space<vmem>>, %arg16: memref<2x3x64x128xbf16, #tpu.memory_space<vmem>>, %arg17: memref<2x1x128xf32, #tpu.memory_space<vmem>>, %arg18: memref<2x64x64xbf16, #tpu.memory_space<vmem>>, %arg19: memref<2x1x64xf32, #tpu.memory_space<vmem>>, %arg20: memref<64x128xbf16, #tpu.memory_space<vmem>>, %arg21: memref<1x128xf32, #tpu.memory_space<vmem>>, %arg22: memref<1x3x128x256xbf16, #tpu.memory_space<vmem>>, %arg23: memref<1x1x256xf32, #tpu.memory_space<vmem>>, %arg24: memref<1x128x128xbf16, #tpu.memory_space<vmem>>, %arg25: memref<1x1x128xf32, #tpu.memory_space<vmem>>, %arg26: memref<512x3xbf16, #tpu.memory_space<vmem>>, %arg27: memref<1x3xf32, #tpu.memory_space<vmem>>, %arg28: memref<1x1x3xf32, #tpu.memory_space<vmem>>, %arg29: memref<1x32x16xbf16, #tpu.memory_space<vmem>>, %arg30: memref<1x32x32xbf16, #tpu.memory_space<vmem>>, %arg31: memref<1x20x64xbf16, #tpu.memory_space<vmem>>, %arg32: memref<1x18x128xbf16, #tpu.memory_space<vmem>>) attributes {dimension_semantics = [#tpu.dimension_semantics<parallel>], iteration_bounds = array<i64: 2>, scalar_prefetch = 0 : i64, scratch_operands = 4 : i64, tpu.core_type = #tpu.core_type<tc>, window_params = [{transform_indices = @transform_0, window_bounds = array<i64: 1, 16, 16>}, {pipeline_mode = #tpu.pipeline_mode<synchronous>, transform_indices = @transform_1, window_bounds = array<i64: 16, 16>}, {pipeline_mode = #tpu.pipeline_mode<synchronous>, transform_indices = @transform_2, window_bounds = array<i64: 1, 16>}, {pipeline_mode = #tpu.pipeline_mode<synchronous>, transform_indices = @transform_3, window_bounds = array<i64: 4, 3, 16, 32>}, {pipeline_mode = #tpu.pipeline_mode<synchronous>, transform_indices = @transform_4, window_bounds = array<i64: 4, 1, 32>}, {pipeline_mode = #tpu.pipeline_mode<synchronous>, transform_indices = @transform_5, window_bounds = array<i64: 4, 16, 16>}, {pipeline_mode = #tpu.pipeline_mode<synchronous>, transform_indices = @transform_6, window_bounds = array<i64: 4, 1, 16>}, {pipeline_mode = #tpu.pipeline_mode<synchronous>, transform_indices = @transform_7, window_bounds = array<i64: 16, 32>}, {pipeline_mode = #tpu.pipeline_mode<synchronous>, transform_indices = @transform_8, window_bounds = array<i64: 1, 32>}, {pipeline_mode = #tpu.pipeline_mode<synchronous>, transform_indices = @transform_9, window_bounds = array<i64: 4, 3, 32, 64>}, {pipeline_mode = #tpu.pipeline_mode<synchronous>, transform_indices = @transform_10, window_bounds = array<i64: 4, 1, 64>}, {pipeline_mode = #tpu.pipeline_mode<synchronous>, transform_indices = @transform_11, window_bounds = array<i64: 4, 32, 32>}, {pipeline_mode = #tpu.pipeline_mode<synchronous>, transform_indices = @transform_12, window_bounds = array<i64: 4, 1, 32>}, {pipeline_mode = #tpu.pipeline_mode<synchronous>, transform_indices = @transform_13, window_bounds = array<i64: 32, 64>}, {pipeline_mode = #tpu.pipeline_mode<synchronous>, transform_indices = @transform_14, window_bounds = array<i64: 1, 64>}, {pipeline_mode = #tpu.pipeline_mode<synchronous>, transform_indices = @transform_15, window_bounds = array<i64: 2, 3, 64, 128>}, {pipeline_mode = #tpu.pipeline_mode<synchronous>, transform_indices = @transform_16, window_bounds = array<i64: 2, 1, 128>}, {pipeline_mode = #tpu.pipeline_mode<synchronous>, transform_indices = @transform_17, window_bounds = array<i64: 2, 64, 64>}, {pipeline_mode = #tpu.pipeline_mode<synchronous>, transform_indices = @transform_18, window_bounds = array<i64: 2, 1, 64>}, {pipeline_mode = #tpu.pipeline_mode<synchronous>, transform_indices = @transform_19, window_bounds = array<i64: 64, 128>}, {pipeline_mode = #tpu.pipeline_mode<synchronous>, transform_indices = @transform_20, window_bounds = array<i64: 1, 128>}, {pipeline_mode = #tpu.pipeline_mode<synchronous>, transform_indices = @transform_21, window_bounds = array<i64: 1, 3, 128, 256>}, {pipeline_mode = #tpu.pipeline_mode<synchronous>, transform_indices = @transform_22, window_bounds = array<i64: 1, 1, 256>}, {pipeline_mode = #tpu.pipeline_mode<synchronous>, transform_indices = @transform_23, window_bounds = array<i64: 1, 128, 128>}, {pipeline_mode = #tpu.pipeline_mode<synchronous>, transform_indices = @transform_24, window_bounds = array<i64: 1, 1, 128>}, {pipeline_mode = #tpu.pipeline_mode<synchronous>, transform_indices = @transform_25, window_bounds = array<i64: 512, 3>}, {pipeline_mode = #tpu.pipeline_mode<synchronous>, transform_indices = @transform_26, window_bounds = array<i64: 1, 3>}, {transform_indices = @transform_27, window_bounds = array<i64: 1, 1, 3>}]} {
    %c0 = arith.constant 0 : index
    %c0_0 = arith.constant 0 : index
    %c0_1 = arith.constant 0 : index
    %0 = vector.load %arg1[%c0, %c0_0, %c0_1] : memref<1x16x16xf32, #tpu.memory_space<vmem>>, vector<1x16x16xf32>
    %1 = vector.shape_cast %0 : vector<1x16x16xf32> to vector<16x16xf32>
    %2 = arith.truncf %1 : vector<16x16xf32> to vector<16x16xbf16>
    %cst = arith.constant 0.000000e+00 : bf16
    %3 = vector.broadcast %cst : bf16 to vector<1x8x16xbf16>
    %c0_2 = arith.constant 0 : index
    %c0_3 = arith.constant 0 : index
    %c0_4 = arith.constant 0 : index
    %4 = vector.load %arg29[%c0_2, %c0_3, %c0_4] : memref<1x32x16xbf16, #tpu.memory_space<vmem>>, vector<1x8x16xbf16>
    tpu.vector_store %arg29[%c0_2, %c0_3, %c0_4], %3 {strides = array<i32>} : memref<1x32x16xbf16, #tpu.memory_space<vmem>>, vector<1x8x16xbf16>,
    %cst_5 = arith.constant 0.000000e+00 : bf16
    %5 = vector.broadcast %cst_5 : bf16 to vector<1x8x16xbf16>
    %c0_6 = arith.constant 0 : index
    %c24 = arith.constant 24 : index
    %c0_7 = arith.constant 0 : index
    %6 = vector.load %arg29[%c0_6, %c24, %c0_7] : memref<1x32x16xbf16, #tpu.memory_space<vmem>>, vector<1x8x16xbf16>
    tpu.vector_store %arg29[%c0_6, %c24, %c0_7], %5 {strides = array<i32>} : memref<1x32x16xbf16, #tpu.memory_space<vmem>>, vector<1x8x16xbf16>,
    %c0_8 = arith.constant 0 : index
    %c0_9 = arith.constant 0 : index
    %7 = vector.load %arg2[%c0_8, %c0_9] : memref<16x16xbf16, #tpu.memory_space<vmem>>, vector<16x16xbf16>
    %cst_10 = arith.constant dense<0.000000e+00> : vector<16x16xf32>
    %8 = tpu.matmul %2, %7, %cst_10 {dimension_numbers = #tpu.dot_dimension_numbers<[1], [0], [0], [1], [0, 0, 1, 1], [], []>} : vector<16x16xbf16>, vector<16x16xbf16>, vector<16x16xf32> -> vector<16x16xf32>
    %c0_11 = arith.constant 0 : index
    %c0_12 = arith.constant 0 : index
    %9 = vector.load %arg3[%c0_11, %c0_12] : memref<1x16xf32, #tpu.memory_space<vmem>>, vector<1x16xf32>
    %10 = vector.broadcast %9 : vector<1x16xf32> to vector<16x16xf32>
    %11 = arith.addf %8, %10 : vector<16x16xf32>
    %12 = arith.truncf %11 : vector<16x16xf32> to vector<16x16xbf16>
    %13 = vector.shape_cast %12 : vector<16x16xbf16> to vector<1x16x16xbf16>
    %c0_13 = arith.constant 0 : index
    %c8 = arith.constant 8 : index
    %c0_14 = arith.constant 0 : index
    %14 = vector.load %arg29[%c0_13, %c8, %c0_14] : memref<1x32x16xbf16, #tpu.memory_space<vmem>>, vector<1x16x16xbf16>
    tpu.vector_store %arg29[%c0_13, %c8, %c0_14], %13 {strides = array<i32>} : memref<1x32x16xbf16, #tpu.memory_space<vmem>>, vector<1x16x16xbf16>,
    %c0_15 = arith.constant 0 : index
    %c7 = arith.constant 7 : index
    %c0_16 = arith.constant 0 : index
    %15 = vector.load %arg29[%c0_15, %c7, %c0_16] : memref<1x32x16xbf16, #tpu.memory_space<vmem>>, vector<1x16x16xbf16>
    %16 = vector.shape_cast %15 : vector<1x16x16xbf16> to vector<16x16xbf16>
    %c0_17 = arith.constant 0 : index
    %c9 = arith.constant 9 : index
    %c0_18 = arith.constant 0 : index
    %17 = vector.load %arg29[%c0_17, %c9, %c0_18] : memref<1x32x16xbf16, #tpu.memory_space<vmem>>, vector<1x16x16xbf16>
    %18 = vector.shape_cast %17 : vector<1x16x16xbf16> to vector<16x16xbf16>
    %c0_19 = arith.constant 0 : index
    %c0_20 = arith.constant 0 : index
    %c0_21 = arith.constant 0 : index
    %c0_22 = arith.constant 0 : index
    %19 = vector.load %arg4[%c0_19, %c0_20, %c0_21, %c0_22] : memref<4x3x16x32xbf16, #tpu.memory_space<vmem>>, vector<1x1x16x32xbf16>
    %20 = vector.shape_cast %19 : vector<1x1x16x32xbf16> to vector<16x32xbf16>
    %cst_23 = arith.constant dense<0.000000e+00> : vector<16x32xf32>
    %21 = tpu.matmul %16, %20, %cst_23 {dimension_numbers = #tpu.dot_dimension_numbers<[1], [0], [0], [1], [0, 0, 1, 1], [], []>} : vector<16x16xbf16>, vector<16x32xbf16>, vector<16x32xf32> -> vector<16x32xf32>
    %c0_24 = arith.constant 0 : index
    %c1 = arith.constant 1 : index
    %c0_25 = arith.constant 0 : index
    %c0_26 = arith.constant 0 : index
    %22 = vector.load %arg4[%c0_24, %c1, %c0_25, %c0_26] : memref<4x3x16x32xbf16, #tpu.memory_space<vmem>>, vector<1x1x16x32xbf16>
    %23 = vector.shape_cast %22 : vector<1x1x16x32xbf16> to vector<16x32xbf16>
    %cst_27 = arith.constant dense<0.000000e+00> : vector<16x32xf32>
    %24 = tpu.matmul %12, %23, %cst_27 {dimension_numbers = #tpu.dot_dimension_numbers<[1], [0], [0], [1], [0, 0, 1, 1], [], []>} : vector<16x16xbf16>, vector<16x32xbf16>, vector<16x32xf32> -> vector<16x32xf32>
    %25 = arith.addf %21, %24 : vector<16x32xf32>
    %c0_28 = arith.constant 0 : index
    %c2 = arith.constant 2 : index
    %c0_29 = arith.constant 0 : index
    %c0_30 = arith.constant 0 : index
    %26 = vector.load %arg4[%c0_28, %c2, %c0_29, %c0_30] : memref<4x3x16x32xbf16, #tpu.memory_space<vmem>>, vector<1x1x16x32xbf16>
    %27 = vector.shape_cast %26 : vector<1x1x16x32xbf16> to vector<16x32xbf16>
    %cst_31 = arith.constant dense<0.000000e+00> : vector<16x32xf32>
    %28 = tpu.matmul %18, %27, %cst_31 {dimension_numbers = #tpu.dot_dimension_numbers<[1], [0], [0], [1], [0, 0, 1, 1], [], []>} : vector<16x16xbf16>, vector<16x32xbf16>, vector<16x32xf32> -> vector<16x32xf32>
    %29 = arith.addf %25, %28 : vector<16x32xf32>
    %c0_32 = arith.constant 0 : index
    %c0_33 = arith.constant 0 : index
    %c0_34 = arith.constant 0 : index
    %30 = vector.load %arg5[%c0_32, %c0_33, %c0_34] : memref<4x1x32xf32, #tpu.memory_space<vmem>>, vector<1x1x32xf32>
    %31 = vector.shape_cast %30 : vector<1x1x32xf32> to vector<1x32xf32>
    %32 = vector.broadcast %31 : vector<1x32xf32> to vector<16x32xf32>
    %33 = arith.addf %29, %32 : vector<16x32xf32>
    %34 = vector.extract_strided_slice %33 {offsets = [0, 0], sizes = [16, 16], strides = [1, 1]} : vector<16x32xf32> to vector<16x16xf32>
    %35 = arith.truncf %34 : vector<16x16xf32> to vector<16x16xbf16>
    %36 = math.tanh %35 : vector<16x16xbf16>
    %37 = vector.extract_strided_slice %33 {offsets = [0, 16], sizes = [16, 16], strides = [1, 1]} : vector<16x32xf32> to vector<16x16xf32>
    %38 = arith.truncf %37 : vector<16x16xf32> to vector<16x16xbf16>
    %39 = arith.negf %38 : vector<16x16xbf16>
    %40 = math.exp %39 : vector<16x16xbf16>
    %cst_35 = arith.constant 1.000000e+00 : bf16
    %41 = vector.broadcast %cst_35 : bf16 to vector<16x16xbf16>
    %42 = arith.addf %41, %40 : vector<16x16xbf16>
    %43 = arith.divf %41, %42 : vector<16x16xbf16>
    %44 = arith.mulf %36, %43 : vector<16x16xbf16>
    %c0_36 = arith.constant 0 : index
    %c0_37 = arith.constant 0 : index
    %c0_38 = arith.constant 0 : index
    %45 = vector.load %arg6[%c0_36, %c0_37, %c0_38] : memref<4x16x16xbf16, #tpu.memory_space<vmem>>, vector<1x16x16xbf16>
    %46 = vector.shape_cast %45 : vector<1x16x16xbf16> to vector<16x16xbf16>
    %cst_39 = arith.constant dense<0.000000e+00> : vector<16x16xf32>
    %47 = tpu.matmul %44, %46, %cst_39 {dimension_numbers = #tpu.dot_dimension_numbers<[1], [0], [0], [1], [0, 0, 1, 1], [], []>} : vector<16x16xbf16>, vector<16x16xbf16>, vector<16x16xf32> -> vector<16x16xf32>
    %c0_40 = arith.constant 0 : index
    %c0_41 = arith.constant 0 : index
    %c0_42 = arith.constant 0 : index
    %48 = vector.load %arg7[%c0_40, %c0_41, %c0_42] : memref<4x1x16xf32, #tpu.memory_space<vmem>>, vector<1x1x16xf32>
    %49 = vector.shape_cast %48 : vector<1x1x16xf32> to vector<1x16xf32>
    %50 = vector.broadcast %49 : vector<1x16xf32> to vector<16x16xf32>
    %51 = arith.addf %47, %50 : vector<16x16xf32>
    %52 = arith.addf %11, %51 : vector<16x16xf32>
    %53 = arith.truncf %51 : vector<16x16xf32> to vector<16x16xbf16>
    %54 = vector.shape_cast %53 : vector<16x16xbf16> to vector<1x16x16xbf16>
    %c0_43 = arith.constant 0 : index
    %c8_44 = arith.constant 8 : index
    %c0_45 = arith.constant 0 : index
    %55 = vector.load %arg29[%c0_43, %c8_44, %c0_45] : memref<1x32x16xbf16, #tpu.memory_space<vmem>>, vector<1x16x16xbf16>
    tpu.vector_store %arg29[%c0_43, %c8_44, %c0_45], %54 {strides = array<i32>} : memref<1x32x16xbf16, #tpu.memory_space<vmem>>, vector<1x16x16xbf16>,
    %c0_46 = arith.constant 0 : index
    %c6 = arith.constant 6 : index
    %c0_47 = arith.constant 0 : index
    %56 = vector.load %arg29[%c0_46, %c6, %c0_47] : memref<1x32x16xbf16, #tpu.memory_space<vmem>>, vector<1x16x16xbf16>
    %57 = vector.shape_cast %56 : vector<1x16x16xbf16> to vector<16x16xbf16>
    %c0_48 = arith.constant 0 : index
    %c10 = arith.constant 10 : index
    %c0_49 = arith.constant 0 : index
    %58 = vector.load %arg29[%c0_48, %c10, %c0_49] : memref<1x32x16xbf16, #tpu.memory_space<vmem>>, vector<1x16x16xbf16>
    %59 = vector.shape_cast %58 : vector<1x16x16xbf16> to vector<16x16xbf16>
    %c1_50 = arith.constant 1 : index
    %c0_51 = arith.constant 0 : index
    %c0_52 = arith.constant 0 : index
    %c0_53 = arith.constant 0 : index
    %60 = vector.load %arg4[%c1_50, %c0_51, %c0_52, %c0_53] : memref<4x3x16x32xbf16, #tpu.memory_space<vmem>>, vector<1x1x16x32xbf16>
    %61 = vector.shape_cast %60 : vector<1x1x16x32xbf16> to vector<16x32xbf16>
    %cst_54 = arith.constant dense<0.000000e+00> : vector<16x32xf32>
    %62 = tpu.matmul %57, %61, %cst_54 {dimension_numbers = #tpu.dot_dimension_numbers<[1], [0], [0], [1], [0, 0, 1, 1], [], []>} : vector<16x16xbf16>, vector<16x32xbf16>, vector<16x32xf32> -> vector<16x32xf32>
    %c1_55 = arith.constant 1 : index
    %c1_56 = arith.constant 1 : index
    %c0_57 = arith.constant 0 : index
    %c0_58 = arith.constant 0 : index
    %63 = vector.load %arg4[%c1_55, %c1_56, %c0_57, %c0_58] : memref<4x3x16x32xbf16, #tpu.memory_space<vmem>>, vector<1x1x16x32xbf16>
    %64 = vector.shape_cast %63 : vector<1x1x16x32xbf16> to vector<16x32xbf16>
    %cst_59 = arith.constant dense<0.000000e+00> : vector<16x32xf32>
    %65 = tpu.matmul %53, %64, %cst_59 {dimension_numbers = #tpu.dot_dimension_numbers<[1], [0], [0], [1], [0, 0, 1, 1], [], []>} : vector<16x16xbf16>, vector<16x32xbf16>, vector<16x32xf32> -> vector<16x32xf32>
    %66 = arith.addf %62, %65 : vector<16x32xf32>
    %c1_60 = arith.constant 1 : index
    %c2_61 = arith.constant 2 : index
    %c0_62 = arith.constant 0 : index
    %c0_63 = arith.constant 0 : index
    %67 = vector.load %arg4[%c1_60, %c2_61, %c0_62, %c0_63] : memref<4x3x16x32xbf16, #tpu.memory_space<vmem>>, vector<1x1x16x32xbf16>
    %68 = vector.shape_cast %67 : vector<1x1x16x32xbf16> to vector<16x32xbf16>
    %cst_64 = arith.constant dense<0.000000e+00> : vector<16x32xf32>
    %69 = tpu.matmul %59, %68, %cst_64 {dimension_numbers = #tpu.dot_dimension_numbers<[1], [0], [0], [1], [0, 0, 1, 1], [], []>} : vector<16x16xbf16>, vector<16x32xbf16>, vector<16x32xf32> -> vector<16x32xf32>
    %70 = arith.addf %66, %69 : vector<16x32xf32>
    %c1_65 = arith.constant 1 : index
    %c0_66 = arith.constant 0 : index
    %c0_67 = arith.constant 0 : index
    %71 = vector.load %arg5[%c1_65, %c0_66, %c0_67] : memref<4x1x32xf32, #tpu.memory_space<vmem>>, vector<1x1x32xf32>
    %72 = vector.shape_cast %71 : vector<1x1x32xf32> to vector<1x32xf32>
    %73 = vector.broadcast %72 : vector<1x32xf32> to vector<16x32xf32>
    %74 = arith.addf %70, %73 : vector<16x32xf32>
    %75 = vector.extract_strided_slice %74 {offsets = [0, 0], sizes = [16, 16], strides = [1, 1]} : vector<16x32xf32> to vector<16x16xf32>
    %76 = arith.truncf %75 : vector<16x16xf32> to vector<16x16xbf16>
    %77 = math.tanh %76 : vector<16x16xbf16>
    %78 = vector.extract_strided_slice %74 {offsets = [0, 16], sizes = [16, 16], strides = [1, 1]} : vector<16x32xf32> to vector<16x16xf32>
    %79 = arith.truncf %78 : vector<16x16xf32> to vector<16x16xbf16>
    %80 = arith.negf %79 : vector<16x16xbf16>
    %81 = math.exp %80 : vector<16x16xbf16>
    %cst_68 = arith.constant 1.000000e+00 : bf16
    %82 = vector.broadcast %cst_68 : bf16 to vector<16x16xbf16>
    %83 = arith.addf %82, %81 : vector<16x16xbf16>
    %84 = arith.divf %82, %83 : vector<16x16xbf16>
    %85 = arith.mulf %77, %84 : vector<16x16xbf16>
    %c1_69 = arith.constant 1 : index
    %c0_70 = arith.constant 0 : index
    %c0_71 = arith.constant 0 : index
    %86 = vector.load %arg6[%c1_69, %c0_70, %c0_71] : memref<4x16x16xbf16, #tpu.memory_space<vmem>>, vector<1x16x16xbf16>
    %87 = vector.shape_cast %86 : vector<1x16x16xbf16> to vector<16x16xbf16>
    %cst_72 = arith.constant dense<0.000000e+00> : vector<16x16xf32>
    %88 = tpu.matmul %85, %87, %cst_72 {dimension_numbers = #tpu.dot_dimension_numbers<[1], [0], [0], [1], [0, 0, 1, 1], [], []>} : vector<16x16xbf16>, vector<16x16xbf16>, vector<16x16xf32> -> vector<16x16xf32>
    %c1_73 = arith.constant 1 : index
    %c0_74 = arith.constant 0 : index
    %c0_75 = arith.constant 0 : index
    %89 = vector.load %arg7[%c1_73, %c0_74, %c0_75] : memref<4x1x16xf32, #tpu.memory_space<vmem>>, vector<1x1x16xf32>
    %90 = vector.shape_cast %89 : vector<1x1x16xf32> to vector<1x16xf32>
    %91 = vector.broadcast %90 : vector<1x16xf32> to vector<16x16xf32>
    %92 = arith.addf %88, %91 : vector<16x16xf32>
    %93 = arith.addf %52, %92 : vector<16x16xf32>
    %94 = arith.truncf %92 : vector<16x16xf32> to vector<16x16xbf16>
    %95 = vector.shape_cast %94 : vector<16x16xbf16> to vector<1x16x16xbf16>
    %c0_76 = arith.constant 0 : index
    %c8_77 = arith.constant 8 : index
    %c0_78 = arith.constant 0 : index
    %96 = vector.load %arg29[%c0_76, %c8_77, %c0_78] : memref<1x32x16xbf16, #tpu.memory_space<vmem>>, vector<1x16x16xbf16>
    tpu.vector_store %arg29[%c0_76, %c8_77, %c0_78], %95 {strides = array<i32>} : memref<1x32x16xbf16, #tpu.memory_space<vmem>>, vector<1x16x16xbf16>,
    %c0_79 = arith.constant 0 : index
    %c4 = arith.constant 4 : index
    %c0_80 = arith.constant 0 : index
    %97 = vector.load %arg29[%c0_79, %c4, %c0_80] : memref<1x32x16xbf16, #tpu.memory_space<vmem>>, vector<1x16x16xbf16>
    %98 = vector.shape_cast %97 : vector<1x16x16xbf16> to vector<16x16xbf16>
    %c0_81 = arith.constant 0 : index
    %c12 = arith.constant 12 : index
    %c0_82 = arith.constant 0 : index
    %99 = vector.load %arg29[%c0_81, %c12, %c0_82] : memref<1x32x16xbf16, #tpu.memory_space<vmem>>, vector<1x16x16xbf16>
    %100 = vector.shape_cast %99 : vector<1x16x16xbf16> to vector<16x16xbf16>
    %c2_83 = arith.constant 2 : index
    %c0_84 = arith.constant 0 : index
    %c0_85 = arith.constant 0 : index
    %c0_86 = arith.constant 0 : index
    %101 = vector.load %arg4[%c2_83, %c0_84, %c0_85, %c0_86] : memref<4x3x16x32xbf16, #tpu.memory_space<vmem>>, vector<1x1x16x32xbf16>
    %102 = vector.shape_cast %101 : vector<1x1x16x32xbf16> to vector<16x32xbf16>
    %cst_87 = arith.constant dense<0.000000e+00> : vector<16x32xf32>
    %103 = tpu.matmul %98, %102, %cst_87 {dimension_numbers = #tpu.dot_dimension_numbers<[1], [0], [0], [1], [0, 0, 1, 1], [], []>} : vector<16x16xbf16>, vector<16x32xbf16>, vector<16x32xf32> -> vector<16x32xf32>
    %c2_88 = arith.constant 2 : index
    %c1_89 = arith.constant 1 : index
    %c0_90 = arith.constant 0 : index
    %c0_91 = arith.constant 0 : index
    %104 = vector.load %arg4[%c2_88, %c1_89, %c0_90, %c0_91] : memref<4x3x16x32xbf16, #tpu.memory_space<vmem>>, vector<1x1x16x32xbf16>
    %105 = vector.shape_cast %104 : vector<1x1x16x32xbf16> to vector<16x32xbf16>
    %cst_92 = arith.constant dense<0.000000e+00> : vector<16x32xf32>
    %106 = tpu.matmul %94, %105, %cst_92 {dimension_numbers = #tpu.dot_dimension_numbers<[1], [0], [0], [1], [0, 0, 1, 1], [], []>} : vector<16x16xbf16>, vector<16x32xbf16>, vector<16x32xf32> -> vector<16x32xf32>
    %107 = arith.addf %103, %106 : vector<16x32xf32>
    %c2_93 = arith.constant 2 : index
    %c2_94 = arith.constant 2 : index
    %c0_95 = arith.constant 0 : index
    %c0_96 = arith.constant 0 : index
    %108 = vector.load %arg4[%c2_93, %c2_94, %c0_95, %c0_96] : memref<4x3x16x32xbf16, #tpu.memory_space<vmem>>, vector<1x1x16x32xbf16>
    %109 = vector.shape_cast %108 : vector<1x1x16x32xbf16> to vector<16x32xbf16>
    %cst_97 = arith.constant dense<0.000000e+00> : vector<16x32xf32>
    %110 = tpu.matmul %100, %109, %cst_97 {dimension_numbers = #tpu.dot_dimension_numbers<[1], [0], [0], [1], [0, 0, 1, 1], [], []>} : vector<16x16xbf16>, vector<16x32xbf16>, vector<16x32xf32> -> vector<16x32xf32>
    %111 = arith.addf %107, %110 : vector<16x32xf32>
    %c2_98 = arith.constant 2 : index
    %c0_99 = arith.constant 0 : index
    %c0_100 = arith.constant 0 : index
    %112 = vector.load %arg5[%c2_98, %c0_99, %c0_100] : memref<4x1x32xf32, #tpu.memory_space<vmem>>, vector<1x1x32xf32>
    %113 = vector.shape_cast %112 : vector<1x1x32xf32> to vector<1x32xf32>
    %114 = vector.broadcast %113 : vector<1x32xf32> to vector<16x32xf32>
    %115 = arith.addf %111, %114 : vector<16x32xf32>
    %116 = vector.extract_strided_slice %115 {offsets = [0, 0], sizes = [16, 16], strides = [1, 1]} : vector<16x32xf32> to vector<16x16xf32>
    %117 = arith.truncf %116 : vector<16x16xf32> to vector<16x16xbf16>
    %118 = math.tanh %117 : vector<16x16xbf16>
    %119 = vector.extract_strided_slice %115 {offsets = [0, 16], sizes = [16, 16], strides = [1, 1]} : vector<16x32xf32> to vector<16x16xf32>
    %120 = arith.truncf %119 : vector<16x16xf32> to vector<16x16xbf16>
    %121 = arith.negf %120 : vector<16x16xbf16>
    %122 = math.exp %121 : vector<16x16xbf16>
    %cst_101 = arith.constant 1.000000e+00 : bf16
    %123 = vector.broadcast %cst_101 : bf16 to vector<16x16xbf16>
    %124 = arith.addf %123, %122 : vector<16x16xbf16>
    %125 = arith.divf %123, %124 : vector<16x16xbf16>
    %126 = arith.mulf %118, %125 : vector<16x16xbf16>
    %c2_102 = arith.constant 2 : index
    %c0_103 = arith.constant 0 : index
    %c0_104 = arith.constant 0 : index
    %127 = vector.load %arg6[%c2_102, %c0_103, %c0_104] : memref<4x16x16xbf16, #tpu.memory_space<vmem>>, vector<1x16x16xbf16>
    %128 = vector.shape_cast %127 : vector<1x16x16xbf16> to vector<16x16xbf16>
    %cst_105 = arith.constant dense<0.000000e+00> : vector<16x16xf32>
    %129 = tpu.matmul %126, %128, %cst_105 {dimension_numbers = #tpu.dot_dimension_numbers<[1], [0], [0], [1], [0, 0, 1, 1], [], []>} : vector<16x16xbf16>, vector<16x16xbf16>, vector<16x16xf32> -> vector<16x16xf32>
    %c2_106 = arith.constant 2 : index
    %c0_107 = arith.constant 0 : index
    %c0_108 = arith.constant 0 : index
    %130 = vector.load %arg7[%c2_106, %c0_107, %c0_108] : memref<4x1x16xf32, #tpu.memory_space<vmem>>, vector<1x1x16xf32>
    %131 = vector.shape_cast %130 : vector<1x1x16xf32> to vector<1x16xf32>
    %132 = vector.broadcast %131 : vector<1x16xf32> to vector<16x16xf32>
    %133 = arith.addf %129, %132 : vector<16x16xf32>
    %134 = arith.addf %93, %133 : vector<16x16xf32>
    %135 = arith.truncf %133 : vector<16x16xf32> to vector<16x16xbf16>
    %136 = vector.shape_cast %135 : vector<16x16xbf16> to vector<1x16x16xbf16>
    %c0_109 = arith.constant 0 : index
    %c8_110 = arith.constant 8 : index
    %c0_111 = arith.constant 0 : index
    %137 = vector.load %arg29[%c0_109, %c8_110, %c0_111] : memref<1x32x16xbf16, #tpu.memory_space<vmem>>, vector<1x16x16xbf16>
    tpu.vector_store %arg29[%c0_109, %c8_110, %c0_111], %136 {strides = array<i32>} : memref<1x32x16xbf16, #tpu.memory_space<vmem>>, vector<1x16x16xbf16>,
    %c0_112 = arith.constant 0 : index
    %c0_113 = arith.constant 0 : index
    %c0_114 = arith.constant 0 : index
    %138 = vector.load %arg29[%c0_112, %c0_113, %c0_114] : memref<1x32x16xbf16, #tpu.memory_space<vmem>>, vector<1x16x16xbf16>
    %139 = vector.shape_cast %138 : vector<1x16x16xbf16> to vector<16x16xbf16>
    %c0_115 = arith.constant 0 : index
    %c16 = arith.constant 16 : index
    %c0_116 = arith.constant 0 : index
    %140 = vector.load %arg29[%c0_115, %c16, %c0_116] : memref<1x32x16xbf16, #tpu.memory_space<vmem>>, vector<1x16x16xbf16>
    %141 = vector.shape_cast %140 : vector<1x16x16xbf16> to vector<16x16xbf16>
    %c3 = arith.constant 3 : index
    %c0_117 = arith.constant 0 : index
    %c0_118 = arith.constant 0 : index
    %c0_119 = arith.constant 0 : index
    %142 = vector.load %arg4[%c3, %c0_117, %c0_118, %c0_119] : memref<4x3x16x32xbf16, #tpu.memory_space<vmem>>, vector<1x1x16x32xbf16>
    %143 = vector.shape_cast %142 : vector<1x1x16x32xbf16> to vector<16x32xbf16>
    %cst_120 = arith.constant dense<0.000000e+00> : vector<16x32xf32>
    %144 = tpu.matmul %139, %143, %cst_120 {dimension_numbers = #tpu.dot_dimension_numbers<[1], [0], [0], [1], [0, 0, 1, 1], [], []>} : vector<16x16xbf16>, vector<16x32xbf16>, vector<16x32xf32> -> vector<16x32xf32>
    %c3_121 = arith.constant 3 : index
    %c1_122 = arith.constant 1 : index
    %c0_123 = arith.constant 0 : index
    %c0_124 = arith.constant 0 : index
    %145 = vector.load %arg4[%c3_121, %c1_122, %c0_123, %c0_124] : memref<4x3x16x32xbf16, #tpu.memory_space<vmem>>, vector<1x1x16x32xbf16>
    %146 = vector.shape_cast %145 : vector<1x1x16x32xbf16> to vector<16x32xbf16>
    %cst_125 = arith.constant dense<0.000000e+00> : vector<16x32xf32>
    %147 = tpu.matmul %135, %146, %cst_125 {dimension_numbers = #tpu.dot_dimension_numbers<[1], [0], [0], [1], [0, 0, 1, 1], [], []>} : vector<16x16xbf16>, vector<16x32xbf16>, vector<16x32xf32> -> vector<16x32xf32>
    %148 = arith.addf %144, %147 : vector<16x32xf32>
    %c3_126 = arith.constant 3 : index
    %c2_127 = arith.constant 2 : index
    %c0_128 = arith.constant 0 : index
    %c0_129 = arith.constant 0 : index
    %149 = vector.load %arg4[%c3_126, %c2_127, %c0_128, %c0_129] : memref<4x3x16x32xbf16, #tpu.memory_space<vmem>>, vector<1x1x16x32xbf16>
    %150 = vector.shape_cast %149 : vector<1x1x16x32xbf16> to vector<16x32xbf16>
    %cst_130 = arith.constant dense<0.000000e+00> : vector<16x32xf32>
    %151 = tpu.matmul %141, %150, %cst_130 {dimension_numbers = #tpu.dot_dimension_numbers<[1], [0], [0], [1], [0, 0, 1, 1], [], []>} : vector<16x16xbf16>, vector<16x32xbf16>, vector<16x32xf32> -> vector<16x32xf32>
    %152 = arith.addf %148, %151 : vector<16x32xf32>
    %c3_131 = arith.constant 3 : index
    %c0_132 = arith.constant 0 : index
    %c0_133 = arith.constant 0 : index
    %153 = vector.load %arg5[%c3_131, %c0_132, %c0_133] : memref<4x1x32xf32, #tpu.memory_space<vmem>>, vector<1x1x32xf32>
    %154 = vector.shape_cast %153 : vector<1x1x32xf32> to vector<1x32xf32>
    %155 = vector.broadcast %154 : vector<1x32xf32> to vector<16x32xf32>
    %156 = arith.addf %152, %155 : vector<16x32xf32>
    %157 = vector.extract_strided_slice %156 {offsets = [0, 0], sizes = [16, 16], strides = [1, 1]} : vector<16x32xf32> to vector<16x16xf32>
    %158 = arith.truncf %157 : vector<16x16xf32> to vector<16x16xbf16>
    %159 = math.tanh %158 : vector<16x16xbf16>
    %160 = vector.extract_strided_slice %156 {offsets = [0, 16], sizes = [16, 16], strides = [1, 1]} : vector<16x32xf32> to vector<16x16xf32>
    %161 = arith.truncf %160 : vector<16x16xf32> to vector<16x16xbf16>
    %162 = arith.negf %161 : vector<16x16xbf16>
    %163 = math.exp %162 : vector<16x16xbf16>
    %cst_134 = arith.constant 1.000000e+00 : bf16
    %164 = vector.broadcast %cst_134 : bf16 to vector<16x16xbf16>
    %165 = arith.addf %164, %163 : vector<16x16xbf16>
    %166 = arith.divf %164, %165 : vector<16x16xbf16>
    %167 = arith.mulf %159, %166 : vector<16x16xbf16>
    %c3_135 = arith.constant 3 : index
    %c0_136 = arith.constant 0 : index
    %c0_137 = arith.constant 0 : index
    %168 = vector.load %arg6[%c3_135, %c0_136, %c0_137] : memref<4x16x16xbf16, #tpu.memory_space<vmem>>, vector<1x16x16xbf16>
    %169 = vector.shape_cast %168 : vector<1x16x16xbf16> to vector<16x16xbf16>
    %cst_138 = arith.constant dense<0.000000e+00> : vector<16x16xf32>
    %170 = tpu.matmul %167, %169, %cst_138 {dimension_numbers = #tpu.dot_dimension_numbers<[1], [0], [0], [1], [0, 0, 1, 1], [], []>} : vector<16x16xbf16>, vector<16x16xbf16>, vector<16x16xf32> -> vector<16x16xf32>
    %c3_139 = arith.constant 3 : index
    %c0_140 = arith.constant 0 : index
    %c0_141 = arith.constant 0 : index
    %171 = vector.load %arg7[%c3_139, %c0_140, %c0_141] : memref<4x1x16xf32, #tpu.memory_space<vmem>>, vector<1x1x16xf32>
    %172 = vector.shape_cast %171 : vector<1x1x16xf32> to vector<1x16xf32>
    %173 = vector.broadcast %172 : vector<1x16xf32> to vector<16x16xf32>
    %174 = arith.addf %170, %173 : vector<16x16xf32>
    %175 = arith.addf %134, %174 : vector<16x16xf32>
    %176 = arith.truncf %175 : vector<16x16xf32> to vector<16x16xbf16>
    %cst_142 = arith.constant 0.000000e+00 : bf16
    %177 = vector.broadcast %cst_142 : bf16 to vector<1x8x32xbf16>
    %c0_143 = arith.constant 0 : index
    %c0_144 = arith.constant 0 : index
    %c0_145 = arith.constant 0 : index
    %178 = vector.load %arg30[%c0_143, %c0_144, %c0_145] : memref<1x32x32xbf16, #tpu.memory_space<vmem>>, vector<1x8x32xbf16>
    tpu.vector_store %arg30[%c0_143, %c0_144, %c0_145], %177 {strides = array<i32>} : memref<1x32x32xbf16, #tpu.memory_space<vmem>>, vector<1x8x32xbf16>,
    %cst_146 = arith.constant 0.000000e+00 : bf16
    %179 = vector.broadcast %cst_146 : bf16 to vector<1x8x32xbf16>
    %c0_147 = arith.constant 0 : index
    %c24_148 = arith.constant 24 : index
    %c0_149 = arith.constant 0 : index
    %180 = vector.load %arg30[%c0_147, %c24_148, %c0_149] : memref<1x32x32xbf16, #tpu.memory_space<vmem>>, vector<1x8x32xbf16>
    tpu.vector_store %arg30[%c0_147, %c24_148, %c0_149], %179 {strides = array<i32>} : memref<1x32x32xbf16, #tpu.memory_space<vmem>>, vector<1x8x32xbf16>,
    %c0_150 = arith.constant 0 : index
    %c0_151 = arith.constant 0 : index
    %181 = vector.load %arg8[%c0_150, %c0_151] : memref<16x32xbf16, #tpu.memory_space<vmem>>, vector<16x32xbf16>
    %cst_152 = arith.constant dense<0.000000e+00> : vector<16x32xf32>
    %182 = tpu.matmul %176, %181, %cst_152 {dimension_numbers = #tpu.dot_dimension_numbers<[1], [0], [0], [1], [0, 0, 1, 1], [], []>} : vector<16x16xbf16>, vector<16x32xbf16>, vector<16x32xf32> -> vector<16x32xf32>
    %c0_153 = arith.constant 0 : index
    %c0_154 = arith.constant 0 : index
    %183 = vector.load %arg9[%c0_153, %c0_154] : memref<1x32xf32, #tpu.memory_space<vmem>>, vector<1x32xf32>
    %184 = vector.broadcast %183 : vector<1x32xf32> to vector<16x32xf32>
    %185 = arith.addf %182, %184 : vector<16x32xf32>
    %186 = arith.truncf %185 : vector<16x32xf32> to vector<16x32xbf16>
    %187 = vector.shape_cast %186 : vector<16x32xbf16> to vector<1x16x32xbf16>
    %c0_155 = arith.constant 0 : index
    %c8_156 = arith.constant 8 : index
    %c0_157 = arith.constant 0 : index
    %188 = vector.load %arg30[%c0_155, %c8_156, %c0_157] : memref<1x32x32xbf16, #tpu.memory_space<vmem>>, vector<1x16x32xbf16>
    tpu.vector_store %arg30[%c0_155, %c8_156, %c0_157], %187 {strides = array<i32>} : memref<1x32x32xbf16, #tpu.memory_space<vmem>>, vector<1x16x32xbf16>,
    %c0_158 = arith.constant 0 : index
    %c7_159 = arith.constant 7 : index
    %c0_160 = arith.constant 0 : index
    %189 = vector.load %arg30[%c0_158, %c7_159, %c0_160] : memref<1x32x32xbf16, #tpu.memory_space<vmem>>, vector<1x16x32xbf16>
    %190 = vector.shape_cast %189 : vector<1x16x32xbf16> to vector<16x32xbf16>
    %c0_161 = arith.constant 0 : index
    %c9_162 = arith.constant 9 : index
    %c0_163 = arith.constant 0 : index
    %191 = vector.load %arg30[%c0_161, %c9_162, %c0_163] : memref<1x32x32xbf16, #tpu.memory_space<vmem>>, vector<1x16x32xbf16>
    %192 = vector.shape_cast %191 : vector<1x16x32xbf16> to vector<16x32xbf16>
    %c0_164 = arith.constant 0 : index
    %c0_165 = arith.constant 0 : index
    %c0_166 = arith.constant 0 : index
    %c0_167 = arith.constant 0 : index
    %193 = vector.load %arg10[%c0_164, %c0_165, %c0_166, %c0_167] : memref<4x3x32x64xbf16, #tpu.memory_space<vmem>>, vector<1x1x32x64xbf16>
    %194 = vector.shape_cast %193 : vector<1x1x32x64xbf16> to vector<32x64xbf16>
    %cst_168 = arith.constant dense<0.000000e+00> : vector<16x64xf32>
    %195 = tpu.matmul %190, %194, %cst_168 {dimension_numbers = #tpu.dot_dimension_numbers<[1], [0], [0], [1], [0, 0, 1, 1], [], []>} : vector<16x32xbf16>, vector<32x64xbf16>, vector<16x64xf32> -> vector<16x64xf32>
    %c0_169 = arith.constant 0 : index
    %c1_170 = arith.constant 1 : index
    %c0_171 = arith.constant 0 : index
    %c0_172 = arith.constant 0 : index
    %196 = vector.load %arg10[%c0_169, %c1_170, %c0_171, %c0_172] : memref<4x3x32x64xbf16, #tpu.memory_space<vmem>>, vector<1x1x32x64xbf16>
    %197 = vector.shape_cast %196 : vector<1x1x32x64xbf16> to vector<32x64xbf16>
    %cst_173 = arith.constant dense<0.000000e+00> : vector<16x64xf32>
    %198 = tpu.matmul %186, %197, %cst_173 {dimension_numbers = #tpu.dot_dimension_numbers<[1], [0], [0], [1], [0, 0, 1, 1], [], []>} : vector<16x32xbf16>, vector<32x64xbf16>, vector<16x64xf32> -> vector<16x64xf32>
    %199 = arith.addf %195, %198 : vector<16x64xf32>
    %c0_174 = arith.constant 0 : index
    %c2_175 = arith.constant 2 : index
    %c0_176 = arith.constant 0 : index
    %c0_177 = arith.constant 0 : index
    %200 = vector.load %arg10[%c0_174, %c2_175, %c0_176, %c0_177] : memref<4x3x32x64xbf16, #tpu.memory_space<vmem>>, vector<1x1x32x64xbf16>
    %201 = vector.shape_cast %200 : vector<1x1x32x64xbf16> to vector<32x64xbf16>
    %cst_178 = arith.constant dense<0.000000e+00> : vector<16x64xf32>
    %202 = tpu.matmul %192, %201, %cst_178 {dimension_numbers = #tpu.dot_dimension_numbers<[1], [0], [0], [1], [0, 0, 1, 1], [], []>} : vector<16x32xbf16>, vector<32x64xbf16>, vector<16x64xf32> -> vector<16x64xf32>
    %203 = arith.addf %199, %202 : vector<16x64xf32>
    %c0_179 = arith.constant 0 : index
    %c0_180 = arith.constant 0 : index
    %c0_181 = arith.constant 0 : index
    %204 = vector.load %arg11[%c0_179, %c0_180, %c0_181] : memref<4x1x64xf32, #tpu.memory_space<vmem>>, vector<1x1x64xf32>
    %205 = vector.shape_cast %204 : vector<1x1x64xf32> to vector<1x64xf32>
    %206 = vector.broadcast %205 : vector<1x64xf32> to vector<16x64xf32>
    %207 = arith.addf %203, %206 : vector<16x64xf32>
    %208 = vector.extract_strided_slice %207 {offsets = [0, 0], sizes = [16, 32], strides = [1, 1]} : vector<16x64xf32> to vector<16x32xf32>
    %209 = arith.truncf %208 : vector<16x32xf32> to vector<16x32xbf16>
    %210 = math.tanh %209 : vector<16x32xbf16>
    %211 = vector.extract_strided_slice %207 {offsets = [0, 32], sizes = [16, 32], strides = [1, 1]} : vector<16x64xf32> to vector<16x32xf32>
    %212 = arith.truncf %211 : vector<16x32xf32> to vector<16x32xbf16>
    %213 = arith.negf %212 : vector<16x32xbf16>
    %214 = math.exp %213 : vector<16x32xbf16>
    %cst_182 = arith.constant 1.000000e+00 : bf16
    %215 = vector.broadcast %cst_182 : bf16 to vector<16x32xbf16>
    %216 = arith.addf %215, %214 : vector<16x32xbf16>
    %217 = arith.divf %215, %216 : vector<16x32xbf16>
    %218 = arith.mulf %210, %217 : vector<16x32xbf16>
    %c0_183 = arith.constant 0 : index
    %c0_184 = arith.constant 0 : index
    %c0_185 = arith.constant 0 : index
    %219 = vector.load %arg12[%c0_183, %c0_184, %c0_185] : memref<4x32x32xbf16, #tpu.memory_space<vmem>>, vector<1x32x32xbf16>
    %220 = vector.shape_cast %219 : vector<1x32x32xbf16> to vector<32x32xbf16>
    %cst_186 = arith.constant dense<0.000000e+00> : vector<16x32xf32>
    %221 = tpu.matmul %218, %220, %cst_186 {dimension_numbers = #tpu.dot_dimension_numbers<[1], [0], [0], [1], [0, 0, 1, 1], [], []>} : vector<16x32xbf16>, vector<32x32xbf16>, vector<16x32xf32> -> vector<16x32xf32>
    %c0_187 = arith.constant 0 : index
    %c0_188 = arith.constant 0 : index
    %c0_189 = arith.constant 0 : index
    %222 = vector.load %arg13[%c0_187, %c0_188, %c0_189] : memref<4x1x32xf32, #tpu.memory_space<vmem>>, vector<1x1x32xf32>
    %223 = vector.shape_cast %222 : vector<1x1x32xf32> to vector<1x32xf32>
    %224 = vector.broadcast %223 : vector<1x32xf32> to vector<16x32xf32>
    %225 = arith.addf %221, %224 : vector<16x32xf32>
    %226 = arith.addf %185, %225 : vector<16x32xf32>
    %227 = arith.truncf %225 : vector<16x32xf32> to vector<16x32xbf16>
    %228 = vector.shape_cast %227 : vector<16x32xbf16> to vector<1x16x32xbf16>
    %c0_190 = arith.constant 0 : index
    %c8_191 = arith.constant 8 : index
    %c0_192 = arith.constant 0 : index
    %229 = vector.load %arg30[%c0_190, %c8_191, %c0_192] : memref<1x32x32xbf16, #tpu.memory_space<vmem>>, vector<1x16x32xbf16>
    tpu.vector_store %arg30[%c0_190, %c8_191, %c0_192], %228 {strides = array<i32>} : memref<1x32x32xbf16, #tpu.memory_space<vmem>>, vector<1x16x32xbf16>,
    %c0_193 = arith.constant 0 : index
    %c6_194 = arith.constant 6 : index
    %c0_195 = arith.constant 0 : index
    %230 = vector.load %arg30[%c0_193, %c6_194, %c0_195] : memref<1x32x32xbf16, #tpu.memory_space<vmem>>, vector<1x16x32xbf16>
    %231 = vector.shape_cast %230 : vector<1x16x32xbf16> to vector<16x32xbf16>
    %c0_196 = arith.constant 0 : index
    %c10_197 = arith.constant 10 : index
    %c0_198 = arith.constant 0 : index
    %232 = vector.load %arg30[%c0_196, %c10_197, %c0_198] : memref<1x32x32xbf16, #tpu.memory_space<vmem>>, vector<1x16x32xbf16>
    %233 = vector.shape_cast %232 : vector<1x16x32xbf16> to vector<16x32xbf16>
    %c1_199 = arith.constant 1 : index
    %c0_200 = arith.constant 0 : index
    %c0_201 = arith.constant 0 : index
    %c0_202 = arith.constant 0 : index
    %234 = vector.load %arg10[%c1_199, %c0_200, %c0_201, %c0_202] : memref<4x3x32x64xbf16, #tpu.memory_space<vmem>>, vector<1x1x32x64xbf16>
    %235 = vector.shape_cast %234 : vector<1x1x32x64xbf16> to vector<32x64xbf16>
    %cst_203 = arith.constant dense<0.000000e+00> : vector<16x64xf32>
    %236 = tpu.matmul %231, %235, %cst_203 {dimension_numbers = #tpu.dot_dimension_numbers<[1], [0], [0], [1], [0, 0, 1, 1], [], []>} : vector<16x32xbf16>, vector<32x64xbf16>, vector<16x64xf32> -> vector<16x64xf32>
    %c1_204 = arith.constant 1 : index
    %c1_205 = arith.constant 1 : index
    %c0_206 = arith.constant 0 : index
    %c0_207 = arith.constant 0 : index
    %237 = vector.load %arg10[%c1_204, %c1_205, %c0_206, %c0_207] : memref<4x3x32x64xbf16, #tpu.memory_space<vmem>>, vector<1x1x32x64xbf16>
    %238 = vector.shape_cast %237 : vector<1x1x32x64xbf16> to vector<32x64xbf16>
    %cst_208 = arith.constant dense<0.000000e+00> : vector<16x64xf32>
    %239 = tpu.matmul %227, %238, %cst_208 {dimension_numbers = #tpu.dot_dimension_numbers<[1], [0], [0], [1], [0, 0, 1, 1], [], []>} : vector<16x32xbf16>, vector<32x64xbf16>, vector<16x64xf32> -> vector<16x64xf32>
    %240 = arith.addf %236, %239 : vector<16x64xf32>
    %c1_209 = arith.constant 1 : index
    %c2_210 = arith.constant 2 : index
    %c0_211 = arith.constant 0 : index
    %c0_212 = arith.constant 0 : index
    %241 = vector.load %arg10[%c1_209, %c2_210, %c0_211, %c0_212] : memref<4x3x32x64xbf16, #tpu.memory_space<vmem>>, vector<1x1x32x64xbf16>
    %242 = vector.shape_cast %241 : vector<1x1x32x64xbf16> to vector<32x64xbf16>
    %cst_213 = arith.constant dense<0.000000e+00> : vector<16x64xf32>
    %243 = tpu.matmul %233, %242, %cst_213 {dimension_numbers = #tpu.dot_dimension_numbers<[1], [0], [0], [1], [0, 0, 1, 1], [], []>} : vector<16x32xbf16>, vector<32x64xbf16>, vector<16x64xf32> -> vector<16x64xf32>
    %244 = arith.addf %240, %243 : vector<16x64xf32>
    %c1_214 = arith.constant 1 : index
    %c0_215 = arith.constant 0 : index
    %c0_216 = arith.constant 0 : index
    %245 = vector.load %arg11[%c1_214, %c0_215, %c0_216] : memref<4x1x64xf32, #tpu.memory_space<vmem>>, vector<1x1x64xf32>
    %246 = vector.shape_cast %245 : vector<1x1x64xf32> to vector<1x64xf32>
    %247 = vector.broadcast %246 : vector<1x64xf32> to vector<16x64xf32>
    %248 = arith.addf %244, %247 : vector<16x64xf32>
    %249 = vector.extract_strided_slice %248 {offsets = [0, 0], sizes = [16, 32], strides = [1, 1]} : vector<16x64xf32> to vector<16x32xf32>
    %250 = arith.truncf %249 : vector<16x32xf32> to vector<16x32xbf16>
    %251 = math.tanh %250 : vector<16x32xbf16>
    %252 = vector.extract_strided_slice %248 {offsets = [0, 32], sizes = [16, 32], strides = [1, 1]} : vector<16x64xf32> to vector<16x32xf32>
    %253 = arith.truncf %252 : vector<16x32xf32> to vector<16x32xbf16>
    %254 = arith.negf %253 : vector<16x32xbf16>
    %255 = math.exp %254 : vector<16x32xbf16>
    %cst_217 = arith.constant 1.000000e+00 : bf16
    %256 = vector.broadcast %cst_217 : bf16 to vector<16x32xbf16>
    %257 = arith.addf %256, %255 : vector<16x32xbf16>
    %258 = arith.divf %256, %257 : vector<16x32xbf16>
    %259 = arith.mulf %251, %258 : vector<16x32xbf16>
    %c1_218 = arith.constant 1 : index
    %c0_219 = arith.constant 0 : index
    %c0_220 = arith.constant 0 : index
    %260 = vector.load %arg12[%c1_218, %c0_219, %c0_220] : memref<4x32x32xbf16, #tpu.memory_space<vmem>>, vector<1x32x32xbf16>
    %261 = vector.shape_cast %260 : vector<1x32x32xbf16> to vector<32x32xbf16>
    %cst_221 = arith.constant dense<0.000000e+00> : vector<16x32xf32>
    %262 = tpu.matmul %259, %261, %cst_221 {dimension_numbers = #tpu.dot_dimension_numbers<[1], [0], [0], [1], [0, 0, 1, 1], [], []>} : vector<16x32xbf16>, vector<32x32xbf16>, vector<16x32xf32> -> vector<16x32xf32>
    %c1_222 = arith.constant 1 : index
    %c0_223 = arith.constant 0 : index
    %c0_224 = arith.constant 0 : index
    %263 = vector.load %arg13[%c1_222, %c0_223, %c0_224] : memref<4x1x32xf32, #tpu.memory_space<vmem>>, vector<1x1x32xf32>
    %264 = vector.shape_cast %263 : vector<1x1x32xf32> to vector<1x32xf32>
    %265 = vector.broadcast %264 : vector<1x32xf32> to vector<16x32xf32>
    %266 = arith.addf %262, %265 : vector<16x32xf32>
    %267 = arith.addf %226, %266 : vector<16x32xf32>
    %268 = arith.truncf %266 : vector<16x32xf32> to vector<16x32xbf16>
    %269 = vector.shape_cast %268 : vector<16x32xbf16> to vector<1x16x32xbf16>
    %c0_225 = arith.constant 0 : index
    %c8_226 = arith.constant 8 : index
    %c0_227 = arith.constant 0 : index
    %270 = vector.load %arg30[%c0_225, %c8_226, %c0_227] : memref<1x32x32xbf16, #tpu.memory_space<vmem>>, vector<1x16x32xbf16>
    tpu.vector_store %arg30[%c0_225, %c8_226, %c0_227], %269 {strides = array<i32>} : memref<1x32x32xbf16, #tpu.memory_space<vmem>>, vector<1x16x32xbf16>,
    %c0_228 = arith.constant 0 : index
    %c4_229 = arith.constant 4 : index
    %c0_230 = arith.constant 0 : index
    %271 = vector.load %arg30[%c0_228, %c4_229, %c0_230] : memref<1x32x32xbf16, #tpu.memory_space<vmem>>, vector<1x16x32xbf16>
    %272 = vector.shape_cast %271 : vector<1x16x32xbf16> to vector<16x32xbf16>
    %c0_231 = arith.constant 0 : index
    %c12_232 = arith.constant 12 : index
    %c0_233 = arith.constant 0 : index
    %273 = vector.load %arg30[%c0_231, %c12_232, %c0_233] : memref<1x32x32xbf16, #tpu.memory_space<vmem>>, vector<1x16x32xbf16>
    %274 = vector.shape_cast %273 : vector<1x16x32xbf16> to vector<16x32xbf16>
    %c2_234 = arith.constant 2 : index
    %c0_235 = arith.constant 0 : index
    %c0_236 = arith.constant 0 : index
    %c0_237 = arith.constant 0 : index
    %275 = vector.load %arg10[%c2_234, %c0_235, %c0_236, %c0_237] : memref<4x3x32x64xbf16, #tpu.memory_space<vmem>>, vector<1x1x32x64xbf16>
    %276 = vector.shape_cast %275 : vector<1x1x32x64xbf16> to vector<32x64xbf16>
    %cst_238 = arith.constant dense<0.000000e+00> : vector<16x64xf32>
    %277 = tpu.matmul %272, %276, %cst_238 {dimension_numbers = #tpu.dot_dimension_numbers<[1], [0], [0], [1], [0, 0, 1, 1], [], []>} : vector<16x32xbf16>, vector<32x64xbf16>, vector<16x64xf32> -> vector<16x64xf32>
    %c2_239 = arith.constant 2 : index
    %c1_240 = arith.constant 1 : index
    %c0_241 = arith.constant 0 : index
    %c0_242 = arith.constant 0 : index
    %278 = vector.load %arg10[%c2_239, %c1_240, %c0_241, %c0_242] : memref<4x3x32x64xbf16, #tpu.memory_space<vmem>>, vector<1x1x32x64xbf16>
    %279 = vector.shape_cast %278 : vector<1x1x32x64xbf16> to vector<32x64xbf16>
    %cst_243 = arith.constant dense<0.000000e+00> : vector<16x64xf32>
    %280 = tpu.matmul %268, %279, %cst_243 {dimension_numbers = #tpu.dot_dimension_numbers<[1], [0], [0], [1], [0, 0, 1, 1], [], []>} : vector<16x32xbf16>, vector<32x64xbf16>, vector<16x64xf32> -> vector<16x64xf32>
    %281 = arith.addf %277, %280 : vector<16x64xf32>
    %c2_244 = arith.constant 2 : index
    %c2_245 = arith.constant 2 : index
    %c0_246 = arith.constant 0 : index
    %c0_247 = arith.constant 0 : index
    %282 = vector.load %arg10[%c2_244, %c2_245, %c0_246, %c0_247] : memref<4x3x32x64xbf16, #tpu.memory_space<vmem>>, vector<1x1x32x64xbf16>
    %283 = vector.shape_cast %282 : vector<1x1x32x64xbf16> to vector<32x64xbf16>
    %cst_248 = arith.constant dense<0.000000e+00> : vector<16x64xf32>
    %284 = tpu.matmul %274, %283, %cst_248 {dimension_numbers = #tpu.dot_dimension_numbers<[1], [0], [0], [1], [0, 0, 1, 1], [], []>} : vector<16x32xbf16>, vector<32x64xbf16>, vector<16x64xf32> -> vector<16x64xf32>
    %285 = arith.addf %281, %284 : vector<16x64xf32>
    %c2_249 = arith.constant 2 : index
    %c0_250 = arith.constant 0 : index
    %c0_251 = arith.constant 0 : index
    %286 = vector.load %arg11[%c2_249, %c0_250, %c0_251] : memref<4x1x64xf32, #tpu.memory_space<vmem>>, vector<1x1x64xf32>
    %287 = vector.shape_cast %286 : vector<1x1x64xf32> to vector<1x64xf32>
    %288 = vector.broadcast %287 : vector<1x64xf32> to vector<16x64xf32>
    %289 = arith.addf %285, %288 : vector<16x64xf32>
    %290 = vector.extract_strided_slice %289 {offsets = [0, 0], sizes = [16, 32], strides = [1, 1]} : vector<16x64xf32> to vector<16x32xf32>
    %291 = arith.truncf %290 : vector<16x32xf32> to vector<16x32xbf16>
    %292 = math.tanh %291 : vector<16x32xbf16>
    %293 = vector.extract_strided_slice %289 {offsets = [0, 32], sizes = [16, 32], strides = [1, 1]} : vector<16x64xf32> to vector<16x32xf32>
    %294 = arith.truncf %293 : vector<16x32xf32> to vector<16x32xbf16>
    %295 = arith.negf %294 : vector<16x32xbf16>
    %296 = math.exp %295 : vector<16x32xbf16>
    %cst_252 = arith.constant 1.000000e+00 : bf16
    %297 = vector.broadcast %cst_252 : bf16 to vector<16x32xbf16>
    %298 = arith.addf %297, %296 : vector<16x32xbf16>
    %299 = arith.divf %297, %298 : vector<16x32xbf16>
    %300 = arith.mulf %292, %299 : vector<16x32xbf16>
    %c2_253 = arith.constant 2 : index
    %c0_254 = arith.constant 0 : index
    %c0_255 = arith.constant 0 : index
    %301 = vector.load %arg12[%c2_253, %c0_254, %c0_255] : memref<4x32x32xbf16, #tpu.memory_space<vmem>>, vector<1x32x32xbf16>
    %302 = vector.shape_cast %301 : vector<1x32x32xbf16> to vector<32x32xbf16>
    %cst_256 = arith.constant dense<0.000000e+00> : vector<16x32xf32>
    %303 = tpu.matmul %300, %302, %cst_256 {dimension_numbers = #tpu.dot_dimension_numbers<[1], [0], [0], [1], [0, 0, 1, 1], [], []>} : vector<16x32xbf16>, vector<32x32xbf16>, vector<16x32xf32> -> vector<16x32xf32>
    %c2_257 = arith.constant 2 : index
    %c0_258 = arith.constant 0 : index
    %c0_259 = arith.constant 0 : index
    %304 = vector.load %arg13[%c2_257, %c0_258, %c0_259] : memref<4x1x32xf32, #tpu.memory_space<vmem>>, vector<1x1x32xf32>
    %305 = vector.shape_cast %304 : vector<1x1x32xf32> to vector<1x32xf32>
    %306 = vector.broadcast %305 : vector<1x32xf32> to vector<16x32xf32>
    %307 = arith.addf %303, %306 : vector<16x32xf32>
    %308 = arith.addf %267, %307 : vector<16x32xf32>
    %309 = arith.truncf %307 : vector<16x32xf32> to vector<16x32xbf16>
    %310 = vector.shape_cast %309 : vector<16x32xbf16> to vector<1x16x32xbf16>
    %c0_260 = arith.constant 0 : index
    %c8_261 = arith.constant 8 : index
    %c0_262 = arith.constant 0 : index
    %311 = vector.load %arg30[%c0_260, %c8_261, %c0_262] : memref<1x32x32xbf16, #tpu.memory_space<vmem>>, vector<1x16x32xbf16>
    tpu.vector_store %arg30[%c0_260, %c8_261, %c0_262], %310 {strides = array<i32>} : memref<1x32x32xbf16, #tpu.memory_space<vmem>>, vector<1x16x32xbf16>,
    %c0_263 = arith.constant 0 : index
    %c0_264 = arith.constant 0 : index
    %c0_265 = arith.constant 0 : index
    %312 = vector.load %arg30[%c0_263, %c0_264, %c0_265] : memref<1x32x32xbf16, #tpu.memory_space<vmem>>, vector<1x16x32xbf16>
    %313 = vector.shape_cast %312 : vector<1x16x32xbf16> to vector<16x32xbf16>
    %c0_266 = arith.constant 0 : index
    %c16_267 = arith.constant 16 : index
    %c0_268 = arith.constant 0 : index
    %314 = vector.load %arg30[%c0_266, %c16_267, %c0_268] : memref<1x32x32xbf16, #tpu.memory_space<vmem>>, vector<1x16x32xbf16>
    %315 = vector.shape_cast %314 : vector<1x16x32xbf16> to vector<16x32xbf16>
    %c3_269 = arith.constant 3 : index
    %c0_270 = arith.constant 0 : index
    %c0_271 = arith.constant 0 : index
    %c0_272 = arith.constant 0 : index
    %316 = vector.load %arg10[%c3_269, %c0_270, %c0_271, %c0_272] : memref<4x3x32x64xbf16, #tpu.memory_space<vmem>>, vector<1x1x32x64xbf16>
    %317 = vector.shape_cast %316 : vector<1x1x32x64xbf16> to vector<32x64xbf16>
    %cst_273 = arith.constant dense<0.000000e+00> : vector<16x64xf32>
    %318 = tpu.matmul %313, %317, %cst_273 {dimension_numbers = #tpu.dot_dimension_numbers<[1], [0], [0], [1], [0, 0, 1, 1], [], []>} : vector<16x32xbf16>, vector<32x64xbf16>, vector<16x64xf32> -> vector<16x64xf32>
    %c3_274 = arith.constant 3 : index
    %c1_275 = arith.constant 1 : index
    %c0_276 = arith.constant 0 : index
    %c0_277 = arith.constant 0 : index
    %319 = vector.load %arg10[%c3_274, %c1_275, %c0_276, %c0_277] : memref<4x3x32x64xbf16, #tpu.memory_space<vmem>>, vector<1x1x32x64xbf16>
    %320 = vector.shape_cast %319 : vector<1x1x32x64xbf16> to vector<32x64xbf16>
    %cst_278 = arith.constant dense<0.000000e+00> : vector<16x64xf32>
    %321 = tpu.matmul %309, %320, %cst_278 {dimension_numbers = #tpu.dot_dimension_numbers<[1], [0], [0], [1], [0, 0, 1, 1], [], []>} : vector<16x32xbf16>, vector<32x64xbf16>, vector<16x64xf32> -> vector<16x64xf32>
    %322 = arith.addf %318, %321 : vector<16x64xf32>
    %c3_279 = arith.constant 3 : index
    %c2_280 = arith.constant 2 : index
    %c0_281 = arith.constant 0 : index
    %c0_282 = arith.constant 0 : index
    %323 = vector.load %arg10[%c3_279, %c2_280, %c0_281, %c0_282] : memref<4x3x32x64xbf16, #tpu.memory_space<vmem>>, vector<1x1x32x64xbf16>
    %324 = vector.shape_cast %323 : vector<1x1x32x64xbf16> to vector<32x64xbf16>
    %cst_283 = arith.constant dense<0.000000e+00> : vector<16x64xf32>
    %325 = tpu.matmul %315, %324, %cst_283 {dimension_numbers = #tpu.dot_dimension_numbers<[1], [0], [0], [1], [0, 0, 1, 1], [], []>} : vector<16x32xbf16>, vector<32x64xbf16>, vector<16x64xf32> -> vector<16x64xf32>
    %326 = arith.addf %322, %325 : vector<16x64xf32>
    %c3_284 = arith.constant 3 : index
    %c0_285 = arith.constant 0 : index
    %c0_286 = arith.constant 0 : index
    %327 = vector.load %arg11[%c3_284, %c0_285, %c0_286] : memref<4x1x64xf32, #tpu.memory_space<vmem>>, vector<1x1x64xf32>
    %328 = vector.shape_cast %327 : vector<1x1x64xf32> to vector<1x64xf32>
    %329 = vector.broadcast %328 : vector<1x64xf32> to vector<16x64xf32>
    %330 = arith.addf %326, %329 : vector<16x64xf32>
    %331 = vector.extract_strided_slice %330 {offsets = [0, 0], sizes = [16, 32], strides = [1, 1]} : vector<16x64xf32> to vector<16x32xf32>
    %332 = arith.truncf %331 : vector<16x32xf32> to vector<16x32xbf16>
    %333 = math.tanh %332 : vector<16x32xbf16>
    %334 = vector.extract_strided_slice %330 {offsets = [0, 32], sizes = [16, 32], strides = [1, 1]} : vector<16x64xf32> to vector<16x32xf32>
    %335 = arith.truncf %334 : vector<16x32xf32> to vector<16x32xbf16>
    %336 = arith.negf %335 : vector<16x32xbf16>
    %337 = math.exp %336 : vector<16x32xbf16>
    %cst_287 = arith.constant 1.000000e+00 : bf16
    %338 = vector.broadcast %cst_287 : bf16 to vector<16x32xbf16>
    %339 = arith.addf %338, %337 : vector<16x32xbf16>
    %340 = arith.divf %338, %339 : vector<16x32xbf16>
    %341 = arith.mulf %333, %340 : vector<16x32xbf16>
    %c3_288 = arith.constant 3 : index
    %c0_289 = arith.constant 0 : index
    %c0_290 = arith.constant 0 : index
    %342 = vector.load %arg12[%c3_288, %c0_289, %c0_290] : memref<4x32x32xbf16, #tpu.memory_space<vmem>>, vector<1x32x32xbf16>
    %343 = vector.shape_cast %342 : vector<1x32x32xbf16> to vector<32x32xbf16>
    %cst_291 = arith.constant dense<0.000000e+00> : vector<16x32xf32>
    %344 = tpu.matmul %341, %343, %cst_291 {dimension_numbers = #tpu.dot_dimension_numbers<[1], [0], [0], [1], [0, 0, 1, 1], [], []>} : vector<16x32xbf16>, vector<32x32xbf16>, vector<16x32xf32> -> vector<16x32xf32>
    %c3_292 = arith.constant 3 : index
    %c0_293 = arith.constant 0 : index
    %c0_294 = arith.constant 0 : index
    %345 = vector.load %arg13[%c3_292, %c0_293, %c0_294] : memref<4x1x32xf32, #tpu.memory_space<vmem>>, vector<1x1x32xf32>
    %346 = vector.shape_cast %345 : vector<1x1x32xf32> to vector<1x32xf32>
    %347 = vector.broadcast %346 : vector<1x32xf32> to vector<16x32xf32>
    %348 = arith.addf %344, %347 : vector<16x32xf32>
    %349 = arith.addf %308, %348 : vector<16x32xf32>
    %350 = arith.truncf %349 : vector<16x32xf32> to vector<16x32xbf16>
    %cst_295 = arith.constant 0.000000e+00 : bf16
    %351 = vector.broadcast %cst_295 : bf16 to vector<1x2x64xbf16>
    %c0_296 = arith.constant 0 : index
    %c0_297 = arith.constant 0 : index
    %c0_298 = arith.constant 0 : index
    %352 = vector.load %arg31[%c0_296, %c0_297, %c0_298] : memref<1x20x64xbf16, #tpu.memory_space<vmem>>, vector<1x2x64xbf16>
    tpu.vector_store %arg31[%c0_296, %c0_297, %c0_298], %351 {strides = array<i32>} : memref<1x20x64xbf16, #tpu.memory_space<vmem>>, vector<1x2x64xbf16>,
    %cst_299 = arith.constant 0.000000e+00 : bf16
    %353 = vector.broadcast %cst_299 : bf16 to vector<1x2x64xbf16>
    %c0_300 = arith.constant 0 : index
    %c18 = arith.constant 18 : index
    %c0_301 = arith.constant 0 : index
    %354 = vector.load %arg31[%c0_300, %c18, %c0_301] : memref<1x20x64xbf16, #tpu.memory_space<vmem>>, vector<1x2x64xbf16>
    tpu.vector_store %arg31[%c0_300, %c18, %c0_301], %353 {strides = array<i32>} : memref<1x20x64xbf16, #tpu.memory_space<vmem>>, vector<1x2x64xbf16>,
    %c0_302 = arith.constant 0 : index
    %c0_303 = arith.constant 0 : index
    %355 = vector.load %arg14[%c0_302, %c0_303] : memref<32x64xbf16, #tpu.memory_space<vmem>>, vector<32x64xbf16>
    %cst_304 = arith.constant dense<0.000000e+00> : vector<16x64xf32>
    %356 = tpu.matmul %350, %355, %cst_304 {dimension_numbers = #tpu.dot_dimension_numbers<[1], [0], [0], [1], [0, 0, 1, 1], [], []>} : vector<16x32xbf16>, vector<32x64xbf16>, vector<16x64xf32> -> vector<16x64xf32>
    %c0_305 = arith.constant 0 : index
    %c0_306 = arith.constant 0 : index
    %357 = vector.load %arg15[%c0_305, %c0_306] : memref<1x64xf32, #tpu.memory_space<vmem>>, vector<1x64xf32>
    %358 = vector.broadcast %357 : vector<1x64xf32> to vector<16x64xf32>
    %359 = arith.addf %356, %358 : vector<16x64xf32>
    %360 = arith.truncf %359 : vector<16x64xf32> to vector<16x64xbf16>
    %361 = vector.shape_cast %360 : vector<16x64xbf16> to vector<1x16x64xbf16>
    %c0_307 = arith.constant 0 : index
    %c2_308 = arith.constant 2 : index
    %c0_309 = arith.constant 0 : index
    %362 = vector.load %arg31[%c0_307, %c2_308, %c0_309] : memref<1x20x64xbf16, #tpu.memory_space<vmem>>, vector<1x16x64xbf16>
    tpu.vector_store %arg31[%c0_307, %c2_308, %c0_309], %361 {strides = array<i32>} : memref<1x20x64xbf16, #tpu.memory_space<vmem>>, vector<1x16x64xbf16>,
    %c0_310 = arith.constant 0 : index
    %c1_311 = arith.constant 1 : index
    %c0_312 = arith.constant 0 : index
    %363 = vector.load %arg31[%c0_310, %c1_311, %c0_312] : memref<1x20x64xbf16, #tpu.memory_space<vmem>>, vector<1x16x64xbf16>
    %364 = vector.shape_cast %363 : vector<1x16x64xbf16> to vector<16x64xbf16>
    %c0_313 = arith.constant 0 : index
    %c3_314 = arith.constant 3 : index
    %c0_315 = arith.constant 0 : index
    %365 = vector.load %arg31[%c0_313, %c3_314, %c0_315] : memref<1x20x64xbf16, #tpu.memory_space<vmem>>, vector<1x16x64xbf16>
    %366 = vector.shape_cast %365 : vector<1x16x64xbf16> to vector<16x64xbf16>
    %c0_316 = arith.constant 0 : index
    %c0_317 = arith.constant 0 : index
    %c0_318 = arith.constant 0 : index
    %c0_319 = arith.constant 0 : index
    %367 = vector.load %arg16[%c0_316, %c0_317, %c0_318, %c0_319] : memref<2x3x64x128xbf16, #tpu.memory_space<vmem>>, vector<1x1x64x128xbf16>
    %368 = vector.shape_cast %367 : vector<1x1x64x128xbf16> to vector<64x128xbf16>
    %cst_320 = arith.constant dense<0.000000e+00> : vector<16x128xf32>
    %369 = tpu.matmul %364, %368, %cst_320 {dimension_numbers = #tpu.dot_dimension_numbers<[1], [0], [0], [1], [0, 0, 1, 1], [], []>} : vector<16x64xbf16>, vector<64x128xbf16>, vector<16x128xf32> -> vector<16x128xf32>
    %c0_321 = arith.constant 0 : index
    %c1_322 = arith.constant 1 : index
    %c0_323 = arith.constant 0 : index
    %c0_324 = arith.constant 0 : index
    %370 = vector.load %arg16[%c0_321, %c1_322, %c0_323, %c0_324] : memref<2x3x64x128xbf16, #tpu.memory_space<vmem>>, vector<1x1x64x128xbf16>
    %371 = vector.shape_cast %370 : vector<1x1x64x128xbf16> to vector<64x128xbf16>
    %cst_325 = arith.constant dense<0.000000e+00> : vector<16x128xf32>
    %372 = tpu.matmul %360, %371, %cst_325 {dimension_numbers = #tpu.dot_dimension_numbers<[1], [0], [0], [1], [0, 0, 1, 1], [], []>} : vector<16x64xbf16>, vector<64x128xbf16>, vector<16x128xf32> -> vector<16x128xf32>
    %373 = arith.addf %369, %372 : vector<16x128xf32>
    %c0_326 = arith.constant 0 : index
    %c2_327 = arith.constant 2 : index
    %c0_328 = arith.constant 0 : index
    %c0_329 = arith.constant 0 : index
    %374 = vector.load %arg16[%c0_326, %c2_327, %c0_328, %c0_329] : memref<2x3x64x128xbf16, #tpu.memory_space<vmem>>, vector<1x1x64x128xbf16>
    %375 = vector.shape_cast %374 : vector<1x1x64x128xbf16> to vector<64x128xbf16>
    %cst_330 = arith.constant dense<0.000000e+00> : vector<16x128xf32>
    %376 = tpu.matmul %366, %375, %cst_330 {dimension_numbers = #tpu.dot_dimension_numbers<[1], [0], [0], [1], [0, 0, 1, 1], [], []>} : vector<16x64xbf16>, vector<64x128xbf16>, vector<16x128xf32> -> vector<16x128xf32>
    %377 = arith.addf %373, %376 : vector<16x128xf32>
    %c0_331 = arith.constant 0 : index
    %c0_332 = arith.constant 0 : index
    %c0_333 = arith.constant 0 : index
    %378 = vector.load %arg17[%c0_331, %c0_332, %c0_333] : memref<2x1x128xf32, #tpu.memory_space<vmem>>, vector<1x1x128xf32>
    %379 = vector.shape_cast %378 : vector<1x1x128xf32> to vector<1x128xf32>
    %380 = vector.broadcast %379 : vector<1x128xf32> to vector<16x128xf32>
    %381 = arith.addf %377, %380 : vector<16x128xf32>
    %382 = vector.extract_strided_slice %381 {offsets = [0, 0], sizes = [16, 64], strides = [1, 1]} : vector<16x128xf32> to vector<16x64xf32>
    %383 = arith.truncf %382 : vector<16x64xf32> to vector<16x64xbf16>
    %384 = math.tanh %383 : vector<16x64xbf16>
    %385 = vector.extract_strided_slice %381 {offsets = [0, 64], sizes = [16, 64], strides = [1, 1]} : vector<16x128xf32> to vector<16x64xf32>
    %386 = arith.truncf %385 : vector<16x64xf32> to vector<16x64xbf16>
    %387 = arith.negf %386 : vector<16x64xbf16>
    %388 = math.exp %387 : vector<16x64xbf16>
    %cst_334 = arith.constant 1.000000e+00 : bf16
    %389 = vector.broadcast %cst_334 : bf16 to vector<16x64xbf16>
    %390 = arith.addf %389, %388 : vector<16x64xbf16>
    %391 = arith.divf %389, %390 : vector<16x64xbf16>
    %392 = arith.mulf %384, %391 : vector<16x64xbf16>
    %c0_335 = arith.constant 0 : index
    %c0_336 = arith.constant 0 : index
    %c0_337 = arith.constant 0 : index
    %393 = vector.load %arg18[%c0_335, %c0_336, %c0_337] : memref<2x64x64xbf16, #tpu.memory_space<vmem>>, vector<1x64x64xbf16>
    %394 = vector.shape_cast %393 : vector<1x64x64xbf16> to vector<64x64xbf16>
    %cst_338 = arith.constant dense<0.000000e+00> : vector<16x64xf32>
    %395 = tpu.matmul %392, %394, %cst_338 {dimension_numbers = #tpu.dot_dimension_numbers<[1], [0], [0], [1], [0, 0, 1, 1], [], []>} : vector<16x64xbf16>, vector<64x64xbf16>, vector<16x64xf32> -> vector<16x64xf32>
    %c0_339 = arith.constant 0 : index
    %c0_340 = arith.constant 0 : index
    %c0_341 = arith.constant 0 : index
    %396 = vector.load %arg19[%c0_339, %c0_340, %c0_341] : memref<2x1x64xf32, #tpu.memory_space<vmem>>, vector<1x1x64xf32>
    %397 = vector.shape_cast %396 : vector<1x1x64xf32> to vector<1x64xf32>
    %398 = vector.broadcast %397 : vector<1x64xf32> to vector<16x64xf32>
    %399 = arith.addf %395, %398 : vector<16x64xf32>
    %400 = arith.addf %359, %399 : vector<16x64xf32>
    %401 = arith.truncf %399 : vector<16x64xf32> to vector<16x64xbf16>
    %402 = vector.shape_cast %401 : vector<16x64xbf16> to vector<1x16x64xbf16>
    %c0_342 = arith.constant 0 : index
    %c2_343 = arith.constant 2 : index
    %c0_344 = arith.constant 0 : index
    %403 = vector.load %arg31[%c0_342, %c2_343, %c0_344] : memref<1x20x64xbf16, #tpu.memory_space<vmem>>, vector<1x16x64xbf16>
    tpu.vector_store %arg31[%c0_342, %c2_343, %c0_344], %402 {strides = array<i32>} : memref<1x20x64xbf16, #tpu.memory_space<vmem>>, vector<1x16x64xbf16>,
    %c0_345 = arith.constant 0 : index
    %c0_346 = arith.constant 0 : index
    %c0_347 = arith.constant 0 : index
    %404 = vector.load %arg31[%c0_345, %c0_346, %c0_347] : memref<1x20x64xbf16, #tpu.memory_space<vmem>>, vector<1x16x64xbf16>
    %405 = vector.shape_cast %404 : vector<1x16x64xbf16> to vector<16x64xbf16>
    %c0_348 = arith.constant 0 : index
    %c4_349 = arith.constant 4 : index
    %c0_350 = arith.constant 0 : index
    %406 = vector.load %arg31[%c0_348, %c4_349, %c0_350] : memref<1x20x64xbf16, #tpu.memory_space<vmem>>, vector<1x16x64xbf16>
    %407 = vector.shape_cast %406 : vector<1x16x64xbf16> to vector<16x64xbf16>
    %c1_351 = arith.constant 1 : index
    %c0_352 = arith.constant 0 : index
    %c0_353 = arith.constant 0 : index
    %c0_354 = arith.constant 0 : index
    %408 = vector.load %arg16[%c1_351, %c0_352, %c0_353, %c0_354] : memref<2x3x64x128xbf16, #tpu.memory_space<vmem>>, vector<1x1x64x128xbf16>
    %409 = vector.shape_cast %408 : vector<1x1x64x128xbf16> to vector<64x128xbf16>
    %cst_355 = arith.constant dense<0.000000e+00> : vector<16x128xf32>
    %410 = tpu.matmul %405, %409, %cst_355 {dimension_numbers = #tpu.dot_dimension_numbers<[1], [0], [0], [1], [0, 0, 1, 1], [], []>} : vector<16x64xbf16>, vector<64x128xbf16>, vector<16x128xf32> -> vector<16x128xf32>
    %c1_356 = arith.constant 1 : index
    %c1_357 = arith.constant 1 : index
    %c0_358 = arith.constant 0 : index
    %c0_359 = arith.constant 0 : index
    %411 = vector.load %arg16[%c1_356, %c1_357, %c0_358, %c0_359] : memref<2x3x64x128xbf16, #tpu.memory_space<vmem>>, vector<1x1x64x128xbf16>
    %412 = vector.shape_cast %411 : vector<1x1x64x128xbf16> to vector<64x128xbf16>
    %cst_360 = arith.constant dense<0.000000e+00> : vector<16x128xf32>
    %413 = tpu.matmul %401, %412, %cst_360 {dimension_numbers = #tpu.dot_dimension_numbers<[1], [0], [0], [1], [0, 0, 1, 1], [], []>} : vector<16x64xbf16>, vector<64x128xbf16>, vector<16x128xf32> -> vector<16x128xf32>
    %414 = arith.addf %410, %413 : vector<16x128xf32>
    %c1_361 = arith.constant 1 : index
    %c2_362 = arith.constant 2 : index
    %c0_363 = arith.constant 0 : index
    %c0_364 = arith.constant 0 : index
    %415 = vector.load %arg16[%c1_361, %c2_362, %c0_363, %c0_364] : memref<2x3x64x128xbf16, #tpu.memory_space<vmem>>, vector<1x1x64x128xbf16>
    %416 = vector.shape_cast %415 : vector<1x1x64x128xbf16> to vector<64x128xbf16>
    %cst_365 = arith.constant dense<0.000000e+00> : vector<16x128xf32>
    %417 = tpu.matmul %407, %416, %cst_365 {dimension_numbers = #tpu.dot_dimension_numbers<[1], [0], [0], [1], [0, 0, 1, 1], [], []>} : vector<16x64xbf16>, vector<64x128xbf16>, vector<16x128xf32> -> vector<16x128xf32>
    %418 = arith.addf %414, %417 : vector<16x128xf32>
    %c1_366 = arith.constant 1 : index
    %c0_367 = arith.constant 0 : index
    %c0_368 = arith.constant 0 : index
    %419 = vector.load %arg17[%c1_366, %c0_367, %c0_368] : memref<2x1x128xf32, #tpu.memory_space<vmem>>, vector<1x1x128xf32>
    %420 = vector.shape_cast %419 : vector<1x1x128xf32> to vector<1x128xf32>
    %421 = vector.broadcast %420 : vector<1x128xf32> to vector<16x128xf32>
    %422 = arith.addf %418, %421 : vector<16x128xf32>
    %423 = vector.extract_strided_slice %422 {offsets = [0, 0], sizes = [16, 64], strides = [1, 1]} : vector<16x128xf32> to vector<16x64xf32>
    %424 = arith.truncf %423 : vector<16x64xf32> to vector<16x64xbf16>
    %425 = math.tanh %424 : vector<16x64xbf16>
    %426 = vector.extract_strided_slice %422 {offsets = [0, 64], sizes = [16, 64], strides = [1, 1]} : vector<16x128xf32> to vector<16x64xf32>
    %427 = arith.truncf %426 : vector<16x64xf32> to vector<16x64xbf16>
    %428 = arith.negf %427 : vector<16x64xbf16>
    %429 = math.exp %428 : vector<16x64xbf16>
    %cst_369 = arith.constant 1.000000e+00 : bf16
    %430 = vector.broadcast %cst_369 : bf16 to vector<16x64xbf16>
    %431 = arith.addf %430, %429 : vector<16x64xbf16>
    %432 = arith.divf %430, %431 : vector<16x64xbf16>
    %433 = arith.mulf %425, %432 : vector<16x64xbf16>
    %c1_370 = arith.constant 1 : index
    %c0_371 = arith.constant 0 : index
    %c0_372 = arith.constant 0 : index
    %434 = vector.load %arg18[%c1_370, %c0_371, %c0_372] : memref<2x64x64xbf16, #tpu.memory_space<vmem>>, vector<1x64x64xbf16>
    %435 = vector.shape_cast %434 : vector<1x64x64xbf16> to vector<64x64xbf16>
    %cst_373 = arith.constant dense<0.000000e+00> : vector<16x64xf32>
    %436 = tpu.matmul %433, %435, %cst_373 {dimension_numbers = #tpu.dot_dimension_numbers<[1], [0], [0], [1], [0, 0, 1, 1], [], []>} : vector<16x64xbf16>, vector<64x64xbf16>, vector<16x64xf32> -> vector<16x64xf32>
    %c1_374 = arith.constant 1 : index
    %c0_375 = arith.constant 0 : index
    %c0_376 = arith.constant 0 : index
    %437 = vector.load %arg19[%c1_374, %c0_375, %c0_376] : memref<2x1x64xf32, #tpu.memory_space<vmem>>, vector<1x1x64xf32>
    %438 = vector.shape_cast %437 : vector<1x1x64xf32> to vector<1x64xf32>
    %439 = vector.broadcast %438 : vector<1x64xf32> to vector<16x64xf32>
    %440 = arith.addf %436, %439 : vector<16x64xf32>
    %441 = arith.addf %400, %440 : vector<16x64xf32>
    %442 = arith.truncf %441 : vector<16x64xf32> to vector<16x64xbf16>
    %cst_377 = arith.constant 0.000000e+00 : bf16
    %443 = vector.broadcast %cst_377 : bf16 to vector<1x1x128xbf16>
    %c0_378 = arith.constant 0 : index
    %c0_379 = arith.constant 0 : index
    %c0_380 = arith.constant 0 : index
    %444 = vector.load %arg32[%c0_378, %c0_379, %c0_380] : memref<1x18x128xbf16, #tpu.memory_space<vmem>>, vector<1x1x128xbf16>
    tpu.vector_store %arg32[%c0_378, %c0_379, %c0_380], %443 {strides = array<i32>} : memref<1x18x128xbf16, #tpu.memory_space<vmem>>, vector<1x1x128xbf16>,
    %cst_381 = arith.constant 0.000000e+00 : bf16
    %445 = vector.broadcast %cst_381 : bf16 to vector<1x1x128xbf16>
    %c0_382 = arith.constant 0 : index
    %c17 = arith.constant 17 : index
    %c0_383 = arith.constant 0 : index
    %446 = vector.load %arg32[%c0_382, %c17, %c0_383] : memref<1x18x128xbf16, #tpu.memory_space<vmem>>, vector<1x1x128xbf16>
    tpu.vector_store %arg32[%c0_382, %c17, %c0_383], %445 {strides = array<i32>} : memref<1x18x128xbf16, #tpu.memory_space<vmem>>, vector<1x1x128xbf16>,
    %c0_384 = arith.constant 0 : index
    %c0_385 = arith.constant 0 : index
    %447 = vector.load %arg20[%c0_384, %c0_385] : memref<64x128xbf16, #tpu.memory_space<vmem>>, vector<64x128xbf16>
    %cst_386 = arith.constant dense<0.000000e+00> : vector<16x128xf32>
    %448 = tpu.matmul %442, %447, %cst_386 {dimension_numbers = #tpu.dot_dimension_numbers<[1], [0], [0], [1], [0, 0, 1, 1], [], []>} : vector<16x64xbf16>, vector<64x128xbf16>, vector<16x128xf32> -> vector<16x128xf32>
    %c0_387 = arith.constant 0 : index
    %c0_388 = arith.constant 0 : index
    %449 = vector.load %arg21[%c0_387, %c0_388] : memref<1x128xf32, #tpu.memory_space<vmem>>, vector<1x128xf32>
    %450 = vector.broadcast %449 : vector<1x128xf32> to vector<16x128xf32>
    %451 = arith.addf %448, %450 : vector<16x128xf32>
    %452 = arith.truncf %451 : vector<16x128xf32> to vector<16x128xbf16>
    %453 = vector.shape_cast %452 : vector<16x128xbf16> to vector<1x16x128xbf16>
    %c0_389 = arith.constant 0 : index
    %c1_390 = arith.constant 1 : index
    %c0_391 = arith.constant 0 : index
    %454 = vector.load %arg32[%c0_389, %c1_390, %c0_391] : memref<1x18x128xbf16, #tpu.memory_space<vmem>>, vector<1x16x128xbf16>
    tpu.vector_store %arg32[%c0_389, %c1_390, %c0_391], %453 {strides = array<i32>} : memref<1x18x128xbf16, #tpu.memory_space<vmem>>, vector<1x16x128xbf16>,
    %c0_392 = arith.constant 0 : index
    %c0_393 = arith.constant 0 : index
    %c0_394 = arith.constant 0 : index
    %455 = vector.load %arg32[%c0_392, %c0_393, %c0_394] : memref<1x18x128xbf16, #tpu.memory_space<vmem>>, vector<1x16x128xbf16>
    %456 = vector.shape_cast %455 : vector<1x16x128xbf16> to vector<16x128xbf16>
    %c0_395 = arith.constant 0 : index
    %c2_396 = arith.constant 2 : index
    %c0_397 = arith.constant 0 : index
    %457 = vector.load %arg32[%c0_395, %c2_396, %c0_397] : memref<1x18x128xbf16, #tpu.memory_space<vmem>>, vector<1x16x128xbf16>
    %458 = vector.shape_cast %457 : vector<1x16x128xbf16> to vector<16x128xbf16>
    %c0_398 = arith.constant 0 : index
    %c0_399 = arith.constant 0 : index
    %c0_400 = arith.constant 0 : index
    %c0_401 = arith.constant 0 : index
    %459 = vector.load %arg22[%c0_398, %c0_399, %c0_400, %c0_401] : memref<1x3x128x256xbf16, #tpu.memory_space<vmem>>, vector<1x1x128x256xbf16>
    %460 = vector.shape_cast %459 : vector<1x1x128x256xbf16> to vector<128x256xbf16>
    %cst_402 = arith.constant dense<0.000000e+00> : vector<16x256xf32>
    %461 = tpu.matmul %456, %460, %cst_402 {dimension_numbers = #tpu.dot_dimension_numbers<[1], [0], [0], [1], [0, 0, 1, 1], [], []>} : vector<16x128xbf16>, vector<128x256xbf16>, vector<16x256xf32> -> vector<16x256xf32>
    %c0_403 = arith.constant 0 : index
    %c1_404 = arith.constant 1 : index
    %c0_405 = arith.constant 0 : index
    %c0_406 = arith.constant 0 : index
    %462 = vector.load %arg22[%c0_403, %c1_404, %c0_405, %c0_406] : memref<1x3x128x256xbf16, #tpu.memory_space<vmem>>, vector<1x1x128x256xbf16>
    %463 = vector.shape_cast %462 : vector<1x1x128x256xbf16> to vector<128x256xbf16>
    %cst_407 = arith.constant dense<0.000000e+00> : vector<16x256xf32>
    %464 = tpu.matmul %452, %463, %cst_407 {dimension_numbers = #tpu.dot_dimension_numbers<[1], [0], [0], [1], [0, 0, 1, 1], [], []>} : vector<16x128xbf16>, vector<128x256xbf16>, vector<16x256xf32> -> vector<16x256xf32>
    %465 = arith.addf %461, %464 : vector<16x256xf32>
    %c0_408 = arith.constant 0 : index
    %c2_409 = arith.constant 2 : index
    %c0_410 = arith.constant 0 : index
    %c0_411 = arith.constant 0 : index
    %466 = vector.load %arg22[%c0_408, %c2_409, %c0_410, %c0_411] : memref<1x3x128x256xbf16, #tpu.memory_space<vmem>>, vector<1x1x128x256xbf16>
    %467 = vector.shape_cast %466 : vector<1x1x128x256xbf16> to vector<128x256xbf16>
    %cst_412 = arith.constant dense<0.000000e+00> : vector<16x256xf32>
    %468 = tpu.matmul %458, %467, %cst_412 {dimension_numbers = #tpu.dot_dimension_numbers<[1], [0], [0], [1], [0, 0, 1, 1], [], []>} : vector<16x128xbf16>, vector<128x256xbf16>, vector<16x256xf32> -> vector<16x256xf32>
    %469 = arith.addf %465, %468 : vector<16x256xf32>
    %c0_413 = arith.constant 0 : index
    %c0_414 = arith.constant 0 : index
    %c0_415 = arith.constant 0 : index
    %470 = vector.load %arg23[%c0_413, %c0_414, %c0_415] : memref<1x1x256xf32, #tpu.memory_space<vmem>>, vector<1x1x256xf32>
    %471 = vector.shape_cast %470 : vector<1x1x256xf32> to vector<1x256xf32>
    %472 = vector.broadcast %471 : vector<1x256xf32> to vector<16x256xf32>
    %473 = arith.addf %469, %472 : vector<16x256xf32>
    %474 = vector.extract_strided_slice %473 {offsets = [0, 0], sizes = [16, 128], strides = [1, 1]} : vector<16x256xf32> to vector<16x128xf32>
    %475 = arith.truncf %474 : vector<16x128xf32> to vector<16x128xbf16>
    %476 = math.tanh %475 : vector<16x128xbf16>
    %477 = vector.extract_strided_slice %473 {offsets = [0, 128], sizes = [16, 128], strides = [1, 1]} : vector<16x256xf32> to vector<16x128xf32>
    %478 = arith.truncf %477 : vector<16x128xf32> to vector<16x128xbf16>
    %479 = arith.negf %478 : vector<16x128xbf16>
    %480 = math.exp %479 : vector<16x128xbf16>
    %cst_416 = arith.constant 1.000000e+00 : bf16
    %481 = vector.broadcast %cst_416 : bf16 to vector<16x128xbf16>
    %482 = arith.addf %481, %480 : vector<16x128xbf16>
    %483 = arith.divf %481, %482 : vector<16x128xbf16>
    %484 = arith.mulf %476, %483 : vector<16x128xbf16>
    %c0_417 = arith.constant 0 : index
    %c0_418 = arith.constant 0 : index
    %c0_419 = arith.constant 0 : index
    %485 = vector.load %arg24[%c0_417, %c0_418, %c0_419] : memref<1x128x128xbf16, #tpu.memory_space<vmem>>, vector<1x128x128xbf16>
    %486 = vector.shape_cast %485 : vector<1x128x128xbf16> to vector<128x128xbf16>
    %cst_420 = arith.constant dense<0.000000e+00> : vector<16x128xf32>
    %487 = tpu.matmul %484, %486, %cst_420 {dimension_numbers = #tpu.dot_dimension_numbers<[1], [0], [0], [1], [0, 0, 1, 1], [], []>} : vector<16x128xbf16>, vector<128x128xbf16>, vector<16x128xf32> -> vector<16x128xf32>
    %c0_421 = arith.constant 0 : index
    %c0_422 = arith.constant 0 : index
    %c0_423 = arith.constant 0 : index
    %488 = vector.load %arg25[%c0_421, %c0_422, %c0_423] : memref<1x1x128xf32, #tpu.memory_space<vmem>>, vector<1x1x128xf32>
    %489 = vector.shape_cast %488 : vector<1x1x128xf32> to vector<1x128xf32>
    %490 = vector.broadcast %489 : vector<1x128xf32> to vector<16x128xf32>
    %491 = arith.addf %487, %490 : vector<16x128xf32>
    %492 = arith.addf %451, %491 : vector<16x128xf32>
    %493 = vector.shape_cast %492 : vector<16x128xf32> to vector<1x4x4x128xf32>
    %cst_424 = arith.constant dense<0.000000e+00> : vector<1x4x128xf32>
    %494 = vector.multi_reduction <add>, %493, %cst_424 [2] : vector<1x4x4x128xf32> to vector<1x4x128xf32>
    %cst_425 = arith.constant 4.000000e+00 : f32
    %495 = vector.broadcast %cst_425 : f32 to vector<1x4x128xf32>
    %496 = arith.divf %494, %495 : vector<1x4x128xf32>
    %497 = vector.shape_cast %496 : vector<1x4x128xf32> to vector<1x512xf32>
    %498 = arith.truncf %497 : vector<1x512xf32> to vector<1x512xbf16>
    %c0_426 = arith.constant 0 : index
    %c0_427 = arith.constant 0 : index
    %499 = vector.load %arg26[%c0_426, %c0_427] : memref<512x3xbf16, #tpu.memory_space<vmem>>, vector<512x3xbf16>
    %cst_428 = arith.constant dense<0.000000e+00> : vector<1x3xf32>
    %500 = tpu.matmul %498, %499, %cst_428 {dimension_numbers = #tpu.dot_dimension_numbers<[1], [0], [0], [1], [0, 0, 1, 1], [], []>} : vector<1x512xbf16>, vector<512x3xbf16>, vector<1x3xf32> -> vector<1x3xf32>
    %c0_429 = arith.constant 0 : index
    %c0_430 = arith.constant 0 : index
    %501 = vector.load %arg27[%c0_429, %c0_430] : memref<1x3xf32, #tpu.memory_space<vmem>>, vector<1x3xf32>
    %502 = arith.addf %500, %501 : vector<1x3xf32>
    %503 = vector.shape_cast %502 : vector<1x3xf32> to vector<1x1x3xf32>
    %c0_431 = arith.constant 0 : index
    %c0_432 = arith.constant 0 : index
    %c0_433 = arith.constant 0 : index
    %504 = vector.load %arg28[%c0_431, %c0_432, %c0_433] : memref<1x1x3xf32, #tpu.memory_space<vmem>>, vector<1x1x3xf32>
    tpu.vector_store %arg28[%c0_431, %c0_432, %c0_433], %503 {strides = array<i32>} : memref<1x1x3xf32, #tpu.memory_space<vmem>>, vector<1x1x3xf32>,
    return
  }
  func.func @transform_0(%arg0: i32) -> (i32, i32, i32) {
    %c0_i32 = arith.constant 0 : i32
    %c0_i32_0 = arith.constant 0 : i32
    %c0_i32_1 = arith.constant 0 : i32
    return %arg0, %c0_i32, %c0_i32_0 : i32, i32, i32
  }
  func.func @transform_1(%arg0: i32) -> (i32, i32) {
    %c0_i32 = arith.constant 0 : i32
    %c0_i32_0 = arith.constant 0 : i32
    %c0_i32_1 = arith.constant 0 : i32
    return %c0_i32, %c0_i32_0 : i32, i32
  }
  func.func @transform_2(%arg0: i32) -> (i32, i32) {
    %c0_i32 = arith.constant 0 : i32
    %c0_i32_0 = arith.constant 0 : i32
    %c0_i32_1 = arith.constant 0 : i32
    return %c0_i32, %c0_i32_0 : i32, i32
  }
  func.func @transform_3(%arg0: i32) -> (i32, i32, i32, i32) {
    %c0_i32 = arith.constant 0 : i32
    %c0_i32_0 = arith.constant 0 : i32
    %c0_i32_1 = arith.constant 0 : i32
    %c0_i32_2 = arith.constant 0 : i32
    %c0_i32_3 = arith.constant 0 : i32
    return %c0_i32, %c0_i32_0, %c0_i32_1, %c0_i32_2 : i32, i32, i32, i32
  }
  func.func @transform_4(%arg0: i32) -> (i32, i32, i32) {
    %c0_i32 = arith.constant 0 : i32
    %c0_i32_0 = arith.constant 0 : i32
    %c0_i32_1 = arith.constant 0 : i32
    %c0_i32_2 = arith.constant 0 : i32
    return %c0_i32, %c0_i32_0, %c0_i32_1 : i32, i32, i32
  }
  func.func @transform_5(%arg0: i32) -> (i32, i32, i32) {
    %c0_i32 = arith.constant 0 : i32
    %c0_i32_0 = arith.constant 0 : i32
    %c0_i32_1 = arith.constant 0 : i32
    %c0_i32_2 = arith.constant 0 : i32
    return %c0_i32, %c0_i32_0, %c0_i32_1 : i32, i32, i32
  }
  func.func @transform_6(%arg0: i32) -> (i32, i32, i32) {
    %c0_i32 = arith.constant 0 : i32
    %c0_i32_0 = arith.constant 0 : i32
    %c0_i32_1 = arith.constant 0 : i32
    %c0_i32_2 = arith.constant 0 : i32
    return %c0_i32, %c0_i32_0, %c0_i32_1 : i32, i32, i32
  }
  func.func @transform_7(%arg0: i32) -> (i32, i32) {
    %c0_i32 = arith.constant 0 : i32
    %c0_i32_0 = arith.constant 0 : i32
    %c0_i32_1 = arith.constant 0 : i32
    return %c0_i32, %c0_i32_0 : i32, i32
  }
  func.func @transform_8(%arg0: i32) -> (i32, i32) {
    %c0_i32 = arith.constant 0 : i32
    %c0_i32_0 = arith.constant 0 : i32
    %c0_i32_1 = arith.constant 0 : i32
    return %c0_i32, %c0_i32_0 : i32, i32
  }
  func.func @transform_9(%arg0: i32) -> (i32, i32, i32, i32) {
    %c0_i32 = arith.constant 0 : i32
    %c0_i32_0 = arith.constant 0 : i32
    %c0_i32_1 = arith.constant 0 : i32
    %c0_i32_2 = arith.constant 0 : i32
    %c0_i32_3 = arith.constant 0 : i32
    return %c0_i32, %c0_i32_0, %c0_i32_1, %c0_i32_2 : i32, i32, i32, i32
  }
  func.func @transform_10(%arg0: i32) -> (i32, i32, i32) {
    %c0_i32 = arith.constant 0 : i32
    %c0_i32_0 = arith.constant 0 : i32
    %c0_i32_1 = arith.constant 0 : i32
    %c0_i32_2 = arith.constant 0 : i32
    return %c0_i32, %c0_i32_0, %c0_i32_1 : i32, i32, i32
  }
  func.func @transform_11(%arg0: i32) -> (i32, i32, i32) {
    %c0_i32 = arith.constant 0 : i32
    %c0_i32_0 = arith.constant 0 : i32
    %c0_i32_1 = arith.constant 0 : i32
    %c0_i32_2 = arith.constant 0 : i32
    return %c0_i32, %c0_i32_0, %c0_i32_1 : i32, i32, i32
  }
  func.func @transform_12(%arg0: i32) -> (i32, i32, i32) {
    %c0_i32 = arith.constant 0 : i32
    %c0_i32_0 = arith.constant 0 : i32
    %c0_i32_1 = arith.constant 0 : i32
    %c0_i32_2 = arith.constant 0 : i32
    return %c0_i32, %c0_i32_0, %c0_i32_1 : i32, i32, i32
  }
  func.func @transform_13(%arg0: i32) -> (i32, i32) {
    %c0_i32 = arith.constant 0 : i32
    %c0_i32_0 = arith.constant 0 : i32
    %c0_i32_1 = arith.constant 0 : i32
    return %c0_i32, %c0_i32_0 : i32, i32
  }
  func.func @transform_14(%arg0: i32) -> (i32, i32) {
    %c0_i32 = arith.constant 0 : i32
    %c0_i32_0 = arith.constant 0 : i32
    %c0_i32_1 = arith.constant 0 : i32
    return %c0_i32, %c0_i32_0 : i32, i32
  }
  func.func @transform_15(%arg0: i32) -> (i32, i32, i32, i32) {
    %c0_i32 = arith.constant 0 : i32
    %c0_i32_0 = arith.constant 0 : i32
    %c0_i32_1 = arith.constant 0 : i32
    %c0_i32_2 = arith.constant 0 : i32
    %c0_i32_3 = arith.constant 0 : i32
    return %c0_i32, %c0_i32_0, %c0_i32_1, %c0_i32_2 : i32, i32, i32, i32
  }
  func.func @transform_16(%arg0: i32) -> (i32, i32, i32) {
    %c0_i32 = arith.constant 0 : i32
    %c0_i32_0 = arith.constant 0 : i32
    %c0_i32_1 = arith.constant 0 : i32
    %c0_i32_2 = arith.constant 0 : i32
    return %c0_i32, %c0_i32_0, %c0_i32_1 : i32, i32, i32
  }
  func.func @transform_17(%arg0: i32) -> (i32, i32, i32) {
    %c0_i32 = arith.constant 0 : i32
    %c0_i32_0 = arith.constant 0 : i32
    %c0_i32_1 = arith.constant 0 : i32
    %c0_i32_2 = arith.constant 0 : i32
    return %c0_i32, %c0_i32_0, %c0_i32_1 : i32, i32, i32
  }
  func.func @transform_18(%arg0: i32) -> (i32, i32, i32) {
    %c0_i32 = arith.constant 0 : i32
    %c0_i32_0 = arith.constant 0 : i32
    %c0_i32_1 = arith.constant 0 : i32
    %c0_i32_2 = arith.constant 0 : i32
    return %c0_i32, %c0_i32_0, %c0_i32_1 : i32, i32, i32
  }
  func.func @transform_19(%arg0: i32) -> (i32, i32) {
    %c0_i32 = arith.constant 0 : i32
    %c0_i32_0 = arith.constant 0 : i32
    %c0_i32_1 = arith.constant 0 : i32
    return %c0_i32, %c0_i32_0 : i32, i32
  }
  func.func @transform_20(%arg0: i32) -> (i32, i32) {
    %c0_i32 = arith.constant 0 : i32
    %c0_i32_0 = arith.constant 0 : i32
    %c0_i32_1 = arith.constant 0 : i32
    return %c0_i32, %c0_i32_0 : i32, i32
  }
  func.func @transform_21(%arg0: i32) -> (i32, i32, i32, i32) {
    %c0_i32 = arith.constant 0 : i32
    %c0_i32_0 = arith.constant 0 : i32
    %c0_i32_1 = arith.constant 0 : i32
    %c0_i32_2 = arith.constant 0 : i32
    %c0_i32_3 = arith.constant 0 : i32
    return %c0_i32, %c0_i32_0, %c0_i32_1, %c0_i32_2 : i32, i32, i32, i32
  }
  func.func @transform_22(%arg0: i32) -> (i32, i32, i32) {
    %c0_i32 = arith.constant 0 : i32
    %c0_i32_0 = arith.constant 0 : i32
    %c0_i32_1 = arith.constant 0 : i32
    %c0_i32_2 = arith.constant 0 : i32
    return %c0_i32, %c0_i32_0, %c0_i32_1 : i32, i32, i32
  }
  func.func @transform_23(%arg0: i32) -> (i32, i32, i32) {
    %c0_i32 = arith.constant 0 : i32
    %c0_i32_0 = arith.constant 0 : i32
    %c0_i32_1 = arith.constant 0 : i32
    %c0_i32_2 = arith.constant 0 : i32
    return %c0_i32, %c0_i32_0, %c0_i32_1 : i32, i32, i32
  }
  func.func @transform_24(%arg0: i32) -> (i32, i32, i32) {
    %c0_i32 = arith.constant 0 : i32
    %c0_i32_0 = arith.constant 0 : i32
    %c0_i32_1 = arith.constant 0 : i32
    %c0_i32_2 = arith.constant 0 : i32
    return %c0_i32, %c0_i32_0, %c0_i32_1 : i32, i32, i32
  }
  func.func @transform_25(%arg0: i32) -> (i32, i32) {
    %c0_i32 = arith.constant 0 : i32
    %c0_i32_0 = arith.constant 0 : i32
    %c0_i32_1 = arith.constant 0 : i32
    return %c0_i32, %c0_i32_0 : i32, i32
  }
  func.func @transform_26(%arg0: i32) -> (i32, i32) {
    %c0_i32 = arith.constant 0 : i32
    %c0_i32_0 = arith.constant 0 : i32
    %c0_i32_1 = arith.constant 0 : i32
    return %c0_i32, %c0_i32_0 : i32, i32
  }
  func.func @transform_27(%arg0: i32) -> (i32, i32, i32) {
    %c0_i32 = arith.constant 0 : i32
    %c0_i32_0 = arith.constant 0 : i32
    %c0_i32_1 = arith.constant 0 : i32
    return %arg0, %c0_i32, %c0_i32_0 : i32, i32, i32
  }
}

</mosaic_0001>

<llo_original>
// kernel: tpu_custom_call.1
$region0: #{tpu_custom_call.1}
  #allocation0 [shape = 'u32[]', space=smem, size = 0x4, offset = 0x4, fixed_abs, tag = 'smem constant byte address 0x4 - core index']
  #allocation1 [shape = 'u32[144,128]{1,0:T(1,128)}', space=vmem, size = 0x12000, scoped, tag = 'internal scratch']
  #allocation2 [shape = 'bf16[1,32,16]{2,1,0:T(16,128)(2,1)}', space=vmem, size = 0x2000, scoped, tag = 'scratch operand']
  #allocation3 [shape = 'bf16[1,32,32]{2,1,0:T(16,128)(2,1)}', space=vmem, size = 0x2000, scoped, tag = 'scratch operand']
  #allocation4 [shape = 'bf16[1,20,64]{2,1,0:T(8,128)(2,1)}', space=vmem, size = 0x1800, scoped, tag = 'scratch operand']
  #allocation5 [shape = 'bf16[1,18,128]{2,1,0:T(8,128)(2,1)}', space=vmem, size = 0x1800, scoped, tag = 'scratch operand']
  %s0 = inlined_call_operand.hbm [shape: f32[2,16,16], index: 0, kind: input, shape index: {}]
  %s1 = inlined_call_operand.hbm [shape: bf16[16,16], index: 1, kind: input, shape index: {}]
  %s2 = inlined_call_operand.hbm [shape: f32[1,16], index: 2, kind: input, shape index: {}]
  %s3 = inlined_call_operand.vmem [shape: bf16[4,3,16,32], index: 3, kind: input, shape index: {}]
  %s4 = inlined_call_operand.hbm [shape: f32[4,1,32], index: 4, kind: input, shape index: {}]
  %s5 = inlined_call_operand.hbm [shape: bf16[4,16,16], index: 5, kind: input, shape index: {}]
  %s6 = inlined_call_operand.hbm [shape: f32[4,1,16], index: 6, kind: input, shape index: {}]
  %s7 = inlined_call_operand.hbm [shape: bf16[16,32], index: 7, kind: input, shape index: {}]
  %s8 = inlined_call_operand.hbm [shape: f32[1,32], index: 8, kind: input, shape index: {}]
  %s9 = inlined_call_operand.vmem [shape: bf16[4,3,32,64], index: 9, kind: input, shape index: {}]
  %s10 = inlined_call_operand.hbm [shape: f32[4,1,64], index: 10, kind: input, shape index: {}]
  %s11 = inlined_call_operand.hbm [shape: bf16[4,32,32], index: 11, kind: input, shape index: {}]
  %s12 = inlined_call_operand.hbm [shape: f32[4,1,32], index: 12, kind: input, shape index: {}]
  %s13 = inlined_call_operand.hbm [shape: bf16[32,64], index: 13, kind: input, shape index: {}]
  %s14 = inlined_call_operand.hbm [shape: f32[1,64], index: 14, kind: input, shape index: {}]
  %s15 = inlined_call_operand.hbm [shape: bf16[2,3,64,128], index: 15, kind: input, shape index: {}]
  %s16 = inlined_call_operand.hbm [shape: f32[2,1,128], index: 16, kind: input, shape index: {}]
  %s17 = inlined_call_operand.hbm [shape: bf16[2,64,64], index: 17, kind: input, shape index: {}]
  %s18 = inlined_call_operand.vmem [shape: f32[2,1,64], index: 18, kind: input, shape index: {}]
  %s19 = inlined_call_operand.vmem [shape: bf16[64,128], index: 19, kind: input, shape index: {}]
  %s20 = inlined_call_operand.vmem [shape: f32[1,128], index: 20, kind: input, shape index: {}]
  %s21 = inlined_call_operand.hbm [shape: bf16[1,3,128,256], index: 21, kind: input, shape index: {}]
  %s22 = inlined_call_operand.vmem [shape: f32[1,1,256], index: 22, kind: input, shape index: {}]
  %s23 = inlined_call_operand.hbm [shape: bf16[1,128,128], index: 23, kind: input, shape index: {}]
  %s24 = inlined_call_operand.vmem [shape: f32[1,1,128], index: 24, kind: input, shape index: {}]
  %s25 = inlined_call_operand.vmem [shape: bf16[512,3], index: 25, kind: input, shape index: {}]
  %s26 = inlined_call_operand.vmem [shape: f32[1,3], index: 26, kind: input, shape index: {}]
  %s27 = inlined_call_operand.hbm [shape: f32[2,1,3], index: 27, kind: output, shape index: {}]
  %s28 = sld [smem:[#allocation0]]
  $region213: #{tpu_custom_call.1} parent=0
    _
  %s30 = ssub.s32 1, %s28
  %s31 = scalar_select 0, %s30, %s28
  $region1: #{tpu_custom_call.1} parent=0
    #allocation6 [shape = 'u8[16384]{0}', space=vmem, size = 0x4000, scoped, tag = 'input window, operand 0']
    #allocation7 [shape = 's32[2]{0}', space=sflag, size = 0x8, scoped, tag = 'scoped memory for tpu_custom_call.1']
    #allocation8 [shape = 's32[2]{0}', space=sflag, size = 0x8, scoped, tag = 'scoped memory for tpu_custom_call.1']
    #allocation9 [shape = 'u8[4096]{0}', space=vmem, size = 0x1000, scoped, tag = 'input window, operand 1, single buffered']
    #allocation10 [shape = 's32[1]{0}', space=sflag, size = 0x4, scoped, tag = 'scoped memory for tpu_custom_call.1']
    #allocation11 [shape = 'u8[512]{0}', space=vmem, size = 0x400, scoped, tag = 'input window, operand 2, single buffered']
    #allocation12 [shape = 'u8[2048]{0}', space=vmem, size = 0x800, scoped, tag = 'input window, operand 4, single buffered']
    #allocation13 [shape = 's32[1]{0}', space=sflag, size = 0x4, scoped, tag = 'scoped memory for tpu_custom_call.1']
    #allocation14 [shape = 'u8[16384]{0}', space=vmem, size = 0x4000, scoped, tag = 'input window, operand 5, single buffered']
    #allocation15 [shape = 'u8[2048]{0}', space=vmem, size = 0x800, scoped, tag = 'input window, operand 6, single buffered']
    #allocation16 [shape = 's32[1]{0}', space=sflag, size = 0x4, scoped, tag = 'scoped memory for tpu_custom_call.1']
    #allocation17 [shape = 'u8[4096]{0}', space=vmem, size = 0x1000, scoped, tag = 'input window, operand 7, single buffered']
    #allocation18 [shape = 'u8[512]{0}', space=vmem, size = 0x400, scoped, tag = 'input window, operand 8, single buffered']
    #allocation19 [shape = 's32[1]{0}', space=sflag, size = 0x4, scoped, tag = 'scoped memory for tpu_custom_call.1']
    #allocation20 [shape = 'u8[2048]{0}', space=vmem, size = 0x800, scoped, tag = 'input window, operand 10, single buffered']
    #allocation21 [shape = 'u8[32768]{0}', space=vmem, size = 0x8000, scoped, tag = 'input window, operand 11, single buffered']
    #allocation22 [shape = 's32[1]{0}', space=sflag, size = 0x4, scoped, tag = 'scoped memory for tpu_custom_call.1']
    #allocation23 [shape = 'u8[2048]{0}', space=vmem, size = 0x800, scoped, tag = 'input window, operand 12, single buffered']
    #allocation24 [shape = 'u8[8192]{0}', space=vmem, size = 0x2000, scoped, tag = 'input window, operand 13, single buffered']
    #allocation25 [shape = 's32[1]{0}', space=sflag, size = 0x4, scoped, tag = 'scoped memory for tpu_custom_call.1']
    #allocation26 [shape = 'u8[512]{0}', space=vmem, size = 0x400, scoped, tag = 'input window, operand 14, single buffered']
    #allocation27 [shape = 'u8[98304]{0}', space=vmem, size = 0x18000, scoped, tag = 'input window, operand 15, single buffered']
    #allocation28 [shape = 's32[1]{0}', space=sflag, size = 0x4, scoped, tag = 'scoped memory for tpu_custom_call.1']
    #allocation29 [shape = 'u8[1024]{0}', space=vmem, size = 0x400, scoped, tag = 'input window, operand 16, single buffered']
    #allocation30 [shape = 'u8[32768]{0}', space=vmem, size = 0x8000, scoped, tag = 'input window, operand 17, single buffered']
    #allocation31 [shape = 's32[1]{0}', space=sflag, size = 0x4, scoped, tag = 'scoped memory for tpu_custom_call.1']
    #allocation32 [shape = 'u8[196608]{0}', space=vmem, size = 0x30000, scoped, tag = 'input window, operand 21, single buffered']
    #allocation33 [shape = 'u8[32768]{0}', space=vmem, size = 0x8000, scoped, tag = 'input window, operand 23, single buffered']
    #allocation34 [shape = 's32[1]{0}', space=sflag, size = 0x4, scoped, tag = 'scoped memory for tpu_custom_call.1']
    #allocation35 [shape = 'u8[1024]{0}', space=vmem, size = 0x400, scoped, tag = 'output window, operand 0']
    %32 = vsyncpa [#allocation7], 0
    %s33 = scalar_lea.sflag [#allocation7], 1
    %34 = vsyncpa %s33, 0
    %35 = vsyncpa [#allocation10], 0
    %36 = vsyncpa [#allocation13], 0
    %37 = vsyncpa [#allocation16], 0
    %38 = vsyncpa [#allocation19], 0
    %39 = vsyncpa [#allocation22], 0
    %40 = vsyncpa [#allocation25], 0
    %41 = vsyncpa [#allocation28], 0
    %42 = vsyncpa [#allocation31], 0
    %43 = vsyncpa [#allocation34], 0
    %44 = vsyncpa [#allocation8], 0
    %s45 = scalar_lea.sflag [#allocation8], 1
    %46 = vsyncpa %s45, 0
    loop: start=0, step=1, limit=4
    $region2: #{tpu_custom_call.1} parent=1 // loop_pre_header
      _
    $region3: #{tpu_custom_call.1} parent=1 // loop_header
      %s48 = sphi 0, %s52
      %p49 = scmp.ge.s32.totalorder %s48, 4
      %s58 = sphi 0, %s60
      %s61 = sphi 0, %s58
      %s62 = sphi 0, %s61
      %s78 = sphi 0, %s62
      %s82 = sphi 0, %s82
      %s84 = sphi 0, %s82
      %s85 = sphi 0, %s84
      %s99 = sphi 0, %s85
      %s103 = sphi 0, %s103
      %s105 = sphi 0, %s103
      %s106 = sphi 0, %s105
      %s120 = sphi 0, %s106
      %s124 = sphi 0, %s124
      %s126 = sphi 0, %s124
      %s127 = sphi 0, %s126
      %s141 = sphi 0, %s127
      %s145 = sphi 0, %s145
      %s147 = sphi 0, %s145
      %s148 = sphi 0, %s147
      %s162 = sphi 0, %s148
      %s166 = sphi 0, %s166
      %s168 = sphi 0, %s166
      %s169 = sphi 0, %s168
      %s183 = sphi 0, %s169
      %s187 = sphi 0, %s187
      %s189 = sphi 0, %s187
      %s190 = sphi 0, %s189
      %s204 = sphi 0, %s190
      %s208 = sphi 0, %s208
      %s210 = sphi 0, %s208
      %s211 = sphi 0, %s210
      %s225 = sphi 0, %s211
      %s229 = sphi 0, %s229
      %s231 = sphi 0, %s229
      %s232 = sphi 0, %s231
      %s246 = sphi 0, %s232
      %s250 = sphi 0, %s250
      %s252 = sphi 0, %s250
      %s253 = sphi 0, %s252
      %s267 = sphi 0, %s253
      %s271 = sphi 0, %s271
      %s273 = sphi 0, %s271
      %s274 = sphi 0, %s273
      %s288 = sphi 0, %s274
      %s292 = sphi 0, %s292
      %s294 = sphi 0, %s292
      %s295 = sphi 0, %s294
      %s309 = sphi 0, %s295
      %s313 = sphi 0, %s313
      %s315 = sphi 0, %s313
      %s316 = sphi 0, %s315
      %s330 = sphi 0, %s316
      %s334 = sphi 0, %s334
      %s336 = sphi 0, %s334
      %s337 = sphi 0, %s336
      %s351 = sphi 0, %s337
      %s355 = sphi 0, %s355
      %s357 = sphi 0, %s355
      %s358 = sphi 0, %s357
      %s372 = sphi 0, %s358
      %s376 = sphi 0, %s376
      %s378 = sphi 0, %s376
      %s379 = sphi 0, %s378
      %s393 = sphi 0, %s379
      %s397 = sphi 0, %s397
      %s399 = sphi 0, %s397
      %s400 = sphi 0, %s399
      %s414 = sphi 0, %s400
      %s418 = sphi 0, %s418
      %s420 = sphi 0, %s418
      %s421 = sphi 0, %s420
      %s435 = sphi 0, %s421
      %s439 = sphi 0, %s439
      %s441 = sphi 0, %s439
      %s442 = sphi 0, %s441
      %s456 = sphi 0, %s442
      %s460 = sphi 0, %s460
      %s462 = sphi 0, %s460
      %s463 = sphi 0, %s462
      %s477 = sphi 0, %s463
      %s481 = sphi 0, %s481
      %s483 = sphi 0, %s481
      %s484 = sphi 0, %s483
      %s498 = sphi 0, %s484
      %s502 = sphi 0, %s502
      %s504 = sphi 0, %s502
      %s505 = sphi 0, %s504
      %s519 = sphi 0, %s505
      %s523 = sphi 0, %s523
      %s525 = sphi 0, %s523
      %s526 = sphi 0, %s525
      %s540 = sphi 0, %s526
      %s544 = sphi 0, %s544
      %s546 = sphi 0, %s544
      %s547 = sphi 0, %s546
      %s561 = sphi 0, %s547
      %s565 = sphi 0, %s565
      %s567 = sphi 0, %s565
      %s568 = sphi 0, %s567
      %s582 = sphi 0, %s568
      %s586 = sphi 0, %s586
      %s588 = sphi 0, %s586
      %s589 = sphi 0, %s588
      %s603 = sphi 0, %s589
      %s607 = sphi 0, %s607
      %s609 = sphi 0, %s607
      %s610 = sphi 0, %s609
      %s624 = sphi 0, %s610
      %s630 = sphi 0, %s632
      %s633 = sphi 0, %s630
      %s634 = sphi 0, %s633
      %s650 = sphi 0, %s634
    $region4: #{tpu_custom_call.1} parent=1 // loop_header_branch
      %51 = sbr.rel (%p49) target = $region8
    $region5: #{tpu_custom_call.1} parent=1 // loop_body
      %s53 = ssub.s32 %s48, 1
      %s54 = ssub.s32 %s48, 2
      %s55 = sadd.s32 %s48, 1
      %s56 = ssub.s32 %s48, %s55
      %p57 = scmp.eq.s32.totalorder %s56, 0
      %s59 = sadd.s32 %s58, 1
      %s60 = scalar_select %p57, %s58, %s59
      %p63 = pneg %p57
      %p64 = scmp.eq.s32.totalorder %s48, 1
      %p65 = por %p63, %p64
      %p66 = scmp.ne.s32.totalorder %s58, %s61
      %p67 = scmp.eq.s32.totalorder %s48, 0
      %p68 = por %p66, %p67
      %p69 = scmp.ne.s32.totalorder %s58, %s61
      %p70 = scmp.eq.s32.totalorder %s53, 1
      %p71 = por %p69, %p70
      %p72 = scmp.ne.s32.totalorder %s61, %s62
      %p73 = scmp.eq.s32.totalorder %s53, 0
      %p74 = por %p72, %p73
      %p75 = scmp.ne.s32.totalorder %s61, %s62
      %p76 = scmp.eq.s32.totalorder %s54, 1
      %p77 = por %p75, %p76
      %p79 = scmp.ne.s32.totalorder %s62, %s78
      %p80 = scmp.eq.s32.totalorder %s54, 0
      %p81 = por %p79, %p80
      %s83 = sadd.s32 %s82, 1
      %p86 = scmp.eq.s32.totalorder %s48, 1
      %p87 = scmp.ne.s32.totalorder %s82, %s84
      %p88 = scmp.eq.s32.totalorder %s48, 0
      %p89 = por %p87, %p88
      %p90 = scmp.ne.s32.totalorder %s82, %s84
      %p91 = scmp.eq.s32.totalorder %s53, 1
      %p92 = por %p90, %p91
      %p93 = scmp.ne.s32.totalorder %s84, %s85
      %p94 = scmp.eq.s32.totalorder %s53, 0
      %p95 = por %p93, %p94
      %p96 = scmp.ne.s32.totalorder %s84, %s85
      %p97 = scmp.eq.s32.totalorder %s54, 1
      %p98 = por %p96, %p97
      %p100 = scmp.ne.s32.totalorder %s85, %s99
      %p101 = scmp.eq.s32.totalorder %s54, 0
      %p102 = por %p100, %p101
      %s104 = sadd.s32 %s103, 1
      %p107 = scmp.eq.s32.totalorder %s48, 1
      %p108 = scmp.ne.s32.totalorder %s103, %s105
      %p109 = scmp.eq.s32.totalorder %s48, 0
      %p110 = por %p108, %p109
      %p111 = scmp.ne.s32.totalorder %s103, %s105
      %p112 = scmp.eq.s32.totalorder %s53, 1
      %p113 = por %p111, %p112
      %p114 = scmp.ne.s32.totalorder %s105, %s106
      %p115 = scmp.eq.s32.totalorder %s53, 0
      %p116 = por %p114, %p115
      %p117 = scmp.ne.s32.totalorder %s105, %s106
      %p118 = scmp.eq.s32.totalorder %s54, 1
      %p119 = por %p117, %p118
      %p121 = scmp.ne.s32.totalorder %s106, %s120
      %p122 = scmp.eq.s32.totalorder %s54, 0
      %p123 = por %p121, %p122
      %s125 = sadd.s32 %s124, 1
      %p128 = scmp.eq.s32.totalorder %s48, 1
      %p129 = scmp.ne.s32.totalorder %s124, %s126
      %p130 = scmp.eq.s32.totalorder %s48, 0
      %p131 = por %p129, %p130
      %p132 = scmp.ne.s32.totalorder %s124, %s126
      %p133 = scmp.eq.s32.totalorder %s53, 1
      %p134 = por %p132, %p133
      %p135 = scmp.ne.s32.totalorder %s126, %s127
      %p136 = scmp.eq.s32.totalorder %s53, 0
      %p137 = por %p135, %p136
      %p138 = scmp.ne.s32.totalorder %s126, %s127
      %p139 = scmp.eq.s32.totalorder %s54, 1
      %p140 = por %p138, %p139
      %p142 = scmp.ne.s32.totalorder %s127, %s141
      %p143 = scmp.eq.s32.totalorder %s54, 0
      %p144 = por %p142, %p143
      %s146 = sadd.s32 %s145, 1
      %p149 = scmp.eq.s32.totalorder %s48, 1
      %p150 = scmp.ne.s32.totalorder %s145, %s147
      %p151 = scmp.eq.s32.totalorder %s48, 0
      %p152 = por %p150, %p151
      %p153 = scmp.ne.s32.totalorder %s145, %s147
      %p154 = scmp.eq.s32.totalorder %s53, 1
      %p155 = por %p153, %p154
      %p156 = scmp.ne.s32.totalorder %s147, %s148
      %p157 = scmp.eq.s32.totalorder %s53, 0
      %p158 = por %p156, %p157
      %p159 = scmp.ne.s32.totalorder %s147, %s148
      %p160 = scmp.eq.s32.totalorder %s54, 1
      %p161 = por %p159, %p160
      %p163 = scmp.ne.s32.totalorder %s148, %s162
      %p164 = scmp.eq.s32.totalorder %s54, 0
      %p165 = por %p163, %p164
      %s167 = sadd.s32 %s166, 1
      %p170 = scmp.eq.s32.totalorder %s48, 1
      %p171 = scmp.ne.s32.totalorder %s166, %s168
      %p172 = scmp.eq.s32.totalorder %s48, 0
      %p173 = por %p171, %p172
      %p174 = scmp.ne.s32.totalorder %s166, %s168
      %p175 = scmp.eq.s32.totalorder %s53, 1
      %p176 = por %p174, %p175
      %p177 = scmp.ne.s32.totalorder %s168, %s169
      %p178 = scmp.eq.s32.totalorder %s53, 0
      %p179 = por %p177, %p178
      %p180 = scmp.ne.s32.totalorder %s168, %s169
      %p181 = scmp.eq.s32.totalorder %s54, 1
      %p182 = por %p180, %p181
      %p184 = scmp.ne.s32.totalorder %s169, %s183
      %p185 = scmp.eq.s32.totalorder %s54, 0
      %p186 = por %p184, %p185
      %s188 = sadd.s32 %s187, 1
      %p191 = scmp.eq.s32.totalorder %s48, 1
      %p192 = scmp.ne.s32.totalorder %s187, %s189
      %p193 = scmp.eq.s32.totalorder %s48, 0
      %p194 = por %p192, %p193
      %p195 = scmp.ne.s32.totalorder %s187, %s189
      %p196 = scmp.eq.s32.totalorder %s53, 1
      %p197 = por %p195, %p196
      %p198 = scmp.ne.s32.totalorder %s189, %s190
      %p199 = scmp.eq.s32.totalorder %s53, 0
      %p200 = por %p198, %p199
      %p201 = scmp.ne.s32.totalorder %s189, %s190
      %p202 = scmp.eq.s32.totalorder %s54, 1
      %p203 = por %p201, %p202
      %p205 = scmp.ne.s32.totalorder %s190, %s204
      %p206 = scmp.eq.s32.totalorder %s54, 0
      %p207 = por %p205, %p206
      %s209 = sadd.s32 %s208, 1
      %p212 = scmp.eq.s32.totalorder %s48, 1
      %p213 = scmp.ne.s32.totalorder %s208, %s210
      %p214 = scmp.eq.s32.totalorder %s48, 0
      %p215 = por %p213, %p214
      %p216 = scmp.ne.s32.totalorder %s208, %s210
      %p217 = scmp.eq.s32.totalorder %s53, 1
      %p218 = por %p216, %p217
      %p219 = scmp.ne.s32.totalorder %s210, %s211
      %p220 = scmp.eq.s32.totalorder %s53, 0
      %p221 = por %p219, %p220
      %p222 = scmp.ne.s32.totalorder %s210, %s211
      %p223 = scmp.eq.s32.totalorder %s54, 1
      %p224 = por %p222, %p223
      %p226 = scmp.ne.s32.totalorder %s211, %s225
      %p227 = scmp.eq.s32.totalorder %s54, 0
      %p228 = por %p226, %p227
      %s230 = sadd.s32 %s229, 1
      %p233 = scmp.eq.s32.totalorder %s48, 1
      %p234 = scmp.ne.s32.totalorder %s229, %s231
      %p235 = scmp.eq.s32.totalorder %s48, 0
      %p236 = por %p234, %p235
      %p237 = scmp.ne.s32.totalorder %s229, %s231
      %p238 = scmp.eq.s32.totalorder %s53, 1
      %p239 = por %p237, %p238
      %p240 = scmp.ne.s32.totalorder %s231, %s232
      %p241 = scmp.eq.s32.totalorder %s53, 0
      %p242 = por %p240, %p241
      %p243 = scmp.ne.s32.totalorder %s231, %s232
      %p244 = scmp.eq.s32.totalorder %s54, 1
      %p245 = por %p243, %p244
      %p247 = scmp.ne.s32.totalorder %s232, %s246
      %p248 = scmp.eq.s32.totalorder %s54, 0
      %p249 = por %p247, %p248
      %s251 = sadd.s32 %s250, 1
      %p254 = scmp.eq.s32.totalorder %s48, 1
      %p255 = scmp.ne.s32.totalorder %s250, %s252
      %p256 = scmp.eq.s32.totalorder %s48, 0
      %p257 = por %p255, %p256
      %p258 = scmp.ne.s32.totalorder %s250, %s252
      %p259 = scmp.eq.s32.totalorder %s53, 1
      %p260 = por %p258, %p259
      %p261 = scmp.ne.s32.totalorder %s252, %s253
      %p262 = scmp.eq.s32.totalorder %s53, 0
      %p263 = por %p261, %p262
      %p264 = scmp.ne.s32.totalorder %s252, %s253
      %p265 = scmp.eq.s32.totalorder %s54, 1
      %p266 = por %p264, %p265
      %p268 = scmp.ne.s32.totalorder %s253, %s267
      %p269 = scmp.eq.s32.totalorder %s54, 0
      %p270 = por %p268, %p269
      %s272 = sadd.s32 %s271, 1
      %p275 = scmp.eq.s32.totalorder %s48, 1
      %p276 = scmp.ne.s32.totalorder %s271, %s273
      %p277 = scmp.eq.s32.totalorder %s48, 0
      %p278 = por %p276, %p277
      %p279 = scmp.ne.s32.totalorder %s271, %s273
      %p280 = scmp.eq.s32.totalorder %s53, 1
      %p281 = por %p279, %p280
      %p282 = scmp.ne.s32.totalorder %s273, %s274
      %p283 = scmp.eq.s32.totalorder %s53, 0
      %p284 = por %p282, %p283
      %p285 = scmp.ne.s32.totalorder %s273, %s274
      %p286 = scmp.eq.s32.totalorder %s54, 1
      %p287 = por %p285, %p286
      %p289 = scmp.ne.s32.totalorder %s274, %s288
      %p290 = scmp.eq.s32.totalorder %s54, 0
      %p291 = por %p289, %p290
      %s293 = sadd.s32 %s292, 1
      %p296 = scmp.eq.s32.totalorder %s48, 1
      %p297 = scmp.ne.s32.totalorder %s292, %s294
      %p298 = scmp.eq.s32.totalorder %s48, 0
      %p299 = por %p297, %p298
      %p300 = scmp.ne.s32.totalorder %s292, %s294
      %p301 = scmp.eq.s32.totalorder %s53, 1
      %p302 = por %p300, %p301
      %p303 = scmp.ne.s32.totalorder %s294, %s295
      %p304 = scmp.eq.s32.totalorder %s53, 0
      %p305 = por %p303, %p304
      %p306 = scmp.ne.s32.totalorder %s294, %s295
      %p307 = scmp.eq.s32.totalorder %s54, 1
      %p308 = por %p306, %p307
      %p310 = scmp.ne.s32.totalorder %s295, %s309
      %p311 = scmp.eq.s32.totalorder %s54, 0
      %p312 = por %p310, %p311
      %s314 = sadd.s32 %s313, 1
      %p317 = scmp.eq.s32.totalorder %s48, 1
      %p318 = scmp.ne.s32.totalorder %s313, %s315
      %p319 = scmp.eq.s32.totalorder %s48, 0
      %p320 = por %p318, %p319
      %p321 = scmp.ne.s32.totalorder %s313, %s315
      %p322 = scmp.eq.s32.totalorder %s53, 1
      %p323 = por %p321, %p322
      %p324 = scmp.ne.s32.totalorder %s315, %s316
      %p325 = scmp.eq.s32.totalorder %s53, 0
      %p326 = por %p324, %p325
      %p327 = scmp.ne.s32.totalorder %s315, %s316
      %p328 = scmp.eq.s32.totalorder %s54, 1
      %p329 = por %p327, %p328
      %p331 = scmp.ne.s32.totalorder %s316, %s330
      %p332 = scmp.eq.s32.totalorder %s54, 0
      %p333 = por %p331, %p332
      %s335 = sadd.s32 %s334, 1
      %p338 = scmp.eq.s32.totalorder %s48, 1
      %p339 = scmp.ne.s32.totalorder %s334, %s336
      %p340 = scmp.eq.s32.totalorder %s48, 0
      %p341 = por %p339, %p340
      %p342 = scmp.ne.s32.totalorder %s334, %s336
      %p343 = scmp.eq.s32.totalorder %s53, 1
      %p344 = por %p342, %p343
      %p345 = scmp.ne.s32.totalorder %s336, %s337
      %p346 = scmp.eq.s32.totalorder %s53, 0
      %p347 = por %p345, %p346
      %p348 = scmp.ne.s32.totalorder %s336, %s337
      %p349 = scmp.eq.s32.totalorder %s54, 1
      %p350 = por %p348, %p349
      %p352 = scmp.ne.s32.totalorder %s337, %s351
      %p353 = scmp.eq.s32.totalorder %s54, 0
      %p354 = por %p352, %p353
      %s356 = sadd.s32 %s355, 1
      %p359 = scmp.eq.s32.totalorder %s48, 1
      %p360 = scmp.ne.s32.totalorder %s355, %s357
      %p361 = scmp.eq.s32.totalorder %s48, 0
      %p362 = por %p360, %p361
      %p363 = scmp.ne.s32.totalorder %s355, %s357
      %p364 = scmp.eq.s32.totalorder %s53, 1
      %p365 = por %p363, %p364
      %p366 = scmp.ne.s32.totalorder %s357, %s358
      %p367 = scmp.eq.s32.totalorder %s53, 0
      %p368 = por %p366, %p367
      %p369 = scmp.ne.s32.totalorder %s357, %s358
      %p370 = scmp.eq.s32.totalorder %s54, 1
      %p371 = por %p369, %p370
      %p373 = scmp.ne.s32.totalorder %s358, %s372
      %p374 = scmp.eq.s32.totalorder %s54, 0
      %p375 = por %p373, %p374
      %s377 = sadd.s32 %s376, 1
      %p380 = scmp.eq.s32.totalorder %s48, 1
      %p381 = scmp.ne.s32.totalorder %s376, %s378
      %p382 = scmp.eq.s32.totalorder %s48, 0
      %p383 = por %p381, %p382
      %p384 = scmp.ne.s32.totalorder %s376, %s378
      %p385 = scmp.eq.s32.totalorder %s53, 1
      %p386 = por %p384, %p385
      %p387 = scmp.ne.s32.totalorder %s378, %s379
      %p388 = scmp.eq.s32.totalorder %s53, 0
      %p389 = por %p387, %p388
      %p390 = scmp.ne.s32.totalorder %s378, %s379
      %p391 = scmp.eq.s32.totalorder %s54, 1
      %p392 = por %p390, %p391
      %p394 = scmp.ne.s32.totalorder %s379, %s393
      %p395 = scmp.eq.s32.totalorder %s54, 0
      %p396 = por %p394, %p395
      %s398 = sadd.s32 %s397, 1
      %p401 = scmp.eq.s32.totalorder %s48, 1
      %p402 = scmp.ne.s32.totalorder %s397, %s399
      %p403 = scmp.eq.s32.totalorder %s48, 0
      %p404 = por %p402, %p403
      %p405 = scmp.ne.s32.totalorder %s397, %s399
      %p406 = scmp.eq.s32.totalorder %s53, 1
      %p407 = por %p405, %p406
      %p408 = scmp.ne.s32.totalorder %s399, %s400
      %p409 = scmp.eq.s32.totalorder %s53, 0
      %p410 = por %p408, %p409
      %p411 = scmp.ne.s32.totalorder %s399, %s400
      %p412 = scmp.eq.s32.totalorder %s54, 1
      %p413 = por %p411, %p412
      %p415 = scmp.ne.s32.totalorder %s400, %s414
      %p416 = scmp.eq.s32.totalorder %s54, 0
      %p417 = por %p415, %p416
      %s419 = sadd.s32 %s418, 1
      %p422 = scmp.eq.s32.totalorder %s48, 1
      %p423 = scmp.ne.s32.totalorder %s418, %s420
      %p424 = scmp.eq.s32.totalorder %s48, 0
      %p425 = por %p423, %p424
      %p426 = scmp.ne.s32.totalorder %s418, %s420
      %p427 = scmp.eq.s32.totalorder %s53, 1
      %p428 = por %p426, %p427
      %p429 = scmp.ne.s32.totalorder %s420, %s421
      %p430 = scmp.eq.s32.totalorder %s53, 0
      %p431 = por %p429, %p430
      %p432 = scmp.ne.s32.totalorder %s420, %s421
      %p433 = scmp.eq.s32.totalorder %s54, 1
      %p434 = por %p432, %p433
      %p436 = scmp.ne.s32.totalorder %s421, %s435
      %p437 = scmp.eq.s32.totalorder %s54, 0
      %p438 = por %p436, %p437
      %s440 = sadd.s32 %s439, 1
      %p443 = scmp.eq.s32.totalorder %s48, 1
      %p444 = scmp.ne.s32.totalorder %s439, %s441
      %p445 = scmp.eq.s32.totalorder %s48, 0
      %p446 = por %p444, %p445
      %p447 = scmp.ne.s32.totalorder %s439, %s441
      %p448 = scmp.eq.s32.totalorder %s53, 1
      %p449 = por %p447, %p448
      %p450 = scmp.ne.s32.totalorder %s441, %s442
      %p451 = scmp.eq.s32.totalorder %s53, 0
      %p452 = por %p450, %p451
      %p453 = scmp.ne.s32.totalorder %s441, %s442
      %p454 = scmp.eq.s32.totalorder %s54, 1
      %p455 = por %p453, %p454
      %p457 = scmp.ne.s32.totalorder %s442, %s456
      %p458 = scmp.eq.s32.totalorder %s54, 0
      %p459 = por %p457, %p458
      %s461 = sadd.s32 %s460, 1
      %p464 = scmp.eq.s32.totalorder %s48, 1
      %p465 = scmp.ne.s32.totalorder %s460, %s462
      %p466 = scmp.eq.s32.totalorder %s48, 0
      %p467 = por %p465, %p466
      %p468 = scmp.ne.s32.totalorder %s460, %s462
      %p469 = scmp.eq.s32.totalorder %s53, 1
      %p470 = por %p468, %p469
      %p471 = scmp.ne.s32.totalorder %s462, %s463
      %p472 = scmp.eq.s32.totalorder %s53, 0
      %p473 = por %p471, %p472
      %p474 = scmp.ne.s32.totalorder %s462, %s463
      %p475 = scmp.eq.s32.totalorder %s54, 1
      %p476 = por %p474, %p475
      %p478 = scmp.ne.s32.totalorder %s463, %s477
      %p479 = scmp.eq.s32.totalorder %s54, 0
      %p480 = por %p478, %p479
      %s482 = sadd.s32 %s481, 1
      %p485 = scmp.eq.s32.totalorder %s48, 1
      %p486 = scmp.ne.s32.totalorder %s481, %s483
      %p487 = scmp.eq.s32.totalorder %s48, 0
      %p488 = por %p486, %p487
      %p489 = scmp.ne.s32.totalorder %s481, %s483
      %p490 = scmp.eq.s32.totalorder %s53, 1
      %p491 = por %p489, %p490
      %p492 = scmp.ne.s32.totalorder %s483, %s484
      %p493 = scmp.eq.s32.totalorder %s53, 0
      %p494 = por %p492, %p493
      %p495 = scmp.ne.s32.totalorder %s483, %s484
      %p496 = scmp.eq.s32.totalorder %s54, 1
      %p497 = por %p495, %p496
      %p499 = scmp.ne.s32.totalorder %s484, %s498
      %p500 = scmp.eq.s32.totalorder %s54, 0
      %p501 = por %p499, %p500
      %s503 = sadd.s32 %s502, 1
      %p506 = scmp.eq.s32.totalorder %s48, 1
      %p507 = scmp.ne.s32.totalorder %s502, %s504
      %p508 = scmp.eq.s32.totalorder %s48, 0
      %p509 = por %p507, %p508
      %p510 = scmp.ne.s32.totalorder %s502, %s504
      %p511 = scmp.eq.s32.totalorder %s53, 1
      %p512 = por %p510, %p511
      %p513 = scmp.ne.s32.totalorder %s504, %s505
      %p514 = scmp.eq.s32.totalorder %s53, 0
      %p515 = por %p513, %p514
      %p516 = scmp.ne.s32.totalorder %s504, %s505
      %p517 = scmp.eq.s32.totalorder %s54, 1
      %p518 = por %p516, %p517
      %p520 = scmp.ne.s32.totalorder %s505, %s519
      %p521 = scmp.eq.s32.totalorder %s54, 0
      %p522 = por %p520, %p521
      %s524 = sadd.s32 %s523, 1
      %p527 = scmp.eq.s32.totalorder %s48, 1
      %p528 = scmp.ne.s32.totalorder %s523, %s525
      %p529 = scmp.eq.s32.totalorder %s48, 0
      %p530 = por %p528, %p529
      %p531 = scmp.ne.s32.totalorder %s523, %s525
      %p532 = scmp.eq.s32.totalorder %s53, 1
      %p533 = por %p531, %p532
      %p534 = scmp.ne.s32.totalorder %s525, %s526
      %p535 = scmp.eq.s32.totalorder %s53, 0
      %p536 = por %p534, %p535
      %p537 = scmp.ne.s32.totalorder %s525, %s526
      %p538 = scmp.eq.s32.totalorder %s54, 1
      %p539 = por %p537, %p538
      %p541 = scmp.ne.s32.totalorder %s526, %s540
      %p542 = scmp.eq.s32.totalorder %s54, 0
      %p543 = por %p541, %p542
      %s545 = sadd.s32 %s544, 1
      %p548 = scmp.eq.s32.totalorder %s48, 1
      %p549 = scmp.ne.s32.totalorder %s544, %s546
      %p550 = scmp.eq.s32.totalorder %s48, 0
      %p551 = por %p549, %p550
      %p552 = scmp.ne.s32.totalorder %s544, %s546
      %p553 = scmp.eq.s32.totalorder %s53, 1
      %p554 = por %p552, %p553
      %p555 = scmp.ne.s32.totalorder %s546, %s547
      %p556 = scmp.eq.s32.totalorder %s53, 0
      %p557 = por %p555, %p556
      %p558 = scmp.ne.s32.totalorder %s546, %s547
      %p559 = scmp.eq.s32.totalorder %s54, 1
      %p560 = por %p558, %p559
      %p562 = scmp.ne.s32.totalorder %s547, %s561
      %p563 = scmp.eq.s32.totalorder %s54, 0
      %p564 = por %p562, %p563
      %s566 = sadd.s32 %s565, 1
      %p569 = scmp.eq.s32.totalorder %s48, 1
      %p570 = scmp.ne.s32.totalorder %s565, %s567
      %p571 = scmp.eq.s32.totalorder %s48, 0
      %p572 = por %p570, %p571
      %p573 = scmp.ne.s32.totalorder %s565, %s567
      %p574 = scmp.eq.s32.totalorder %s53, 1
      %p575 = por %p573, %p574
      %p576 = scmp.ne.s32.totalorder %s567, %s568
      %p577 = scmp.eq.s32.totalorder %s53, 0
      %p578 = por %p576, %p577
      %p579 = scmp.ne.s32.totalorder %s567, %s568
      %p580 = scmp.eq.s32.totalorder %s54, 1
      %p581 = por %p579, %p580
      %p583 = scmp.ne.s32.totalorder %s568, %s582
      %p584 = scmp.eq.s32.totalorder %s54, 0
      %p585 = por %p583, %p584
      %s587 = sadd.s32 %s586, 1
      %p590 = scmp.eq.s32.totalorder %s48, 1
      %p591 = scmp.ne.s32.totalorder %s586, %s588
      %p592 = scmp.eq.s32.totalorder %s48, 0
      %p593 = por %p591, %p592
      %p594 = scmp.ne.s32.totalorder %s586, %s588
      %p595 = scmp.eq.s32.totalorder %s53, 1
      %p596 = por %p594, %p595
      %p597 = scmp.ne.s32.totalorder %s588, %s589
      %p598 = scmp.eq.s32.totalorder %s53, 0
      %p599 = por %p597, %p598
      %p600 = scmp.ne.s32.totalorder %s588, %s589
      %p601 = scmp.eq.s32.totalorder %s54, 1
      %p602 = por %p600, %p601
      %p604 = scmp.ne.s32.totalorder %s589, %s603
      %p605 = scmp.eq.s32.totalorder %s54, 0
      %p606 = por %p604, %p605
      %s608 = sadd.s32 %s607, 1
      %p611 = scmp.eq.s32.totalorder %s48, 1
      %p612 = scmp.ne.s32.totalorder %s607, %s609
      %p613 = scmp.eq.s32.totalorder %s48, 0
      %p614 = por %p612, %p613
      %p615 = scmp.ne.s32.totalorder %s607, %s609
      %p616 = scmp.eq.s32.totalorder %s53, 1
      %p617 = por %p615, %p616
      %p618 = scmp.ne.s32.totalorder %s609, %s610
      %p619 = scmp.eq.s32.totalorder %s53, 0
      %p620 = por %p618, %p619
      %p621 = scmp.ne.s32.totalorder %s609, %s610
      %p622 = scmp.eq.s32.totalorder %s54, 1
      %p623 = por %p621, %p622
      %p625 = scmp.ne.s32.totalorder %s610, %s624
      %p626 = scmp.eq.s32.totalorder %s54, 0
      %p627 = por %p625, %p626
      %s628 = ssub.s32 %s48, %s55
      %p629 = scmp.eq.s32.totalorder %s628, 0
      %s631 = sadd.s32 %s630, 1
      %s632 = scalar_select %p629, %s630, %s631
      %p635 = pneg %p629
      %p636 = scmp.eq.s32.totalorder %s48, 1
      %p637 = por %p635, %p636
      %p638 = scmp.ne.s32.totalorder %s630, %s633
      %p639 = scmp.eq.s32.totalorder %s48, 0
      %p640 = por %p638, %p639
      %p641 = scmp.ne.s32.totalorder %s630, %s633
      %p642 = scmp.eq.s32.totalorder %s53, 1
      %p643 = por %p641, %p642
      %p644 = scmp.ne.s32.totalorder %s633, %s634
      %p645 = scmp.eq.s32.totalorder %s53, 0
      %p646 = por %p644, %p645
      %p647 = scmp.ne.s32.totalorder %s633, %s634
      %p648 = scmp.eq.s32.totalorder %s54, 1
      %p649 = por %p647, %p648
      %p651 = scmp.ne.s32.totalorder %s634, %s650
      %p652 = scmp.eq.s32.totalorder %s54, 0
      %p653 = por %p651, %p652
      %p654 = scmp.le.s32.totalorder 1, %s48
      %p655 = scmp.lt.s32.totalorder %s48, 3
      %p656 = pnand %p654, %p655
      %p657 = pneg %p656
      // Predicated region
      $region9: #{tpu_custom_call.1} parent=5 // pred_check
        _
      $region10: #{tpu_custom_call.1} parent=5 // pred_check_branch
        %659 = sbr.rel (%p656) target = $region12
      $region11: #{tpu_custom_call.1} parent=5 // pred_region
        %s660 = ssub.s32 %s48, 1
        // Predicated region
        $region13: #{tpu_custom_call.1} parent=11 // pred_check
          %p661 = pneg %p95
        $region14: #{tpu_custom_call.1} parent=11 // pred_check_branch
          %663 = sbr.rel (%p661) target = $region16
        $region15: #{tpu_custom_call.1} parent=11 // pred_region
          %s665 = ssub.s32 128, 128
          %666 = vsyncadd [#allocation10], %s665
          %s667 = sshll.u32 [#allocation9], 4
          %s668 = int_to_ptr.vmem [resolvable:$true] %s667
          %673 = dma.hbm_to_vmem [thread:$0]  %s1, 128, %s668, [#allocation10], 64, 64, 4
        $region16: #{tpu_custom_call.1} parent=11 // pred_fallthru
          _
        // Predicated region
        $region17: #{tpu_custom_call.1} parent=11 // pred_check
          %p674 = pneg %p116
        $region18: #{tpu_custom_call.1} parent=11 // pred_check_branch
          %676 = sbr.rel (%p674) target = $region20
        $region19: #{tpu_custom_call.1} parent=11 // pred_region
          %s678 = ssub.s32 16, 16
          %679 = vsyncadd [#allocation10], %s678
          %s681 = sshll.u32 [#allocation11], 4
          %s682 = int_to_ptr.vmem [resolvable:$true] %s681
          %684 = dma.hbm_to_vmem [thread:$0]  %s2, 16, %s682, [#allocation10]
        $region20: #{tpu_custom_call.1} parent=11 // pred_fallthru
          _
        // Predicated region
        $region21: #{tpu_custom_call.1} parent=11 // pred_check
          %p685 = pneg %p137
        $region22: #{tpu_custom_call.1} parent=11 // pred_check_branch
          %687 = sbr.rel (%p685) target = $region24
        $region23: #{tpu_custom_call.1} parent=11 // pred_region
          _
        $region24: #{tpu_custom_call.1} parent=11 // pred_fallthru
          _
        // Predicated region
        $region25: #{tpu_custom_call.1} parent=11 // pred_check
          %p688 = pneg %p158
        $region26: #{tpu_custom_call.1} parent=11 // pred_check_branch
          %690 = sbr.rel (%p688) target = $region28
        $region27: #{tpu_custom_call.1} parent=11 // pred_region
          %s692 = ssub.s32 64, 64
          %693 = vsyncadd [#allocation13], %s692
          %s694 = sshll.u32 [#allocation12], 4
          %s695 = int_to_ptr.vmem [resolvable:$true] %s694
          %700 = dma.hbm_to_vmem [thread:$0]  %s4, 64, %s695, [#allocation13], 16, 16, 1
        $region28: #{tpu_custom_call.1} parent=11 // pred_fallthru
          _
        // Predicated region
        $region29: #{tpu_custom_call.1} parent=11 // pred_check
          %p701 = pneg %p179
        $region30: #{tpu_custom_call.1} parent=11 // pred_check_branch
          %703 = sbr.rel (%p701) target = $region32
        $region31: #{tpu_custom_call.1} parent=11 // pred_region
          %s705 = ssub.s32 512, 512
          %706 = vsyncadd [#allocation13], %s705
          %s707 = sshll.u32 [#allocation14], 4
          %s708 = int_to_ptr.vmem [resolvable:$true] %s707
          %713 = dma.hbm_to_vmem [thread:$0]  %s5, 512, %s708, [#allocation13], 64, 64, 4
        $region32: #{tpu_custom_call.1} parent=11 // pred_fallthru
          _
        // Predicated region
        $region33: #{tpu_custom_call.1} parent=11 // pred_check
          %p714 = pneg %p200
        $region34: #{tpu_custom_call.1} parent=11 // pred_check_branch
          %716 = sbr.rel (%p714) target = $region36
        $region35: #{tpu_custom_call.1} parent=11 // pred_region
          %s718 = ssub.s32 64, 64
          %719 = vsyncadd [#allocation16], %s718
          %s720 = sshll.u32 [#allocation15], 4
          %s721 = int_to_ptr.vmem [resolvable:$true] %s720
          %726 = dma.hbm_to_vmem [thread:$0]  %s6, 64, %s721, [#allocation16], 16, 16, 1
        $region36: #{tpu_custom_call.1} parent=11 // pred_fallthru
          _
        // Predicated region
        $region37: #{tpu_custom_call.1} parent=11 // pred_check
          %p727 = pneg %p221
        $region38: #{tpu_custom_call.1} parent=11 // pred_check_branch
          %729 = sbr.rel (%p727) target = $region40
        $region39: #{tpu_custom_call.1} parent=11 // pred_region
          %s731 = ssub.s32 128, 128
          %732 = vsyncadd [#allocation16], %s731
          %s733 = sshll.u32 [#allocation17], 4
          %s734 = int_to_ptr.vmem [resolvable:$true] %s733
          %739 = dma.hbm_to_vmem [thread:$0]  %s7, 128, %s734, [#allocation16], 64, 64, 4
        $region40: #{tpu_custom_call.1} parent=11 // pred_fallthru
          _
        // Predicated region
        $region41: #{tpu_custom_call.1} parent=11 // pred_check
          %p740 = pneg %p242
        $region42: #{tpu_custom_call.1} parent=11 // pred_check_branch
          %742 = sbr.rel (%p740) target = $region44
        $region43: #{tpu_custom_call.1} parent=11 // pred_region
          %s744 = ssub.s32 16, 16
          %745 = vsyncadd [#allocation19], %s744
          %s747 = sshll.u32 [#allocation18], 4
          %s748 = int_to_ptr.vmem [resolvable:$true] %s747
          %750 = dma.hbm_to_vmem [thread:$0]  %s8, 16, %s748, [#allocation19]
        $region44: #{tpu_custom_call.1} parent=11 // pred_fallthru
          _
        // Predicated region
        $region45: #{tpu_custom_call.1} parent=11 // pred_check
          %p751 = pneg %p263
        $region46: #{tpu_custom_call.1} parent=11 // pred_check_branch
          %753 = sbr.rel (%p751) target = $region48
        $region47: #{tpu_custom_call.1} parent=11 // pred_region
          _
        $region48: #{tpu_custom_call.1} parent=11 // pred_fallthru
          _
        // Predicated region
        $region49: #{tpu_custom_call.1} parent=11 // pred_check
          %p754 = pneg %p284
        $region50: #{tpu_custom_call.1} parent=11 // pred_check_branch
          %756 = sbr.rel (%p754) target = $region52
        $region51: #{tpu_custom_call.1} parent=11 // pred_region
          %s758 = ssub.s32 64, 64
          %759 = vsyncadd [#allocation19], %s758
          %s760 = sshll.u32 [#allocation20], 4
          %s761 = int_to_ptr.vmem [resolvable:$true] %s760
          %766 = dma.hbm_to_vmem [thread:$0]  %s10, 64, %s761, [#allocation19], 16, 16, 1
        $region52: #{tpu_custom_call.1} parent=11 // pred_fallthru
          _
        // Predicated region
        $region53: #{tpu_custom_call.1} parent=11 // pred_check
          %p767 = pneg %p305
        $region54: #{tpu_custom_call.1} parent=11 // pred_check_branch
          %769 = sbr.rel (%p767) target = $region56
        $region55: #{tpu_custom_call.1} parent=11 // pred_region
          %s771 = ssub.s32 1024, 1024
          %772 = vsyncadd [#allocation22], %s771
          %s773 = sshll.u32 [#allocation21], 4
          %s774 = int_to_ptr.vmem [resolvable:$true] %s773
          %779 = dma.hbm_to_vmem [thread:$0]  %s11, 1024, %s774, [#allocation22], 64, 64, 4
        $region56: #{tpu_custom_call.1} parent=11 // pred_fallthru
          _
        // Predicated region
        $region57: #{tpu_custom_call.1} parent=11 // pred_check
          %p780 = pneg %p326
        $region58: #{tpu_custom_call.1} parent=11 // pred_check_branch
          %782 = sbr.rel (%p780) target = $region60
        $region59: #{tpu_custom_call.1} parent=11 // pred_region
          %s784 = ssub.s32 64, 64
          %785 = vsyncadd [#allocation22], %s784
          %s786 = sshll.u32 [#allocation23], 4
          %s787 = int_to_ptr.vmem [resolvable:$true] %s786
          %792 = dma.hbm_to_vmem [thread:$0]  %s12, 64, %s787, [#allocation22], 16, 16, 1
        $region60: #{tpu_custom_call.1} parent=11 // pred_fallthru
          _
        // Predicated region
        $region61: #{tpu_custom_call.1} parent=11 // pred_check
          %p793 = pneg %p347
        $region62: #{tpu_custom_call.1} parent=11 // pred_check_branch
          %795 = sbr.rel (%p793) target = $region64
        $region63: #{tpu_custom_call.1} parent=11 // pred_region
          %s797 = ssub.s32 256, 256
          %798 = vsyncadd [#allocation25], %s797
          %s799 = sshll.u32 [#allocation24], 4
          %s800 = int_to_ptr.vmem [resolvable:$true] %s799
          %805 = dma.hbm_to_vmem [thread:$0]  %s13, 256, %s800, [#allocation25], 64, 64, 4
        $region64: #{tpu_custom_call.1} parent=11 // pred_fallthru
          _
        // Predicated region
        $region65: #{tpu_custom_call.1} parent=11 // pred_check
          %p806 = pneg %p368
        $region66: #{tpu_custom_call.1} parent=11 // pred_check_branch
          %808 = sbr.rel (%p806) target = $region68
        $region67: #{tpu_custom_call.1} parent=11 // pred_region
          %s810 = ssub.s32 16, 16
          %811 = vsyncadd [#allocation25], %s810
          %s813 = sshll.u32 [#allocation26], 4
          %s814 = int_to_ptr.vmem [resolvable:$true] %s813
          %816 = dma.hbm_to_vmem [thread:$0]  %s14, 16, %s814, [#allocation25]
        $region68: #{tpu_custom_call.1} parent=11 // pred_fallthru
          _
        // Predicated region
        $region69: #{tpu_custom_call.1} parent=11 // pred_check
          %p817 = pneg %p389
        $region70: #{tpu_custom_call.1} parent=11 // pred_check_branch
          %819 = sbr.rel (%p817) target = $region72
        $region71: #{tpu_custom_call.1} parent=11 // pred_region
          %s821 = ssub.s32 3072, 3072
          %822 = vsyncadd [#allocation28], %s821
          %s823 = sshll.u32 [#allocation27], 4
          %s824 = int_to_ptr.vmem [resolvable:$true] %s823
          %829 = dma.hbm_to_vmem [thread:$0]  %s15, 3072, %s824, [#allocation28], 64, 64, 4
        $region72: #{tpu_custom_call.1} parent=11 // pred_fallthru
          _
        // Predicated region
        $region73: #{tpu_custom_call.1} parent=11 // pred_check
          %p830 = pneg %p410
        $region74: #{tpu_custom_call.1} parent=11 // pred_check_branch
          %832 = sbr.rel (%p830) target = $region76
        $region75: #{tpu_custom_call.1} parent=11 // pred_region
          %s834 = ssub.s32 32, 32
          %835 = vsyncadd [#allocation28], %s834
          %s836 = sshll.u32 [#allocation29], 4
          %s837 = int_to_ptr.vmem [resolvable:$true] %s836
          %842 = dma.hbm_to_vmem [thread:$0]  %s16, 32, %s837, [#allocation28], 16, 16, 1
        $region76: #{tpu_custom_call.1} parent=11 // pred_fallthru
          _
        // Predicated region
        $region77: #{tpu_custom_call.1} parent=11 // pred_check
          %p843 = pneg %p431
        $region78: #{tpu_custom_call.1} parent=11 // pred_check_branch
          %845 = sbr.rel (%p843) target = $region80
        $region79: #{tpu_custom_call.1} parent=11 // pred_region
          %s847 = ssub.s32 1024, 1024
          %848 = vsyncadd [#allocation31], %s847
          %s849 = sshll.u32 [#allocation30], 4
          %s850 = int_to_ptr.vmem [resolvable:$true] %s849
          %855 = dma.hbm_to_vmem [thread:$0]  %s17, 1024, %s850, [#allocation31], 64, 64, 4
        $region80: #{tpu_custom_call.1} parent=11 // pred_fallthru
          _
        // Predicated region
        $region81: #{tpu_custom_call.1} parent=11 // pred_check
          %p856 = pneg %p452
        $region82: #{tpu_custom_call.1} parent=11 // pred_check_branch
          %858 = sbr.rel (%p856) target = $region84
        $region83: #{tpu_custom_call.1} parent=11 // pred_region
          _
        $region84: #{tpu_custom_call.1} parent=11 // pred_fallthru
          _
        // Predicated region
        $region85: #{tpu_custom_call.1} parent=11 // pred_check
          %p859 = pneg %p473
        $region86: #{tpu_custom_call.1} parent=11 // pred_check_branch
          %861 = sbr.rel (%p859) target = $region88
        $region87: #{tpu_custom_call.1} parent=11 // pred_region
          _
        $region88: #{tpu_custom_call.1} parent=11 // pred_fallthru
          _
        // Predicated region
        $region89: #{tpu_custom_call.1} parent=11 // pred_check
          %p862 = pneg %p494
        $region90: #{tpu_custom_call.1} parent=11 // pred_check_branch
          %864 = sbr.rel (%p862) target = $region92
        $region91: #{tpu_custom_call.1} parent=11 // pred_region
          _
        $region92: #{tpu_custom_call.1} parent=11 // pred_fallthru
          _
        // Predicated region
        $region93: #{tpu_custom_call.1} parent=11 // pred_check
          %p865 = pneg %p515
        $region94: #{tpu_custom_call.1} parent=11 // pred_check_branch
          %867 = sbr.rel (%p865) target = $region96
        $region95: #{tpu_custom_call.1} parent=11 // pred_region
          %s869 = ssub.s32 6144, 6144
          %870 = vsyncadd [#allocation31], %s869
          %s871 = sshll.u32 [#allocation32], 4
          %s872 = int_to_ptr.vmem [resolvable:$true] %s871
          %877 = dma.hbm_to_vmem [thread:$0]  %s21, 6144, %s872, [#allocation31], 128, 128, 8
        $region96: #{tpu_custom_call.1} parent=11 // pred_fallthru
          _
        // Predicated region
        $region97: #{tpu_custom_call.1} parent=11 // pred_check
          %p878 = pneg %p536
        $region98: #{tpu_custom_call.1} parent=11 // pred_check_branch
          %880 = sbr.rel (%p878) target = $region100
        $region99: #{tpu_custom_call.1} parent=11 // pred_region
          _
        $region100: #{tpu_custom_call.1} parent=11 // pred_fallthru
          _
        // Predicated region
        $region101: #{tpu_custom_call.1} parent=11 // pred_check
          %p881 = pneg %p557
        $region102: #{tpu_custom_call.1} parent=11 // pred_check_branch
          %883 = sbr.rel (%p881) target = $region104
        $region103: #{tpu_custom_call.1} parent=11 // pred_region
          %s885 = ssub.s32 1024, 1024
          %886 = vsyncadd [#allocation34], %s885
          %s887 = sshll.u32 [#allocation33], 4
          %s888 = int_to_ptr.vmem [resolvable:$true] %s887
          %893 = dma.hbm_to_vmem [thread:$0]  %s23, 1024, %s888, [#allocation34], 64, 64, 4
        $region104: #{tpu_custom_call.1} parent=11 // pred_fallthru
          _
        // Predicated region
        $region105: #{tpu_custom_call.1} parent=11 // pred_check
          %p894 = pneg %p578
        $region106: #{tpu_custom_call.1} parent=11 // pred_check_branch
          %896 = sbr.rel (%p894) target = $region108
        $region107: #{tpu_custom_call.1} parent=11 // pred_region
          _
        $region108: #{tpu_custom_call.1} parent=11 // pred_fallthru
          _
        // Predicated region
        $region109: #{tpu_custom_call.1} parent=11 // pred_check
          %p897 = pneg %p599
        $region110: #{tpu_custom_call.1} parent=11 // pred_check_branch
          %899 = sbr.rel (%p897) target = $region112
        $region111: #{tpu_custom_call.1} parent=11 // pred_region
          _
        $region112: #{tpu_custom_call.1} parent=11 // pred_fallthru
          _
        // Predicated region
        $region113: #{tpu_custom_call.1} parent=11 // pred_check
          %p900 = pneg %p620
        $region114: #{tpu_custom_call.1} parent=11 // pred_check_branch
          %902 = sbr.rel (%p900) target = $region116
        $region115: #{tpu_custom_call.1} parent=11 // pred_region
          _
        $region116: #{tpu_custom_call.1} parent=11 // pred_fallthru
          _
      $region12: #{tpu_custom_call.1} parent=5 // pred_fallthru
        _
      %p903 = scmp.lt.s32.totalorder %s48, 2
      // Predicated region
      $region117: #{tpu_custom_call.1} parent=5 // pred_check
        %p904 = pneg %p903
      $region118: #{tpu_custom_call.1} parent=5 // pred_check_branch
        %906 = sbr.rel (%p904) target = $region120
      $region119: #{tpu_custom_call.1} parent=5 // pred_region
        // Predicated region
        $region121: #{tpu_custom_call.1} parent=119 // pred_check
          %p907 = pneg %p68
        $region122: #{tpu_custom_call.1} parent=119 // pred_check_branch
          %909 = sbr.rel (%p907) target = $region124
        $region123: #{tpu_custom_call.1} parent=119 // pred_region
          %s910 = sand.u32 %s58, 1
          %s911 = scalar_lea.sflag [#allocation7], %s910
          %s912 = sand.u32 %s58, 1
          %s913 = smul.addr %s912, 16
          %s914 = scalar_lea.vmem [#allocation6], %s913
          %s916 = ssub.s32 256, 256
          %917 = vsyncadd %s911, %s916
          %s918 = smul.addr %s48, 2
          %s919 = smul.addr %s918, 128
          %s920 = scalar_lea.hbm %s0, %s919
          %s921 = sshll.u32 %s914, 4
          %s922 = int_to_ptr.vmem [resolvable:$true] %s921
          %927 = dma.hbm_to_vmem [thread:$0]  %s920, 256, %s922, %s911, 128, 128, 8
        $region124: #{tpu_custom_call.1} parent=119 // pred_fallthru
          _
      $region120: #{tpu_custom_call.1} parent=5 // pred_fallthru
        _
      %p928 = scmp.le.s32.totalorder 1, %s48
      %p929 = scmp.lt.s32.totalorder %s48, 3
      %p930 = pnand %p928, %p929
      %p931 = pneg %p930
      // Predicated region
      $region125: #{tpu_custom_call.1} parent=5 // pred_check
        _
      $region126: #{tpu_custom_call.1} parent=5 // pred_check_branch
        %933 = sbr.rel (%p930) target = $region128
      $region127: #{tpu_custom_call.1} parent=5 // pred_region
        %s934 = ssub.s32 %s48, 1
        %s935 = sand.u32 %s61, 1
        %s936 = scalar_lea.sflag [#allocation7], %s935
        %s937 = sand.u32 %s61, 1
        %s938 = smul.addr %s937, 16
        %s939 = scalar_lea.vmem [#allocation6], %s938
        // Predicated region
        $region129: #{tpu_custom_call.1} parent=127 // pred_check
          %p940 = pneg %p74
        $region130: #{tpu_custom_call.1} parent=127 // pred_check_branch
          %942 = sbr.rel (%p940) target = $region132
        $region131: #{tpu_custom_call.1} parent=127 // pred_region
          %943 = dma.done %s936, 256
        $region132: #{tpu_custom_call.1} parent=127 // pred_fallthru
          _
        // Predicated region
        $region133: #{tpu_custom_call.1} parent=127 // pred_check
          %p944 = pneg %p95
        $region134: #{tpu_custom_call.1} parent=127 // pred_check_branch
          %946 = sbr.rel (%p944) target = $region136
        $region135: #{tpu_custom_call.1} parent=127 // pred_region
          %947 = dma.done [#allocation10], 128
        $region136: #{tpu_custom_call.1} parent=127 // pred_fallthru
          _
        // Predicated region
        $region137: #{tpu_custom_call.1} parent=127 // pred_check
          %p948 = pneg %p116
        $region138: #{tpu_custom_call.1} parent=127 // pred_check_branch
          %950 = sbr.rel (%p948) target = $region140
        $region139: #{tpu_custom_call.1} parent=127 // pred_region
          %951 = dma.done [#allocation10], 16
        $region140: #{tpu_custom_call.1} parent=127 // pred_fallthru
          _
        // Predicated region
        $region141: #{tpu_custom_call.1} parent=127 // pred_check
          %p952 = pneg %p158
        $region142: #{tpu_custom_call.1} parent=127 // pred_check_branch
          %954 = sbr.rel (%p952) target = $region144
        $region143: #{tpu_custom_call.1} parent=127 // pred_region
          %955 = dma.done [#allocation13], 64
        $region144: #{tpu_custom_call.1} parent=127 // pred_fallthru
          _
        // Predicated region
        $region145: #{tpu_custom_call.1} parent=127 // pred_check
          %p956 = pneg %p179
        $region146: #{tpu_custom_call.1} parent=127 // pred_check_branch
          %958 = sbr.rel (%p956) target = $region148
        $region147: #{tpu_custom_call.1} parent=127 // pred_region
          %959 = dma.done [#allocation13], 512
        $region148: #{tpu_custom_call.1} parent=127 // pred_fallthru
          _
        // Predicated region
        $region149: #{tpu_custom_call.1} parent=127 // pred_check
          %p960 = pneg %p200
        $region150: #{tpu_custom_call.1} parent=127 // pred_check_branch
          %962 = sbr.rel (%p960) target = $region152
        $region151: #{tpu_custom_call.1} parent=127 // pred_region
          %963 = dma.done [#allocation16], 64
        $region152: #{tpu_custom_call.1} parent=127 // pred_fallthru
          _
        // Predicated region
        $region153: #{tpu_custom_call.1} parent=127 // pred_check
          %p964 = pneg %p221
        $region154: #{tpu_custom_call.1} parent=127 // pred_check_branch
          %966 = sbr.rel (%p964) target = $region156
        $region155: #{tpu_custom_call.1} parent=127 // pred_region
          %967 = dma.done [#allocation16], 128
        $region156: #{tpu_custom_call.1} parent=127 // pred_fallthru
          _
        // Predicated region
        $region157: #{tpu_custom_call.1} parent=127 // pred_check
          %p968 = pneg %p242
        $region158: #{tpu_custom_call.1} parent=127 // pred_check_branch
          %970 = sbr.rel (%p968) target = $region160
        $region159: #{tpu_custom_call.1} parent=127 // pred_region
          %971 = dma.done [#allocation19], 16
        $region160: #{tpu_custom_call.1} parent=127 // pred_fallthru
          _
        // Predicated region
        $region161: #{tpu_custom_call.1} parent=127 // pred_check
          %p972 = pneg %p284
        $region162: #{tpu_custom_call.1} parent=127 // pred_check_branch
          %974 = sbr.rel (%p972) target = $region164
        $region163: #{tpu_custom_call.1} parent=127 // pred_region
          %975 = dma.done [#allocation19], 64
        $region164: #{tpu_custom_call.1} parent=127 // pred_fallthru
          _
        // Predicated region
        $region165: #{tpu_custom_call.1} parent=127 // pred_check
          %p976 = pneg %p305
        $region166: #{tpu_custom_call.1} parent=127 // pred_check_branch
          %978 = sbr.rel (%p976) target = $region168
        $region167: #{tpu_custom_call.1} parent=127 // pred_region
          %979 = dma.done [#allocation22], 1024
        $region168: #{tpu_custom_call.1} parent=127 // pred_fallthru
          _
        // Predicated region
        $region169: #{tpu_custom_call.1} parent=127 // pred_check
          %p980 = pneg %p326
        $region170: #{tpu_custom_call.1} parent=127 // pred_check_branch
          %982 = sbr.rel (%p980) target = $region172
        $region171: #{tpu_custom_call.1} parent=127 // pred_region
          %983 = dma.done [#allocation22], 64
        $region172: #{tpu_custom_call.1} parent=127 // pred_fallthru
          _
        // Predicated region
        $region173: #{tpu_custom_call.1} parent=127 // pred_check
          %p984 = pneg %p347
        $region174: #{tpu_custom_call.1} parent=127 // pred_check_branch
          %986 = sbr.rel (%p984) target = $region176
        $region175: #{tpu_custom_call.1} parent=127 // pred_region
          %987 = dma.done [#allocation25], 256
        $region176: #{tpu_custom_call.1} parent=127 // pred_fallthru
          _
        // Predicated region
        $region177: #{tpu_custom_call.1} parent=127 // pred_check
          %p988 = pneg %p368
        $region178: #{tpu_custom_call.1} parent=127 // pred_check_branch
          %990 = sbr.rel (%p988) target = $region180
        $region179: #{tpu_custom_call.1} parent=127 // pred_region
          %991 = dma.done [#allocation25], 16
        $region180: #{tpu_custom_call.1} parent=127 // pred_fallthru
          _
        // Predicated region
        $region181: #{tpu_custom_call.1} parent=127 // pred_check
          %p992 = pneg %p389
        $region182: #{tpu_custom_call.1} parent=127 // pred_check_branch
          %994 = sbr.rel (%p992) target = $region184
        $region183: #{tpu_custom_call.1} parent=127 // pred_region
          %995 = dma.done [#allocation28], 3072
        $region184: #{tpu_custom_call.1} parent=127 // pred_fallthru
          _
        // Predicated region
        $region185: #{tpu_custom_call.1} parent=127 // pred_check
          %p996 = pneg %p410
        $region186: #{tpu_custom_call.1} parent=127 // pred_check_branch
          %998 = sbr.rel (%p996) target = $region188
        $region187: #{tpu_custom_call.1} parent=127 // pred_region
          %999 = dma.done [#allocation28], 32
        $region188: #{tpu_custom_call.1} parent=127 // pred_fallthru
          _
        // Predicated region
        $region189: #{tpu_custom_call.1} parent=127 // pred_check
          %p1000 = pneg %p431
        $region190: #{tpu_custom_call.1} parent=127 // pred_check_branch
          %1002 = sbr.rel (%p1000) target = $region192
        $region191: #{tpu_custom_call.1} parent=127 // pred_region
          %1003 = dma.done [#allocation31], 1024
        $region192: #{tpu_custom_call.1} parent=127 // pred_fallthru
          _
        // Predicated region
        $region193: #{tpu_custom_call.1} parent=127 // pred_check
          %p1004 = pneg %p515
        $region194: #{tpu_custom_call.1} parent=127 // pred_check_branch
          %1006 = sbr.rel (%p1004) target = $region196
        $region195: #{tpu_custom_call.1} parent=127 // pred_region
          %1007 = dma.done [#allocation31], 6144
        $region196: #{tpu_custom_call.1} parent=127 // pred_fallthru
          _
        // Predicated region
        $region197: #{tpu_custom_call.1} parent=127 // pred_check
          %p1008 = pneg %p557
        $region198: #{tpu_custom_call.1} parent=127 // pred_check_branch
          %1010 = sbr.rel (%p1008) target = $region200
        $region199: #{tpu_custom_call.1} parent=127 // pred_region
          %1011 = dma.done [#allocation34], 1024
        $region200: #{tpu_custom_call.1} parent=127 // pred_fallthru
          _
        %s1012 = sand.u32 %s61, 1
        %s1013 = scalar_lea.sflag [#allocation7], %s1012
        %s1014 = sand.u32 %s61, 1
        %s1015 = smul.addr %s1014, 16
        %s1016 = scalar_lea.vmem [#allocation6], %s1015
        %p1017 = pneg %p74
        %p1018 = pneg %p71
        %p1019 = pneg %p95
        %p1020 = pneg %p92
        %p1021 = pneg %p116
        %p1022 = pneg %p113
        %p1023 = pneg %p137
        %p1024 = pneg %p134
        %p1025 = pneg %p158
        %p1026 = pneg %p155
        %p1027 = pneg %p179
        %p1028 = pneg %p176
        %p1029 = pneg %p200
        %p1030 = pneg %p197
        %p1031 = pneg %p221
        %p1032 = pneg %p218
        %p1033 = pneg %p242
        %p1034 = pneg %p239
        %p1035 = pneg %p263
        %p1036 = pneg %p260
        %p1037 = pneg %p284
        %p1038 = pneg %p281
        %p1039 = pneg %p305
        %p1040 = pneg %p302
        %p1041 = pneg %p326
        %p1042 = pneg %p323
        %p1043 = pneg %p347
        %p1044 = pneg %p344
        %p1045 = pneg %p368
        %p1046 = pneg %p365
        %p1047 = pneg %p389
        %p1048 = pneg %p386
        %p1049 = pneg %p410
        %p1050 = pneg %p407
        %p1051 = pneg %p431
        %p1052 = pneg %p428
        %p1053 = pneg %p452
        %p1054 = pneg %p449
        %p1055 = pneg %p473
        %p1056 = pneg %p470
        %p1057 = pneg %p494
        %p1058 = pneg %p491
        %p1059 = pneg %p515
        %p1060 = pneg %p512
        %p1061 = pneg %p536
        %p1062 = pneg %p533
        %p1063 = pneg %p557
        %p1064 = pneg %p554
        %p1065 = pneg %p578
        %p1066 = pneg %p575
        %p1067 = pneg %p599
        %p1068 = pneg %p596
        %p1069 = pneg %p620
        %p1070 = pneg %p617
        %p1071 = pneg %p646
        %p1072 = pneg %p643
        %s1073 = sand.u32 %s633, 1
        %s1074 = scalar_lea.sflag [#allocation8], %s1073
        %s1075 = sand.u32 %s633, 1
        %s1076 = scalar_lea.vmem [#allocation35], %s1075
        %v1079 = vld [vmem:[%s939] sm:$0xff]
        %v1080 = vld [vmem:[%s939 + $0x8] sm:$0xff]
        %v1081 = vpack.c.bf16 %v1080, %v1079
        %vm1082 = vcmask 125952
        %1083 = vst.msk [vmem:[#allocation2] sm:$0xf] %vm1082, 0
        %vm1084 = vcmask 130052
        %1085 = vst.msk [vmem:[#allocation2 + $0x8] sm:$0xf0] %vm1084, 0
        %v1086 = vld [vmem:[#allocation9] sm:$0xf]
        %v1087 = vld [vmem:[#allocation9 + $0x4] sm:$0xf]
        %v1088 = vld [vmem:[#allocation11] sm:$0x1]
        %v1090 = vlaneseq
        %v1091 = vshrl.u32 %v1090, 7
        %v1092 = vsub.s32 0, %v1091
        %v1093 = vrot.slane %v1088, %v1092
        %v1097 = vunpack.c.l.b16 %v1086
        %v1098 = vunpack.c.l.b16 %v1087
        %v1099 = vpack.c.b16 %v1098, %v1097
        %vm1101 = vcmask 130048
        %v1103 = vsel %vm1101, %v1081, 0
        %1105 = vmatprep.subr.bf16.mxu0 0
        %1106 = vmatpush1.bf16.msra.mxu0 %v1099
        %1107 = vmatprep.subr.bf16.mxu0 0
        %1108 = vmatpush1.bf16.msra.mxu0 0
        %1109 = vmatprep.subr.bf16.mxu0 0
        %1110 = vmatpush1.bf16.msra.mxu0 0
        %1111 = vmatprep.subr.bf16.mxu0 0
        %1112 = vmatpush1.bf16.msra.mxu0 0
        %1113 = vmatprep.subr.bf16.mxu0 0
        %1114 = vmatpush1.bf16.msra.mxu0 0
        %1115 = vmatprep.subr.bf16.mxu0 0
        %1116 = vmatpush1.bf16.msra.mxu0 0
        %1117 = vmatprep.subr.bf16.mxu0 0
        %1118 = vmatpush1.bf16.msra.mxu0 0
        %1119 = vmatprep.subr.bf16.mxu0 0
        %1120 = vmatpush1.bf16.msra.mxu0 0
        %1121 = vmatprep.subr.bf16.mxu0 0
        %1122 = vmatpush1.bf16.msra.mxu0 0
        %1123 = vmatprep.subr.bf16.mxu0 0
        %1124 = vmatpush1.bf16.msra.mxu0 0
        %1125 = vmatprep.subr.bf16.mxu0 0
        %1126 = vmatpush1.bf16.msra.mxu0 0
        %1127 = vmatprep.subr.bf16.mxu0 0
        %1128 = vmatpush1.bf16.msra.mxu0 0
        %1129 = vmatprep.subr.bf16.mxu0 0
        %1130 = vmatpush1.bf16.msra.mxu0 0
        %1131 = vmatprep.subr.bf16.mxu0 0
        %1132 = vmatpush1.bf16.msra.mxu0 0
        %1133 = vmatprep.subr.bf16.mxu0 0
        %1134 = vmatpush1.bf16.msra.mxu0 0
        %1135 = vmatprep.subr.bf16.mxu0 0
        %1136 = vmatpush1.bf16.msra.mxu0 0
        %1137 = vmatprep.mubr.bf16.mxu0 0
        %1138 = vmatmul.mubr.bf16.gmra.mrb[0].mxu0 %v1103
        %v1139 = vpop.f32.mrb[0].mxu0
        %v1140 = vadd.f32 %v1093, %v1139
        %v1141 = vpop.f32.mrb[0].mxu0
        %v1142 = vpop.f32.mrb[0].mxu0
        %v1143 = vadd.f32 %v1093, %v1142
        %v1144 = vpop.f32.mrb[0].mxu0
        %1145 = vdwg.mxu0
        %v1146 = vpack.c.bf16 %v1143, %v1140
        %v1148 = vrot.slane %v1146, 4
        %1150 = vst.msk [vmem:[#allocation2] sm:$0xf0] %vm1084, %v1148
        %1151 = vst.msk [vmem:[#allocation2 + $0x8] sm:$0xf] %vm1082, %v1148
        %v1152 = vld [vmem:[#allocation2] sm:$0xf8]
        %v1153 = vld [vmem:[#allocation2 + $0x8] sm:$0xf]
        %v1154 = vld [vmem:[#allocation2] sm:$0xf0]
        %v1155 = vld [vmem:[#allocation2 + $0x8] sm:$0x1f]
        %v1156 = vld [vmem:[%s3] sm:$0xf]
        %v1157 = vld [vmem:[%s3 + $0x4] sm:$0xf]
        %s1158 = scalar_lea.vmem %s3, 8
        %v1159 = vld [vmem:[%s1158] sm:$0xf]
        %v1160 = vld [vmem:[%s1158 + $0x4] sm:$0xf]
        %v1163 = vunpack.c.l.b16 %v1159
        %v1164 = vunpack.c.l.b16 %v1160
        %v1165 = vpack.c.b16 %v1164, %v1163
        %v1168 = vsel %vm1101, %v1146, 0
        %1170 = vmatprep.subr.bf16.mxu0 0
        %1171 = vmatpush1.bf16.msra.mxu0 %v1165
        %1172 = vmatprep.subr.bf16.mxu0 0
        %1173 = vmatpush1.bf16.msra.mxu0 0
        %1174 = vmatprep.subr.bf16.mxu0 0
        %1175 = vmatpush1.bf16.msra.mxu0 0
        %1176 = vmatprep.subr.bf16.mxu0 0
        %1177 = vmatpush1.bf16.msra.mxu0 0
        %1178 = vmatprep.subr.bf16.mxu0 0
        %1179 = vmatpush1.bf16.msra.mxu0 0
        %1180 = vmatprep.subr.bf16.mxu0 0
        %1181 = vmatpush1.bf16.msra.mxu0 0
        %1182 = vmatprep.subr.bf16.mxu0 0
        %1183 = vmatpush1.bf16.msra.mxu0 0
        %1184 = vmatprep.subr.bf16.mxu0 0
        %1185 = vmatpush1.bf16.msra.mxu0 0
        %1186 = vmatprep.subr.bf16.mxu0 0
        %1187 = vmatpush1.bf16.msra.mxu0 0
        %1188 = vmatprep.subr.bf16.mxu0 0
        %1189 = vmatpush1.bf16.msra.mxu0 0
        %1190 = vmatprep.subr.bf16.mxu0 0
        %1191 = vmatpush1.bf16.msra.mxu0 0
        %1192 = vmatprep.subr.bf16.mxu0 0
        %1193 = vmatpush1.bf16.msra.mxu0 0
        %1194 = vmatprep.subr.bf16.mxu0 0
        %1195 = vmatpush1.bf16.msra.mxu0 0
        %1196 = vmatprep.subr.bf16.mxu0 0
        %1197 = vmatpush1.bf16.msra.mxu0 0
        %1198 = vmatprep.subr.bf16.mxu0 0
        %1199 = vmatpush1.bf16.msra.mxu0 0
        %1200 = vmatprep.subr.bf16.mxu0 0
        %1201 = vmatpush1.bf16.msra.mxu0 0
        %1202 = vmatprep.mubr.bf16.mxu0 0
        %1203 = vmatmul.mubr.bf16.gmra.mrb[0].mxu0 %v1168
        %v1204 = vpop.f32.mrb[0].mxu0
        %v1205 = vadd.f32 0.0, %v1204
        %v1206 = vpop.f32.mrb[0].mxu0
        %v1207 = vpop.f32.mrb[0].mxu0
        %v1208 = vadd.f32 0.0, %v1207
        %v1209 = vpop.f32.mrb[0].mxu0
        %1210 = vdwg.mxu0
        %vm1211 = vsmask.f32 4352
        %v1213 = vshrl.u32 %v1152, 16
        %v1215 = vrot.slane %v1213, 3
        %v1216 = vshll.u32 %v1152, 16
        %v1218 = vrot.slane %v1216, 4
        %v1219 = vor.u32 %v1215, %v1218
        %v1221 = vshrl.u32 %v1153, 16
        %v1223 = vrot.slane %v1221, 3
        %v1224 = vshll.u32 %v1153, 16
        %v1226 = vrot.slane %v1224, 4
        %v1227 = vor.u32 %v1223, %v1226
        %v1228 = vsel %vm1211, %v1219, %v1227
        %v1231 = vunpack.c.l.b16 %v1156
        %v1232 = vunpack.c.l.b16 %v1157
        %v1233 = vpack.c.b16 %v1232, %v1231
        %v1236 = vsel %vm1101, %v1228, 0
        %1238 = vmatprep.subr.bf16.mxu0 0
        %1239 = vmatpush1.bf16.msra.mxu0 %v1233
        %1240 = vmatprep.subr.bf16.mxu0 0
        %1241 = vmatpush1.bf16.msra.mxu0 0
        %1242 = vmatprep.subr.bf16.mxu0 0
        %1243 = vmatpush1.bf16.msra.mxu0 0
        %1244 = vmatprep.subr.bf16.mxu0 0
        %1245 = vmatpush1.bf16.msra.mxu0 0
        %1246 = vmatprep.subr.bf16.mxu0 0
        %1247 = vmatpush1.bf16.msra.mxu0 0
        %1248 = vmatprep.subr.bf16.mxu0 0
        %1249 = vmatpush1.bf16.msra.mxu0 0
        %1250 = vmatprep.subr.bf16.mxu0 0
        %1251 = vmatpush1.bf16.msra.mxu0 0
        %1252 = vmatprep.subr.bf16.mxu0 0
        %1253 = vmatpush1.bf16.msra.mxu0 0
        %1254 = vmatprep.subr.bf16.mxu0 0
        %1255 = vmatpush1.bf16.msra.mxu0 0
        %1256 = vmatprep.subr.bf16.mxu0 0
        %1257 = vmatpush1.bf16.msra.mxu0 0
        %1258 = vmatprep.subr.bf16.mxu0 0
        %1259 = vmatpush1.bf16.msra.mxu0 0
        %1260 = vmatprep.subr.bf16.mxu0 0
        %1261 = vmatpush1.bf16.msra.mxu0 0
        %1262 = vmatprep.subr.bf16.mxu0 0
        %1263 = vmatpush1.bf16.msra.mxu0 0
        %1264 = vmatprep.subr.bf16.mxu0 0
        %1265 = vmatpush1.bf16.msra.mxu0 0
        %1266 = vmatprep.subr.bf16.mxu0 0
        %1267 = vmatpush1.bf16.msra.mxu0 0
        %1268 = vmatprep.subr.bf16.mxu0 0
        %1269 = vmatpush1.bf16.msra.mxu0 0
        %1270 = vmatprep.mubr.bf16.mxu0 0
        %1271 = vmatmul.mubr.bf16.gmra.mrb[0].mxu0 %v1236
        %v1272 = vpop.f32.mrb[0].mxu0
        %v1273 = vadd.f32 %v1205, %v1272
        %v1274 = vpop.f32.mrb[0].mxu0
        %v1275 = vpop.f32.mrb[0].mxu0
        %v1276 = vadd.f32 %v1208, %v1275
        %v1277 = vpop.f32.mrb[0].mxu0
        %1278 = vdwg.mxu0
        %s1279 = scalar_lea.vmem %s3, 16
        %v1280 = vld [vmem:[%s1279] sm:$0xf]
        %v1281 = vld [vmem:[%s1279 + $0x4] sm:$0xf]
        %vm1282 = vsmask.f32 3328
        %v1284 = vshrl.u32 %v1154, 16
        %v1286 = vrot.slane %v1284, 4
        %v1287 = vshll.u32 %v1154, 16
        %v1289 = vrot.slane %v1287, 5
        %v1290 = vor.u32 %v1286, %v1289
        %v1292 = vshrl.u32 %v1155, 16
        %v1294 = vrot.slane %v1292, 4
        %v1295 = vshll.u32 %v1155, 16
        %v1297 = vrot.slane %v1295, 5
        %v1298 = vor.u32 %v1294, %v1297
        %v1299 = vsel %vm1282, %v1290, %v1298
        %v1302 = vunpack.c.l.b16 %v1280
        %v1303 = vunpack.c.l.b16 %v1281
        %v1304 = vpack.c.b16 %v1303, %v1302
        %v1307 = vsel %vm1101, %v1299, 0
        %1309 = vmatprep.subr.bf16.mxu0 0
        %1310 = vmatpush1.bf16.msra.mxu0 %v1304
        %1311 = vmatprep.subr.bf16.mxu0 0
        %1312 = vmatpush1.bf16.msra.mxu0 0
        %1313 = vmatprep.subr.bf16.mxu0 0
        %1314 = vmatpush1.bf16.msra.mxu0 0
        %1315 = vmatprep.subr.bf16.mxu0 0
        %1316 = vmatpush1.bf16.msra.mxu0 0
        %1317 = vmatprep.subr.bf16.mxu0 0
        %1318 = vmatpush1.bf16.msra.mxu0 0
        %1319 = vmatprep.subr.bf16.mxu0 0
        %1320 = vmatpush1.bf16.msra.mxu0 0
        %1321 = vmatprep.subr.bf16.mxu0 0
        %1322 = vmatpush1.bf16.msra.mxu0 0
        %1323 = vmatprep.subr.bf16.mxu0 0
        %1324 = vmatpush1.bf16.msra.mxu0 0
        %1325 = vmatprep.subr.bf16.mxu0 0
        %1326 = vmatpush1.bf16.msra.mxu0 0
        %1327 = vmatprep.subr.bf16.mxu0 0
        %1328 = vmatpush1.bf16.msra.mxu0 0
        %1329 = vmatprep.subr.bf16.mxu0 0
        %1330 = vmatpush1.bf16.msra.mxu0 0
        %1331 = vmatprep.subr.bf16.mxu0 0
        %1332 = vmatpush1.bf16.msra.mxu0 0
        %1333 = vmatprep.subr.bf16.mxu0 0
        %1334 = vmatpush1.bf16.msra.mxu0 0
        %1335 = vmatprep.subr.bf16.mxu0 0
        %1336 = vmatpush1.bf16.msra.mxu0 0
        %1337 = vmatprep.subr.bf16.mxu0 0
        %1338 = vmatpush1.bf16.msra.mxu0 0
        %1339 = vmatprep.subr.bf16.mxu0 0
        %1340 = vmatpush1.bf16.msra.mxu0 0
        %1341 = vmatprep.mubr.bf16.mxu0 0
        %1342 = vmatmul.mubr.bf16.gmra.mrb[0].mxu0 %v1307
        %v1343 = vpop.f32.mrb[0].mxu0
        %v1344 = vadd.f32 0.0, %v1343
        %v1345 = vpop.f32.mrb[0].mxu0
        %v1346 = vpop.f32.mrb[0].mxu0
        %v1347 = vadd.f32 0.0, %v1346
        %v1348 = vpop.f32.mrb[0].mxu0
        %1349 = vdwg.mxu0
        %v1350 = vadd.f32 %v1273, %v1344
        %v1351 = vadd.f32 %v1276, %v1347
        %v1352 = vld [vmem:[#allocation12] sm:$0x1]
        %v1354 = vlaneseq
        %v1355 = vshrl.u32 %v1354, 7
        %v1356 = vsub.s32 0, %v1355
        %v1357 = vrot.slane %v1352, %v1356
        %v1359 = vadd.f32 %v1350, %v1357
        %v1360 = vadd.f32 %v1351, %v1357
        %v1361 = vpack.c.bf16 %v1360, %v1359
        %v1362 = vtanh.bf16.pop %v1361
        %v1363 = vxor.u32 %v1361, 2147516416
        %v1365 = vmul.bf16 %v1363, 1069105081
        %v1366 = vpow.bf16.pop %v1365
        %v1367 = vadd.bf16 %v1366, 1065369472
        %v1368 = vrcp.bf16.pop %v1367
        %v1369 = vmul.bf16 1065369472, %v1368
        %1371 = vrot.lane.b32.xlu0 %v1369, 112
        %v1372 = vpop.permute.xlu0 %1371
        %v1374 = vmul.bf16 %v1362, %v1372
        %v1375 = vld [vmem:[#allocation14] sm:$0xf]
        %v1376 = vld [vmem:[#allocation14 + $0x4] sm:$0xf]
        %v1377 = vld [vmem:[#allocation15] sm:$0x1]
        %v1379 = vlaneseq
        %v1380 = vshrl.u32 %v1379, 7
        %v1381 = vsub.s32 0, %v1380
        %v1382 = vrot.slane %v1377, %v1381
        %v1386 = vunpack.c.l.b16 %v1375
        %v1387 = vunpack.c.l.b16 %v1376
        %v1388 = vpack.c.b16 %v1387, %v1386
        %v1391 = vsel %vm1101, %v1374, 0
        %1393 = vmatprep.subr.bf16.mxu0 0
        %1394 = vmatpush1.bf16.msra.mxu0 %v1388
        %1395 = vmatprep.subr.bf16.mxu0 0
        %1396 = vmatpush1.bf16.msra.mxu0 0
        %1397 = vmatprep.subr.bf16.mxu0 0
        %1398 = vmatpush1.bf16.msra.mxu0 0
        %1399 = vmatprep.subr.bf16.mxu0 0
        %1400 = vmatpush1.bf16.msra.mxu0 0
        %1401 = vmatprep.subr.bf16.mxu0 0
        %1402 = vmatpush1.bf16.msra.mxu0 0
        %1403 = vmatprep.subr.bf16.mxu0 0
        %1404 = vmatpush1.bf16.msra.mxu0 0
        %1405 = vmatprep.subr.bf16.mxu0 0
        %1406 = vmatpush1.bf16.msra.mxu0 0
        %1407 = vmatprep.subr.bf16.mxu0 0
        %1408 = vmatpush1.bf16.msra.mxu0 0
        %1409 = vmatprep.subr.bf16.mxu0 0
        %1410 = vmatpush1.bf16.msra.mxu0 0
        %1411 = vmatprep.subr.bf16.mxu0 0
        %1412 = vmatpush1.bf16.msra.mxu0 0
        %1413 = vmatprep.subr.bf16.mxu0 0
        %1414 = vmatpush1.bf16.msra.mxu0 0
        %1415 = vmatprep.subr.bf16.mxu0 0
        %1416 = vmatpush1.bf16.msra.mxu0 0
        %1417 = vmatprep.subr.bf16.mxu0 0
        %1418 = vmatpush1.bf16.msra.mxu0 0
        %1419 = vmatprep.subr.bf16.mxu0 0
        %1420 = vmatpush1.bf16.msra.mxu0 0
        %1421 = vmatprep.subr.bf16.mxu0 0
        %1422 = vmatpush1.bf16.msra.mxu0 0
        %1423 = vmatprep.subr.bf16.mxu0 0
        %1424 = vmatpush1.bf16.msra.mxu0 0
        %1425 = vmatprep.mubr.bf16.mxu0 0
        %1426 = vmatmul.mubr.bf16.gmra.mrb[0].mxu0 %v1391
        %v1427 = vpop.f32.mrb[0].mxu0
        %v1428 = vadd.f32 %v1382, %v1427
        %v1429 = vpop.f32.mrb[0].mxu0
        %v1430 = vpop.f32.mrb[0].mxu0
        %v1431 = vadd.f32 %v1382, %v1430
        %v1432 = vpop.f32.mrb[0].mxu0
        %1433 = vdwg.mxu0
        %v1434 = vadd.f32 %v1140, %v1428
        %v1435 = vadd.f32 %v1143, %v1431
        %v1436 = vpack.c.bf16 %v1431, %v1428
        %v1438 = vrot.slane %v1436, 4
        %1440 = vst.msk [vmem:[#allocation2] sm:$0xf0] %vm1084, %v1438
        %1441 = vst.msk [vmem:[#allocation2 + $0x8] sm:$0xf] %vm1082, %v1438
        %v1442 = vld [vmem:[#allocation2] sm:$0xf8]
        %v1443 = vld [vmem:[#allocation2 + $0x8] sm:$0x7]
        %v1444 = vld [vmem:[#allocation2] sm:$0xe0]
        %v1445 = vld [vmem:[#allocation2 + $0x8] sm:$0x1f]
        %s1446 = scalar_lea.vmem %s3, 24
        %v1447 = vld [vmem:[%s1446] sm:$0xf]
        %v1448 = vld [vmem:[%s1446 + $0x4] sm:$0xf]
        %s1449 = scalar_lea.vmem %s3, 32
        %v1450 = vld [vmem:[%s1449] sm:$0xf]
        %v1451 = vld [vmem:[%s1449 + $0x4] sm:$0xf]
        %v1454 = vunpack.c.l.b16 %v1450
        %v1455 = vunpack.c.l.b16 %v1451
        %v1456 = vpack.c.b16 %v1455, %v1454
        %v1459 = vsel %vm1101, %v1436, 0
        %1461 = vmatprep.subr.bf16.mxu0 0
        %1462 = vmatpush1.bf16.msra.mxu0 %v1456
        %1463 = vmatprep.subr.bf16.mxu0 0
        %1464 = vmatpush1.bf16.msra.mxu0 0
        %1465 = vmatprep.subr.bf16.mxu0 0
        %1466 = vmatpush1.bf16.msra.mxu0 0
        %1467 = vmatprep.subr.bf16.mxu0 0
        %1468 = vmatpush1.bf16.msra.mxu0 0
        %1469 = vmatprep.subr.bf16.mxu0 0
        %1470 = vmatpush1.bf16.msra.mxu0 0
        %1471 = vmatprep.subr.bf16.mxu0 0
        %1472 = vmatpush1.bf16.msra.mxu0 0
        %1473 = vmatprep.subr.bf16.mxu0 0
        %1474 = vmatpush1.bf16.msra.mxu0 0
        %1475 = vmatprep.subr.bf16.mxu0 0
        %1476 = vmatpush1.bf16.msra.mxu0 0
        %1477 = vmatprep.subr.bf16.mxu0 0
        %1478 = vmatpush1.bf16.msra.mxu0 0
        %1479 = vmatprep.subr.bf16.mxu0 0
        %1480 = vmatpush1.bf16.msra.mxu0 0
        %1481 = vmatprep.subr.bf16.mxu0 0
        %1482 = vmatpush1.bf16.msra.mxu0 0
        %1483 = vmatprep.subr.bf16.mxu0 0
        %1484 = vmatpush1.bf16.msra.mxu0 0
        %1485 = vmatprep.subr.bf16.mxu0 0
        %1486 = vmatpush1.bf16.msra.mxu0 0
        %1487 = vmatprep.subr.bf16.mxu0 0
        %1488 = vmatpush1.bf16.msra.mxu0 0
        %1489 = vmatprep.subr.bf16.mxu0 0
        %1490 = vmatpush1.bf16.msra.mxu0 0
        %1491 = vmatprep.subr.bf16.mxu0 0
        %1492 = vmatpush1.bf16.msra.mxu0 0
        %1493 = vmatprep.mubr.bf16.mxu0 0
        %1494 = vmatmul.mubr.bf16.gmra.mrb[0].mxu0 %v1459
        %v1495 = vpop.f32.mrb[0].mxu0
        %v1496 = vadd.f32 0.0, %v1495
        %v1497 = vpop.f32.mrb[0].mxu0
        %v1498 = vpop.f32.mrb[0].mxu0
        %v1499 = vadd.f32 0.0, %v1498
        %v1500 = vpop.f32.mrb[0].mxu0
        %1501 = vdwg.mxu0
        %vm1504 = vcmask 1044480
        %v1505 = vrot.slane %v1442, 3
        %v1506 = vrot.slane %v1443, 3
        %v1507 = vsel %vm1504, %v1505, %v1506
        %v1510 = vunpack.c.l.b16 %v1447
        %v1511 = vunpack.c.l.b16 %v1448
        %v1512 = vpack.c.b16 %v1511, %v1510
        %v1515 = vsel %vm1101, %v1507, 0
        %1517 = vmatprep.subr.bf16.mxu0 0
        %1518 = vmatpush1.bf16.msra.mxu0 %v1512
        %1519 = vmatprep.subr.bf16.mxu0 0
        %1520 = vmatpush1.bf16.msra.mxu0 0
        %1521 = vmatprep.subr.bf16.mxu0 0
        %1522 = vmatpush1.bf16.msra.mxu0 0
        %1523 = vmatprep.subr.bf16.mxu0 0
        %1524 = vmatpush1.bf16.msra.mxu0 0
        %1525 = vmatprep.subr.bf16.mxu0 0
        %1526 = vmatpush1.bf16.msra.mxu0 0
        %1527 = vmatprep.subr.bf16.mxu0 0
        %1528 = vmatpush1.bf16.msra.mxu0 0
        %1529 = vmatprep.subr.bf16.mxu0 0
        %1530 = vmatpush1.bf16.msra.mxu0 0
        %1531 = vmatprep.subr.bf16.mxu0 0
        %1532 = vmatpush1.bf16.msra.mxu0 0
        %1533 = vmatprep.subr.bf16.mxu0 0
        %1534 = vmatpush1.bf16.msra.mxu0 0
        %1535 = vmatprep.subr.bf16.mxu0 0
        %1536 = vmatpush1.bf16.msra.mxu0 0
        %1537 = vmatprep.subr.bf16.mxu0 0
        %1538 = vmatpush1.bf16.msra.mxu0 0
        %1539 = vmatprep.subr.bf16.mxu0 0
        %1540 = vmatpush1.bf16.msra.mxu0 0
        %1541 = vmatprep.subr.bf16.mxu0 0
        %1542 = vmatpush1.bf16.msra.mxu0 0
        %1543 = vmatprep.subr.bf16.mxu0 0
        %1544 = vmatpush1.bf16.msra.mxu0 0
        %1545 = vmatprep.subr.bf16.mxu0 0
        %1546 = vmatpush1.bf16.msra.mxu0 0
        %1547 = vmatprep.subr.bf16.mxu0 0
        %1548 = vmatpush1.bf16.msra.mxu0 0
        %1549 = vmatprep.mubr.bf16.mxu0 0
        %1550 = vmatmul.mubr.bf16.gmra.mrb[0].mxu0 %v1515
        %v1551 = vpop.f32.mrb[0].mxu0
        %v1552 = vadd.f32 %v1496, %v1551
        %v1553 = vpop.f32.mrb[0].mxu0
        %v1554 = vpop.f32.mrb[0].mxu0
        %v1555 = vadd.f32 %v1499, %v1554
        %v1556 = vpop.f32.mrb[0].mxu0
        %1557 = vdwg.mxu0
        %s1558 = scalar_lea.vmem %s3, 40
        %v1559 = vld [vmem:[%s1558] sm:$0xf]
        %v1560 = vld [vmem:[%s1558 + $0x4] sm:$0xf]
        %vm1563 = vcmask 1042432
        %v1564 = vrot.slane %v1444, 5
        %v1565 = vrot.slane %v1445, 5
        %v1566 = vsel %vm1563, %v1564, %v1565
        %v1569 = vunpack.c.l.b16 %v1559
        %v1570 = vunpack.c.l.b16 %v1560
        %v1571 = vpack.c.b16 %v1570, %v1569
        %v1574 = vsel %vm1101, %v1566, 0
        %1576 = vmatprep.subr.bf16.mxu0 0
        %1577 = vmatpush1.bf16.msra.mxu0 %v1571
        %1578 = vmatprep.subr.bf16.mxu0 0
        %1579 = vmatpush1.bf16.msra.mxu0 0
        %1580 = vmatprep.subr.bf16.mxu0 0
        %1581 = vmatpush1.bf16.msra.mxu0 0
        %1582 = vmatprep.subr.bf16.mxu0 0
        %1583 = vmatpush1.bf16.msra.mxu0 0
        %1584 = vmatprep.subr.bf16.mxu0 0
        %1585 = vmatpush1.bf16.msra.mxu0 0
        %1586 = vmatprep.subr.bf16.mxu0 0
        %1587 = vmatpush1.bf16.msra.mxu0 0
        %1588 = vmatprep.subr.bf16.mxu0 0
        %1589 = vmatpush1.bf16.msra.mxu0 0
        %1590 = vmatprep.subr.bf16.mxu0 0
        %1591 = vmatpush1.bf16.msra.mxu0 0
        %1592 = vmatprep.subr.bf16.mxu0 0
        %1593 = vmatpush1.bf16.msra.mxu0 0
        %1594 = vmatprep.subr.bf16.mxu0 0
        %1595 = vmatpush1.bf16.msra.mxu0 0
        %1596 = vmatprep.subr.bf16.mxu0 0
        %1597 = vmatpush1.bf16.msra.mxu0 0
        %1598 = vmatprep.subr.bf16.mxu0 0
        %1599 = vmatpush1.bf16.msra.mxu0 0
        %1600 = vmatprep.subr.bf16.mxu0 0
        %1601 = vmatpush1.bf16.msra.mxu0 0
        %1602 = vmatprep.subr.bf16.mxu0 0
        %1603 = vmatpush1.bf16.msra.mxu0 0
        %1604 = vmatprep.subr.bf16.mxu0 0
        %1605 = vmatpush1.bf16.msra.mxu0 0
        %1606 = vmatprep.subr.bf16.mxu0 0
        %1607 = vmatpush1.bf16.msra.mxu0 0
        %1608 = vmatprep.mubr.bf16.mxu0 0
        %1609 = vmatmul.mubr.bf16.gmra.mrb[0].mxu0 %v1574
        %v1610 = vpop.f32.mrb[0].mxu0
        %v1611 = vadd.f32 0.0, %v1610
        %v1612 = vpop.f32.mrb[0].mxu0
        %v1613 = vpop.f32.mrb[0].mxu0
        %v1614 = vadd.f32 0.0, %v1613
        %v1615 = vpop.f32.mrb[0].mxu0
        %1616 = vdwg.mxu0
        %v1617 = vadd.f32 %v1552, %v1611
        %v1618 = vadd.f32 %v1555, %v1614
        %s1619 = scalar_lea.vmem [#allocation12], 1
        %v1620 = vld [vmem:[%s1619] sm:$0x1]
        %v1622 = vlaneseq
        %v1623 = vshrl.u32 %v1622, 7
        %v1624 = vsub.s32 0, %v1623
        %v1625 = vrot.slane %v1620, %v1624
        %v1627 = vadd.f32 %v1617, %v1625
        %v1628 = vadd.f32 %v1618, %v1625
        %v1629 = vpack.c.bf16 %v1628, %v1627
        %v1630 = vtanh.bf16.pop %v1629
        %v1631 = vxor.u32 %v1629, 2147516416
        %v1633 = vmul.bf16 %v1631, 1069105081
        %v1634 = vpow.bf16.pop %v1633
        %v1635 = vadd.bf16 %v1634, 1065369472
        %v1636 = vrcp.bf16.pop %v1635
        %v1637 = vmul.bf16 1065369472, %v1636
        %1639 = vrot.lane.b32.xlu0 %v1637, 112
        %v1640 = vpop.permute.xlu0 %1639
        %v1642 = vmul.bf16 %v1630, %v1640
        %s1643 = scalar_lea.vmem [#allocation14], 8
        %v1644 = vld [vmem:[%s1643] sm:$0xf]
        %v1645 = vld [vmem:[%s1643 + $0x4] sm:$0xf]
        %s1646 = scalar_lea.vmem [#allocation15], 1
        %v1647 = vld [vmem:[%s1646] sm:$0x1]
        %v1649 = vlaneseq
        %v1650 = vshrl.u32 %v1649, 7
        %v1651 = vsub.s32 0, %v1650
        %v1652 = vrot.slane %v1647, %v1651
        %v1656 = vunpack.c.l.b16 %v1644
        %v1657 = vunpack.c.l.b16 %v1645
        %v1658 = vpack.c.b16 %v1657, %v1656
        %v1661 = vsel %vm1101, %v1642, 0
        %1663 = vmatprep.subr.bf16.mxu0 0
        %1664 = vmatpush1.bf16.msra.mxu0 %v1658
        %1665 = vmatprep.subr.bf16.mxu0 0
        %1666 = vmatpush1.bf16.msra.mxu0 0
        %1667 = vmatprep.subr.bf16.mxu0 0
        %1668 = vmatpush1.bf16.msra.mxu0 0
        %1669 = vmatprep.subr.bf16.mxu0 0
        %1670 = vmatpush1.bf16.msra.mxu0 0
        %1671 = vmatprep.subr.bf16.mxu0 0
        %1672 = vmatpush1.bf16.msra.mxu0 0
        %1673 = vmatprep.subr.bf16.mxu0 0
        %1674 = vmatpush1.bf16.msra.mxu0 0
        %1675 = vmatprep.subr.bf16.mxu0 0
        %1676 = vmatpush1.bf16.msra.mxu0 0
        %1677 = vmatprep.subr.bf16.mxu0 0
        %1678 = vmatpush1.bf16.msra.mxu0 0
        %1679 = vmatprep.subr.bf16.mxu0 0
        %1680 = vmatpush1.bf16.msra.mxu0 0
        %1681 = vmatprep.subr.bf16.mxu0 0
        %1682 = vmatpush1.bf16.msra.mxu0 0
        %1683 = vmatprep.subr.bf16.mxu0 0
        %1684 = vmatpush1.bf16.msra.mxu0 0
        %1685 = vmatprep.subr.bf16.mxu0 0
        %1686 = vmatpush1.bf16.msra.mxu0 0
        %1687 = vmatprep.subr.bf16.mxu0 0
        %1688 = vmatpush1.bf16.msra.mxu0 0
        %1689 = vmatprep.subr.bf16.mxu0 0
        %1690 = vmatpush1.bf16.msra.mxu0 0
        %1691 = vmatprep.subr.bf16.mxu0 0
        %1692 = vmatpush1.bf16.msra.mxu0 0
        %1693 = vmatprep.subr.bf16.mxu0 0
        %1694 = vmatpush1.bf16.msra.mxu0 0
        %1695 = vmatprep.mubr.bf16.mxu0 0
        %1696 = vmatmul.mubr.bf16.gmra.mrb[0].mxu0 %v1661
        %v1697 = vpop.f32.mrb[0].mxu0
        %v1698 = vadd.f32 %v1652, %v1697
        %v1699 = vpop.f32.mrb[0].mxu0
        %v1700 = vpop.f32.mrb[0].mxu0
        %v1701 = vadd.f32 %v1652, %v1700
        %v1702 = vpop.f32.mrb[0].mxu0
        %1703 = vdwg.mxu0
        %v1704 = vadd.f32 %v1434, %v1698
        %v1705 = vadd.f32 %v1435, %v1701
        %v1706 = vpack.c.bf16 %v1701, %v1698
        %v1708 = vrot.slane %v1706, 4
        %1710 = vst.msk [vmem:[#allocation2] sm:$0xf0] %vm1084, %v1708
        %1711 = vst.msk [vmem:[#allocation2 + $0x8] sm:$0xf] %vm1082, %v1708
        %v1712 = vld [vmem:[#allocation2] sm:$0xfc]
        %v1713 = vld [vmem:[#allocation2 + $0x8] sm:$0x3]
        %v1714 = vld [vmem:[#allocation2] sm:$0xc0]
        %v1715 = vld [vmem:[#allocation2 + $0x8] sm:$0x3f]
        %s1716 = scalar_lea.vmem %s3, 48
        %v1717 = vld [vmem:[%s1716] sm:$0xf]
        %v1718 = vld [vmem:[%s1716 + $0x4] sm:$0xf]
        %s1719 = scalar_lea.vmem %s3, 56
        %v1720 = vld [vmem:[%s1719] sm:$0xf]
        %v1721 = vld [vmem:[%s1719 + $0x4] sm:$0xf]
        %v1724 = vunpack.c.l.b16 %v1720
        %v1725 = vunpack.c.l.b16 %v1721
        %v1726 = vpack.c.b16 %v1725, %v1724
        %v1729 = vsel %vm1101, %v1706, 0
        %1731 = vmatprep.subr.bf16.mxu0 0
        %1732 = vmatpush1.bf16.msra.mxu0 %v1726
        %1733 = vmatprep.subr.bf16.mxu0 0
        %1734 = vmatpush1.bf16.msra.mxu0 0
        %1735 = vmatprep.subr.bf16.mxu0 0
        %1736 = vmatpush1.bf16.msra.mxu0 0
        %1737 = vmatprep.subr.bf16.mxu0 0
        %1738 = vmatpush1.bf16.msra.mxu0 0
        %1739 = vmatprep.subr.bf16.mxu0 0
        %1740 = vmatpush1.bf16.msra.mxu0 0
        %1741 = vmatprep.subr.bf16.mxu0 0
        %1742 = vmatpush1.bf16.msra.mxu0 0
        %1743 = vmatprep.subr.bf16.mxu0 0
        %1744 = vmatpush1.bf16.msra.mxu0 0
        %1745 = vmatprep.subr.bf16.mxu0 0
        %1746 = vmatpush1.bf16.msra.mxu0 0
        %1747 = vmatprep.subr.bf16.mxu0 0
        %1748 = vmatpush1.bf16.msra.mxu0 0
        %1749 = vmatprep.subr.bf16.mxu0 0
        %1750 = vmatpush1.bf16.msra.mxu0 0
        %1751 = vmatprep.subr.bf16.mxu0 0
        %1752 = vmatpush1.bf16.msra.mxu0 0
        %1753 = vmatprep.subr.bf16.mxu0 0
        %1754 = vmatpush1.bf16.msra.mxu0 0
        %1755 = vmatprep.subr.bf16.mxu0 0
        %1756 = vmatpush1.bf16.msra.mxu0 0
        %1757 = vmatprep.subr.bf16.mxu0 0
        %1758 = vmatpush1.bf16.msra.mxu0 0
        %1759 = vmatprep.subr.bf16.mxu0 0
        %1760 = vmatpush1.bf16.msra.mxu0 0
        %1761 = vmatprep.subr.bf16.mxu0 0
        %1762 = vmatpush1.bf16.msra.mxu0 0
        %1763 = vmatprep.mubr.bf16.mxu0 0
        %1764 = vmatmul.mubr.bf16.gmra.mrb[0].mxu0 %v1729
        %v1765 = vpop.f32.mrb[0].mxu0
        %v1766 = vadd.f32 0.0, %v1765
        %v1767 = vpop.f32.mrb[0].mxu0
        %v1768 = vpop.f32.mrb[0].mxu0
        %v1769 = vadd.f32 0.0, %v1768
        %v1770 = vpop.f32.mrb[0].mxu0
        %1771 = vdwg.mxu0
        %vm1774 = vcmask 1045504
        %v1775 = vrot.slane %v1712, 2
        %v1776 = vrot.slane %v1713, 2
        %v1777 = vsel %vm1774, %v1775, %v1776
        %v1780 = vunpack.c.l.b16 %v1717
        %v1781 = vunpack.c.l.b16 %v1718
        %v1782 = vpack.c.b16 %v1781, %v1780
        %v1785 = vsel %vm1101, %v1777, 0
        %1787 = vmatprep.subr.bf16.mxu0 0
        %1788 = vmatpush1.bf16.msra.mxu0 %v1782
        %1789 = vmatprep.subr.bf16.mxu0 0
        %1790 = vmatpush1.bf16.msra.mxu0 0
        %1791 = vmatprep.subr.bf16.mxu0 0
        %1792 = vmatpush1.bf16.msra.mxu0 0
        %1793 = vmatprep.subr.bf16.mxu0 0
        %1794 = vmatpush1.bf16.msra.mxu0 0
        %1795 = vmatprep.subr.bf16.mxu0 0
        %1796 = vmatpush1.bf16.msra.mxu0 0
        %1797 = vmatprep.subr.bf16.mxu0 0
        %1798 = vmatpush1.bf16.msra.mxu0 0
        %1799 = vmatprep.subr.bf16.mxu0 0
        %1800 = vmatpush1.bf16.msra.mxu0 0
        %1801 = vmatprep.subr.bf16.mxu0 0
        %1802 = vmatpush1.bf16.msra.mxu0 0
        %1803 = vmatprep.subr.bf16.mxu0 0
        %1804 = vmatpush1.bf16.msra.mxu0 0
        %1805 = vmatprep.subr.bf16.mxu0 0
        %1806 = vmatpush1.bf16.msra.mxu0 0
        %1807 = vmatprep.subr.bf16.mxu0 0
        %1808 = vmatpush1.bf16.msra.mxu0 0
        %1809 = vmatprep.subr.bf16.mxu0 0
        %1810 = vmatpush1.bf16.msra.mxu0 0
        %1811 = vmatprep.subr.bf16.mxu0 0
        %1812 = vmatpush1.bf16.msra.mxu0 0
        %1813 = vmatprep.subr.bf16.mxu0 0
        %1814 = vmatpush1.bf16.msra.mxu0 0
        %1815 = vmatprep.subr.bf16.mxu0 0
        %1816 = vmatpush1.bf16.msra.mxu0 0
        %1817 = vmatprep.subr.bf16.mxu0 0
        %1818 = vmatpush1.bf16.msra.mxu0 0
        %1819 = vmatprep.mubr.bf16.mxu0 0
        %1820 = vmatmul.mubr.bf16.gmra.mrb[0].mxu0 %v1785
        %v1821 = vpop.f32.mrb[0].mxu0
        %v1822 = vadd.f32 %v1766, %v1821
        %v1823 = vpop.f32.mrb[0].mxu0
        %v1824 = vpop.f32.mrb[0].mxu0
        %v1825 = vadd.f32 %v1769, %v1824
        %v1826 = vpop.f32.mrb[0].mxu0
        %1827 = vdwg.mxu0
        %s1828 = scalar_lea.vmem %s3, 64
        %v1829 = vld [vmem:[%s1828] sm:$0xf]
        %v1830 = vld [vmem:[%s1828 + $0x4] sm:$0xf]
        %vm1833 = vcmask 1041408
        %v1834 = vrot.slane %v1714, 6
        %v1835 = vrot.slane %v1715, 6
        %v1836 = vsel %vm1833, %v1834, %v1835
        %v1839 = vunpack.c.l.b16 %v1829
        %v1840 = vunpack.c.l.b16 %v1830
        %v1841 = vpack.c.b16 %v1840, %v1839
        %v1844 = vsel %vm1101, %v1836, 0
        %1846 = vmatprep.subr.bf16.mxu0 0
        %1847 = vmatpush1.bf16.msra.mxu0 %v1841
        %1848 = vmatprep.subr.bf16.mxu0 0
        %1849 = vmatpush1.bf16.msra.mxu0 0
        %1850 = vmatprep.subr.bf16.mxu0 0
        %1851 = vmatpush1.bf16.msra.mxu0 0
        %1852 = vmatprep.subr.bf16.mxu0 0
        %1853 = vmatpush1.bf16.msra.mxu0 0
        %1854 = vmatprep.subr.bf16.mxu0 0
        %1855 = vmatpush1.bf16.msra.mxu0 0
        %1856 = vmatprep.subr.bf16.mxu0 0
        %1857 = vmatpush1.bf16.msra.mxu0 0
        %1858 = vmatprep.subr.bf16.mxu0 0
        %1859 = vmatpush1.bf16.msra.mxu0 0
        %1860 = vmatprep.subr.bf16.mxu0 0
        %1861 = vmatpush1.bf16.msra.mxu0 0
        %1862 = vmatprep.subr.bf16.mxu0 0
        %1863 = vmatpush1.bf16.msra.mxu0 0
        %1864 = vmatprep.subr.bf16.mxu0 0
        %1865 = vmatpush1.bf16.msra.mxu0 0
        %1866 = vmatprep.subr.bf16.mxu0 0
        %1867 = vmatpush1.bf16.msra.mxu0 0
        %1868 = vmatprep.subr.bf16.mxu0 0
        %1869 = vmatpush1.bf16.msra.mxu0 0
        %1870 = vmatprep.subr.bf16.mxu0 0
        %1871 = vmatpush1.bf16.msra.mxu0 0
        %1872 = vmatprep.subr.bf16.mxu0 0
        %1873 = vmatpush1.bf16.msra.mxu0 0
        %1874 = vmatprep.subr.bf16.mxu0 0
        %1875 = vmatpush1.bf16.msra.mxu0 0
        %1876 = vmatprep.subr.bf16.mxu0 0
        %1877 = vmatpush1.bf16.msra.mxu0 0
        %1878 = vmatprep.mubr.bf16.mxu0 0
        %1879 = vmatmul.mubr.bf16.gmra.mrb[0].mxu0 %v1844
        %v1880 = vpop.f32.mrb[0].mxu0
        %v1881 = vadd.f32 0.0, %v1880
        %v1882 = vpop.f32.mrb[0].mxu0
        %v1883 = vpop.f32.mrb[0].mxu0
        %v1884 = vadd.f32 0.0, %v1883
        %v1885 = vpop.f32.mrb[0].mxu0
        %1886 = vdwg.mxu0
        %v1887 = vadd.f32 %v1822, %v1881
        %v1888 = vadd.f32 %v1825, %v1884
        %s1889 = scalar_lea.vmem [#allocation12], 2
        %v1890 = vld [vmem:[%s1889] sm:$0x1]
        %v1892 = vlaneseq
        %v1893 = vshrl.u32 %v1892, 7
        %v1894 = vsub.s32 0, %v1893
        %v1895 = vrot.slane %v1890, %v1894
        %v1897 = vadd.f32 %v1887, %v1895
        %v1898 = vadd.f32 %v1888, %v1895
        %v1899 = vpack.c.bf16 %v1898, %v1897
        %v1900 = vtanh.bf16.pop %v1899
        %v1901 = vxor.u32 %v1899, 2147516416
        %v1903 = vmul.bf16 %v1901, 1069105081
        %v1904 = vpow.bf16.pop %v1903
        %v1905 = vadd.bf16 %v1904, 1065369472
        %v1906 = vrcp.bf16.pop %v1905
        %v1907 = vmul.bf16 1065369472, %v1906
        %1909 = vrot.lane.b32.xlu0 %v1907, 112
        %v1910 = vpop.permute.xlu0 %1909
        %v1912 = vmul.bf16 %v1900, %v1910
        %s1913 = scalar_lea.vmem [#allocation14], 16
        %v1914 = vld [vmem:[%s1913] sm:$0xf]
        %v1915 = vld [vmem:[%s1913 + $0x4] sm:$0xf]
        %s1916 = scalar_lea.vmem [#allocation15], 2
        %v1917 = vld [vmem:[%s1916] sm:$0x1]
        %v1919 = vlaneseq
        %v1920 = vshrl.u32 %v1919, 7
        %v1921 = vsub.s32 0, %v1920
        %v1922 = vrot.slane %v1917, %v1921
        %v1926 = vunpack.c.l.b16 %v1914
        %v1927 = vunpack.c.l.b16 %v1915
        %v1928 = vpack.c.b16 %v1927, %v1926
        %v1931 = vsel %vm1101, %v1912, 0
        %1933 = vmatprep.subr.bf16.mxu0 0
        %1934 = vmatpush1.bf16.msra.mxu0 %v1928
        %1935 = vmatprep.subr.bf16.mxu0 0
        %1936 = vmatpush1.bf16.msra.mxu0 0
        %1937 = vmatprep.subr.bf16.mxu0 0
        %1938 = vmatpush1.bf16.msra.mxu0 0
        %1939 = vmatprep.subr.bf16.mxu0 0
        %1940 = vmatpush1.bf16.msra.mxu0 0
        %1941 = vmatprep.subr.bf16.mxu0 0
        %1942 = vmatpush1.bf16.msra.mxu0 0
        %1943 = vmatprep.subr.bf16.mxu0 0
        %1944 = vmatpush1.bf16.msra.mxu0 0
        %1945 = vmatprep.subr.bf16.mxu0 0
        %1946 = vmatpush1.bf16.msra.mxu0 0
        %1947 = vmatprep.subr.bf16.mxu0 0
        %1948 = vmatpush1.bf16.msra.mxu0 0
        %1949 = vmatprep.subr.bf16.mxu0 0
        %1950 = vmatpush1.bf16.msra.mxu0 0
        %1951 = vmatprep.subr.bf16.mxu0 0
        %1952 = vmatpush1.bf16.msra.mxu0 0
        %1953 = vmatprep.subr.bf16.mxu0 0
        %1954 = vmatpush1.bf16.msra.mxu0 0
        %1955 = vmatprep.subr.bf16.mxu0 0
        %1956 = vmatpush1.bf16.msra.mxu0 0
        %1957 = vmatprep.subr.bf16.mxu0 0
        %1958 = vmatpush1.bf16.msra.mxu0 0
        %1959 = vmatprep.subr.bf16.mxu0 0
        %1960 = vmatpush1.bf16.msra.mxu0 0
        %1961 = vmatprep.subr.bf16.mxu0 0
        %1962 = vmatpush1.bf16.msra.mxu0 0
        %1963 = vmatprep.subr.bf16.mxu0 0
        %1964 = vmatpush1.bf16.msra.mxu0 0
        %1965 = vmatprep.mubr.bf16.mxu0 0
        %1966 = vmatmul.mubr.bf16.gmra.mrb[0].mxu0 %v1931
        %v1967 = vpop.f32.mrb[0].mxu0
        %v1968 = vadd.f32 %v1922, %v1967
        %v1969 = vpop.f32.mrb[0].mxu0
        %v1970 = vpop.f32.mrb[0].mxu0
        %v1971 = vadd.f32 %v1922, %v1970
        %v1972 = vpop.f32.mrb[0].mxu0
        %1973 = vdwg.mxu0
        %v1974 = vadd.f32 %v1704, %v1968
        %v1975 = vadd.f32 %v1705, %v1971
        %v1976 = vpack.c.bf16 %v1971, %v1968
        %v1978 = vrot.slane %v1976, 4
        %1980 = vst.msk [vmem:[#allocation2] sm:$0xf0] %vm1084, %v1978
        %1981 = vst.msk [vmem:[#allocation2 + $0x8] sm:$0xf] %vm1082, %v1978
        %v1982 = vld [vmem:[#allocation2] sm:$0xff]
        %v1983 = vld [vmem:[#allocation2 + $0x8] sm:$0xff]
        %s1984 = scalar_lea.vmem %s3, 72
        %v1985 = vld [vmem:[%s1984] sm:$0xf]
        %v1986 = vld [vmem:[%s1984 + $0x4] sm:$0xf]
        %s1987 = scalar_lea.vmem %s3, 80
        %v1988 = vld [vmem:[%s1987] sm:$0xf]
        %v1989 = vld [vmem:[%s1987 + $0x4] sm:$0xf]
        %v1992 = vunpack.c.l.b16 %v1988
        %v1993 = vunpack.c.l.b16 %v1989
        %v1994 = vpack.c.b16 %v1993, %v1992
        %v1997 = vsel %vm1101, %v1976, 0
        %1999 = vmatprep.subr.bf16.mxu0 0
        %2000 = vmatpush1.bf16.msra.mxu0 %v1994
        %2001 = vmatprep.subr.bf16.mxu0 0
        %2002 = vmatpush1.bf16.msra.mxu0 0
        %2003 = vmatprep.subr.bf16.mxu0 0
        %2004 = vmatpush1.bf16.msra.mxu0 0
        %2005 = vmatprep.subr.bf16.mxu0 0
        %2006 = vmatpush1.bf16.msra.mxu0 0
        %2007 = vmatprep.subr.bf16.mxu0 0
        %2008 = vmatpush1.bf16.msra.mxu0 0
        %2009 = vmatprep.subr.bf16.mxu0 0
        %2010 = vmatpush1.bf16.msra.mxu0 0
        %2011 = vmatprep.subr.bf16.mxu0 0
        %2012 = vmatpush1.bf16.msra.mxu0 0
        %2013 = vmatprep.subr.bf16.mxu0 0
        %2014 = vmatpush1.bf16.msra.mxu0 0
        %2015 = vmatprep.subr.bf16.mxu0 0
        %2016 = vmatpush1.bf16.msra.mxu0 0
        %2017 = vmatprep.subr.bf16.mxu0 0
        %2018 = vmatpush1.bf16.msra.mxu0 0
        %2019 = vmatprep.subr.bf16.mxu0 0
        %2020 = vmatpush1.bf16.msra.mxu0 0
        %2021 = vmatprep.subr.bf16.mxu0 0
        %2022 = vmatpush1.bf16.msra.mxu0 0
        %2023 = vmatprep.subr.bf16.mxu0 0
        %2024 = vmatpush1.bf16.msra.mxu0 0
        %2025 = vmatprep.subr.bf16.mxu0 0
        %2026 = vmatpush1.bf16.msra.mxu0 0
        %2027 = vmatprep.subr.bf16.mxu0 0
        %2028 = vmatpush1.bf16.msra.mxu0 0
        %2029 = vmatprep.subr.bf16.mxu0 0
        %2030 = vmatpush1.bf16.msra.mxu0 0
        %2031 = vmatprep.mubr.bf16.mxu0 0
        %2032 = vmatmul.mubr.bf16.gmra.mrb[0].mxu0 %v1997
        %v2033 = vpop.f32.mrb[0].mxu0
        %v2034 = vadd.f32 0.0, %v2033
        %v2035 = vpop.f32.mrb[0].mxu0
        %v2036 = vpop.f32.mrb[0].mxu0
        %v2037 = vadd.f32 0.0, %v2036
        %v2038 = vpop.f32.mrb[0].mxu0
        %2039 = vdwg.mxu0
        %v2042 = vunpack.c.l.b16 %v1985
        %v2043 = vunpack.c.l.b16 %v1986
        %v2044 = vpack.c.b16 %v2043, %v2042
        %v2047 = vsel %vm1101, %v1982, 0
        %2049 = vmatprep.subr.bf16.mxu0 0
        %2050 = vmatpush1.bf16.msra.mxu0 %v2044
        %2051 = vmatprep.subr.bf16.mxu0 0
        %2052 = vmatpush1.bf16.msra.mxu0 0
        %2053 = vmatprep.subr.bf16.mxu0 0
        %2054 = vmatpush1.bf16.msra.mxu0 0
        %2055 = vmatprep.subr.bf16.mxu0 0
        %2056 = vmatpush1.bf16.msra.mxu0 0
        %2057 = vmatprep.subr.bf16.mxu0 0
        %2058 = vmatpush1.bf16.msra.mxu0 0
        %2059 = vmatprep.subr.bf16.mxu0 0
        %2060 = vmatpush1.bf16.msra.mxu0 0
        %2061 = vmatprep.subr.bf16.mxu0 0
        %2062 = vmatpush1.bf16.msra.mxu0 0
        %2063 = vmatprep.subr.bf16.mxu0 0
        %2064 = vmatpush1.bf16.msra.mxu0 0
        %2065 = vmatprep.subr.bf16.mxu0 0
        %2066 = vmatpush1.bf16.msra.mxu0 0
        %2067 = vmatprep.subr.bf16.mxu0 0
        %2068 = vmatpush1.bf16.msra.mxu0 0
        %2069 = vmatprep.subr.bf16.mxu0 0
        %2070 = vmatpush1.bf16.msra.mxu0 0
        %2071 = vmatprep.subr.bf16.mxu0 0
        %2072 = vmatpush1.bf16.msra.mxu0 0
        %2073 = vmatprep.subr.bf16.mxu0 0
        %2074 = vmatpush1.bf16.msra.mxu0 0
        %2075 = vmatprep.subr.bf16.mxu0 0
        %2076 = vmatpush1.bf16.msra.mxu0 0
        %2077 = vmatprep.subr.bf16.mxu0 0
        %2078 = vmatpush1.bf16.msra.mxu0 0
        %2079 = vmatprep.subr.bf16.mxu0 0
        %2080 = vmatpush1.bf16.msra.mxu0 0
        %2081 = vmatprep.mubr.bf16.mxu0 0
        %2082 = vmatmul.mubr.bf16.gmra.mrb[0].mxu0 %v2047
        %v2083 = vpop.f32.mrb[0].mxu0
        %v2084 = vadd.f32 %v2034, %v2083
        %v2085 = vpop.f32.mrb[0].mxu0
        %v2086 = vpop.f32.mrb[0].mxu0
        %v2087 = vadd.f32 %v2037, %v2086
        %v2088 = vpop.f32.mrb[0].mxu0
        %2089 = vdwg.mxu0
        %s2090 = scalar_lea.vmem %s3, 88
        %v2091 = vld [vmem:[%s2090] sm:$0xf]
        %v2092 = vld [vmem:[%s2090 + $0x4] sm:$0xf]
        %v2095 = vunpack.c.l.b16 %v2091
        %v2096 = vunpack.c.l.b16 %v2092
        %v2097 = vpack.c.b16 %v2096, %v2095
        %v2100 = vsel %vm1101, %v1983, 0
        %2102 = vmatprep.subr.bf16.mxu0 0
        %2103 = vmatpush1.bf16.msra.mxu0 %v2097
        %2104 = vmatprep.subr.bf16.mxu0 0
        %2105 = vmatpush1.bf16.msra.mxu0 0
        %2106 = vmatprep.subr.bf16.mxu0 0
        %2107 = vmatpush1.bf16.msra.mxu0 0
        %2108 = vmatprep.subr.bf16.mxu0 0
        %2109 = vmatpush1.bf16.msra.mxu0 0
        %2110 = vmatprep.subr.bf16.mxu0 0
        %2111 = vmatpush1.bf16.msra.mxu0 0
        %2112 = vmatprep.subr.bf16.mxu0 0
        %2113 = vmatpush1.bf16.msra.mxu0 0
        %2114 = vmatprep.subr.bf16.mxu0 0
        %2115 = vmatpush1.bf16.msra.mxu0 0
        %2116 = vmatprep.subr.bf16.mxu0 0
        %2117 = vmatpush1.bf16.msra.mxu0 0
        %2118 = vmatprep.subr.bf16.mxu0 0
        %2119 = vmatpush1.bf16.msra.mxu0 0
        %2120 = vmatprep.subr.bf16.mxu0 0
        %2121 = vmatpush1.bf16.msra.mxu0 0
        %2122 = vmatprep.subr.bf16.mxu0 0
        %2123 = vmatpush1.bf16.msra.mxu0 0
        %2124 = vmatprep.subr.bf16.mxu0 0
        %2125 = vmatpush1.bf16.msra.mxu0 0
        %2126 = vmatprep.subr.bf16.mxu0 0
        %2127 = vmatpush1.bf16.msra.mxu0 0
        %2128 = vmatprep.subr.bf16.mxu0 0
        %2129 = vmatpush1.bf16.msra.mxu0 0
        %2130 = vmatprep.subr.bf16.mxu0 0
        %2131 = vmatpush1.bf16.msra.mxu0 0
        %2132 = vmatprep.subr.bf16.mxu0 0
        %2133 = vmatpush1.bf16.msra.mxu0 0
        %2134 = vmatprep.mubr.bf16.mxu0 0
        %2135 = vmatmul.mubr.bf16.gmra.mrb[0].mxu0 %v2100
        %v2136 = vpop.f32.mrb[0].mxu0
        %v2137 = vadd.f32 0.0, %v2136
        %v2138 = vpop.f32.mrb[0].mxu0
        %v2139 = vpop.f32.mrb[0].mxu0
        %v2140 = vadd.f32 0.0, %v2139
        %v2141 = vpop.f32.mrb[0].mxu0
        %2142 = vdwg.mxu0
        %v2143 = vadd.f32 %v2084, %v2137
        %v2144 = vadd.f32 %v2087, %v2140
        %s2145 = scalar_lea.vmem [#allocation12], 3
        %v2146 = vld [vmem:[%s2145] sm:$0x1]
        %v2148 = vlaneseq
        %v2149 = vshrl.u32 %v2148, 7
        %v2150 = vsub.s32 0, %v2149
        %v2151 = vrot.slane %v2146, %v2150
        %v2153 = vadd.f32 %v2143, %v2151
        %v2154 = vadd.f32 %v2144, %v2151
        %v2155 = vpack.c.bf16 %v2154, %v2153
        %v2156 = vtanh.bf16.pop %v2155
        %v2157 = vxor.u32 %v2155, 2147516416
        %v2159 = vmul.bf16 %v2157, 1069105081
        %v2160 = vpow.bf16.pop %v2159
        %v2161 = vadd.bf16 %v2160, 1065369472
        %v2162 = vrcp.bf16.pop %v2161
        %v2163 = vmul.bf16 1065369472, %v2162
        %2165 = vrot.lane.b32.xlu0 %v2163, 112
        %v2166 = vpop.permute.xlu0 %2165
        %v2168 = vmul.bf16 %v2156, %v2166
        %s2169 = scalar_lea.vmem [#allocation14], 24
        %v2170 = vld [vmem:[%s2169] sm:$0xf]
        %v2171 = vld [vmem:[%s2169 + $0x4] sm:$0xf]
        %s2172 = scalar_lea.vmem [#allocation15], 3
        %v2173 = vld [vmem:[%s2172] sm:$0x1]
        %v2175 = vlaneseq
        %v2176 = vshrl.u32 %v2175, 7
        %v2177 = vsub.s32 0, %v2176
        %v2178 = vrot.slane %v2173, %v2177
        %v2182 = vunpack.c.l.b16 %v2170
        %v2183 = vunpack.c.l.b16 %v2171
        %v2184 = vpack.c.b16 %v2183, %v2182
        %v2187 = vsel %vm1101, %v2168, 0
        %2189 = vmatprep.subr.bf16.mxu0 0
        %2190 = vmatpush1.bf16.msra.mxu0 %v2184
        %2191 = vmatprep.subr.bf16.mxu0 0
        %2192 = vmatpush1.bf16.msra.mxu0 0
        %2193 = vmatprep.subr.bf16.mxu0 0
        %2194 = vmatpush1.bf16.msra.mxu0 0
        %2195 = vmatprep.subr.bf16.mxu0 0
        %2196 = vmatpush1.bf16.msra.mxu0 0
        %2197 = vmatprep.subr.bf16.mxu0 0
        %2198 = vmatpush1.bf16.msra.mxu0 0
        %2199 = vmatprep.subr.bf16.mxu0 0
        %2200 = vmatpush1.bf16.msra.mxu0 0
        %2201 = vmatprep.subr.bf16.mxu0 0
        %2202 = vmatpush1.bf16.msra.mxu0 0
        %2203 = vmatprep.subr.bf16.mxu0 0
        %2204 = vmatpush1.bf16.msra.mxu0 0
        %2205 = vmatprep.subr.bf16.mxu0 0
        %2206 = vmatpush1.bf16.msra.mxu0 0
        %2207 = vmatprep.subr.bf16.mxu0 0
        %2208 = vmatpush1.bf16.msra.mxu0 0
        %2209 = vmatprep.subr.bf16.mxu0 0
        %2210 = vmatpush1.bf16.msra.mxu0 0
        %2211 = vmatprep.subr.bf16.mxu0 0
        %2212 = vmatpush1.bf16.msra.mxu0 0
        %2213 = vmatprep.subr.bf16.mxu0 0
        %2214 = vmatpush1.bf16.msra.mxu0 0
        %2215 = vmatprep.subr.bf16.mxu0 0
        %2216 = vmatpush1.bf16.msra.mxu0 0
        %2217 = vmatprep.subr.bf16.mxu0 0
        %2218 = vmatpush1.bf16.msra.mxu0 0
        %2219 = vmatprep.subr.bf16.mxu0 0
        %2220 = vmatpush1.bf16.msra.mxu0 0
        %2221 = vmatprep.mubr.bf16.mxu0 0
        %2222 = vmatmul.mubr.bf16.gmra.mrb[0].mxu0 %v2187
        %v2223 = vpop.f32.mrb[0].mxu0
        %v2224 = vadd.f32 %v2178, %v2223
        %v2225 = vpop.f32.mrb[0].mxu0
        %v2226 = vpop.f32.mrb[0].mxu0
        %v2227 = vadd.f32 %v2178, %v2226
        %v2228 = vpop.f32.mrb[0].mxu0
        %2229 = vdwg.mxu0
        %v2230 = vadd.f32 %v1974, %v2224
        %v2231 = vadd.f32 %v1975, %v2227
        %v2232 = vpack.c.bf16 %v2231, %v2230
        %vm2233 = vcmask 257024
        %2234 = vst.msk [vmem:[#allocation3] sm:$0xf] %vm2233, 0
        %vm2235 = vcmask 261124
        %2236 = vst.msk [vmem:[#allocation3 + $0x8] sm:$0xf0] %vm2235, 0
        %v2237 = vld [vmem:[#allocation17] sm:$0xf]
        %v2238 = vld [vmem:[#allocation17 + $0x4] sm:$0xf]
        %v2239 = vld [vmem:[#allocation18] sm:$0x1]
        %v2241 = vlaneseq
        %v2242 = vshrl.u32 %v2241, 7
        %v2243 = vsub.s32 0, %v2242
        %v2244 = vrot.slane %v2239, %v2243
        %v2248 = vunpack.c.l.b16 %v2237
        %v2249 = vunpack.c.l.b16 %v2238
        %v2250 = vpack.c.b16 %v2249, %v2248
        %v2253 = vsel %vm1101, %v2232, 0
        %2255 = vmatprep.subr.bf16.mxu0 0
        %2256 = vmatpush1.bf16.msra.mxu0 %v2250
        %2257 = vmatprep.subr.bf16.mxu0 0
        %2258 = vmatpush1.bf16.msra.mxu0 0
        %2259 = vmatprep.subr.bf16.mxu0 0
        %2260 = vmatpush1.bf16.msra.mxu0 0
        %2261 = vmatprep.subr.bf16.mxu0 0
        %2262 = vmatpush1.bf16.msra.mxu0 0
        %2263 = vmatprep.subr.bf16.mxu0 0
        %2264 = vmatpush1.bf16.msra.mxu0 0
        %2265 = vmatprep.subr.bf16.mxu0 0
        %2266 = vmatpush1.bf16.msra.mxu0 0
        %2267 = vmatprep.subr.bf16.mxu0 0
        %2268 = vmatpush1.bf16.msra.mxu0 0
        %2269 = vmatprep.subr.bf16.mxu0 0
        %2270 = vmatpush1.bf16.msra.mxu0 0
        %2271 = vmatprep.subr.bf16.mxu0 0
        %2272 = vmatpush1.bf16.msra.mxu0 0
        %2273 = vmatprep.subr.bf16.mxu0 0
        %2274 = vmatpush1.bf16.msra.mxu0 0
        %2275 = vmatprep.subr.bf16.mxu0 0
        %2276 = vmatpush1.bf16.msra.mxu0 0
        %2277 = vmatprep.subr.bf16.mxu0 0
        %2278 = vmatpush1.bf16.msra.mxu0 0
        %2279 = vmatprep.subr.bf16.mxu0 0
        %2280 = vmatpush1.bf16.msra.mxu0 0
        %2281 = vmatprep.subr.bf16.mxu0 0
        %2282 = vmatpush1.bf16.msra.mxu0 0
        %2283 = vmatprep.subr.bf16.mxu0 0
        %2284 = vmatpush1.bf16.msra.mxu0 0
        %2285 = vmatprep.subr.bf16.mxu0 0
        %2286 = vmatpush1.bf16.msra.mxu0 0
        %2287 = vmatprep.mubr.bf16.mxu0 0
        %2288 = vmatmul.mubr.bf16.gmra.mrb[0].mxu0 %v2253
        %v2289 = vpop.f32.mrb[0].mxu0
        %v2290 = vadd.f32 %v2244, %v2289
        %v2291 = vpop.f32.mrb[0].mxu0
        %v2292 = vpop.f32.mrb[0].mxu0
        %v2293 = vadd.f32 %v2244, %v2292
        %v2294 = vpop.f32.mrb[0].mxu0
        %2295 = vdwg.mxu0
        %v2296 = vpack.c.bf16 %v2293, %v2290
        %v2298 = vrot.slane %v2296, 4
        %2300 = vst.msk [vmem:[#allocation3] sm:$0xf0] %vm2235, %v2298
        %2301 = vst.msk [vmem:[#allocation3 + $0x8] sm:$0xf] %vm2233, %v2298
        %v2302 = vld [vmem:[#allocation3] sm:$0xf8]
        %v2303 = vld [vmem:[#allocation3 + $0x8] sm:$0xf]
        %v2304 = vld [vmem:[#allocation3] sm:$0xf0]
        %v2305 = vld [vmem:[#allocation3 + $0x8] sm:$0x1f]
        %v2306 = vld [vmem:[%s9] sm:$0xf]
        %v2307 = vld [vmem:[%s9 + $0x4] sm:$0xf]
        %v2308 = vld [vmem:[%s9 + $0x8] sm:$0xf]
        %v2309 = vld [vmem:[%s9 + $0xc] sm:$0xf]
        %s2310 = scalar_lea.vmem %s9, 16
        %v2311 = vld [vmem:[%s2310] sm:$0xf]
        %v2312 = vld [vmem:[%s2310 + $0x4] sm:$0xf]
        %v2313 = vld [vmem:[%s2310 + $0x8] sm:$0xf]
        %v2314 = vld [vmem:[%s2310 + $0xc] sm:$0xf]
        %v2319 = vunpack.c.l.b16 %v2311
        %v2320 = vunpack.c.l.b16 %v2312
        %v2321 = vunpack.c.l.b16 %v2313
        %v2322 = vunpack.c.l.b16 %v2314
        %v2323 = vpack.c.b16 %v2320, %v2319
        %v2324 = vpack.c.b16 %v2322, %v2321
        %vm2327 = vcmask 261120
        %v2329 = vsel %vm2327, %v2296, 0
        %2331 = vmatprep.subr.bf16.mxu0 0
        %2332 = vmatpush1.bf16.msra.mxu0 %v2323
        %2333 = vmatprep.subr.bf16.mxu0 0
        %2334 = vmatpush1.bf16.msra.mxu0 %v2324
        %2335 = vmatprep.subr.bf16.mxu0 0
        %2336 = vmatpush1.bf16.msra.mxu0 0
        %2337 = vmatprep.subr.bf16.mxu0 0
        %2338 = vmatpush1.bf16.msra.mxu0 0
        %2339 = vmatprep.subr.bf16.mxu0 0
        %2340 = vmatpush1.bf16.msra.mxu0 0
        %2341 = vmatprep.subr.bf16.mxu0 0
        %2342 = vmatpush1.bf16.msra.mxu0 0
        %2343 = vmatprep.subr.bf16.mxu0 0
        %2344 = vmatpush1.bf16.msra.mxu0 0
        %2345 = vmatprep.subr.bf16.mxu0 0
        %2346 = vmatpush1.bf16.msra.mxu0 0
        %2347 = vmatprep.subr.bf16.mxu0 0
        %2348 = vmatpush1.bf16.msra.mxu0 0
        %2349 = vmatprep.subr.bf16.mxu0 0
        %2350 = vmatpush1.bf16.msra.mxu0 0
        %2351 = vmatprep.subr.bf16.mxu0 0
        %2352 = vmatpush1.bf16.msra.mxu0 0
        %2353 = vmatprep.subr.bf16.mxu0 0
        %2354 = vmatpush1.bf16.msra.mxu0 0
        %2355 = vmatprep.subr.bf16.mxu0 0
        %2356 = vmatpush1.bf16.msra.mxu0 0
        %2357 = vmatprep.subr.bf16.mxu0 0
        %2358 = vmatpush1.bf16.msra.mxu0 0
        %2359 = vmatprep.subr.bf16.mxu0 0
        %2360 = vmatpush1.bf16.msra.mxu0 0
        %2361 = vmatprep.subr.bf16.mxu0 0
        %2362 = vmatpush1.bf16.msra.mxu0 0
        %2363 = vmatprep.mubr.bf16.mxu0 0
        %2364 = vmatmul.mubr.bf16.gmra.mrb[0].mxu0 %v2329
        %v2365 = vpop.f32.mrb[0].mxu0
        %v2366 = vadd.f32 0.0, %v2365
        %v2367 = vpop.f32.mrb[0].mxu0
        %v2368 = vpop.f32.mrb[0].mxu0
        %v2369 = vadd.f32 0.0, %v2368
        %v2370 = vpop.f32.mrb[0].mxu0
        %2371 = vdwg.mxu0
        %v2373 = vshrl.u32 %v2302, 16
        %v2375 = vrot.slane %v2373, 3
        %v2376 = vshll.u32 %v2302, 16
        %v2378 = vrot.slane %v2376, 4
        %v2379 = vor.u32 %v2375, %v2378
        %v2381 = vshrl.u32 %v2303, 16
        %v2383 = vrot.slane %v2381, 3
        %v2384 = vshll.u32 %v2303, 16
        %v2386 = vrot.slane %v2384, 4
        %v2387 = vor.u32 %v2383, %v2386
        %v2388 = vsel %vm1211, %v2379, %v2387
        %v2393 = vunpack.c.l.b16 %v2306
        %v2394 = vunpack.c.l.b16 %v2307
        %v2395 = vunpack.c.l.b16 %v2308
        %v2396 = vunpack.c.l.b16 %v2309
        %v2397 = vpack.c.b16 %v2394, %v2393
        %v2398 = vpack.c.b16 %v2396, %v2395
        %v2402 = vsel %vm2327, %v2388, 0
        %2404 = vmatprep.subr.bf16.mxu0 0
        %2405 = vmatpush1.bf16.msra.mxu0 %v2397
        %2406 = vmatprep.subr.bf16.mxu0 0
        %2407 = vmatpush1.bf16.msra.mxu0 %v2398
        %2408 = vmatprep.subr.bf16.mxu0 0
        %2409 = vmatpush1.bf16.msra.mxu0 0
        %2410 = vmatprep.subr.bf16.mxu0 0
        %2411 = vmatpush1.bf16.msra.mxu0 0
        %2412 = vmatprep.subr.bf16.mxu0 0
        %2413 = vmatpush1.bf16.msra.mxu0 0
        %2414 = vmatprep.subr.bf16.mxu0 0
        %2415 = vmatpush1.bf16.msra.mxu0 0
        %2416 = vmatprep.subr.bf16.mxu0 0
        %2417 = vmatpush1.bf16.msra.mxu0 0
        %2418 = vmatprep.subr.bf16.mxu0 0
        %2419 = vmatpush1.bf16.msra.mxu0 0
        %2420 = vmatprep.subr.bf16.mxu0 0
        %2421 = vmatpush1.bf16.msra.mxu0 0
        %2422 = vmatprep.subr.bf16.mxu0 0
        %2423 = vmatpush1.bf16.msra.mxu0 0
        %2424 = vmatprep.subr.bf16.mxu0 0
        %2425 = vmatpush1.bf16.msra.mxu0 0
        %2426 = vmatprep.subr.bf16.mxu0 0
        %2427 = vmatpush1.bf16.msra.mxu0 0
        %2428 = vmatprep.subr.bf16.mxu0 0
        %2429 = vmatpush1.bf16.msra.mxu0 0
        %2430 = vmatprep.subr.bf16.mxu0 0
        %2431 = vmatpush1.bf16.msra.mxu0 0
        %2432 = vmatprep.subr.bf16.mxu0 0
        %2433 = vmatpush1.bf16.msra.mxu0 0
        %2434 = vmatprep.subr.bf16.mxu0 0
        %2435 = vmatpush1.bf16.msra.mxu0 0
        %2436 = vmatprep.mubr.bf16.mxu0 0
        %2437 = vmatmul.mubr.bf16.gmra.mrb[0].mxu0 %v2402
        %v2438 = vpop.f32.mrb[0].mxu0
        %v2439 = vadd.f32 %v2366, %v2438
        %v2440 = vpop.f32.mrb[0].mxu0
        %v2441 = vpop.f32.mrb[0].mxu0
        %v2442 = vadd.f32 %v2369, %v2441
        %v2443 = vpop.f32.mrb[0].mxu0
        %2444 = vdwg.mxu0
        %s2445 = scalar_lea.vmem %s9, 32
        %v2446 = vld [vmem:[%s2445] sm:$0xf]
        %v2447 = vld [vmem:[%s2445 + $0x4] sm:$0xf]
        %v2448 = vld [vmem:[%s2445 + $0x8] sm:$0xf]
        %v2449 = vld [vmem:[%s2445 + $0xc] sm:$0xf]
        %v2451 = vshrl.u32 %v2304, 16
        %v2453 = vrot.slane %v2451, 4
        %v2454 = vshll.u32 %v2304, 16
        %v2456 = vrot.slane %v2454, 5
        %v2457 = vor.u32 %v2453, %v2456
        %v2459 = vshrl.u32 %v2305, 16
        %v2461 = vrot.slane %v2459, 4
        %v2462 = vshll.u32 %v2305, 16
        %v2464 = vrot.slane %v2462, 5
        %v2465 = vor.u32 %v2461, %v2464
        %v2466 = vsel %vm1282, %v2457, %v2465
        %v2471 = vunpack.c.l.b16 %v2446
        %v2472 = vunpack.c.l.b16 %v2447
        %v2473 = vunpack.c.l.b16 %v2448
        %v2474 = vunpack.c.l.b16 %v2449
        %v2475 = vpack.c.b16 %v2472, %v2471
        %v2476 = vpack.c.b16 %v2474, %v2473
        %v2480 = vsel %vm2327, %v2466, 0
        %2482 = vmatprep.subr.bf16.mxu0 0
        %2483 = vmatpush1.bf16.msra.mxu0 %v2475
        %2484 = vmatprep.subr.bf16.mxu0 0
        %2485 = vmatpush1.bf16.msra.mxu0 %v2476
        %2486 = vmatprep.subr.bf16.mxu0 0
        %2487 = vmatpush1.bf16.msra.mxu0 0
        %2488 = vmatprep.subr.bf16.mxu0 0
        %2489 = vmatpush1.bf16.msra.mxu0 0
        %2490 = vmatprep.subr.bf16.mxu0 0
        %2491 = vmatpush1.bf16.msra.mxu0 0
        %2492 = vmatprep.subr.bf16.mxu0 0
        %2493 = vmatpush1.bf16.msra.mxu0 0
        %2494 = vmatprep.subr.bf16.mxu0 0
        %2495 = vmatpush1.bf16.msra.mxu0 0
        %2496 = vmatprep.subr.bf16.mxu0 0
        %2497 = vmatpush1.bf16.msra.mxu0 0
        %2498 = vmatprep.subr.bf16.mxu0 0
        %2499 = vmatpush1.bf16.msra.mxu0 0
        %2500 = vmatprep.subr.bf16.mxu0 0
        %2501 = vmatpush1.bf16.msra.mxu0 0
        %2502 = vmatprep.subr.bf16.mxu0 0
        %2503 = vmatpush1.bf16.msra.mxu0 0
        %2504 = vmatprep.subr.bf16.mxu0 0
        %2505 = vmatpush1.bf16.msra.mxu0 0
        %2506 = vmatprep.subr.bf16.mxu0 0
        %2507 = vmatpush1.bf16.msra.mxu0 0
        %2508 = vmatprep.subr.bf16.mxu0 0
        %2509 = vmatpush1.bf16.msra.mxu0 0
        %2510 = vmatprep.subr.bf16.mxu0 0
        %2511 = vmatpush1.bf16.msra.mxu0 0
        %2512 = vmatprep.subr.bf16.mxu0 0
        %2513 = vmatpush1.bf16.msra.mxu0 0
        %2514 = vmatprep.mubr.bf16.mxu0 0
        %2515 = vmatmul.mubr.bf16.gmra.mrb[0].mxu0 %v2480
        %v2516 = vpop.f32.mrb[0].mxu0
        %v2517 = vadd.f32 0.0, %v2516
        %v2518 = vpop.f32.mrb[0].mxu0
        %v2519 = vpop.f32.mrb[0].mxu0
        %v2520 = vadd.f32 0.0, %v2519
        %v2521 = vpop.f32.mrb[0].mxu0
        %2522 = vdwg.mxu0
        %v2523 = vadd.f32 %v2439, %v2517
        %v2524 = vadd.f32 %v2442, %v2520
        %v2525 = vld [vmem:[#allocation20] sm:$0x1]
        %v2527 = vlaneseq
        %v2528 = vshrl.u32 %v2527, 7
        %v2529 = vsub.s32 0, %v2528
        %v2530 = vrot.slane %v2525, %v2529
        %v2532 = vadd.f32 %v2523, %v2530
        %v2533 = vadd.f32 %v2524, %v2530
        %v2534 = vpack.c.bf16 %v2533, %v2532
        %v2535 = vtanh.bf16.pop %v2534
        %v2536 = vxor.u32 %v2534, 2147516416
        %v2538 = vmul.bf16 %v2536, 1069105081
        %v2539 = vpow.bf16.pop %v2538
        %v2540 = vadd.bf16 %v2539, 1065369472
        %v2541 = vrcp.bf16.pop %v2540
        %v2542 = vmul.bf16 1065369472, %v2541
        %2544 = vrot.lane.b32.xlu0 %v2542, 96
        %v2545 = vpop.permute.xlu0 %2544
        %v2547 = vmul.bf16 %v2535, %v2545
        %v2548 = vld [vmem:[#allocation21] sm:$0xf]
        %v2549 = vld [vmem:[#allocation21 + $0x4] sm:$0xf]
        %v2550 = vld [vmem:[#allocation21 + $0x8] sm:$0xf]
        %v2551 = vld [vmem:[#allocation21 + $0xc] sm:$0xf]
        %v2552 = vld [vmem:[#allocation23] sm:$0x1]
        %v2554 = vlaneseq
        %v2555 = vshrl.u32 %v2554, 7
        %v2556 = vsub.s32 0, %v2555
        %v2557 = vrot.slane %v2552, %v2556
        %v2563 = vunpack.c.l.b16 %v2548
        %v2564 = vunpack.c.l.b16 %v2549
        %v2565 = vunpack.c.l.b16 %v2550
        %v2566 = vunpack.c.l.b16 %v2551
        %v2567 = vpack.c.b16 %v2564, %v2563
        %v2568 = vpack.c.b16 %v2566, %v2565
        %v2572 = vsel %vm2327, %v2547, 0
        %2574 = vmatprep.subr.bf16.mxu0 0
        %2575 = vmatpush1.bf16.msra.mxu0 %v2567
        %2576 = vmatprep.subr.bf16.mxu0 0
        %2577 = vmatpush1.bf16.msra.mxu0 %v2568
        %2578 = vmatprep.subr.bf16.mxu0 0
        %2579 = vmatpush1.bf16.msra.mxu0 0
        %2580 = vmatprep.subr.bf16.mxu0 0
        %2581 = vmatpush1.bf16.msra.mxu0 0
        %2582 = vmatprep.subr.bf16.mxu0 0
        %2583 = vmatpush1.bf16.msra.mxu0 0
        %2584 = vmatprep.subr.bf16.mxu0 0
        %2585 = vmatpush1.bf16.msra.mxu0 0
        %2586 = vmatprep.subr.bf16.mxu0 0
        %2587 = vmatpush1.bf16.msra.mxu0 0
        %2588 = vmatprep.subr.bf16.mxu0 0
        %2589 = vmatpush1.bf16.msra.mxu0 0
        %2590 = vmatprep.subr.bf16.mxu0 0
        %2591 = vmatpush1.bf16.msra.mxu0 0
        %2592 = vmatprep.subr.bf16.mxu0 0
        %2593 = vmatpush1.bf16.msra.mxu0 0
        %2594 = vmatprep.subr.bf16.mxu0 0
        %2595 = vmatpush1.bf16.msra.mxu0 0
        %2596 = vmatprep.subr.bf16.mxu0 0
        %2597 = vmatpush1.bf16.msra.mxu0 0
        %2598 = vmatprep.subr.bf16.mxu0 0
        %2599 = vmatpush1.bf16.msra.mxu0 0
        %2600 = vmatprep.subr.bf16.mxu0 0
        %2601 = vmatpush1.bf16.msra.mxu0 0
        %2602 = vmatprep.subr.bf16.mxu0 0
        %2603 = vmatpush1.bf16.msra.mxu0 0
        %2604 = vmatprep.subr.bf16.mxu0 0
        %2605 = vmatpush1.bf16.msra.mxu0 0
        %2606 = vmatprep.mubr.bf16.mxu0 0
        %2607 = vmatmul.mubr.bf16.gmra.mrb[0].mxu0 %v2572
        %v2608 = vpop.f32.mrb[0].mxu0
        %v2609 = vadd.f32 %v2557, %v2608
        %v2610 = vpop.f32.mrb[0].mxu0
        %v2611 = vpop.f32.mrb[0].mxu0
        %v2612 = vadd.f32 %v2557, %v2611
        %v2613 = vpop.f32.mrb[0].mxu0
        %2614 = vdwg.mxu0
        %v2615 = vadd.f32 %v2290, %v2609
        %v2616 = vadd.f32 %v2293, %v2612
        %v2617 = vpack.c.bf16 %v2612, %v2609
        %v2619 = vrot.slane %v2617, 4
        %2621 = vst.msk [vmem:[#allocation3] sm:$0xf0] %vm2235, %v2619
        %2622 = vst.msk [vmem:[#allocation3 + $0x8] sm:$0xf] %vm2233, %v2619
        %v2623 = vld [vmem:[#allocation3] sm:$0xf8]
        %v2624 = vld [vmem:[#allocation3 + $0x8] sm:$0x7]
        %v2625 = vld [vmem:[#allocation3] sm:$0xe0]
        %v2626 = vld [vmem:[#allocation3 + $0x8] sm:$0x1f]
        %s2627 = scalar_lea.vmem %s9, 48
        %v2628 = vld [vmem:[%s2627] sm:$0xf]
        %v2629 = vld [vmem:[%s2627 + $0x4] sm:$0xf]
        %v2630 = vld [vmem:[%s2627 + $0x8] sm:$0xf]
        %v2631 = vld [vmem:[%s2627 + $0xc] sm:$0xf]
        %s2632 = scalar_lea.vmem %s9, 64
        %v2633 = vld [vmem:[%s2632] sm:$0xf]
        %v2634 = vld [vmem:[%s2632 + $0x4] sm:$0xf]
        %v2635 = vld [vmem:[%s2632 + $0x8] sm:$0xf]
        %v2636 = vld [vmem:[%s2632 + $0xc] sm:$0xf]
        %v2641 = vunpack.c.l.b16 %v2633
        %v2642 = vunpack.c.l.b16 %v2634
        %v2643 = vunpack.c.l.b16 %v2635
        %v2644 = vunpack.c.l.b16 %v2636
        %v2645 = vpack.c.b16 %v2642, %v2641
        %v2646 = vpack.c.b16 %v2644, %v2643
        %v2650 = vsel %vm2327, %v2617, 0
        %2652 = vmatprep.subr.bf16.mxu0 0
        %2653 = vmatpush1.bf16.msra.mxu0 %v2645
        %2654 = vmatprep.subr.bf16.mxu0 0
        %2655 = vmatpush1.bf16.msra.mxu0 %v2646
        %2656 = vmatprep.subr.bf16.mxu0 0
        %2657 = vmatpush1.bf16.msra.mxu0 0
        %2658 = vmatprep.subr.bf16.mxu0 0
        %2659 = vmatpush1.bf16.msra.mxu0 0
        %2660 = vmatprep.subr.bf16.mxu0 0
        %2661 = vmatpush1.bf16.msra.mxu0 0
        %2662 = vmatprep.subr.bf16.mxu0 0
        %2663 = vmatpush1.bf16.msra.mxu0 0
        %2664 = vmatprep.subr.bf16.mxu0 0
        %2665 = vmatpush1.bf16.msra.mxu0 0
        %2666 = vmatprep.subr.bf16.mxu0 0
        %2667 = vmatpush1.bf16.msra.mxu0 0
        %2668 = vmatprep.subr.bf16.mxu0 0
        %2669 = vmatpush1.bf16.msra.mxu0 0
        %2670 = vmatprep.subr.bf16.mxu0 0
        %2671 = vmatpush1.bf16.msra.mxu0 0
        %2672 = vmatprep.subr.bf16.mxu0 0
        %2673 = vmatpush1.bf16.msra.mxu0 0
        %2674 = vmatprep.subr.bf16.mxu0 0
        %2675 = vmatpush1.bf16.msra.mxu0 0
        %2676 = vmatprep.subr.bf16.mxu0 0
        %2677 = vmatpush1.bf16.msra.mxu0 0
        %2678 = vmatprep.subr.bf16.mxu0 0
        %2679 = vmatpush1.bf16.msra.mxu0 0
        %2680 = vmatprep.subr.bf16.mxu0 0
        %2681 = vmatpush1.bf16.msra.mxu0 0
        %2682 = vmatprep.subr.bf16.mxu0 0
        %2683 = vmatpush1.bf16.msra.mxu0 0
        %2684 = vmatprep.mubr.bf16.mxu0 0
        %2685 = vmatmul.mubr.bf16.gmra.mrb[0].mxu0 %v2650
        %v2686 = vpop.f32.mrb[0].mxu0
        %v2687 = vadd.f32 0.0, %v2686
        %v2688 = vpop.f32.mrb[0].mxu0
        %v2689 = vpop.f32.mrb[0].mxu0
        %v2690 = vadd.f32 0.0, %v2689
        %v2691 = vpop.f32.mrb[0].mxu0
        %2692 = vdwg.mxu0
        %v2695 = vrot.slane %v2623, 3
        %v2696 = vrot.slane %v2624, 3
        %v2697 = vsel %vm1504, %v2695, %v2696
        %v2702 = vunpack.c.l.b16 %v2628
        %v2703 = vunpack.c.l.b16 %v2629
        %v2704 = vunpack.c.l.b16 %v2630
        %v2705 = vunpack.c.l.b16 %v2631
        %v2706 = vpack.c.b16 %v2703, %v2702
        %v2707 = vpack.c.b16 %v2705, %v2704
        %v2711 = vsel %vm2327, %v2697, 0
        %2713 = vmatprep.subr.bf16.mxu0 0
        %2714 = vmatpush1.bf16.msra.mxu0 %v2706
        %2715 = vmatprep.subr.bf16.mxu0 0
        %2716 = vmatpush1.bf16.msra.mxu0 %v2707
        %2717 = vmatprep.subr.bf16.mxu0 0
        %2718 = vmatpush1.bf16.msra.mxu0 0
        %2719 = vmatprep.subr.bf16.mxu0 0
        %2720 = vmatpush1.bf16.msra.mxu0 0
        %2721 = vmatprep.subr.bf16.mxu0 0
        %2722 = vmatpush1.bf16.msra.mxu0 0
        %2723 = vmatprep.subr.bf16.mxu0 0
        %2724 = vmatpush1.bf16.msra.mxu0 0
        %2725 = vmatprep.subr.bf16.mxu0 0
        %2726 = vmatpush1.bf16.msra.mxu0 0
        %2727 = vmatprep.subr.bf16.mxu0 0
        %2728 = vmatpush1.bf16.msra.mxu0 0
        %2729 = vmatprep.subr.bf16.mxu0 0
        %2730 = vmatpush1.bf16.msra.mxu0 0
        %2731 = vmatprep.subr.bf16.mxu0 0
        %2732 = vmatpush1.bf16.msra.mxu0 0
        %2733 = vmatprep.subr.bf16.mxu0 0
        %2734 = vmatpush1.bf16.msra.mxu0 0
        %2735 = vmatprep.subr.bf16.mxu0 0
        %2736 = vmatpush1.bf16.msra.mxu0 0
        %2737 = vmatprep.subr.bf16.mxu0 0
        %2738 = vmatpush1.bf16.msra.mxu0 0
        %2739 = vmatprep.subr.bf16.mxu0 0
        %2740 = vmatpush1.bf16.msra.mxu0 0
        %2741 = vmatprep.subr.bf16.mxu0 0
        %2742 = vmatpush1.bf16.msra.mxu0 0
        %2743 = vmatprep.subr.bf16.mxu0 0
        %2744 = vmatpush1.bf16.msra.mxu0 0
        %2745 = vmatprep.mubr.bf16.mxu0 0
        %2746 = vmatmul.mubr.bf16.gmra.mrb[0].mxu0 %v2711
        %v2747 = vpop.f32.mrb[0].mxu0
        %v2748 = vadd.f32 %v2687, %v2747
        %v2749 = vpop.f32.mrb[0].mxu0
        %v2750 = vpop.f32.mrb[0].mxu0
        %v2751 = vadd.f32 %v2690, %v2750
        %v2752 = vpop.f32.mrb[0].mxu0
        %2753 = vdwg.mxu0
        %s2754 = scalar_lea.vmem %s9, 80
        %v2755 = vld [vmem:[%s2754] sm:$0xf]
        %v2756 = vld [vmem:[%s2754 + $0x4] sm:$0xf]
        %v2757 = vld [vmem:[%s2754 + $0x8] sm:$0xf]
        %v2758 = vld [vmem:[%s2754 + $0xc] sm:$0xf]
        %v2761 = vrot.slane %v2625, 5
        %v2762 = vrot.slane %v2626, 5
        %v2763 = vsel %vm1563, %v2761, %v2762
        %v2768 = vunpack.c.l.b16 %v2755
        %v2769 = vunpack.c.l.b16 %v2756
        %v2770 = vunpack.c.l.b16 %v2757
        %v2771 = vunpack.c.l.b16 %v2758
        %v2772 = vpack.c.b16 %v2769, %v2768
        %v2773 = vpack.c.b16 %v2771, %v2770
        %v2777 = vsel %vm2327, %v2763, 0
        %2779 = vmatprep.subr.bf16.mxu0 0
        %2780 = vmatpush1.bf16.msra.mxu0 %v2772
        %2781 = vmatprep.subr.bf16.mxu0 0
        %2782 = vmatpush1.bf16.msra.mxu0 %v2773
        %2783 = vmatprep.subr.bf16.mxu0 0
        %2784 = vmatpush1.bf16.msra.mxu0 0
        %2785 = vmatprep.subr.bf16.mxu0 0
        %2786 = vmatpush1.bf16.msra.mxu0 0
        %2787 = vmatprep.subr.bf16.mxu0 0
        %2788 = vmatpush1.bf16.msra.mxu0 0
        %2789 = vmatprep.subr.bf16.mxu0 0
        %2790 = vmatpush1.bf16.msra.mxu0 0
        %2791 = vmatprep.subr.bf16.mxu0 0
        %2792 = vmatpush1.bf16.msra.mxu0 0
        %2793 = vmatprep.subr.bf16.mxu0 0
        %2794 = vmatpush1.bf16.msra.mxu0 0
        %2795 = vmatprep.subr.bf16.mxu0 0
        %2796 = vmatpush1.bf16.msra.mxu0 0
        %2797 = vmatprep.subr.bf16.mxu0 0
        %2798 = vmatpush1.bf16.msra.mxu0 0
        %2799 = vmatprep.subr.bf16.mxu0 0
        %2800 = vmatpush1.bf16.msra.mxu0 0
        %2801 = vmatprep.subr.bf16.mxu0 0
        %2802 = vmatpush1.bf16.msra.mxu0 0
        %2803 = vmatprep.subr.bf16.mxu0 0
        %2804 = vmatpush1.bf16.msra.mxu0 0
        %2805 = vmatprep.subr.bf16.mxu0 0
        %2806 = vmatpush1.bf16.msra.mxu0 0
        %2807 = vmatprep.subr.bf16.mxu0 0
        %2808 = vmatpush1.bf16.msra.mxu0 0
        %2809 = vmatprep.subr.bf16.mxu0 0
        %2810 = vmatpush1.bf16.msra.mxu0 0
        %2811 = vmatprep.mubr.bf16.mxu0 0
        %2812 = vmatmul.mubr.bf16.gmra.mrb[0].mxu0 %v2777
        %v2813 = vpop.f32.mrb[0].mxu0
        %v2814 = vadd.f32 0.0, %v2813
        %v2815 = vpop.f32.mrb[0].mxu0
        %v2816 = vpop.f32.mrb[0].mxu0
        %v2817 = vadd.f32 0.0, %v2816
        %v2818 = vpop.f32.mrb[0].mxu0
        %2819 = vdwg.mxu0
        %v2820 = vadd.f32 %v2748, %v2814
        %v2821 = vadd.f32 %v2751, %v2817
        %s2822 = scalar_lea.vmem [#allocation20], 1
        %v2823 = vld [vmem:[%s2822] sm:$0x1]
        %v2825 = vlaneseq
        %v2826 = vshrl.u32 %v2825, 7
        %v2827 = vsub.s32 0, %v2826
        %v2828 = vrot.slane %v2823, %v2827
        %v2830 = vadd.f32 %v2820, %v2828
        %v2831 = vadd.f32 %v2821, %v2828
        %v2832 = vpack.c.bf16 %v2831, %v2830
        %v2833 = vtanh.bf16.pop %v2832
        %v2834 = vxor.u32 %v2832, 2147516416
        %v2836 = vmul.bf16 %v2834, 1069105081
        %v2837 = vpow.bf16.pop %v2836
        %v2838 = vadd.bf16 %v2837, 1065369472
        %v2839 = vrcp.bf16.pop %v2838
        %v2840 = vmul.bf16 1065369472, %v2839
        %2842 = vrot.lane.b32.xlu0 %v2840, 96
        %v2843 = vpop.permute.xlu0 %2842
        %v2845 = vmul.bf16 %v2833, %v2843
        %s2846 = scalar_lea.vmem [#allocation21], 16
        %v2847 = vld [vmem:[%s2846] sm:$0xf]
        %v2848 = vld [vmem:[%s2846 + $0x4] sm:$0xf]
        %v2849 = vld [vmem:[%s2846 + $0x8] sm:$0xf]
        %v2850 = vld [vmem:[%s2846 + $0xc] sm:$0xf]
        %s2851 = scalar_lea.vmem [#allocation23], 1
        %v2852 = vld [vmem:[%s2851] sm:$0x1]
        %v2854 = vlaneseq
        %v2855 = vshrl.u32 %v2854, 7
        %v2856 = vsub.s32 0, %v2855
        %v2857 = vrot.slane %v2852, %v2856
        %v2863 = vunpack.c.l.b16 %v2847
        %v2864 = vunpack.c.l.b16 %v2848
        %v2865 = vunpack.c.l.b16 %v2849
        %v2866 = vunpack.c.l.b16 %v2850
        %v2867 = vpack.c.b16 %v2864, %v2863
        %v2868 = vpack.c.b16 %v2866, %v2865
        %v2872 = vsel %vm2327, %v2845, 0
        %2874 = vmatprep.subr.bf16.mxu0 0
        %2875 = vmatpush1.bf16.msra.mxu0 %v2867
        %2876 = vmatprep.subr.bf16.mxu0 0
        %2877 = vmatpush1.bf16.msra.mxu0 %v2868
        %2878 = vmatprep.subr.bf16.mxu0 0
        %2879 = vmatpush1.bf16.msra.mxu0 0
        %2880 = vmatprep.subr.bf16.mxu0 0
        %2881 = vmatpush1.bf16.msra.mxu0 0
        %2882 = vmatprep.subr.bf16.mxu0 0
        %2883 = vmatpush1.bf16.msra.mxu0 0
        %2884 = vmatprep.subr.bf16.mxu0 0
        %2885 = vmatpush1.bf16.msra.mxu0 0
        %2886 = vmatprep.subr.bf16.mxu0 0
        %2887 = vmatpush1.bf16.msra.mxu0 0
        %2888 = vmatprep.subr.bf16.mxu0 0
        %2889 = vmatpush1.bf16.msra.mxu0 0
        %2890 = vmatprep.subr.bf16.mxu0 0
        %2891 = vmatpush1.bf16.msra.mxu0 0
        %2892 = vmatprep.subr.bf16.mxu0 0
        %2893 = vmatpush1.bf16.msra.mxu0 0
        %2894 = vmatprep.subr.bf16.mxu0 0
        %2895 = vmatpush1.bf16.msra.mxu0 0
        %2896 = vmatprep.subr.bf16.mxu0 0
        %2897 = vmatpush1.bf16.msra.mxu0 0
        %2898 = vmatprep.subr.bf16.mxu0 0
        %2899 = vmatpush1.bf16.msra.mxu0 0
        %2900 = vmatprep.subr.bf16.mxu0 0
        %2901 = vmatpush1.bf16.msra.mxu0 0
        %2902 = vmatprep.subr.bf16.mxu0 0
        %2903 = vmatpush1.bf16.msra.mxu0 0
        %2904 = vmatprep.subr.bf16.mxu0 0
        %2905 = vmatpush1.bf16.msra.mxu0 0
        %2906 = vmatprep.mubr.bf16.mxu0 0
        %2907 = vmatmul.mubr.bf16.gmra.mrb[0].mxu0 %v2872
        %v2908 = vpop.f32.mrb[0].mxu0
        %v2909 = vadd.f32 %v2857, %v2908
        %v2910 = vpop.f32.mrb[0].mxu0
        %v2911 = vpop.f32.mrb[0].mxu0
        %v2912 = vadd.f32 %v2857, %v2911
        %v2913 = vpop.f32.mrb[0].mxu0
        %2914 = vdwg.mxu0
        %v2915 = vadd.f32 %v2615, %v2909
        %v2916 = vadd.f32 %v2616, %v2912
        %v2917 = vpack.c.bf16 %v2912, %v2909
        %v2919 = vrot.slane %v2917, 4
        %2921 = vst.msk [vmem:[#allocation3] sm:$0xf0] %vm2235, %v2919
        %2922 = vst.msk [vmem:[#allocation3 + $0x8] sm:$0xf] %vm2233, %v2919
        %v2923 = vld [vmem:[#allocation3] sm:$0xfc]
        %v2924 = vld [vmem:[#allocation3 + $0x8] sm:$0x3]
        %v2925 = vld [vmem:[#allocation3] sm:$0xc0]
        %v2926 = vld [vmem:[#allocation3 + $0x8] sm:$0x3f]
        %s2927 = scalar_lea.vmem %s9, 96
        %v2928 = vld [vmem:[%s2927] sm:$0xf]
        %v2929 = vld [vmem:[%s2927 + $0x4] sm:$0xf]
        %v2930 = vld [vmem:[%s2927 + $0x8] sm:$0xf]
        %v2931 = vld [vmem:[%s2927 + $0xc] sm:$0xf]
        %s2932 = scalar_lea.vmem %s9, 112
        %v2933 = vld [vmem:[%s2932] sm:$0xf]
        %v2934 = vld [vmem:[%s2932 + $0x4] sm:$0xf]
        %v2935 = vld [vmem:[%s2932 + $0x8] sm:$0xf]
        %v2936 = vld [vmem:[%s2932 + $0xc] sm:$0xf]
        %v2941 = vunpack.c.l.b16 %v2933
        %v2942 = vunpack.c.l.b16 %v2934
        %v2943 = vunpack.c.l.b16 %v2935
        %v2944 = vunpack.c.l.b16 %v2936
        %v2945 = vpack.c.b16 %v2942, %v2941
        %v2946 = vpack.c.b16 %v2944, %v2943
        %v2950 = vsel %vm2327, %v2917, 0
        %2952 = vmatprep.subr.bf16.mxu0 0
        %2953 = vmatpush1.bf16.msra.mxu0 %v2945
        %2954 = vmatprep.subr.bf16.mxu0 0
        %2955 = vmatpush1.bf16.msra.mxu0 %v2946
        %2956 = vmatprep.subr.bf16.mxu0 0
        %2957 = vmatpush1.bf16.msra.mxu0 0
        %2958 = vmatprep.subr.bf16.mxu0 0
        %2959 = vmatpush1.bf16.msra.mxu0 0
        %2960 = vmatprep.subr.bf16.mxu0 0
        %2961 = vmatpush1.bf16.msra.mxu0 0
        %2962 = vmatprep.subr.bf16.mxu0 0
        %2963 = vmatpush1.bf16.msra.mxu0 0
        %2964 = vmatprep.subr.bf16.mxu0 0
        %2965 = vmatpush1.bf16.msra.mxu0 0
        %2966 = vmatprep.subr.bf16.mxu0 0
        %2967 = vmatpush1.bf16.msra.mxu0 0
        %2968 = vmatprep.subr.bf16.mxu0 0
        %2969 = vmatpush1.bf16.msra.mxu0 0
        %2970 = vmatprep.subr.bf16.mxu0 0
        %2971 = vmatpush1.bf16.msra.mxu0 0
        %2972 = vmatprep.subr.bf16.mxu0 0
        %2973 = vmatpush1.bf16.msra.mxu0 0
        %2974 = vmatprep.subr.bf16.mxu0 0
        %2975 = vmatpush1.bf16.msra.mxu0 0
        %2976 = vmatprep.subr.bf16.mxu0 0
        %2977 = vmatpush1.bf16.msra.mxu0 0
        %2978 = vmatprep.subr.bf16.mxu0 0
        %2979 = vmatpush1.bf16.msra.mxu0 0
        %2980 = vmatprep.subr.bf16.mxu0 0
        %2981 = vmatpush1.bf16.msra.mxu0 0
        %2982 = vmatprep.subr.bf16.mxu0 0
        %2983 = vmatpush1.bf16.msra.mxu0 0
        %2984 = vmatprep.mubr.bf16.mxu0 0
        %2985 = vmatmul.mubr.bf16.gmra.mrb[0].mxu0 %v2950
        %v2986 = vpop.f32.mrb[0].mxu0
        %v2987 = vadd.f32 0.0, %v2986
        %v2988 = vpop.f32.mrb[0].mxu0
        %v2989 = vpop.f32.mrb[0].mxu0
        %v2990 = vadd.f32 0.0, %v2989
        %v2991 = vpop.f32.mrb[0].mxu0
        %2992 = vdwg.mxu0
        %v2995 = vrot.slane %v2923, 2
        %v2996 = vrot.slane %v2924, 2
        %v2997 = vsel %vm1774, %v2995, %v2996
        %v3002 = vunpack.c.l.b16 %v2928
        %v3003 = vunpack.c.l.b16 %v2929
        %v3004 = vunpack.c.l.b16 %v2930
        %v3005 = vunpack.c.l.b16 %v2931
        %v3006 = vpack.c.b16 %v3003, %v3002
        %v3007 = vpack.c.b16 %v3005, %v3004
        %v3011 = vsel %vm2327, %v2997, 0
        %3013 = vmatprep.subr.bf16.mxu0 0
        %3014 = vmatpush1.bf16.msra.mxu0 %v3006
        %3015 = vmatprep.subr.bf16.mxu0 0
        %3016 = vmatpush1.bf16.msra.mxu0 %v3007
        %3017 = vmatprep.subr.bf16.mxu0 0
        %3018 = vmatpush1.bf16.msra.mxu0 0
        %3019 = vmatprep.subr.bf16.mxu0 0
        %3020 = vmatpush1.bf16.msra.mxu0 0
        %3021 = vmatprep.subr.bf16.mxu0 0
        %3022 = vmatpush1.bf16.msra.mxu0 0
        %3023 = vmatprep.subr.bf16.mxu0 0
        %3024 = vmatpush1.bf16.msra.mxu0 0
        %3025 = vmatprep.subr.bf16.mxu0 0
        %3026 = vmatpush1.bf16.msra.mxu0 0
        %3027 = vmatprep.subr.bf16.mxu0 0
        %3028 = vmatpush1.bf16.msra.mxu0 0
        %3029 = vmatprep.subr.bf16.mxu0 0
        %3030 = vmatpush1.bf16.msra.mxu0 0
        %3031 = vmatprep.subr.bf16.mxu0 0
        %3032 = vmatpush1.bf16.msra.mxu0 0
        %3033 = vmatprep.subr.bf16.mxu0 0
        %3034 = vmatpush1.bf16.msra.mxu0 0
        %3035 = vmatprep.subr.bf16.mxu0 0
        %3036 = vmatpush1.bf16.msra.mxu0 0
        %3037 = vmatprep.subr.bf16.mxu0 0
        %3038 = vmatpush1.bf16.msra.mxu0 0
        %3039 = vmatprep.subr.bf16.mxu0 0
        %3040 = vmatpush1.bf16.msra.mxu0 0
        %3041 = vmatprep.subr.bf16.mxu0 0
        %3042 = vmatpush1.bf16.msra.mxu0 0
        %3043 = vmatprep.subr.bf16.mxu0 0
        %3044 = vmatpush1.bf16.msra.mxu0 0
        %3045 = vmatprep.mubr.bf16.mxu0 0
        %3046 = vmatmul.mubr.bf16.gmra.mrb[0].mxu0 %v3011
        %v3047 = vpop.f32.mrb[0].mxu0
        %v3048 = vadd.f32 %v2987, %v3047
        %v3049 = vpop.f32.mrb[0].mxu0
        %v3050 = vpop.f32.mrb[0].mxu0
        %v3051 = vadd.f32 %v2990, %v3050
        %v3052 = vpop.f32.mrb[0].mxu0
        %3053 = vdwg.mxu0
        %s3054 = scalar_lea.vmem %s9, 128
        %v3055 = vld [vmem:[%s3054] sm:$0xf]
        %v3056 = vld [vmem:[%s3054 + $0x4] sm:$0xf]
        %v3057 = vld [vmem:[%s3054 + $0x8] sm:$0xf]
        %v3058 = vld [vmem:[%s3054 + $0xc] sm:$0xf]
        %v3061 = vrot.slane %v2925, 6
        %v3062 = vrot.slane %v2926, 6
        %v3063 = vsel %vm1833, %v3061, %v3062
        %v3068 = vunpack.c.l.b16 %v3055
        %v3069 = vunpack.c.l.b16 %v3056
        %v3070 = vunpack.c.l.b16 %v3057
        %v3071 = vunpack.c.l.b16 %v3058
        %v3072 = vpack.c.b16 %v3069, %v3068
        %v3073 = vpack.c.b16 %v3071, %v3070
        %v3077 = vsel %vm2327, %v3063, 0
        %3079 = vmatprep.subr.bf16.mxu0 0
        %3080 = vmatpush1.bf16.msra.mxu0 %v3072
        %3081 = vmatprep.subr.bf16.mxu0 0
        %3082 = vmatpush1.bf16.msra.mxu0 %v3073
        %3083 = vmatprep.subr.bf16.mxu0 0
        %3084 = vmatpush1.bf16.msra.mxu0 0
        %3085 = vmatprep.subr.bf16.mxu0 0
        %3086 = vmatpush1.bf16.msra.mxu0 0
        %3087 = vmatprep.subr.bf16.mxu0 0
        %3088 = vmatpush1.bf16.msra.mxu0 0
        %3089 = vmatprep.subr.bf16.mxu0 0
        %3090 = vmatpush1.bf16.msra.mxu0 0
        %3091 = vmatprep.subr.bf16.mxu0 0
        %3092 = vmatpush1.bf16.msra.mxu0 0
        %3093 = vmatprep.subr.bf16.mxu0 0
        %3094 = vmatpush1.bf16.msra.mxu0 0
        %3095 = vmatprep.subr.bf16.mxu0 0
        %3096 = vmatpush1.bf16.msra.mxu0 0
        %3097 = vmatprep.subr.bf16.mxu0 0
        %3098 = vmatpush1.bf16.msra.mxu0 0
        %3099 = vmatprep.subr.bf16.mxu0 0
        %3100 = vmatpush1.bf16.msra.mxu0 0
        %3101 = vmatprep.subr.bf16.mxu0 0
        %3102 = vmatpush1.bf16.msra.mxu0 0
        %3103 = vmatprep.subr.bf16.mxu0 0
        %3104 = vmatpush1.bf16.msra.mxu0 0
        %3105 = vmatprep.subr.bf16.mxu0 0
        %3106 = vmatpush1.bf16.msra.mxu0 0
        %3107 = vmatprep.subr.bf16.mxu0 0
        %3108 = vmatpush1.bf16.msra.mxu0 0
        %3109 = vmatprep.subr.bf16.mxu0 0
        %3110 = vmatpush1.bf16.msra.mxu0 0
        %3111 = vmatprep.mubr.bf16.mxu0 0
        %3112 = vmatmul.mubr.bf16.gmra.mrb[0].mxu0 %v3077
        %v3113 = vpop.f32.mrb[0].mxu0
        %v3114 = vadd.f32 0.0, %v3113
        %v3115 = vpop.f32.mrb[0].mxu0
        %v3116 = vpop.f32.mrb[0].mxu0
        %v3117 = vadd.f32 0.0, %v3116
        %v3118 = vpop.f32.mrb[0].mxu0
        %3119 = vdwg.mxu0
        %v3120 = vadd.f32 %v3048, %v3114
        %v3121 = vadd.f32 %v3051, %v3117
        %s3122 = scalar_lea.vmem [#allocation20], 2
        %v3123 = vld [vmem:[%s3122] sm:$0x1]
        %v3125 = vlaneseq
        %v3126 = vshrl.u32 %v3125, 7
        %v3127 = vsub.s32 0, %v3126
        %v3128 = vrot.slane %v3123, %v3127
        %v3130 = vadd.f32 %v3120, %v3128
        %v3131 = vadd.f32 %v3121, %v3128
        %v3132 = vpack.c.bf16 %v3131, %v3130
        %v3133 = vtanh.bf16.pop %v3132
        %v3134 = vxor.u32 %v3132, 2147516416
        %v3136 = vmul.bf16 %v3134, 1069105081
        %v3137 = vpow.bf16.pop %v3136
        %v3138 = vadd.bf16 %v3137, 1065369472
        %v3139 = vrcp.bf16.pop %v3138
        %v3140 = vmul.bf16 1065369472, %v3139
        %3142 = vrot.lane.b32.xlu0 %v3140, 96
        %v3143 = vpop.permute.xlu0 %3142
        %v3145 = vmul.bf16 %v3133, %v3143
        %s3146 = scalar_lea.vmem [#allocation21], 32
        %v3147 = vld [vmem:[%s3146] sm:$0xf]
        %v3148 = vld [vmem:[%s3146 + $0x4] sm:$0xf]
        %v3149 = vld [vmem:[%s3146 + $0x8] sm:$0xf]
        %v3150 = vld [vmem:[%s3146 + $0xc] sm:$0xf]
        %s3151 = scalar_lea.vmem [#allocation23], 2
        %v3152 = vld [vmem:[%s3151] sm:$0x1]
        %v3154 = vlaneseq
        %v3155 = vshrl.u32 %v3154, 7
        %v3156 = vsub.s32 0, %v3155
        %v3157 = vrot.slane %v3152, %v3156
        %v3163 = vunpack.c.l.b16 %v3147
        %v3164 = vunpack.c.l.b16 %v3148
        %v3165 = vunpack.c.l.b16 %v3149
        %v3166 = vunpack.c.l.b16 %v3150
        %v3167 = vpack.c.b16 %v3164, %v3163
        %v3168 = vpack.c.b16 %v3166, %v3165
        %v3172 = vsel %vm2327, %v3145, 0
        %3174 = vmatprep.subr.bf16.mxu0 0
        %3175 = vmatpush1.bf16.msra.mxu0 %v3167
        %3176 = vmatprep.subr.bf16.mxu0 0
        %3177 = vmatpush1.bf16.msra.mxu0 %v3168
        %3178 = vmatprep.subr.bf16.mxu0 0
        %3179 = vmatpush1.bf16.msra.mxu0 0
        %3180 = vmatprep.subr.bf16.mxu0 0
        %3181 = vmatpush1.bf16.msra.mxu0 0
        %3182 = vmatprep.subr.bf16.mxu0 0
        %3183 = vmatpush1.bf16.msra.mxu0 0
        %3184 = vmatprep.subr.bf16.mxu0 0
        %3185 = vmatpush1.bf16.msra.mxu0 0
        %3186 = vmatprep.subr.bf16.mxu0 0
        %3187 = vmatpush1.bf16.msra.mxu0 0
        %3188 = vmatprep.subr.bf16.mxu0 0
        %3189 = vmatpush1.bf16.msra.mxu0 0
        %3190 = vmatprep.subr.bf16.mxu0 0
        %3191 = vmatpush1.bf16.msra.mxu0 0
        %3192 = vmatprep.subr.bf16.mxu0 0
        %3193 = vmatpush1.bf16.msra.mxu0 0
        %3194 = vmatprep.subr.bf16.mxu0 0
        %3195 = vmatpush1.bf16.msra.mxu0 0
        %3196 = vmatprep.subr.bf16.mxu0 0
        %3197 = vmatpush1.bf16.msra.mxu0 0
        %3198 = vmatprep.subr.bf16.mxu0 0
        %3199 = vmatpush1.bf16.msra.mxu0 0
        %3200 = vmatprep.subr.bf16.mxu0 0
        %3201 = vmatpush1.bf16.msra.mxu0 0
        %3202 = vmatprep.subr.bf16.mxu0 0
        %3203 = vmatpush1.bf16.msra.mxu0 0
        %3204 = vmatprep.subr.bf16.mxu0 0
        %3205 = vmatpush1.bf16.msra.mxu0 0
        %3206 = vmatprep.mubr.bf16.mxu0 0
        %3207 = vmatmul.mubr.bf16.gmra.mrb[0].mxu0 %v3172
        %v3208 = vpop.f32.mrb[0].mxu0
        %v3209 = vadd.f32 %v3157, %v3208
        %v3210 = vpop.f32.mrb[0].mxu0
        %v3211 = vpop.f32.mrb[0].mxu0
        %v3212 = vadd.f32 %v3157, %v3211
        %v3213 = vpop.f32.mrb[0].mxu0
        %3214 = vdwg.mxu0
        %v3215 = vadd.f32 %v2915, %v3209
        %v3216 = vadd.f32 %v2916, %v3212
        %v3217 = vpack.c.bf16 %v3212, %v3209
        %v3219 = vrot.slane %v3217, 4
        %3221 = vst.msk [vmem:[#allocation3] sm:$0xf0] %vm2235, %v3219
        %3222 = vst.msk [vmem:[#allocation3 + $0x8] sm:$0xf] %vm2233, %v3219
        %v3223 = vld [vmem:[#allocation3] sm:$0xff]
        %v3224 = vld [vmem:[#allocation3 + $0x8] sm:$0xff]
        %s3225 = scalar_lea.vmem %s9, 144
        %v3226 = vld [vmem:[%s3225] sm:$0xf]
        %v3227 = vld [vmem:[%s3225 + $0x4] sm:$0xf]
        %v3228 = vld [vmem:[%s3225 + $0x8] sm:$0xf]
        %v3229 = vld [vmem:[%s3225 + $0xc] sm:$0xf]
        %s3230 = scalar_lea.vmem %s9, 160
        %v3231 = vld [vmem:[%s3230] sm:$0xf]
        %v3232 = vld [vmem:[%s3230 + $0x4] sm:$0xf]
        %v3233 = vld [vmem:[%s3230 + $0x8] sm:$0xf]
        %v3234 = vld [vmem:[%s3230 + $0xc] sm:$0xf]
        %v3239 = vunpack.c.l.b16 %v3231
        %v3240 = vunpack.c.l.b16 %v3232
        %v3241 = vunpack.c.l.b16 %v3233
        %v3242 = vunpack.c.l.b16 %v3234
        %v3243 = vpack.c.b16 %v3240, %v3239
        %v3244 = vpack.c.b16 %v3242, %v3241
        %v3248 = vsel %vm2327, %v3217, 0
        %3250 = vmatprep.subr.bf16.mxu0 0
        %3251 = vmatpush1.bf16.msra.mxu0 %v3243
        %3252 = vmatprep.subr.bf16.mxu0 0
        %3253 = vmatpush1.bf16.msra.mxu0 %v3244
        %3254 = vmatprep.subr.bf16.mxu0 0
        %3255 = vmatpush1.bf16.msra.mxu0 0
        %3256 = vmatprep.subr.bf16.mxu0 0
        %3257 = vmatpush1.bf16.msra.mxu0 0
        %3258 = vmatprep.subr.bf16.mxu0 0
        %3259 = vmatpush1.bf16.msra.mxu0 0
        %3260 = vmatprep.subr.bf16.mxu0 0
        %3261 = vmatpush1.bf16.msra.mxu0 0
        %3262 = vmatprep.subr.bf16.mxu0 0
        %3263 = vmatpush1.bf16.msra.mxu0 0
        %3264 = vmatprep.subr.bf16.mxu0 0
        %3265 = vmatpush1.bf16.msra.mxu0 0
        %3266 = vmatprep.subr.bf16.mxu0 0
        %3267 = vmatpush1.bf16.msra.mxu0 0
        %3268 = vmatprep.subr.bf16.mxu0 0
        %3269 = vmatpush1.bf16.msra.mxu0 0
        %3270 = vmatprep.subr.bf16.mxu0 0
        %3271 = vmatpush1.bf16.msra.mxu0 0
        %3272 = vmatprep.subr.bf16.mxu0 0
        %3273 = vmatpush1.bf16.msra.mxu0 0
        %3274 = vmatprep.subr.bf16.mxu0 0
        %3275 = vmatpush1.bf16.msra.mxu0 0
        %3276 = vmatprep.subr.bf16.mxu0 0
        %3277 = vmatpush1.bf16.msra.mxu0 0
        %3278 = vmatprep.subr.bf16.mxu0 0
        %3279 = vmatpush1.bf16.msra.mxu0 0
        %3280 = vmatprep.subr.bf16.mxu0 0
        %3281 = vmatpush1.bf16.msra.mxu0 0
        %3282 = vmatprep.mubr.bf16.mxu0 0
        %3283 = vmatmul.mubr.bf16.gmra.mrb[0].mxu0 %v3248
        %v3284 = vpop.f32.mrb[0].mxu0
        %v3285 = vadd.f32 0.0, %v3284
        %v3286 = vpop.f32.mrb[0].mxu0
        %v3287 = vpop.f32.mrb[0].mxu0
        %v3288 = vadd.f32 0.0, %v3287
        %v3289 = vpop.f32.mrb[0].mxu0
        %3290 = vdwg.mxu0
        %v3295 = vunpack.c.l.b16 %v3226
        %v3296 = vunpack.c.l.b16 %v3227
        %v3297 = vunpack.c.l.b16 %v3228
        %v3298 = vunpack.c.l.b16 %v3229
        %v3299 = vpack.c.b16 %v3296, %v3295
        %v3300 = vpack.c.b16 %v3298, %v3297
        %v3304 = vsel %vm2327, %v3223, 0
        %3306 = vmatprep.subr.bf16.mxu0 0
        %3307 = vmatpush1.bf16.msra.mxu0 %v3299
        %3308 = vmatprep.subr.bf16.mxu0 0
        %3309 = vmatpush1.bf16.msra.mxu0 %v3300
        %3310 = vmatprep.subr.bf16.mxu0 0
        %3311 = vmatpush1.bf16.msra.mxu0 0
        %3312 = vmatprep.subr.bf16.mxu0 0
        %3313 = vmatpush1.bf16.msra.mxu0 0
        %3314 = vmatprep.subr.bf16.mxu0 0
        %3315 = vmatpush1.bf16.msra.mxu0 0
        %3316 = vmatprep.subr.bf16.mxu0 0
        %3317 = vmatpush1.bf16.msra.mxu0 0
        %3318 = vmatprep.subr.bf16.mxu0 0
        %3319 = vmatpush1.bf16.msra.mxu0 0
        %3320 = vmatprep.subr.bf16.mxu0 0
        %3321 = vmatpush1.bf16.msra.mxu0 0
        %3322 = vmatprep.subr.bf16.mxu0 0
        %3323 = vmatpush1.bf16.msra.mxu0 0
        %3324 = vmatprep.subr.bf16.mxu0 0
        %3325 = vmatpush1.bf16.msra.mxu0 0
        %3326 = vmatprep.subr.bf16.mxu0 0
        %3327 = vmatpush1.bf16.msra.mxu0 0
        %3328 = vmatprep.subr.bf16.mxu0 0
        %3329 = vmatpush1.bf16.msra.mxu0 0
        %3330 = vmatprep.subr.bf16.mxu0 0
        %3331 = vmatpush1.bf16.msra.mxu0 0
        %3332 = vmatprep.subr.bf16.mxu0 0
        %3333 = vmatpush1.bf16.msra.mxu0 0
        %3334 = vmatprep.subr.bf16.mxu0 0
        %3335 = vmatpush1.bf16.msra.mxu0 0
        %3336 = vmatprep.subr.bf16.mxu0 0
        %3337 = vmatpush1.bf16.msra.mxu0 0
        %3338 = vmatprep.mubr.bf16.mxu0 0
        %3339 = vmatmul.mubr.bf16.gmra.mrb[0].mxu0 %v3304
        %v3340 = vpop.f32.mrb[0].mxu0
        %v3341 = vadd.f32 %v3285, %v3340
        %v3342 = vpop.f32.mrb[0].mxu0
        %v3343 = vpop.f32.mrb[0].mxu0
        %v3344 = vadd.f32 %v3288, %v3343
        %v3345 = vpop.f32.mrb[0].mxu0
        %3346 = vdwg.mxu0
        %s3347 = scalar_lea.vmem %s9, 176
        %v3348 = vld [vmem:[%s3347] sm:$0xf]
        %v3349 = vld [vmem:[%s3347 + $0x4] sm:$0xf]
        %v3350 = vld [vmem:[%s3347 + $0x8] sm:$0xf]
        %v3351 = vld [vmem:[%s3347 + $0xc] sm:$0xf]
        %v3356 = vunpack.c.l.b16 %v3348
        %v3357 = vunpack.c.l.b16 %v3349
        %v3358 = vunpack.c.l.b16 %v3350
        %v3359 = vunpack.c.l.b16 %v3351
        %v3360 = vpack.c.b16 %v3357, %v3356
        %v3361 = vpack.c.b16 %v3359, %v3358
        %v3365 = vsel %vm2327, %v3224, 0
        %3367 = vmatprep.subr.bf16.mxu0 0
        %3368 = vmatpush1.bf16.msra.mxu0 %v3360
        %3369 = vmatprep.subr.bf16.mxu0 0
        %3370 = vmatpush1.bf16.msra.mxu0 %v3361
        %3371 = vmatprep.subr.bf16.mxu0 0
        %3372 = vmatpush1.bf16.msra.mxu0 0
        %3373 = vmatprep.subr.bf16.mxu0 0
        %3374 = vmatpush1.bf16.msra.mxu0 0
        %3375 = vmatprep.subr.bf16.mxu0 0
        %3376 = vmatpush1.bf16.msra.mxu0 0
        %3377 = vmatprep.subr.bf16.mxu0 0
        %3378 = vmatpush1.bf16.msra.mxu0 0
        %3379 = vmatprep.subr.bf16.mxu0 0
        %3380 = vmatpush1.bf16.msra.mxu0 0
        %3381 = vmatprep.subr.bf16.mxu0 0
        %3382 = vmatpush1.bf16.msra.mxu0 0
        %3383 = vmatprep.subr.bf16.mxu0 0
        %3384 = vmatpush1.bf16.msra.mxu0 0
        %3385 = vmatprep.subr.bf16.mxu0 0
        %3386 = vmatpush1.bf16.msra.mxu0 0
        %3387 = vmatprep.subr.bf16.mxu0 0
        %3388 = vmatpush1.bf16.msra.mxu0 0
        %3389 = vmatprep.subr.bf16.mxu0 0
        %3390 = vmatpush1.bf16.msra.mxu0 0
        %3391 = vmatprep.subr.bf16.mxu0 0
        %3392 = vmatpush1.bf16.msra.mxu0 0
        %3393 = vmatprep.subr.bf16.mxu0 0
        %3394 = vmatpush1.bf16.msra.mxu0 0
        %3395 = vmatprep.subr.bf16.mxu0 0
        %3396 = vmatpush1.bf16.msra.mxu0 0
        %3397 = vmatprep.subr.bf16.mxu0 0
        %3398 = vmatpush1.bf16.msra.mxu0 0
        %3399 = vmatprep.mubr.bf16.mxu0 0
        %3400 = vmatmul.mubr.bf16.gmra.mrb[0].mxu0 %v3365
        %v3401 = vpop.f32.mrb[0].mxu0
        %v3402 = vadd.f32 0.0, %v3401
        %v3403 = vpop.f32.mrb[0].mxu0
        %v3404 = vpop.f32.mrb[0].mxu0
        %v3405 = vadd.f32 0.0, %v3404
        %v3406 = vpop.f32.mrb[0].mxu0
        %3407 = vdwg.mxu0
        %v3408 = vadd.f32 %v3341, %v3402
        %v3409 = vadd.f32 %v3344, %v3405
        %s3410 = scalar_lea.vmem [#allocation20], 3
        %v3411 = vld [vmem:[%s3410] sm:$0x1]
        %v3413 = vlaneseq
        %v3414 = vshrl.u32 %v3413, 7
        %v3415 = vsub.s32 0, %v3414
        %v3416 = vrot.slane %v3411, %v3415
        %v3418 = vadd.f32 %v3408, %v3416
        %v3419 = vadd.f32 %v3409, %v3416
        %v3420 = vpack.c.bf16 %v3419, %v3418
        %v3421 = vtanh.bf16.pop %v3420
        %v3422 = vxor.u32 %v3420, 2147516416
        %v3424 = vmul.bf16 %v3422, 1069105081
        %v3425 = vpow.bf16.pop %v3424
        %v3426 = vadd.bf16 %v3425, 1065369472
        %v3427 = vrcp.bf16.pop %v3426
        %v3428 = vmul.bf16 1065369472, %v3427
        %3430 = vrot.lane.b32.xlu0 %v3428, 96
        %v3431 = vpop.permute.xlu0 %3430
        %v3433 = vmul.bf16 %v3421, %v3431
        %s3434 = scalar_lea.vmem [#allocation21], 48
        %v3435 = vld [vmem:[%s3434] sm:$0xf]
        %v3436 = vld [vmem:[%s3434 + $0x4] sm:$0xf]
        %v3437 = vld [vmem:[%s3434 + $0x8] sm:$0xf]
        %v3438 = vld [vmem:[%s3434 + $0xc] sm:$0xf]
        %s3439 = scalar_lea.vmem [#allocation23], 3
        %v3440 = vld [vmem:[%s3439] sm:$0x1]
        %v3442 = vlaneseq
        %v3443 = vshrl.u32 %v3442, 7
        %v3444 = vsub.s32 0, %v3443
        %v3445 = vrot.slane %v3440, %v3444
        %v3451 = vunpack.c.l.b16 %v3435
        %v3452 = vunpack.c.l.b16 %v3436
        %v3453 = vunpack.c.l.b16 %v3437
        %v3454 = vunpack.c.l.b16 %v3438
        %v3455 = vpack.c.b16 %v3452, %v3451
        %v3456 = vpack.c.b16 %v3454, %v3453
        %v3460 = vsel %vm2327, %v3433, 0
        %3462 = vmatprep.subr.bf16.mxu0 0
        %3463 = vmatpush1.bf16.msra.mxu0 %v3455
        %3464 = vmatprep.subr.bf16.mxu0 0
        %3465 = vmatpush1.bf16.msra.mxu0 %v3456
        %3466 = vmatprep.subr.bf16.mxu0 0
        %3467 = vmatpush1.bf16.msra.mxu0 0
        %3468 = vmatprep.subr.bf16.mxu0 0
        %3469 = vmatpush1.bf16.msra.mxu0 0
        %3470 = vmatprep.subr.bf16.mxu0 0
        %3471 = vmatpush1.bf16.msra.mxu0 0
        %3472 = vmatprep.subr.bf16.mxu0 0
        %3473 = vmatpush1.bf16.msra.mxu0 0
        %3474 = vmatprep.subr.bf16.mxu0 0
        %3475 = vmatpush1.bf16.msra.mxu0 0
        %3476 = vmatprep.subr.bf16.mxu0 0
        %3477 = vmatpush1.bf16.msra.mxu0 0
        %3478 = vmatprep.subr.bf16.mxu0 0
        %3479 = vmatpush1.bf16.msra.mxu0 0
        %3480 = vmatprep.subr.bf16.mxu0 0
        %3481 = vmatpush1.bf16.msra.mxu0 0
        %3482 = vmatprep.subr.bf16.mxu0 0
        %3483 = vmatpush1.bf16.msra.mxu0 0
        %3484 = vmatprep.subr.bf16.mxu0 0
        %3485 = vmatpush1.bf16.msra.mxu0 0
        %3486 = vmatprep.subr.bf16.mxu0 0
        %3487 = vmatpush1.bf16.msra.mxu0 0
        %3488 = vmatprep.subr.bf16.mxu0 0
        %3489 = vmatpush1.bf16.msra.mxu0 0
        %3490 = vmatprep.subr.bf16.mxu0 0
        %3491 = vmatpush1.bf16.msra.mxu0 0
        %3492 = vmatprep.subr.bf16.mxu0 0
        %3493 = vmatpush1.bf16.msra.mxu0 0
        %3494 = vmatprep.mubr.bf16.mxu0 0
        %3495 = vmatmul.mubr.bf16.gmra.mrb[0].mxu0 %v3460
        %v3496 = vpop.f32.mrb[0].mxu0
        %v3497 = vadd.f32 %v3445, %v3496
        %v3498 = vpop.f32.mrb[0].mxu0
        %v3499 = vpop.f32.mrb[0].mxu0
        %v3500 = vadd.f32 %v3445, %v3499
        %v3501 = vpop.f32.mrb[0].mxu0
        %3502 = vdwg.mxu0
        %v3503 = vadd.f32 %v3215, %v3497
        %v3504 = vadd.f32 %v3216, %v3500
        %v3505 = vpack.c.bf16 %v3504, %v3503
        %vm3506 = vcmask 516096
        %3507 = vst.msk [vmem:[#allocation4] sm:$0x1] %vm3506, 0
        %vm3508 = vcmask 517121
        %3509 = vst.msk [vmem:[#allocation4 + $0x8] sm:$0x2] %vm3508, 0
        %v3510 = vld [vmem:[#allocation24] sm:$0xf]
        %v3511 = vld [vmem:[#allocation24 + $0x4] sm:$0xf]
        %v3512 = vld [vmem:[#allocation24 + $0x8] sm:$0xf]
        %v3513 = vld [vmem:[#allocation24 + $0xc] sm:$0xf]
        %v3514 = vld [vmem:[#allocation26] sm:$0x1]
        %v3516 = vlaneseq
        %v3517 = vshrl.u32 %v3516, 7
        %v3518 = vsub.s32 0, %v3517
        %v3519 = vrot.slane %v3514, %v3518
        %v3525 = vunpack.c.l.b16 %v3510
        %v3526 = vunpack.c.l.b16 %v3511
        %v3527 = vunpack.c.l.b16 %v3512
        %v3528 = vunpack.c.l.b16 %v3513
        %v3529 = vpack.c.b16 %v3526, %v3525
        %v3530 = vpack.c.b16 %v3528, %v3527
        %v3534 = vsel %vm2327, %v3505, 0
        %3536 = vmatprep.subr.bf16.mxu0 0
        %3537 = vmatpush1.bf16.msra.mxu0 %v3529
        %3538 = vmatprep.subr.bf16.mxu0 0
        %3539 = vmatpush1.bf16.msra.mxu0 %v3530
        %3540 = vmatprep.subr.bf16.mxu0 0
        %3541 = vmatpush1.bf16.msra.mxu0 0
        %3542 = vmatprep.subr.bf16.mxu0 0
        %3543 = vmatpush1.bf16.msra.mxu0 0
        %3544 = vmatprep.subr.bf16.mxu0 0
        %3545 = vmatpush1.bf16.msra.mxu0 0
        %3546 = vmatprep.subr.bf16.mxu0 0
        %3547 = vmatpush1.bf16.msra.mxu0 0
        %3548 = vmatprep.subr.bf16.mxu0 0
        %3549 = vmatpush1.bf16.msra.mxu0 0
        %3550 = vmatprep.subr.bf16.mxu0 0
        %3551 = vmatpush1.bf16.msra.mxu0 0
        %3552 = vmatprep.subr.bf16.mxu0 0
        %3553 = vmatpush1.bf16.msra.mxu0 0
        %3554 = vmatprep.subr.bf16.mxu0 0
        %3555 = vmatpush1.bf16.msra.mxu0 0
        %3556 = vmatprep.subr.bf16.mxu0 0
        %3557 = vmatpush1.bf16.msra.mxu0 0
        %3558 = vmatprep.subr.bf16.mxu0 0
        %3559 = vmatpush1.bf16.msra.mxu0 0
        %3560 = vmatprep.subr.bf16.mxu0 0
        %3561 = vmatpush1.bf16.msra.mxu0 0
        %3562 = vmatprep.subr.bf16.mxu0 0
        %3563 = vmatpush1.bf16.msra.mxu0 0
        %3564 = vmatprep.subr.bf16.mxu0 0
        %3565 = vmatpush1.bf16.msra.mxu0 0
        %3566 = vmatprep.subr.bf16.mxu0 0
        %3567 = vmatpush1.bf16.msra.mxu0 0
        %3568 = vmatprep.mubr.bf16.mxu0 0
        %3569 = vmatmul.mubr.bf16.gmra.mrb[0].mxu0 %v3534
        %v3570 = vpop.f32.mrb[0].mxu0
        %v3571 = vadd.f32 %v3519, %v3570
        %v3572 = vpop.f32.mrb[0].mxu0
        %v3573 = vpop.f32.mrb[0].mxu0
        %v3574 = vadd.f32 %v3519, %v3573
        %v3575 = vpop.f32.mrb[0].mxu0
        %3576 = vdwg.mxu0
        %v3577 = vpack.c.bf16 %v3574, %v3571
        %v3579 = vunpack.c.l.b16 %v3577
        %v3580 = vunpack.c.h.b16 %v3577
        %v3581 = vpack.c.b16 %v3579, %v3579
        %v3582 = vpack.c.b16 %v3580, %v3580
        %vm3583 = vcmask 1040384
        %vm3584 = vcmask 1044484
        %vm3585 = vmor %vm3583, %vm3584
        %v3586 = vrot.slane %v3581, 7
        %v3587 = vrot.slane %v3586, 4
        %v3588 = vrot.slane %v3582, 7
        %v3589 = vsel %vm3585, %v3587, %v3588
        %v3590 = vrot.slane %v3588, 4
        %vm3594 = vcmask 519169
        %3595 = vst.msk [vmem:[#allocation4] sm:$0xe] %vm3594, %v3586
        %vm3596 = vcmask 519168
        %3597 = vst.msk [vmem:[#allocation4 + $0x4] sm:$0xf] %vm3596, %v3589
        %3598 = vst.msk [vmem:[#allocation4 + $0x8] sm:$0x1] %vm3506, %v3590
        %v3599 = vld [vmem:[#allocation4] sm:$0xf]
        %v3600 = vld [vmem:[#allocation4 + $0x4] sm:$0xf]
        %v3601 = vld [vmem:[#allocation4 + $0x8] sm:$0x1]
        %v3602 = vld [vmem:[#allocation4] sm:$0xe]
        %v3603 = vld [vmem:[#allocation4 + $0x8] sm:$0x3]
        %v3604 = vld [vmem:[#allocation27] sm:$0xf]
        %v3605 = vld [vmem:[#allocation27 + $0x4] sm:$0xf]
        %v3606 = vld [vmem:[#allocation27 + $0x8] sm:$0xf]
        %v3607 = vld [vmem:[#allocation27 + $0xc] sm:$0xf]
        %v3608 = vld [vmem:[#allocation27 + $0x10] sm:$0xf]
        %v3609 = vld [vmem:[#allocation27 + $0x14] sm:$0xf]
        %v3610 = vld [vmem:[#allocation27 + $0x18] sm:$0xf]
        %v3611 = vld [vmem:[#allocation27 + $0x1c] sm:$0xf]
        %s3612 = scalar_lea.vmem [#allocation27], 32
        %v3613 = vld [vmem:[%s3612] sm:$0xf]
        %v3614 = vld [vmem:[%s3612 + $0x4] sm:$0xf]
        %v3615 = vld [vmem:[%s3612 + $0x8] sm:$0xf]
        %v3616 = vld [vmem:[%s3612 + $0xc] sm:$0xf]
        %v3617 = vld [vmem:[%s3612 + $0x10] sm:$0xf]
        %v3618 = vld [vmem:[%s3612 + $0x14] sm:$0xf]
        %v3619 = vld [vmem:[%s3612 + $0x18] sm:$0xf]
        %v3620 = vld [vmem:[%s3612 + $0x1c] sm:$0xf]
        %v3629 = vunpack.c.l.b16 %v3613
        %v3630 = vunpack.c.l.b16 %v3614
        %v3631 = vunpack.c.l.b16 %v3615
        %v3632 = vunpack.c.l.b16 %v3616
        %v3633 = vunpack.c.l.b16 %v3617
        %v3634 = vunpack.c.l.b16 %v3618
        %v3635 = vunpack.c.l.b16 %v3619
        %v3636 = vunpack.c.l.b16 %v3620
        %v3637 = vpack.c.b16 %v3630, %v3629
        %v3638 = vpack.c.b16 %v3632, %v3631
        %v3639 = vpack.c.b16 %v3634, %v3633
        %v3640 = vpack.c.b16 %v3636, %v3635
        %vm3645 = vcmask 523264
        %v3647 = vsel %vm3645, %v3577, 0
        %3649 = vmatprep.subr.bf16.mxu0 0
        %3650 = vmatpush1.bf16.msra.mxu0 %v3637
        %3651 = vmatprep.subr.bf16.mxu0 0
        %3652 = vmatpush1.bf16.msra.mxu0 %v3638
        %3653 = vmatprep.subr.bf16.mxu0 0
        %3654 = vmatpush1.bf16.msra.mxu0 %v3639
        %3655 = vmatprep.subr.bf16.mxu0 0
        %3656 = vmatpush1.bf16.msra.mxu0 %v3640
        %3657 = vmatprep.subr.bf16.mxu0 0
        %3658 = vmatpush1.bf16.msra.mxu0 0
        %3659 = vmatprep.subr.bf16.mxu0 0
        %3660 = vmatpush1.bf16.msra.mxu0 0
        %3661 = vmatprep.subr.bf16.mxu0 0
        %3662 = vmatpush1.bf16.msra.mxu0 0
        %3663 = vmatprep.subr.bf16.mxu0 0
        %3664 = vmatpush1.bf16.msra.mxu0 0
        %3665 = vmatprep.subr.bf16.mxu0 0
        %3666 = vmatpush1.bf16.msra.mxu0 0
        %3667 = vmatprep.subr.bf16.mxu0 0
        %3668 = vmatpush1.bf16.msra.mxu0 0
        %3669 = vmatprep.subr.bf16.mxu0 0
        %3670 = vmatpush1.bf16.msra.mxu0 0
        %3671 = vmatprep.subr.bf16.mxu0 0
        %3672 = vmatpush1.bf16.msra.mxu0 0
        %3673 = vmatprep.subr.bf16.mxu0 0
        %3674 = vmatpush1.bf16.msra.mxu0 0
        %3675 = vmatprep.subr.bf16.mxu0 0
        %3676 = vmatpush1.bf16.msra.mxu0 0
        %3677 = vmatprep.subr.bf16.mxu0 0
        %3678 = vmatpush1.bf16.msra.mxu0 0
        %3679 = vmatprep.subr.bf16.mxu0 0
        %3680 = vmatpush1.bf16.msra.mxu0 0
        %3681 = vmatprep.mubr.bf16.mxu0 0
        %3682 = vmatmul.mubr.bf16.gmra.mrb[0].mxu0 %v3647
        %v3683 = vpop.f32.mrb[0].mxu0
        %v3684 = vadd.f32 0.0, %v3683
        %v3685 = vpop.f32.mrb[0].mxu0
        %v3686 = vpop.f32.mrb[0].mxu0
        %v3687 = vadd.f32 0.0, %v3686
        %v3688 = vpop.f32.mrb[0].mxu0
        %3689 = vdwg.mxu0
        %v3693 = vunpack.c.l.b16 %v3599
        %v3694 = vunpack.c.l.b16 %v3600
        %v3695 = vunpack.c.l.b16 %v3601
        %v3696 = vpack.c.b16 %v3694, %v3693
        %v3697 = vpack.c.b16 %v3695, %v3695
        %vm3698 = vsmask.f32 7424
        %v3700 = vshrl.u32 %v3696, 16
        %v3702 = vshll.u32 %v3696, 16
        %v3704 = vrot.slane %v3702, 1
        %v3705 = vor.u32 %v3700, %v3704
        %v3707 = vshll.u32 %v3697, 16
        %v3709 = vrot.slane %v3707, 1
        %v3710 = vsel %vm3698, %v3705, %v3709
        %v3719 = vunpack.c.l.b16 %v3604
        %v3720 = vunpack.c.l.b16 %v3605
        %v3721 = vunpack.c.l.b16 %v3606
        %v3722 = vunpack.c.l.b16 %v3607
        %v3723 = vunpack.c.l.b16 %v3608
        %v3724 = vunpack.c.l.b16 %v3609
        %v3725 = vunpack.c.l.b16 %v3610
        %v3726 = vunpack.c.l.b16 %v3611
        %v3727 = vpack.c.b16 %v3720, %v3719
        %v3728 = vpack.c.b16 %v3722, %v3721
        %v3729 = vpack.c.b16 %v3724, %v3723
        %v3730 = vpack.c.b16 %v3726, %v3725
        %v3736 = vsel %vm3645, %v3710, 0
        %3738 = vmatprep.subr.bf16.mxu0 0
        %3739 = vmatpush1.bf16.msra.mxu0 %v3727
        %3740 = vmatprep.subr.bf16.mxu0 0
        %3741 = vmatpush1.bf16.msra.mxu0 %v3728
        %3742 = vmatprep.subr.bf16.mxu0 0
        %3743 = vmatpush1.bf16.msra.mxu0 %v3729
        %3744 = vmatprep.subr.bf16.mxu0 0
        %3745 = vmatpush1.bf16.msra.mxu0 %v3730
        %3746 = vmatprep.subr.bf16.mxu0 0
        %3747 = vmatpush1.bf16.msra.mxu0 0
        %3748 = vmatprep.subr.bf16.mxu0 0
        %3749 = vmatpush1.bf16.msra.mxu0 0
        %3750 = vmatprep.subr.bf16.mxu0 0
        %3751 = vmatpush1.bf16.msra.mxu0 0
        %3752 = vmatprep.subr.bf16.mxu0 0
        %3753 = vmatpush1.bf16.msra.mxu0 0
        %3754 = vmatprep.subr.bf16.mxu0 0
        %3755 = vmatpush1.bf16.msra.mxu0 0
        %3756 = vmatprep.subr.bf16.mxu0 0
        %3757 = vmatpush1.bf16.msra.mxu0 0
        %3758 = vmatprep.subr.bf16.mxu0 0
        %3759 = vmatpush1.bf16.msra.mxu0 0
        %3760 = vmatprep.subr.bf16.mxu0 0
        %3761 = vmatpush1.bf16.msra.mxu0 0
        %3762 = vmatprep.subr.bf16.mxu0 0
        %3763 = vmatpush1.bf16.msra.mxu0 0
        %3764 = vmatprep.subr.bf16.mxu0 0
        %3765 = vmatpush1.bf16.msra.mxu0 0
        %3766 = vmatprep.subr.bf16.mxu0 0
        %3767 = vmatpush1.bf16.msra.mxu0 0
        %3768 = vmatprep.subr.bf16.mxu0 0
        %3769 = vmatpush1.bf16.msra.mxu0 0
        %3770 = vmatprep.mubr.bf16.mxu0 0
        %3771 = vmatmul.mubr.bf16.gmra.mrb[0].mxu0 %v3736
        %v3772 = vpop.f32.mrb[0].mxu0
        %v3773 = vadd.f32 %v3684, %v3772
        %v3774 = vpop.f32.mrb[0].mxu0
        %v3775 = vpop.f32.mrb[0].mxu0
        %v3776 = vadd.f32 %v3687, %v3775
        %v3777 = vpop.f32.mrb[0].mxu0
        %3778 = vdwg.mxu0
        %s3779 = scalar_lea.vmem [#allocation27], 64
        %v3780 = vld [vmem:[%s3779] sm:$0xf]
        %v3781 = vld [vmem:[%s3779 + $0x4] sm:$0xf]
        %v3782 = vld [vmem:[%s3779 + $0x8] sm:$0xf]
        %v3783 = vld [vmem:[%s3779 + $0xc] sm:$0xf]
        %v3784 = vld [vmem:[%s3779 + $0x10] sm:$0xf]
        %v3785 = vld [vmem:[%s3779 + $0x14] sm:$0xf]
        %v3786 = vld [vmem:[%s3779 + $0x18] sm:$0xf]
        %v3787 = vld [vmem:[%s3779 + $0x1c] sm:$0xf]
        %v3790 = vunpack.c.l.b16 %v3602
        %v3791 = vunpack.c.l.b16 %v3603
        %v3792 = vpack.c.b16 %v3694, %v3790
        %v3793 = vpack.c.b16 %v3791, %v3791
        %vm3794 = vsmask.f32 6400
        %v3796 = vshrl.u32 %v3792, 16
        %v3798 = vrot.slane %v3796, 1
        %v3799 = vshll.u32 %v3792, 16
        %v3801 = vrot.slane %v3799, 2
        %v3802 = vor.u32 %v3798, %v3801
        %v3804 = vshrl.u32 %v3793, 16
        %v3806 = vrot.slane %v3804, 1
        %v3807 = vshll.u32 %v3793, 16
        %v3809 = vrot.slane %v3807, 2
        %v3810 = vor.u32 %v3806, %v3809
        %v3811 = vsel %vm3794, %v3802, %v3810
        %v3820 = vunpack.c.l.b16 %v3780
        %v3821 = vunpack.c.l.b16 %v3781
        %v3822 = vunpack.c.l.b16 %v3782
        %v3823 = vunpack.c.l.b16 %v3783
        %v3824 = vunpack.c.l.b16 %v3784
        %v3825 = vunpack.c.l.b16 %v3785
        %v3826 = vunpack.c.l.b16 %v3786
        %v3827 = vunpack.c.l.b16 %v3787
        %v3828 = vpack.c.b16 %v3821, %v3820
        %v3829 = vpack.c.b16 %v3823, %v3822
        %v3830 = vpack.c.b16 %v3825, %v3824
        %v3831 = vpack.c.b16 %v3827, %v3826
        %v3837 = vsel %vm3645, %v3811, 0
        %3839 = vmatprep.subr.bf16.mxu0 0
        %3840 = vmatpush1.bf16.msra.mxu0 %v3828
        %3841 = vmatprep.subr.bf16.mxu0 0
        %3842 = vmatpush1.bf16.msra.mxu0 %v3829
        %3843 = vmatprep.subr.bf16.mxu0 0
        %3844 = vmatpush1.bf16.msra.mxu0 %v3830
        %3845 = vmatprep.subr.bf16.mxu0 0
        %3846 = vmatpush1.bf16.msra.mxu0 %v3831
        %3847 = vmatprep.subr.bf16.mxu0 0
        %3848 = vmatpush1.bf16.msra.mxu0 0
        %3849 = vmatprep.subr.bf16.mxu0 0
        %3850 = vmatpush1.bf16.msra.mxu0 0
        %3851 = vmatprep.subr.bf16.mxu0 0
        %3852 = vmatpush1.bf16.msra.mxu0 0
        %3853 = vmatprep.subr.bf16.mxu0 0
        %3854 = vmatpush1.bf16.msra.mxu0 0
        %3855 = vmatprep.subr.bf16.mxu0 0
        %3856 = vmatpush1.bf16.msra.mxu0 0
        %3857 = vmatprep.subr.bf16.mxu0 0
        %3858 = vmatpush1.bf16.msra.mxu0 0
        %3859 = vmatprep.subr.bf16.mxu0 0
        %3860 = vmatpush1.bf16.msra.mxu0 0
        %3861 = vmatprep.subr.bf16.mxu0 0
        %3862 = vmatpush1.bf16.msra.mxu0 0
        %3863 = vmatprep.subr.bf16.mxu0 0
        %3864 = vmatpush1.bf16.msra.mxu0 0
        %3865 = vmatprep.subr.bf16.mxu0 0
        %3866 = vmatpush1.bf16.msra.mxu0 0
        %3867 = vmatprep.subr.bf16.mxu0 0
        %3868 = vmatpush1.bf16.msra.mxu0 0
        %3869 = vmatprep.subr.bf16.mxu0 0
        %3870 = vmatpush1.bf16.msra.mxu0 0
        %3871 = vmatprep.mubr.bf16.mxu0 0
        %3872 = vmatmul.mubr.bf16.gmra.mrb[0].mxu0 %v3837
        %v3873 = vpop.f32.mrb[0].mxu0
        %v3874 = vadd.f32 0.0, %v3873
        %v3875 = vpop.f32.mrb[0].mxu0
        %v3876 = vpop.f32.mrb[0].mxu0
        %v3877 = vadd.f32 0.0, %v3876
        %v3878 = vpop.f32.mrb[0].mxu0
        %3879 = vdwg.mxu0
        %v3880 = vadd.f32 %v3773, %v3874
        %v3881 = vadd.f32 %v3776, %v3877
        %v3882 = vld [vmem:[#allocation29] sm:$0x1]
        %v3884 = vlaneseq
        %v3885 = vshrl.u32 %v3884, 7
        %v3886 = vsub.s32 0, %v3885
        %v3887 = vrot.slane %v3882, %v3886
        %v3889 = vadd.f32 %v3880, %v3887
        %v3890 = vadd.f32 %v3881, %v3887
        %v3891 = vpack.c.bf16 %v3890, %v3889
        %v3892 = vtanh.bf16.pop %v3891
        %v3893 = vxor.u32 %v3891, 2147516416
        %v3895 = vmul.bf16 %v3893, 1069105081
        %v3896 = vpow.bf16.pop %v3895
        %v3897 = vadd.bf16 %v3896, 1065369472
        %v3898 = vrcp.bf16.pop %v3897
        %v3899 = vmul.bf16 1065369472, %v3898
        %3901 = vrot.lane.b32.xlu0 %v3899, 64
        %v3902 = vpop.permute.xlu0 %3901
        %v3904 = vmul.bf16 %v3892, %v3902
        %v3905 = vld [vmem:[#allocation30] sm:$0xf]
        %v3906 = vld [vmem:[#allocation30 + $0x4] sm:$0xf]
        %v3907 = vld [vmem:[#allocation30 + $0x8] sm:$0xf]
        %v3908 = vld [vmem:[#allocation30 + $0xc] sm:$0xf]
        %v3909 = vld [vmem:[#allocation30 + $0x10] sm:$0xf]
        %v3910 = vld [vmem:[#allocation30 + $0x14] sm:$0xf]
        %v3911 = vld [vmem:[#allocation30 + $0x18] sm:$0xf]
        %v3912 = vld [vmem:[#allocation30 + $0x1c] sm:$0xf]
        %v3913 = vld [vmem:[%s18] sm:$0x1]
        %v3915 = vlaneseq
        %v3916 = vshrl.u32 %v3915, 7
        %v3917 = vsub.s32 0, %v3916
        %v3918 = vrot.slane %v3913, %v3917
        %v3928 = vunpack.c.l.b16 %v3905
        %v3929 = vunpack.c.l.b16 %v3906
        %v3930 = vunpack.c.l.b16 %v3907
        %v3931 = vunpack.c.l.b16 %v3908
        %v3932 = vunpack.c.l.b16 %v3909
        %v3933 = vunpack.c.l.b16 %v3910
        %v3934 = vunpack.c.l.b16 %v3911
        %v3935 = vunpack.c.l.b16 %v3912
        %v3936 = vpack.c.b16 %v3929, %v3928
        %v3937 = vpack.c.b16 %v3931, %v3930
        %v3938 = vpack.c.b16 %v3933, %v3932
        %v3939 = vpack.c.b16 %v3935, %v3934
        %v3945 = vsel %vm3645, %v3904, 0
        %3947 = vmatprep.subr.bf16.mxu0 0
        %3948 = vmatpush1.bf16.msra.mxu0 %v3936
        %3949 = vmatprep.subr.bf16.mxu0 0
        %3950 = vmatpush1.bf16.msra.mxu0 %v3937
        %3951 = vmatprep.subr.bf16.mxu0 0
        %3952 = vmatpush1.bf16.msra.mxu0 %v3938
        %3953 = vmatprep.subr.bf16.mxu0 0
        %3954 = vmatpush1.bf16.msra.mxu0 %v3939
        %3955 = vmatprep.subr.bf16.mxu0 0
        %3956 = vmatpush1.bf16.msra.mxu0 0
        %3957 = vmatprep.subr.bf16.mxu0 0
        %3958 = vmatpush1.bf16.msra.mxu0 0
        %3959 = vmatprep.subr.bf16.mxu0 0
        %3960 = vmatpush1.bf16.msra.mxu0 0
        %3961 = vmatprep.subr.bf16.mxu0 0
        %3962 = vmatpush1.bf16.msra.mxu0 0
        %3963 = vmatprep.subr.bf16.mxu0 0
        %3964 = vmatpush1.bf16.msra.mxu0 0
        %3965 = vmatprep.subr.bf16.mxu0 0
        %3966 = vmatpush1.bf16.msra.mxu0 0
        %3967 = vmatprep.subr.bf16.mxu0 0
        %3968 = vmatpush1.bf16.msra.mxu0 0
        %3969 = vmatprep.subr.bf16.mxu0 0
        %3970 = vmatpush1.bf16.msra.mxu0 0
        %3971 = vmatprep.subr.bf16.mxu0 0
        %3972 = vmatpush1.bf16.msra.mxu0 0
        %3973 = vmatprep.subr.bf16.mxu0 0
        %3974 = vmatpush1.bf16.msra.mxu0 0
        %3975 = vmatprep.subr.bf16.mxu0 0
        %3976 = vmatpush1.bf16.msra.mxu0 0
        %3977 = vmatprep.subr.bf16.mxu0 0
        %3978 = vmatpush1.bf16.msra.mxu0 0
        %3979 = vmatprep.mubr.bf16.mxu0 0
        %3980 = vmatmul.mubr.bf16.gmra.mrb[0].mxu0 %v3945
        %v3981 = vpop.f32.mrb[0].mxu0
        %v3982 = vadd.f32 %v3918, %v3981
        %v3983 = vpop.f32.mrb[0].mxu0
        %v3984 = vpop.f32.mrb[0].mxu0
        %v3985 = vadd.f32 %v3918, %v3984
        %v3986 = vpop.f32.mrb[0].mxu0
        %3987 = vdwg.mxu0
        %v3988 = vadd.f32 %v3571, %v3982
        %v3989 = vadd.f32 %v3574, %v3985
        %v3990 = vpack.c.bf16 %v3985, %v3982
        %v3992 = vunpack.c.l.b16 %v3990
        %v3993 = vunpack.c.h.b16 %v3990
        %v3994 = vpack.c.b16 %v3992, %v3992
        %v3995 = vpack.c.b16 %v3993, %v3993
        %v3996 = vrot.slane %v3994, 7
        %v3997 = vrot.slane %v3996, 4
        %v3998 = vrot.slane %v3995, 7
        %v3999 = vsel %vm3585, %v3997, %v3998
        %v4000 = vrot.slane %v3998, 4
        %4004 = vst.msk [vmem:[#allocation4] sm:$0xe] %vm3594, %v3996
        %4005 = vst.msk [vmem:[#allocation4 + $0x4] sm:$0xf] %vm3596, %v3999
        %4006 = vst.msk [vmem:[#allocation4 + $0x8] sm:$0x1] %vm3506, %v4000
        %v4007 = vld [vmem:[#allocation4] sm:$0xf]
        %v4008 = vld [vmem:[#allocation4 + $0x4] sm:$0xf]
        %v4009 = vld [vmem:[#allocation4] sm:$0xc]
        %v4010 = vld [vmem:[#allocation4 + $0x8] sm:$0x3]
        %s4011 = scalar_lea.vmem [#allocation27], 96
        %v4012 = vld [vmem:[%s4011] sm:$0xf]
        %v4013 = vld [vmem:[%s4011 + $0x4] sm:$0xf]
        %v4014 = vld [vmem:[%s4011 + $0x8] sm:$0xf]
        %v4015 = vld [vmem:[%s4011 + $0xc] sm:$0xf]
        %v4016 = vld [vmem:[%s4011 + $0x10] sm:$0xf]
        %v4017 = vld [vmem:[%s4011 + $0x14] sm:$0xf]
        %v4018 = vld [vmem:[%s4011 + $0x18] sm:$0xf]
        %v4019 = vld [vmem:[%s4011 + $0x1c] sm:$0xf]
        %s4020 = scalar_lea.vmem [#allocation27], 128
        %v4021 = vld [vmem:[%s4020] sm:$0xf]
        %v4022 = vld [vmem:[%s4020 + $0x4] sm:$0xf]
        %v4023 = vld [vmem:[%s4020 + $0x8] sm:$0xf]
        %v4024 = vld [vmem:[%s4020 + $0xc] sm:$0xf]
        %v4025 = vld [vmem:[%s4020 + $0x10] sm:$0xf]
        %v4026 = vld [vmem:[%s4020 + $0x14] sm:$0xf]
        %v4027 = vld [vmem:[%s4020 + $0x18] sm:$0xf]
        %v4028 = vld [vmem:[%s4020 + $0x1c] sm:$0xf]
        %v4037 = vunpack.c.l.b16 %v4021
        %v4038 = vunpack.c.l.b16 %v4022
        %v4039 = vunpack.c.l.b16 %v4023
        %v4040 = vunpack.c.l.b16 %v4024
        %v4041 = vunpack.c.l.b16 %v4025
        %v4042 = vunpack.c.l.b16 %v4026
        %v4043 = vunpack.c.l.b16 %v4027
        %v4044 = vunpack.c.l.b16 %v4028
        %v4045 = vpack.c.b16 %v4038, %v4037
        %v4046 = vpack.c.b16 %v4040, %v4039
        %v4047 = vpack.c.b16 %v4042, %v4041
        %v4048 = vpack.c.b16 %v4044, %v4043
        %v4054 = vsel %vm3645, %v3990, 0
        %4056 = vmatprep.subr.bf16.mxu0 0
        %4057 = vmatpush1.bf16.msra.mxu0 %v4045
        %4058 = vmatprep.subr.bf16.mxu0 0
        %4059 = vmatpush1.bf16.msra.mxu0 %v4046
        %4060 = vmatprep.subr.bf16.mxu0 0
        %4061 = vmatpush1.bf16.msra.mxu0 %v4047
        %4062 = vmatprep.subr.bf16.mxu0 0
        %4063 = vmatpush1.bf16.msra.mxu0 %v4048
        %4064 = vmatprep.subr.bf16.mxu0 0
        %4065 = vmatpush1.bf16.msra.mxu0 0
        %4066 = vmatprep.subr.bf16.mxu0 0
        %4067 = vmatpush1.bf16.msra.mxu0 0
        %4068 = vmatprep.subr.bf16.mxu0 0
        %4069 = vmatpush1.bf16.msra.mxu0 0
        %4070 = vmatprep.subr.bf16.mxu0 0
        %4071 = vmatpush1.bf16.msra.mxu0 0
        %4072 = vmatprep.subr.bf16.mxu0 0
        %4073 = vmatpush1.bf16.msra.mxu0 0
        %4074 = vmatprep.subr.bf16.mxu0 0
        %4075 = vmatpush1.bf16.msra.mxu0 0
        %4076 = vmatprep.subr.bf16.mxu0 0
        %4077 = vmatpush1.bf16.msra.mxu0 0
        %4078 = vmatprep.subr.bf16.mxu0 0
        %4079 = vmatpush1.bf16.msra.mxu0 0
        %4080 = vmatprep.subr.bf16.mxu0 0
        %4081 = vmatpush1.bf16.msra.mxu0 0
        %4082 = vmatprep.subr.bf16.mxu0 0
        %4083 = vmatpush1.bf16.msra.mxu0 0
        %4084 = vmatprep.subr.bf16.mxu0 0
        %4085 = vmatpush1.bf16.msra.mxu0 0
        %4086 = vmatprep.subr.bf16.mxu0 0
        %4087 = vmatpush1.bf16.msra.mxu0 0
        %4088 = vmatprep.mubr.bf16.mxu0 0
        %4089 = vmatmul.mubr.bf16.gmra.mrb[0].mxu0 %v4054
        %v4090 = vpop.f32.mrb[0].mxu0
        %v4091 = vadd.f32 0.0, %v4090
        %v4092 = vpop.f32.mrb[0].mxu0
        %v4093 = vpop.f32.mrb[0].mxu0
        %v4094 = vadd.f32 0.0, %v4093
        %v4095 = vpop.f32.mrb[0].mxu0
        %4096 = vdwg.mxu0
        %v4099 = vunpack.c.l.b16 %v4007
        %v4100 = vunpack.c.l.b16 %v4008
        %v4101 = vpack.c.b16 %v4100, %v4099
        %v4110 = vunpack.c.l.b16 %v4012
        %v4111 = vunpack.c.l.b16 %v4013
        %v4112 = vunpack.c.l.b16 %v4014
        %v4113 = vunpack.c.l.b16 %v4015
        %v4114 = vunpack.c.l.b16 %v4016
        %v4115 = vunpack.c.l.b16 %v4017
        %v4116 = vunpack.c.l.b16 %v4018
        %v4117 = vunpack.c.l.b16 %v4019
        %v4118 = vpack.c.b16 %v4111, %v4110
        %v4119 = vpack.c.b16 %v4113, %v4112
        %v4120 = vpack.c.b16 %v4115, %v4114
        %v4121 = vpack.c.b16 %v4117, %v4116
        %v4127 = vsel %vm3645, %v4101, 0
        %4129 = vmatprep.subr.bf16.mxu0 0
        %4130 = vmatpush1.bf16.msra.mxu0 %v4118
        %4131 = vmatprep.subr.bf16.mxu0 0
        %4132 = vmatpush1.bf16.msra.mxu0 %v4119
        %4133 = vmatprep.subr.bf16.mxu0 0
        %4134 = vmatpush1.bf16.msra.mxu0 %v4120
        %4135 = vmatprep.subr.bf16.mxu0 0
        %4136 = vmatpush1.bf16.msra.mxu0 %v4121
        %4137 = vmatprep.subr.bf16.mxu0 0
        %4138 = vmatpush1.bf16.msra.mxu0 0
        %4139 = vmatprep.subr.bf16.mxu0 0
        %4140 = vmatpush1.bf16.msra.mxu0 0
        %4141 = vmatprep.subr.bf16.mxu0 0
        %4142 = vmatpush1.bf16.msra.mxu0 0
        %4143 = vmatprep.subr.bf16.mxu0 0
        %4144 = vmatpush1.bf16.msra.mxu0 0
        %4145 = vmatprep.subr.bf16.mxu0 0
        %4146 = vmatpush1.bf16.msra.mxu0 0
        %4147 = vmatprep.subr.bf16.mxu0 0
        %4148 = vmatpush1.bf16.msra.mxu0 0
        %4149 = vmatprep.subr.bf16.mxu0 0
        %4150 = vmatpush1.bf16.msra.mxu0 0
        %4151 = vmatprep.subr.bf16.mxu0 0
        %4152 = vmatpush1.bf16.msra.mxu0 0
        %4153 = vmatprep.subr.bf16.mxu0 0
        %4154 = vmatpush1.bf16.msra.mxu0 0
        %4155 = vmatprep.subr.bf16.mxu0 0
        %4156 = vmatpush1.bf16.msra.mxu0 0
        %4157 = vmatprep.subr.bf16.mxu0 0
        %4158 = vmatpush1.bf16.msra.mxu0 0
        %4159 = vmatprep.subr.bf16.mxu0 0
        %4160 = vmatpush1.bf16.msra.mxu0 0
        %4161 = vmatprep.mubr.bf16.mxu0 0
        %4162 = vmatmul.mubr.bf16.gmra.mrb[0].mxu0 %v4127
        %v4163 = vpop.f32.mrb[0].mxu0
        %v4164 = vadd.f32 %v4091, %v4163
        %v4165 = vpop.f32.mrb[0].mxu0
        %v4166 = vpop.f32.mrb[0].mxu0
        %v4167 = vadd.f32 %v4094, %v4166
        %v4168 = vpop.f32.mrb[0].mxu0
        %4169 = vdwg.mxu0
        %s4170 = scalar_lea.vmem [#allocation27], 160
        %v4171 = vld [vmem:[%s4170] sm:$0xf]
        %v4172 = vld [vmem:[%s4170 + $0x4] sm:$0xf]
        %v4173 = vld [vmem:[%s4170 + $0x8] sm:$0xf]
        %v4174 = vld [vmem:[%s4170 + $0xc] sm:$0xf]
        %v4175 = vld [vmem:[%s4170 + $0x10] sm:$0xf]
        %v4176 = vld [vmem:[%s4170 + $0x14] sm:$0xf]
        %v4177 = vld [vmem:[%s4170 + $0x18] sm:$0xf]
        %v4178 = vld [vmem:[%s4170 + $0x1c] sm:$0xf]
        %v4181 = vunpack.c.l.b16 %v4009
        %v4182 = vunpack.c.l.b16 %v4010
        %v4183 = vpack.c.b16 %v4100, %v4181
        %v4184 = vpack.c.b16 %v4182, %v4182
        %v4185 = vrot.slane %v4183, 2
        %v4186 = vrot.slane %v4184, 2
        %v4187 = vsel %vm1774, %v4185, %v4186
        %v4196 = vunpack.c.l.b16 %v4171
        %v4197 = vunpack.c.l.b16 %v4172
        %v4198 = vunpack.c.l.b16 %v4173
        %v4199 = vunpack.c.l.b16 %v4174
        %v4200 = vunpack.c.l.b16 %v4175
        %v4201 = vunpack.c.l.b16 %v4176
        %v4202 = vunpack.c.l.b16 %v4177
        %v4203 = vunpack.c.l.b16 %v4178
        %v4204 = vpack.c.b16 %v4197, %v4196
        %v4205 = vpack.c.b16 %v4199, %v4198
        %v4206 = vpack.c.b16 %v4201, %v4200
        %v4207 = vpack.c.b16 %v4203, %v4202
        %v4213 = vsel %vm3645, %v4187, 0
        %4215 = vmatprep.subr.bf16.mxu0 0
        %4216 = vmatpush1.bf16.msra.mxu0 %v4204
        %4217 = vmatprep.subr.bf16.mxu0 0
        %4218 = vmatpush1.bf16.msra.mxu0 %v4205
        %4219 = vmatprep.subr.bf16.mxu0 0
        %4220 = vmatpush1.bf16.msra.mxu0 %v4206
        %4221 = vmatprep.subr.bf16.mxu0 0
        %4222 = vmatpush1.bf16.msra.mxu0 %v4207
        %4223 = vmatprep.subr.bf16.mxu0 0
        %4224 = vmatpush1.bf16.msra.mxu0 0
        %4225 = vmatprep.subr.bf16.mxu0 0
        %4226 = vmatpush1.bf16.msra.mxu0 0
        %4227 = vmatprep.subr.bf16.mxu0 0
        %4228 = vmatpush1.bf16.msra.mxu0 0
        %4229 = vmatprep.subr.bf16.mxu0 0
        %4230 = vmatpush1.bf16.msra.mxu0 0
        %4231 = vmatprep.subr.bf16.mxu0 0
        %4232 = vmatpush1.bf16.msra.mxu0 0
        %4233 = vmatprep.subr.bf16.mxu0 0
        %4234 = vmatpush1.bf16.msra.mxu0 0
        %4235 = vmatprep.subr.bf16.mxu0 0
        %4236 = vmatpush1.bf16.msra.mxu0 0
        %4237 = vmatprep.subr.bf16.mxu0 0
        %4238 = vmatpush1.bf16.msra.mxu0 0
        %4239 = vmatprep.subr.bf16.mxu0 0
        %4240 = vmatpush1.bf16.msra.mxu0 0
        %4241 = vmatprep.subr.bf16.mxu0 0
        %4242 = vmatpush1.bf16.msra.mxu0 0
        %4243 = vmatprep.subr.bf16.mxu0 0
        %4244 = vmatpush1.bf16.msra.mxu0 0
        %4245 = vmatprep.subr.bf16.mxu0 0
        %4246 = vmatpush1.bf16.msra.mxu0 0
        %4247 = vmatprep.mubr.bf16.mxu0 0
        %4248 = vmatmul.mubr.bf16.gmra.mrb[0].mxu0 %v4213
        %v4249 = vpop.f32.mrb[0].mxu0
        %v4250 = vadd.f32 0.0, %v4249
        %v4251 = vpop.f32.mrb[0].mxu0
        %v4252 = vpop.f32.mrb[0].mxu0
        %v4253 = vadd.f32 0.0, %v4252
        %v4254 = vpop.f32.mrb[0].mxu0
        %4255 = vdwg.mxu0
        %v4256 = vadd.f32 %v4164, %v4250
        %v4257 = vadd.f32 %v4167, %v4253
        %s4258 = scalar_lea.vmem [#allocation29], 1
        %v4259 = vld [vmem:[%s4258] sm:$0x1]
        %v4261 = vlaneseq
        %v4262 = vshrl.u32 %v4261, 7
        %v4263 = vsub.s32 0, %v4262
        %v4264 = vrot.slane %v4259, %v4263
        %v4266 = vadd.f32 %v4256, %v4264
        %v4267 = vadd.f32 %v4257, %v4264
        %v4268 = vpack.c.bf16 %v4267, %v4266
        %v4269 = vtanh.bf16.pop %v4268
        %v4270 = vxor.u32 %v4268, 2147516416
        %v4272 = vmul.bf16 %v4270, 1069105081
        %v4273 = vpow.bf16.pop %v4272
        %v4274 = vadd.bf16 %v4273, 1065369472
        %v4275 = vrcp.bf16.pop %v4274
        %v4276 = vmul.bf16 1065369472, %v4275
        %4278 = vrot.lane.b32.xlu0 %v4276, 64
        %v4279 = vpop.permute.xlu0 %4278
        %v4281 = vmul.bf16 %v4269, %v4279
        %s4282 = scalar_lea.vmem [#allocation30], 32
        %v4283 = vld [vmem:[%s4282] sm:$0xf]
        %v4284 = vld [vmem:[%s4282 + $0x4] sm:$0xf]
        %v4285 = vld [vmem:[%s4282 + $0x8] sm:$0xf]
        %v4286 = vld [vmem:[%s4282 + $0xc] sm:$0xf]
        %v4287 = vld [vmem:[%s4282 + $0x10] sm:$0xf]
        %v4288 = vld [vmem:[%s4282 + $0x14] sm:$0xf]
        %v4289 = vld [vmem:[%s4282 + $0x18] sm:$0xf]
        %v4290 = vld [vmem:[%s4282 + $0x1c] sm:$0xf]
        %s4291 = scalar_lea.vmem %s18, 1
        %v4292 = vld [vmem:[%s4291] sm:$0x1]
        %v4294 = vlaneseq
        %v4295 = vshrl.u32 %v4294, 7
        %v4296 = vsub.s32 0, %v4295
        %v4297 = vrot.slane %v4292, %v4296
        %v4307 = vunpack.c.l.b16 %v4283
        %v4308 = vunpack.c.l.b16 %v4284
        %v4309 = vunpack.c.l.b16 %v4285
        %v4310 = vunpack.c.l.b16 %v4286
        %v4311 = vunpack.c.l.b16 %v4287
        %v4312 = vunpack.c.l.b16 %v4288
        %v4313 = vunpack.c.l.b16 %v4289
        %v4314 = vunpack.c.l.b16 %v4290
        %v4315 = vpack.c.b16 %v4308, %v4307
        %v4316 = vpack.c.b16 %v4310, %v4309
        %v4317 = vpack.c.b16 %v4312, %v4311
        %v4318 = vpack.c.b16 %v4314, %v4313
        %v4324 = vsel %vm3645, %v4281, 0
        %4326 = vmatprep.subr.bf16.mxu0 0
        %4327 = vmatpush1.bf16.msra.mxu0 %v4315
        %4328 = vmatprep.subr.bf16.mxu0 0
        %4329 = vmatpush1.bf16.msra.mxu0 %v4316
        %4330 = vmatprep.subr.bf16.mxu0 0
        %4331 = vmatpush1.bf16.msra.mxu0 %v4317
        %4332 = vmatprep.subr.bf16.mxu0 0
        %4333 = vmatpush1.bf16.msra.mxu0 %v4318
        %4334 = vmatprep.subr.bf16.mxu0 0
        %4335 = vmatpush1.bf16.msra.mxu0 0
        %4336 = vmatprep.subr.bf16.mxu0 0
        %4337 = vmatpush1.bf16.msra.mxu0 0
        %4338 = vmatprep.subr.bf16.mxu0 0
        %4339 = vmatpush1.bf16.msra.mxu0 0
        %4340 = vmatprep.subr.bf16.mxu0 0
        %4341 = vmatpush1.bf16.msra.mxu0 0
        %4342 = vmatprep.subr.bf16.mxu0 0
        %4343 = vmatpush1.bf16.msra.mxu0 0
        %4344 = vmatprep.subr.bf16.mxu0 0
        %4345 = vmatpush1.bf16.msra.mxu0 0
        %4346 = vmatprep.subr.bf16.mxu0 0
        %4347 = vmatpush1.bf16.msra.mxu0 0
        %4348 = vmatprep.subr.bf16.mxu0 0
        %4349 = vmatpush1.bf16.msra.mxu0 0
        %4350 = vmatprep.subr.bf16.mxu0 0
        %4351 = vmatpush1.bf16.msra.mxu0 0
        %4352 = vmatprep.subr.bf16.mxu0 0
        %4353 = vmatpush1.bf16.msra.mxu0 0
        %4354 = vmatprep.subr.bf16.mxu0 0
        %4355 = vmatpush1.bf16.msra.mxu0 0
        %4356 = vmatprep.subr.bf16.mxu0 0
        %4357 = vmatpush1.bf16.msra.mxu0 0
        %4358 = vmatprep.mubr.bf16.mxu0 0
        %4359 = vmatmul.mubr.bf16.gmra.mrb[0].mxu0 %v4324
        %v4360 = vpop.f32.mrb[0].mxu0
        %v4361 = vadd.f32 %v4297, %v4360
        %v4362 = vpop.f32.mrb[0].mxu0
        %v4363 = vpop.f32.mrb[0].mxu0
        %v4364 = vadd.f32 %v4297, %v4363
        %v4365 = vpop.f32.mrb[0].mxu0
        %4366 = vdwg.mxu0
        %v4367 = vadd.f32 %v3988, %v4361
        %v4368 = vadd.f32 %v3989, %v4364
        %v4369 = vpack.c.bf16 %v4368, %v4367
        %vm4370 = vsmask.f32 256
        %vm4371 = vmand %vm3583, %vm4370
        %v4372 = vld [vmem:[#allocation5] sm:$0x1]
        %v4373 = vsel %vm4371, 0, %v4372
        %4374 = vst [vmem:[#allocation5] sm:$0x1] %v4373
        %vm4375 = vsmask.f32 7938
        %vm4376 = vmand %vm3583, %vm4375
        %v4377 = vld [vmem:[#allocation5 + $0x8] sm:$0x1]
        %v4378 = vsel %vm4376, 0, %v4377
        %4379 = vst [vmem:[#allocation5 + $0x8] sm:$0x1] %v4378
        %v4380 = vld [vmem:[%s19] sm:$0xf]
        %v4381 = vld [vmem:[%s19 + $0x4] sm:$0xf]
        %v4382 = vld [vmem:[%s19 + $0x8] sm:$0xf]
        %v4383 = vld [vmem:[%s19 + $0xc] sm:$0xf]
        %v4384 = vld [vmem:[%s19 + $0x10] sm:$0xf]
        %v4385 = vld [vmem:[%s19 + $0x14] sm:$0xf]
        %v4386 = vld [vmem:[%s19 + $0x18] sm:$0xf]
        %v4387 = vld [vmem:[%s19 + $0x1c] sm:$0xf]
        %v4388 = vld [vmem:[%s20] sm:$0x1]
        %v4390 = vlaneseq
        %v4391 = vshrl.u32 %v4390, 7
        %v4392 = vsub.s32 0, %v4391
        %v4393 = vrot.slane %v4388, %v4392
        %v4403 = vunpack.c.l.b16 %v4380
        %v4404 = vunpack.c.l.b16 %v4381
        %v4405 = vunpack.c.l.b16 %v4382
        %v4406 = vunpack.c.l.b16 %v4383
        %v4407 = vunpack.c.l.b16 %v4384
        %v4408 = vunpack.c.l.b16 %v4385
        %v4409 = vunpack.c.l.b16 %v4386
        %v4410 = vunpack.c.l.b16 %v4387
        %v4411 = vpack.c.b16 %v4404, %v4403
        %v4412 = vpack.c.b16 %v4406, %v4405
        %v4413 = vpack.c.b16 %v4408, %v4407
        %v4414 = vpack.c.b16 %v4410, %v4409
        %v4420 = vsel %vm3645, %v4369, 0
        %4422 = vmatprep.subr.bf16.mxu0 0
        %4423 = vmatpush1.bf16.msra.mxu0 %v4411
        %4424 = vmatprep.subr.bf16.mxu0 0
        %4425 = vmatpush1.bf16.msra.mxu0 %v4412
        %4426 = vmatprep.subr.bf16.mxu0 0
        %4427 = vmatpush1.bf16.msra.mxu0 %v4413
        %4428 = vmatprep.subr.bf16.mxu0 0
        %4429 = vmatpush1.bf16.msra.mxu0 %v4414
        %4430 = vmatprep.subr.bf16.mxu0 0
        %4431 = vmatpush1.bf16.msra.mxu0 0
        %4432 = vmatprep.subr.bf16.mxu0 0
        %4433 = vmatpush1.bf16.msra.mxu0 0
        %4434 = vmatprep.subr.bf16.mxu0 0
        %4435 = vmatpush1.bf16.msra.mxu0 0
        %4436 = vmatprep.subr.bf16.mxu0 0
        %4437 = vmatpush1.bf16.msra.mxu0 0
        %4438 = vmatprep.subr.bf16.mxu0 0
        %4439 = vmatpush1.bf16.msra.mxu0 0
        %4440 = vmatprep.subr.bf16.mxu0 0
        %4441 = vmatpush1.bf16.msra.mxu0 0
        %4442 = vmatprep.subr.bf16.mxu0 0
        %4443 = vmatpush1.bf16.msra.mxu0 0
        %4444 = vmatprep.subr.bf16.mxu0 0
        %4445 = vmatpush1.bf16.msra.mxu0 0
        %4446 = vmatprep.subr.bf16.mxu0 0
        %4447 = vmatpush1.bf16.msra.mxu0 0
        %4448 = vmatprep.subr.bf16.mxu0 0
        %4449 = vmatpush1.bf16.msra.mxu0 0
        %4450 = vmatprep.subr.bf16.mxu0 0
        %4451 = vmatpush1.bf16.msra.mxu0 0
        %4452 = vmatprep.subr.bf16.mxu0 0
        %4453 = vmatpush1.bf16.msra.mxu0 0
        %4454 = vmatprep.mubr.bf16.mxu0 0
        %4455 = vmatmul.mubr.bf16.gmra.mrb[0].mxu0 %v4420
        %v4456 = vpop.f32.mrb[0].mxu0
        %v4457 = vadd.f32 %v4393, %v4456
        %v4458 = vpop.f32.mrb[0].mxu0
        %v4459 = vpop.f32.mrb[0].mxu0
        %v4460 = vadd.f32 %v4393, %v4459
        %v4461 = vpop.f32.mrb[0].mxu0
        %4462 = vdwg.mxu0
        %v4463 = vpack.c.bf16 %v4460, %v4457
        %v4465 = vunpack.c.l.b16 %v4463
        %v4466 = vunpack.c.h.b16 %v4463
        %v4467 = vpack.c.b16 %v4465, %v4465
        %v4468 = vpack.c.b16 %v4466, %v4466
        %vm4469 = vsmask.f32 4368
        %vm4470 = vmor %vm4370, %vm4469
        %v4472 = vshrl.u32 %v4467, 16
        %v4474 = vrot.slane %v4472, 7
        %v4475 = vshll.u32 %v4467, 16
        %v4477 = vor.u32 %v4474, %v4475
        %v4478 = vrot.slane %v4474, 4
        %v4480 = vshrl.u32 %v4468, 16
        %v4482 = vrot.slane %v4480, 7
        %v4483 = vshll.u32 %v4468, 16
        %v4485 = vor.u32 %v4482, %v4483
        %v4486 = vsel %vm4470, %v4478, %v4485
        %v4487 = vrot.slane %v4482, 4
        %vm4491 = vcmask 1043456
        %vm4492 = vmand %vm4491, %vm4375
        %v4493 = vld [vmem:[#allocation5] sm:$0xf]
        %v4494 = vsel %vm4492, %v4477, %v4493
        %4495 = vst [vmem:[#allocation5] sm:$0xf] %v4494
        %4496 = vst [vmem:[#allocation5 + $0x4] sm:$0xf] %v4486
        %v4497 = vld [vmem:[#allocation5 + $0x8] sm:$0x1]
        %v4498 = vsel %vm4371, %v4487, %v4497
        %4499 = vst [vmem:[#allocation5 + $0x8] sm:$0x1] %v4498
        %v4500 = vld [vmem:[#allocation5] sm:$0xf]
        %v4501 = vld [vmem:[#allocation5 + $0x4] sm:$0xf]
        %v4502 = vld [vmem:[#allocation5] sm:$0xe]
        %v4503 = vld [vmem:[#allocation5 + $0x8] sm:$0x1]
        %v4504 = vld [vmem:[#allocation32] sm:$0xff]
        %v4505 = vld [vmem:[#allocation32 + $0x8] sm:$0xff]
        %v4506 = vld [vmem:[#allocation32 + $0x10] sm:$0xff]
        %v4507 = vld [vmem:[#allocation32 + $0x18] sm:$0xff]
        %v4508 = vld [vmem:[#allocation32 + $0x20] sm:$0xff]
        %v4509 = vld [vmem:[#allocation32 + $0x28] sm:$0xff]
        %v4510 = vld [vmem:[#allocation32 + $0x30] sm:$0xff]
        %v4511 = vld [vmem:[#allocation32 + $0x38] sm:$0xff]
        %v4512 = vld [vmem:[#allocation32 + $0x40] sm:$0xff]
        %v4513 = vld [vmem:[#allocation32 + $0x48] sm:$0xff]
        %v4514 = vld [vmem:[#allocation32 + $0x50] sm:$0xff]
        %v4515 = vld [vmem:[#allocation32 + $0x58] sm:$0xff]
        %v4516 = vld [vmem:[#allocation32 + $0x60] sm:$0xff]
        %v4517 = vld [vmem:[#allocation32 + $0x68] sm:$0xff]
        %v4518 = vld [vmem:[#allocation32 + $0x70] sm:$0xff]
        %v4519 = vld [vmem:[#allocation32 + $0x78] sm:$0xff]
        %s4520 = scalar_lea.vmem [#allocation32], 128
        %v4521 = vld [vmem:[%s4520] sm:$0xff]
        %v4522 = vld [vmem:[%s4520 + $0x8] sm:$0xff]
        %v4523 = vld [vmem:[%s4520 + $0x10] sm:$0xff]
        %v4524 = vld [vmem:[%s4520 + $0x18] sm:$0xff]
        %v4525 = vld [vmem:[%s4520 + $0x20] sm:$0xff]
        %v4526 = vld [vmem:[%s4520 + $0x28] sm:$0xff]
        %v4527 = vld [vmem:[%s4520 + $0x30] sm:$0xff]
        %v4528 = vld [vmem:[%s4520 + $0x38] sm:$0xff]
        %v4529 = vld [vmem:[%s4520 + $0x40] sm:$0xff]
        %v4530 = vld [vmem:[%s4520 + $0x48] sm:$0xff]
        %v4531 = vld [vmem:[%s4520 + $0x50] sm:$0xff]
        %v4532 = vld [vmem:[%s4520 + $0x58] sm:$0xff]
        %v4533 = vld [vmem:[%s4520 + $0x60] sm:$0xff]
        %v4534 = vld [vmem:[%s4520 + $0x68] sm:$0xff]
        %v4535 = vld [vmem:[%s4520 + $0x70] sm:$0xff]
        %v4536 = vld [vmem:[%s4520 + $0x78] sm:$0xff]
        %v4553 = vunpack.c.l.b16 %v4521
        %v4554 = vunpack.c.h.b16 %v4521
        %v4555 = vunpack.c.l.b16 %v4522
        %v4556 = vunpack.c.h.b16 %v4522
        %v4557 = vunpack.c.l.b16 %v4523
        %v4558 = vunpack.c.h.b16 %v4523
        %v4559 = vunpack.c.l.b16 %v4524
        %v4560 = vunpack.c.h.b16 %v4524
        %v4561 = vunpack.c.l.b16 %v4525
        %v4562 = vunpack.c.h.b16 %v4525
        %v4563 = vunpack.c.l.b16 %v4526
        %v4564 = vunpack.c.h.b16 %v4526
        %v4565 = vunpack.c.l.b16 %v4527
        %v4566 = vunpack.c.h.b16 %v4527
        %v4567 = vunpack.c.l.b16 %v4528
        %v4568 = vunpack.c.h.b16 %v4528
        %v4569 = vunpack.c.l.b16 %v4529
        %v4570 = vunpack.c.h.b16 %v4529
        %v4571 = vunpack.c.l.b16 %v4530
        %v4572 = vunpack.c.h.b16 %v4530
        %v4573 = vunpack.c.l.b16 %v4531
        %v4574 = vunpack.c.h.b16 %v4531
        %v4575 = vunpack.c.l.b16 %v4532
        %v4576 = vunpack.c.h.b16 %v4532
        %v4577 = vunpack.c.l.b16 %v4533
        %v4578 = vunpack.c.h.b16 %v4533
        %v4579 = vunpack.c.l.b16 %v4534
        %v4580 = vunpack.c.h.b16 %v4534
        %v4581 = vunpack.c.l.b16 %v4535
        %v4582 = vunpack.c.h.b16 %v4535
        %v4583 = vunpack.c.l.b16 %v4536
        %v4584 = vunpack.c.h.b16 %v4536
        %v4585 = vpack.c.b16 %v4555, %v4553
        %v4586 = vpack.c.b16 %v4556, %v4554
        %v4587 = vpack.c.b16 %v4559, %v4557
        %v4588 = vpack.c.b16 %v4560, %v4558
        %v4589 = vpack.c.b16 %v4563, %v4561
        %v4590 = vpack.c.b16 %v4564, %v4562
        %v4591 = vpack.c.b16 %v4567, %v4565
        %v4592 = vpack.c.b16 %v4568, %v4566
        %v4593 = vpack.c.b16 %v4571, %v4569
        %v4594 = vpack.c.b16 %v4572, %v4570
        %v4595 = vpack.c.b16 %v4575, %v4573
        %v4596 = vpack.c.b16 %v4576, %v4574
        %v4597 = vpack.c.b16 %v4579, %v4577
        %v4598 = vpack.c.b16 %v4580, %v4578
        %v4599 = vpack.c.b16 %v4583, %v4581
        %v4600 = vpack.c.b16 %v4584, %v4582
        %4617 = vmatprep.subr.bf16.mxu0 %v4586
        %4618 = vmatpush1.bf16.msra.mxu0 %v4585
        %4619 = vmatprep.subr.bf16.mxu0 %v4588
        %4620 = vmatpush1.bf16.msra.mxu0 %v4587
        %4621 = vmatprep.subr.bf16.mxu0 %v4590
        %4622 = vmatpush1.bf16.msra.mxu0 %v4589
        %4623 = vmatprep.subr.bf16.mxu0 %v4592
        %4624 = vmatpush1.bf16.msra.mxu0 %v4591
        %4625 = vmatprep.subr.bf16.mxu0 %v4594
        %4626 = vmatpush1.bf16.msra.mxu0 %v4593
        %4627 = vmatprep.subr.bf16.mxu0 %v4596
        %4628 = vmatpush1.bf16.msra.mxu0 %v4595
        %4629 = vmatprep.subr.bf16.mxu0 %v4598
        %4630 = vmatpush1.bf16.msra.mxu0 %v4597
        %4631 = vmatprep.subr.bf16.mxu0 %v4600
        %4632 = vmatpush1.bf16.msra.mxu0 %v4599
        %4633 = vmatprep.subr.bf16.mxu0 0
        %4634 = vmatpush1.bf16.msra.mxu0 0
        %4635 = vmatprep.subr.bf16.mxu0 0
        %4636 = vmatpush1.bf16.msra.mxu0 0
        %4637 = vmatprep.subr.bf16.mxu0 0
        %4638 = vmatpush1.bf16.msra.mxu0 0
        %4639 = vmatprep.subr.bf16.mxu0 0
        %4640 = vmatpush1.bf16.msra.mxu0 0
        %4641 = vmatprep.subr.bf16.mxu0 0
        %4642 = vmatpush1.bf16.msra.mxu0 0
        %4643 = vmatprep.subr.bf16.mxu0 0
        %4644 = vmatpush1.bf16.msra.mxu0 0
        %4645 = vmatprep.subr.bf16.mxu0 0
        %4646 = vmatpush1.bf16.msra.mxu0 0
        %4647 = vmatprep.subr.bf16.mxu0 0
        %4648 = vmatpush1.bf16.msra.mxu0 0
        %4649 = vmatprep.mubr.bf16.mxu0 0
        %4650 = vmatmul.mubr.bf16.gmra.mrb[0].mxu0 %v4463
        %v4651 = vpop.f32.mrb[0].mxu0
        %v4652 = vadd.f32 0.0, %v4651
        %v4653 = vpop.f32.mrb[0].mxu0
        %v4654 = vadd.f32 0.0, %v4653
        %v4655 = vpop.f32.mrb[0].mxu0
        %v4656 = vadd.f32 0.0, %v4655
        %v4657 = vpop.f32.mrb[0].mxu0
        %v4658 = vadd.f32 0.0, %v4657
        %4659 = vdwg.mxu0
        %v4662 = vunpack.c.l.b16 %v4500
        %v4663 = vunpack.c.l.b16 %v4501
        %v4664 = vpack.c.b16 %v4663, %v4662
        %v4682 = vunpack.c.l.b16 %v4504
        %v4683 = vunpack.c.h.b16 %v4504
        %v4684 = vunpack.c.l.b16 %v4505
        %v4685 = vunpack.c.h.b16 %v4505
        %v4686 = vunpack.c.l.b16 %v4506
        %v4687 = vunpack.c.h.b16 %v4506
        %v4688 = vunpack.c.l.b16 %v4507
        %v4689 = vunpack.c.h.b16 %v4507
        %v4690 = vunpack.c.l.b16 %v4508
        %v4691 = vunpack.c.h.b16 %v4508
        %v4692 = vunpack.c.l.b16 %v4509
        %v4693 = vunpack.c.h.b16 %v4509
        %v4694 = vunpack.c.l.b16 %v4510
        %v4695 = vunpack.c.h.b16 %v4510
        %v4696 = vunpack.c.l.b16 %v4511
        %v4697 = vunpack.c.h.b16 %v4511
        %v4698 = vunpack.c.l.b16 %v4512
        %v4699 = vunpack.c.h.b16 %v4512
        %v4700 = vunpack.c.l.b16 %v4513
        %v4701 = vunpack.c.h.b16 %v4513
        %v4702 = vunpack.c.l.b16 %v4514
        %v4703 = vunpack.c.h.b16 %v4514
        %v4704 = vunpack.c.l.b16 %v4515
        %v4705 = vunpack.c.h.b16 %v4515
        %v4706 = vunpack.c.l.b16 %v4516
        %v4707 = vunpack.c.h.b16 %v4516
        %v4708 = vunpack.c.l.b16 %v4517
        %v4709 = vunpack.c.h.b16 %v4517
        %v4710 = vunpack.c.l.b16 %v4518
        %v4711 = vunpack.c.h.b16 %v4518
        %v4712 = vunpack.c.l.b16 %v4519
        %v4713 = vunpack.c.h.b16 %v4519
        %v4714 = vpack.c.b16 %v4684, %v4682
        %v4715 = vpack.c.b16 %v4685, %v4683
        %v4716 = vpack.c.b16 %v4688, %v4686
        %v4717 = vpack.c.b16 %v4689, %v4687
        %v4718 = vpack.c.b16 %v4692, %v4690
        %v4719 = vpack.c.b16 %v4693, %v4691
        %v4720 = vpack.c.b16 %v4696, %v4694
        %v4721 = vpack.c.b16 %v4697, %v4695
        %v4722 = vpack.c.b16 %v4700, %v4698
        %v4723 = vpack.c.b16 %v4701, %v4699
        %v4724 = vpack.c.b16 %v4704, %v4702
        %v4725 = vpack.c.b16 %v4705, %v4703
        %v4726 = vpack.c.b16 %v4708, %v4706
        %v4727 = vpack.c.b16 %v4709, %v4707
        %v4728 = vpack.c.b16 %v4712, %v4710
        %v4729 = vpack.c.b16 %v4713, %v4711
        %4746 = vmatprep.subr.bf16.mxu0 %v4715
        %4747 = vmatpush1.bf16.msra.mxu0 %v4714
        %4748 = vmatprep.subr.bf16.mxu0 %v4717
        %4749 = vmatpush1.bf16.msra.mxu0 %v4716
        %4750 = vmatprep.subr.bf16.mxu0 %v4719
        %4751 = vmatpush1.bf16.msra.mxu0 %v4718
        %4752 = vmatprep.subr.bf16.mxu0 %v4721
        %4753 = vmatpush1.bf16.msra.mxu0 %v4720
        %4754 = vmatprep.subr.bf16.mxu0 %v4723
        %4755 = vmatpush1.bf16.msra.mxu0 %v4722
        %4756 = vmatprep.subr.bf16.mxu0 %v4725
        %4757 = vmatpush1.bf16.msra.mxu0 %v4724
        %4758 = vmatprep.subr.bf16.mxu0 %v4727
        %4759 = vmatpush1.bf16.msra.mxu0 %v4726
        %4760 = vmatprep.subr.bf16.mxu0 %v4729
        %4761 = vmatpush1.bf16.msra.mxu0 %v4728
        %4762 = vmatprep.subr.bf16.mxu0 0
        %4763 = vmatpush1.bf16.msra.mxu0 0
        %4764 = vmatprep.subr.bf16.mxu0 0
        %4765 = vmatpush1.bf16.msra.mxu0 0
        %4766 = vmatprep.subr.bf16.mxu0 0
        %4767 = vmatpush1.bf16.msra.mxu0 0
        %4768 = vmatprep.subr.bf16.mxu0 0
        %4769 = vmatpush1.bf16.msra.mxu0 0
        %4770 = vmatprep.subr.bf16.mxu0 0
        %4771 = vmatpush1.bf16.msra.mxu0 0
        %4772 = vmatprep.subr.bf16.mxu0 0
        %4773 = vmatpush1.bf16.msra.mxu0 0
        %4774 = vmatprep.subr.bf16.mxu0 0
        %4775 = vmatpush1.bf16.msra.mxu0 0
        %4776 = vmatprep.subr.bf16.mxu0 0
        %4777 = vmatpush1.bf16.msra.mxu0 0
        %4778 = vmatprep.mubr.bf16.mxu0 0
        %4779 = vmatmul.mubr.bf16.gmra.mrb[0].mxu0 %v4664
        %v4780 = vpop.f32.mrb[0].mxu0
        %v4781 = vadd.f32 %v4652, %v4780
        %v4782 = vpop.f32.mrb[0].mxu0
        %v4783 = vadd.f32 %v4654, %v4782
        %v4784 = vpop.f32.mrb[0].mxu0
        %v4785 = vadd.f32 %v4656, %v4784
        %v4786 = vpop.f32.mrb[0].mxu0
        %v4787 = vadd.f32 %v4658, %v4786
        %4788 = vdwg.mxu0
        %s4789 = scalar_lea.vmem [#allocation32], 256
        %v4790 = vld [vmem:[%s4789] sm:$0xff]
        %v4791 = vld [vmem:[%s4789 + $0x8] sm:$0xff]
        %v4792 = vld [vmem:[%s4789 + $0x10] sm:$0xff]
        %v4793 = vld [vmem:[%s4789 + $0x18] sm:$0xff]
        %v4794 = vld [vmem:[%s4789 + $0x20] sm:$0xff]
        %v4795 = vld [vmem:[%s4789 + $0x28] sm:$0xff]
        %v4796 = vld [vmem:[%s4789 + $0x30] sm:$0xff]
        %v4797 = vld [vmem:[%s4789 + $0x38] sm:$0xff]
        %v4798 = vld [vmem:[%s4789 + $0x40] sm:$0xff]
        %v4799 = vld [vmem:[%s4789 + $0x48] sm:$0xff]
        %v4800 = vld [vmem:[%s4789 + $0x50] sm:$0xff]
        %v4801 = vld [vmem:[%s4789 + $0x58] sm:$0xff]
        %v4802 = vld [vmem:[%s4789 + $0x60] sm:$0xff]
        %v4803 = vld [vmem:[%s4789 + $0x68] sm:$0xff]
        %v4804 = vld [vmem:[%s4789 + $0x70] sm:$0xff]
        %v4805 = vld [vmem:[%s4789 + $0x78] sm:$0xff]
        %v4808 = vunpack.c.l.b16 %v4502
        %v4809 = vunpack.c.l.b16 %v4503
        %v4810 = vpack.c.b16 %v4663, %v4808
        %v4811 = vpack.c.b16 %v4809, %v4809
        %vm4812 = vcmask 1046528
        %v4813 = vrot.slane %v4810, 1
        %v4814 = vrot.slane %v4811, 1
        %v4815 = vsel %vm4812, %v4813, %v4814
        %v4833 = vunpack.c.l.b16 %v4790
        %v4834 = vunpack.c.h.b16 %v4790
        %v4835 = vunpack.c.l.b16 %v4791
        %v4836 = vunpack.c.h.b16 %v4791
        %v4837 = vunpack.c.l.b16 %v4792
        %v4838 = vunpack.c.h.b16 %v4792
        %v4839 = vunpack.c.l.b16 %v4793
        %v4840 = vunpack.c.h.b16 %v4793
        %v4841 = vunpack.c.l.b16 %v4794
        %v4842 = vunpack.c.h.b16 %v4794
        %v4843 = vunpack.c.l.b16 %v4795
        %v4844 = vunpack.c.h.b16 %v4795
        %v4845 = vunpack.c.l.b16 %v4796
        %v4846 = vunpack.c.h.b16 %v4796
        %v4847 = vunpack.c.l.b16 %v4797
        %v4848 = vunpack.c.h.b16 %v4797
        %v4849 = vunpack.c.l.b16 %v4798
        %v4850 = vunpack.c.h.b16 %v4798
        %v4851 = vunpack.c.l.b16 %v4799
        %v4852 = vunpack.c.h.b16 %v4799
        %v4853 = vunpack.c.l.b16 %v4800
        %v4854 = vunpack.c.h.b16 %v4800
        %v4855 = vunpack.c.l.b16 %v4801
        %v4856 = vunpack.c.h.b16 %v4801
        %v4857 = vunpack.c.l.b16 %v4802
        %v4858 = vunpack.c.h.b16 %v4802
        %v4859 = vunpack.c.l.b16 %v4803
        %v4860 = vunpack.c.h.b16 %v4803
        %v4861 = vunpack.c.l.b16 %v4804
        %v4862 = vunpack.c.h.b16 %v4804
        %v4863 = vunpack.c.l.b16 %v4805
        %v4864 = vunpack.c.h.b16 %v4805
        %v4865 = vpack.c.b16 %v4835, %v4833
        %v4866 = vpack.c.b16 %v4836, %v4834
        %v4867 = vpack.c.b16 %v4839, %v4837
        %v4868 = vpack.c.b16 %v4840, %v4838
        %v4869 = vpack.c.b16 %v4843, %v4841
        %v4870 = vpack.c.b16 %v4844, %v4842
        %v4871 = vpack.c.b16 %v4847, %v4845
        %v4872 = vpack.c.b16 %v4848, %v4846
        %v4873 = vpack.c.b16 %v4851, %v4849
        %v4874 = vpack.c.b16 %v4852, %v4850
        %v4875 = vpack.c.b16 %v4855, %v4853
        %v4876 = vpack.c.b16 %v4856, %v4854
        %v4877 = vpack.c.b16 %v4859, %v4857
        %v4878 = vpack.c.b16 %v4860, %v4858
        %v4879 = vpack.c.b16 %v4863, %v4861
        %v4880 = vpack.c.b16 %v4864, %v4862
        %4897 = vmatprep.subr.bf16.mxu0 %v4866
        %4898 = vmatpush1.bf16.msra.mxu0 %v4865
        %4899 = vmatprep.subr.bf16.mxu0 %v4868
        %4900 = vmatpush1.bf16.msra.mxu0 %v4867
        %4901 = vmatprep.subr.bf16.mxu0 %v4870
        %4902 = vmatpush1.bf16.msra.mxu0 %v4869
        %4903 = vmatprep.subr.bf16.mxu0 %v4872
        %4904 = vmatpush1.bf16.msra.mxu0 %v4871
        %4905 = vmatprep.subr.bf16.mxu0 %v4874
        %4906 = vmatpush1.bf16.msra.mxu0 %v4873
        %4907 = vmatprep.subr.bf16.mxu0 %v4876
        %4908 = vmatpush1.bf16.msra.mxu0 %v4875
        %4909 = vmatprep.subr.bf16.mxu0 %v4878
        %4910 = vmatpush1.bf16.msra.mxu0 %v4877
        %4911 = vmatprep.subr.bf16.mxu0 %v4880
        %4912 = vmatpush1.bf16.msra.mxu0 %v4879
        %4913 = vmatprep.subr.bf16.mxu0 0
        %4914 = vmatpush1.bf16.msra.mxu0 0
        %4915 = vmatprep.subr.bf16.mxu0 0
        %4916 = vmatpush1.bf16.msra.mxu0 0
        %4917 = vmatprep.subr.bf16.mxu0 0
        %4918 = vmatpush1.bf16.msra.mxu0 0
        %4919 = vmatprep.subr.bf16.mxu0 0
        %4920 = vmatpush1.bf16.msra.mxu0 0
        %4921 = vmatprep.subr.bf16.mxu0 0
        %4922 = vmatpush1.bf16.msra.mxu0 0
        %4923 = vmatprep.subr.bf16.mxu0 0
        %4924 = vmatpush1.bf16.msra.mxu0 0
        %4925 = vmatprep.subr.bf16.mxu0 0
        %4926 = vmatpush1.bf16.msra.mxu0 0
        %4927 = vmatprep.subr.bf16.mxu0 0
        %4928 = vmatpush1.bf16.msra.mxu0 0
        %4929 = vmatprep.mubr.bf16.mxu0 0
        %4930 = vmatmul.mubr.bf16.gmra.mrb[0].mxu0 %v4815
        %v4931 = vpop.f32.mrb[0].mxu0
        %v4932 = vadd.f32 0.0, %v4931
        %v4933 = vpop.f32.mrb[0].mxu0
        %v4934 = vadd.f32 0.0, %v4933
        %v4935 = vpop.f32.mrb[0].mxu0
        %v4936 = vadd.f32 0.0, %v4935
        %v4937 = vpop.f32.mrb[0].mxu0
        %v4938 = vadd.f32 0.0, %v4937
        %4939 = vdwg.mxu0
        %v4940 = vadd.f32 %v4781, %v4932
        %v4941 = vadd.f32 %v4783, %v4934
        %v4942 = vadd.f32 %v4785, %v4936
        %v4943 = vadd.f32 %v4787, %v4938
        %v4944 = vld [vmem:[%s22] sm:$0x3]
        %v4946 = vlaneseq
        %v4947 = vshrl.u32 %v4946, 7
        %v4948 = vsub.s32 0, %v4947
        %v4949 = vrot.slane %v4944, %v4948
        %v4950 = vlaneseq
        %v4951 = vshrl.u32 %v4950, 7
        %v4952 = vsub.s32 1, %v4951
        %v4953 = vrot.slane %v4944, %v4952
        %v4956 = vadd.f32 %v4940, %v4949
        %v4957 = vadd.f32 %v4941, %v4953
        %v4958 = vadd.f32 %v4942, %v4949
        %v4959 = vadd.f32 %v4943, %v4953
        %v4960 = vpack.c.bf16 %v4958, %v4956
        %v4961 = vtanh.bf16.pop %v4960
        %v4962 = vpack.c.bf16 %v4959, %v4957
        %v4963 = vxor.u32 %v4962, 2147516416
        %v4965 = vmul.bf16 %v4963, 1069105081
        %v4966 = vpow.bf16.pop %v4965
        %v4967 = vadd.bf16 %v4966, 1065369472
        %v4968 = vrcp.bf16.pop %v4967
        %v4969 = vmul.bf16 1065369472, %v4968
        %v4970 = vmul.bf16 %v4961, %v4969
        %v4971 = vld [vmem:[#allocation33] sm:$0xf]
        %v4972 = vld [vmem:[#allocation33 + $0x4] sm:$0xf]
        %v4973 = vld [vmem:[#allocation33 + $0x8] sm:$0xf]
        %v4974 = vld [vmem:[#allocation33 + $0xc] sm:$0xf]
        %v4975 = vld [vmem:[#allocation33 + $0x10] sm:$0xf]
        %v4976 = vld [vmem:[#allocation33 + $0x14] sm:$0xf]
        %v4977 = vld [vmem:[#allocation33 + $0x18] sm:$0xf]
        %v4978 = vld [vmem:[#allocation33 + $0x1c] sm:$0xf]
        %v4979 = vld [vmem:[#allocation33 + $0x20] sm:$0xf]
        %v4980 = vld [vmem:[#allocation33 + $0x24] sm:$0xf]
        %v4981 = vld [vmem:[#allocation33 + $0x28] sm:$0xf]
        %v4982 = vld [vmem:[#allocation33 + $0x2c] sm:$0xf]
        %v4983 = vld [vmem:[#allocation33 + $0x30] sm:$0xf]
        %v4984 = vld [vmem:[#allocation33 + $0x34] sm:$0xf]
        %v4985 = vld [vmem:[#allocation33 + $0x38] sm:$0xf]
        %v4986 = vld [vmem:[#allocation33 + $0x3c] sm:$0xf]
        %v4987 = vld [vmem:[%s24] sm:$0x1]
        %v4989 = vlaneseq
        %v4990 = vshrl.u32 %v4989, 7
        %v4991 = vsub.s32 0, %v4990
        %v4992 = vrot.slane %v4987, %v4991
        %v5010 = vunpack.c.l.b16 %v4971
        %v5011 = vunpack.c.l.b16 %v4972
        %v5012 = vunpack.c.l.b16 %v4973
        %v5013 = vunpack.c.l.b16 %v4974
        %v5014 = vunpack.c.l.b16 %v4975
        %v5015 = vunpack.c.l.b16 %v4976
        %v5016 = vunpack.c.l.b16 %v4977
        %v5017 = vunpack.c.l.b16 %v4978
        %v5018 = vunpack.c.l.b16 %v4979
        %v5019 = vunpack.c.l.b16 %v4980
        %v5020 = vunpack.c.l.b16 %v4981
        %v5021 = vunpack.c.l.b16 %v4982
        %v5022 = vunpack.c.l.b16 %v4983
        %v5023 = vunpack.c.l.b16 %v4984
        %v5024 = vunpack.c.l.b16 %v4985
        %v5025 = vunpack.c.l.b16 %v4986
        %v5026 = vpack.c.b16 %v5011, %v5010
        %v5027 = vpack.c.b16 %v5013, %v5012
        %v5028 = vpack.c.b16 %v5015, %v5014
        %v5029 = vpack.c.b16 %v5017, %v5016
        %v5030 = vpack.c.b16 %v5019, %v5018
        %v5031 = vpack.c.b16 %v5021, %v5020
        %v5032 = vpack.c.b16 %v5023, %v5022
        %v5033 = vpack.c.b16 %v5025, %v5024
        %5042 = vmatprep.subr.bf16.mxu0 0
        %5043 = vmatpush1.bf16.msra.mxu0 %v5026
        %5044 = vmatprep.subr.bf16.mxu0 0
        %5045 = vmatpush1.bf16.msra.mxu0 %v5027
        %5046 = vmatprep.subr.bf16.mxu0 0
        %5047 = vmatpush1.bf16.msra.mxu0 %v5028
        %5048 = vmatprep.subr.bf16.mxu0 0
        %5049 = vmatpush1.bf16.msra.mxu0 %v5029
        %5050 = vmatprep.subr.bf16.mxu0 0
        %5051 = vmatpush1.bf16.msra.mxu0 %v5030
        %5052 = vmatprep.subr.bf16.mxu0 0
        %5053 = vmatpush1.bf16.msra.mxu0 %v5031
        %5054 = vmatprep.subr.bf16.mxu0 0
        %5055 = vmatpush1.bf16.msra.mxu0 %v5032
        %5056 = vmatprep.subr.bf16.mxu0 0
        %5057 = vmatpush1.bf16.msra.mxu0 %v5033
        %5058 = vmatprep.subr.bf16.mxu0 0
        %5059 = vmatpush1.bf16.msra.mxu0 0
        %5060 = vmatprep.subr.bf16.mxu0 0
        %5061 = vmatpush1.bf16.msra.mxu0 0
        %5062 = vmatprep.subr.bf16.mxu0 0
        %5063 = vmatpush1.bf16.msra.mxu0 0
        %5064 = vmatprep.subr.bf16.mxu0 0
        %5065 = vmatpush1.bf16.msra.mxu0 0
        %5066 = vmatprep.subr.bf16.mxu0 0
        %5067 = vmatpush1.bf16.msra.mxu0 0
        %5068 = vmatprep.subr.bf16.mxu0 0
        %5069 = vmatpush1.bf16.msra.mxu0 0
        %5070 = vmatprep.subr.bf16.mxu0 0
        %5071 = vmatpush1.bf16.msra.mxu0 0
        %5072 = vmatprep.subr.bf16.mxu0 0
        %5073 = vmatpush1.bf16.msra.mxu0 0
        %5074 = vmatprep.mubr.bf16.mxu0 0
        %5075 = vmatmul.mubr.bf16.gmra.mrb[0].mxu0 %v4970
        %v5076 = vpop.f32.mrb[0].mxu0
        %v5077 = vadd.f32 %v4992, %v5076
        %v5078 = vpop.f32.mrb[0].mxu0
        %v5079 = vpop.f32.mrb[0].mxu0
        %v5080 = vadd.f32 %v4992, %v5079
        %v5081 = vpop.f32.mrb[0].mxu0
        %5082 = vdwg.mxu0
        %v5083 = vadd.f32 %v4457, %v5077
        %v5084 = vadd.f32 %v4460, %v5080
        %v5087 = vcombine.high %v5083, %v5083
        %v5088 = vcombine.high %v5084, %v5084
        %vm5091 = vcmask 1043456
        %v5092 = vsel %vm5091, %v5083, 0.0
        %v5093 = vrot.slane %v5092, 4
        %v5094 = vadd.f32 %v5092, %v5093
        %v5095 = vrot.slane %v5094, 2
        %v5096 = vadd.f32 %v5094, %v5095
        %v5097 = vrot.slane %v5096, 1
        %v5098 = vadd.f32 %v5096, %v5097
        %v5099 = vsel %vm5091, %v5087, 0.0
        %v5100 = vrot.slane %v5099, 4
        %v5101 = vadd.f32 %v5099, %v5100
        %v5102 = vrot.slane %v5101, 2
        %v5103 = vadd.f32 %v5101, %v5102
        %v5104 = vrot.slane %v5103, 1
        %v5105 = vadd.f32 %v5103, %v5104
        %v5106 = vsel %vm5091, %v5084, 0.0
        %v5107 = vrot.slane %v5106, 4
        %v5108 = vadd.f32 %v5106, %v5107
        %v5109 = vrot.slane %v5108, 2
        %v5110 = vadd.f32 %v5108, %v5109
        %v5111 = vrot.slane %v5110, 1
        %v5112 = vadd.f32 %v5110, %v5111
        %v5113 = vsel %vm5091, %v5088, 0.0
        %v5114 = vrot.slane %v5113, 4
        %v5115 = vadd.f32 %v5113, %v5114
        %v5116 = vrot.slane %v5115, 2
        %v5117 = vadd.f32 %v5115, %v5116
        %v5118 = vrot.slane %v5117, 1
        %v5119 = vadd.f32 %v5117, %v5118
        %v5120 = vrcp.pop 4.0
        %v5121 = vmul.f32 %v5098, %v5120
        %v5122 = vmul.f32 %v5105, %v5120
        %v5123 = vmul.f32 %v5112, %v5120
        %v5124 = vmul.f32 %v5119, %v5120
        %vm5129 = vcmask 1041409
        %v5130 = vsel %vm5129, %v5122, %v5121
        %vm5131 = vcmask 1042434
        %v5132 = vsel %vm5131, %v5123, %v5130
        %vm5133 = vcmask 1043459
        %v5134 = vsel %vm5133, %v5124, %v5132
        %v5137 = vunpack.c.l.s4 1983009808
        %v5138 = vunpack.c.0.s8 %v5137
        %v5139 = vlaneseq
        %v5140 = vshrl.u32 %v5139, 7
        %v5141 = vsub.s32 %v5138, %v5140
        %v5142 = vrot.slane %v5134, %v5141
        %v5143 = vcombine.high %v5142, 0.0
        %v5145 = vunpack.c.l.s4 1934713408
        %v5146 = vunpack.c.0.s8 %v5145
        %v5147 = vlaneseq
        %v5148 = vshrl.u32 %v5147, 7
        %v5149 = vsub.s32 %v5146, %v5148
        %v5150 = vrot.slane %v5142, %v5149
        %v5152 = vunpack.c.l.s4 1934713408
        %v5153 = vunpack.c.0.s8 %v5152
        %v5154 = vlaneseq
        %v5155 = vshrl.u32 %v5154, 7
        %v5156 = vsub.s32 %v5153, %v5155
        %v5157 = vrot.slane %v5143, %v5156
        %v5158 = vcombine.high %v5150, 0.0
        %v5159 = vcombine.high %v5157, 0.0
        %v5160 = vpack.c.bf16 %v5150, %v5150
        %v5161 = vpack.c.bf16 %v5158, %v5158
        %v5162 = vpack.c.bf16 %v5157, %v5157
        %v5163 = vpack.c.bf16 %v5159, %v5159
        %v5164 = vld [vmem:[%s25] sm:$0xf]
        %v5165 = vld [vmem:[%s25 + $0x4] sm:$0xf]
        %v5166 = vld [vmem:[%s25 + $0x8] sm:$0xf]
        %v5167 = vld [vmem:[%s25 + $0xc] sm:$0xf]
        %v5168 = vld [vmem:[%s25 + $0x10] sm:$0xf]
        %v5169 = vld [vmem:[%s25 + $0x14] sm:$0xf]
        %v5170 = vld [vmem:[%s25 + $0x18] sm:$0xf]
        %v5171 = vld [vmem:[%s25 + $0x1c] sm:$0xf]
        %v5172 = vld [vmem:[%s25 + $0x20] sm:$0xf]
        %v5173 = vld [vmem:[%s25 + $0x24] sm:$0xf]
        %v5174 = vld [vmem:[%s25 + $0x28] sm:$0xf]
        %v5175 = vld [vmem:[%s25 + $0x2c] sm:$0xf]
        %v5176 = vld [vmem:[%s25 + $0x30] sm:$0xf]
        %v5177 = vld [vmem:[%s25 + $0x34] sm:$0xf]
        %v5178 = vld [vmem:[%s25 + $0x38] sm:$0xf]
        %v5179 = vld [vmem:[%s25 + $0x3c] sm:$0xf]
        %v5180 = vld [vmem:[%s25 + $0x40] sm:$0xf]
        %v5181 = vld [vmem:[%s25 + $0x44] sm:$0xf]
        %v5182 = vld [vmem:[%s25 + $0x48] sm:$0xf]
        %v5183 = vld [vmem:[%s25 + $0x4c] sm:$0xf]
        %v5184 = vld [vmem:[%s25 + $0x50] sm:$0xf]
        %v5185 = vld [vmem:[%s25 + $0x54] sm:$0xf]
        %v5186 = vld [vmem:[%s25 + $0x58] sm:$0xf]
        %v5187 = vld [vmem:[%s25 + $0x5c] sm:$0xf]
        %v5188 = vld [vmem:[%s25 + $0x60] sm:$0xf]
        %v5189 = vld [vmem:[%s25 + $0x64] sm:$0xf]
        %v5190 = vld [vmem:[%s25 + $0x68] sm:$0xf]
        %v5191 = vld [vmem:[%s25 + $0x6c] sm:$0xf]
        %v5192 = vld [vmem:[%s25 + $0x70] sm:$0xf]
        %v5193 = vld [vmem:[%s25 + $0x74] sm:$0xf]
        %v5194 = vld [vmem:[%s25 + $0x78] sm:$0xf]
        %v5195 = vld [vmem:[%s25 + $0x7c] sm:$0xf]
        %v5196 = vld [vmem:[%s25 + $0x80] sm:$0xf]
        %v5197 = vld [vmem:[%s25 + $0x84] sm:$0xf]
        %v5198 = vld [vmem:[%s25 + $0x88] sm:$0xf]
        %v5199 = vld [vmem:[%s25 + $0x8c] sm:$0xf]
        %v5200 = vld [vmem:[%s25 + $0x90] sm:$0xf]
        %v5201 = vld [vmem:[%s25 + $0x94] sm:$0xf]
        %v5202 = vld [vmem:[%s25 + $0x98] sm:$0xf]
        %v5203 = vld [vmem:[%s25 + $0x9c] sm:$0xf]
        %v5204 = vld [vmem:[%s25 + $0xa0] sm:$0xf]
        %v5205 = vld [vmem:[%s25 + $0xa4] sm:$0xf]
        %v5206 = vld [vmem:[%s25 + $0xa8] sm:$0xf]
        %v5207 = vld [vmem:[%s25 + $0xac] sm:$0xf]
        %v5208 = vld [vmem:[%s25 + $0xb0] sm:$0xf]
        %v5209 = vld [vmem:[%s25 + $0xb4] sm:$0xf]
        %v5210 = vld [vmem:[%s25 + $0xb8] sm:$0xf]
        %v5211 = vld [vmem:[%s25 + $0xbc] sm:$0xf]
        %v5212 = vld [vmem:[%s25 + $0xc0] sm:$0xf]
        %v5213 = vld [vmem:[%s25 + $0xc4] sm:$0xf]
        %v5214 = vld [vmem:[%s25 + $0xc8] sm:$0xf]
        %v5215 = vld [vmem:[%s25 + $0xcc] sm:$0xf]
        %v5216 = vld [vmem:[%s25 + $0xd0] sm:$0xf]
        %v5217 = vld [vmem:[%s25 + $0xd4] sm:$0xf]
        %v5218 = vld [vmem:[%s25 + $0xd8] sm:$0xf]
        %v5219 = vld [vmem:[%s25 + $0xdc] sm:$0xf]
        %v5220 = vld [vmem:[%s25 + $0xe0] sm:$0xf]
        %v5221 = vld [vmem:[%s25 + $0xe4] sm:$0xf]
        %v5222 = vld [vmem:[%s25 + $0xe8] sm:$0xf]
        %v5223 = vld [vmem:[%s25 + $0xec] sm:$0xf]
        %v5224 = vld [vmem:[%s25 + $0xf0] sm:$0xf]
        %v5225 = vld [vmem:[%s25 + $0xf4] sm:$0xf]
        %v5226 = vld [vmem:[%s25 + $0xf8] sm:$0xf]
        %v5227 = vld [vmem:[%s25 + $0xfc] sm:$0xf]
        %v5228 = vld [vmem:[%s26] sm:$0x1]
        %v5293 = vunpack.c.l.b16 %v5164
        %v5294 = vunpack.c.l.b16 %v5165
        %v5295 = vunpack.c.l.b16 %v5166
        %v5296 = vunpack.c.l.b16 %v5167
        %v5297 = vunpack.c.l.b16 %v5168
        %v5298 = vunpack.c.l.b16 %v5169
        %v5299 = vunpack.c.l.b16 %v5170
        %v5300 = vunpack.c.l.b16 %v5171
        %v5301 = vunpack.c.l.b16 %v5172
        %v5302 = vunpack.c.l.b16 %v5173
        %v5303 = vunpack.c.l.b16 %v5174
        %v5304 = vunpack.c.l.b16 %v5175
        %v5305 = vunpack.c.l.b16 %v5176
        %v5306 = vunpack.c.l.b16 %v5177
        %v5307 = vunpack.c.l.b16 %v5178
        %v5308 = vunpack.c.l.b16 %v5179
        %v5309 = vunpack.c.l.b16 %v5180
        %v5310 = vunpack.c.l.b16 %v5181
        %v5311 = vunpack.c.l.b16 %v5182
        %v5312 = vunpack.c.l.b16 %v5183
        %v5313 = vunpack.c.l.b16 %v5184
        %v5314 = vunpack.c.l.b16 %v5185
        %v5315 = vunpack.c.l.b16 %v5186
        %v5316 = vunpack.c.l.b16 %v5187
        %v5317 = vunpack.c.l.b16 %v5188
        %v5318 = vunpack.c.l.b16 %v5189
        %v5319 = vunpack.c.l.b16 %v5190
        %v5320 = vunpack.c.l.b16 %v5191
        %v5321 = vunpack.c.l.b16 %v5192
        %v5322 = vunpack.c.l.b16 %v5193
        %v5323 = vunpack.c.l.b16 %v5194
        %v5324 = vunpack.c.l.b16 %v5195
        %v5325 = vunpack.c.l.b16 %v5196
        %v5326 = vunpack.c.l.b16 %v5197
        %v5327 = vunpack.c.l.b16 %v5198
        %v5328 = vunpack.c.l.b16 %v5199
        %v5329 = vunpack.c.l.b16 %v5200
        %v5330 = vunpack.c.l.b16 %v5201
        %v5331 = vunpack.c.l.b16 %v5202
        %v5332 = vunpack.c.l.b16 %v5203
        %v5333 = vunpack.c.l.b16 %v5204
        %v5334 = vunpack.c.l.b16 %v5205
        %v5335 = vunpack.c.l.b16 %v5206
        %v5336 = vunpack.c.l.b16 %v5207
        %v5337 = vunpack.c.l.b16 %v5208
        %v5338 = vunpack.c.l.b16 %v5209
        %v5339 = vunpack.c.l.b16 %v5210
        %v5340 = vunpack.c.l.b16 %v5211
        %v5341 = vunpack.c.l.b16 %v5212
        %v5342 = vunpack.c.l.b16 %v5213
        %v5343 = vunpack.c.l.b16 %v5214
        %v5344 = vunpack.c.l.b16 %v5215
        %v5345 = vunpack.c.l.b16 %v5216
        %v5346 = vunpack.c.l.b16 %v5217
        %v5347 = vunpack.c.l.b16 %v5218
        %v5348 = vunpack.c.l.b16 %v5219
        %v5349 = vunpack.c.l.b16 %v5220
        %v5350 = vunpack.c.l.b16 %v5221
        %v5351 = vunpack.c.l.b16 %v5222
        %v5352 = vunpack.c.l.b16 %v5223
        %v5353 = vunpack.c.l.b16 %v5224
        %v5354 = vunpack.c.l.b16 %v5225
        %v5355 = vunpack.c.l.b16 %v5226
        %v5356 = vunpack.c.l.b16 %v5227
        %v5357 = vpack.c.b16 %v5294, %v5293
        %v5358 = vpack.c.b16 %v5296, %v5295
        %v5359 = vpack.c.b16 %v5298, %v5297
        %v5360 = vpack.c.b16 %v5300, %v5299
        %v5361 = vpack.c.b16 %v5302, %v5301
        %v5362 = vpack.c.b16 %v5304, %v5303
        %v5363 = vpack.c.b16 %v5306, %v5305
        %v5364 = vpack.c.b16 %v5308, %v5307
        %v5365 = vpack.c.b16 %v5310, %v5309
        %v5366 = vpack.c.b16 %v5312, %v5311
        %v5367 = vpack.c.b16 %v5314, %v5313
        %v5368 = vpack.c.b16 %v5316, %v5315
        %v5369 = vpack.c.b16 %v5318, %v5317
        %v5370 = vpack.c.b16 %v5320, %v5319
        %v5371 = vpack.c.b16 %v5322, %v5321
        %v5372 = vpack.c.b16 %v5324, %v5323
        %v5373 = vpack.c.b16 %v5326, %v5325
        %v5374 = vpack.c.b16 %v5328, %v5327
        %v5375 = vpack.c.b16 %v5330, %v5329
        %v5376 = vpack.c.b16 %v5332, %v5331
        %v5377 = vpack.c.b16 %v5334, %v5333
        %v5378 = vpack.c.b16 %v5336, %v5335
        %v5379 = vpack.c.b16 %v5338, %v5337
        %v5380 = vpack.c.b16 %v5340, %v5339
        %v5381 = vpack.c.b16 %v5342, %v5341
        %v5382 = vpack.c.b16 %v5344, %v5343
        %v5383 = vpack.c.b16 %v5346, %v5345
        %v5384 = vpack.c.b16 %v5348, %v5347
        %v5385 = vpack.c.b16 %v5350, %v5349
        %v5386 = vpack.c.b16 %v5352, %v5351
        %v5387 = vpack.c.b16 %v5354, %v5353
        %v5388 = vpack.c.b16 %v5356, %v5355
        %5421 = vmatprep.subr.bf16.mxu0 0
        %5422 = vmatpush1.bf16.msra.mxu0 %v5357
        %5423 = vmatprep.subr.bf16.mxu0 0
        %5424 = vmatpush1.bf16.msra.mxu0 %v5358
        %5425 = vmatprep.subr.bf16.mxu0 0
        %5426 = vmatpush1.bf16.msra.mxu0 %v5359
        %5427 = vmatprep.subr.bf16.mxu0 0
        %5428 = vmatpush1.bf16.msra.mxu0 %v5360
        %5429 = vmatprep.subr.bf16.mxu0 0
        %5430 = vmatpush1.bf16.msra.mxu0 %v5361
        %5431 = vmatprep.subr.bf16.mxu0 0
        %5432 = vmatpush1.bf16.msra.mxu0 %v5362
        %5433 = vmatprep.subr.bf16.mxu0 0
        %5434 = vmatpush1.bf16.msra.mxu0 %v5363
        %5435 = vmatprep.subr.bf16.mxu0 0
        %5436 = vmatpush1.bf16.msra.mxu0 %v5364
        %5437 = vmatprep.subr.bf16.mxu0 0
        %5438 = vmatpush1.bf16.msra.mxu0 %v5365
        %5439 = vmatprep.subr.bf16.mxu0 0
        %5440 = vmatpush1.bf16.msra.mxu0 %v5366
        %5441 = vmatprep.subr.bf16.mxu0 0
        %5442 = vmatpush1.bf16.msra.mxu0 %v5367
        %5443 = vmatprep.subr.bf16.mxu0 0
        %5444 = vmatpush1.bf16.msra.mxu0 %v5368
        %5445 = vmatprep.subr.bf16.mxu0 0
        %5446 = vmatpush1.bf16.msra.mxu0 %v5369
        %5447 = vmatprep.subr.bf16.mxu0 0
        %5448 = vmatpush1.bf16.msra.mxu0 %v5370
        %5449 = vmatprep.subr.bf16.mxu0 0
        %5450 = vmatpush1.bf16.msra.mxu0 %v5371
        %5451 = vmatprep.subr.bf16.mxu0 0
        %5452 = vmatpush1.bf16.msra.mxu0 %v5372
        %5453 = vmatprep.mubr.bf16.mxu0 %v5161
        %5454 = vmatmul.mubr.bf16.gmra.mrb[0].mxu0 %v5160
        %v5455 = vpop.f32.mrb[0].mxu0
        %v5456 = vadd.f32 %v5228, %v5455
        %v5457 = vpop.f32.mrb[0].mxu0
        %v5458 = vpop.f32.mrb[0].mxu0
        %v5459 = vpop.f32.mrb[0].mxu0
        %5460 = vdwg.mxu0
        %5461 = vmatprep.subr.bf16.mxu0 0
        %5462 = vmatpush1.bf16.msra.mxu0 %v5373
        %5463 = vmatprep.subr.bf16.mxu0 0
        %5464 = vmatpush1.bf16.msra.mxu0 %v5374
        %5465 = vmatprep.subr.bf16.mxu0 0
        %5466 = vmatpush1.bf16.msra.mxu0 %v5375
        %5467 = vmatprep.subr.bf16.mxu0 0
        %5468 = vmatpush1.bf16.msra.mxu0 %v5376
        %5469 = vmatprep.subr.bf16.mxu0 0
        %5470 = vmatpush1.bf16.msra.mxu0 %v5377
        %5471 = vmatprep.subr.bf16.mxu0 0
        %5472 = vmatpush1.bf16.msra.mxu0 %v5378
        %5473 = vmatprep.subr.bf16.mxu0 0
        %5474 = vmatpush1.bf16.msra.mxu0 %v5379
        %5475 = vmatprep.subr.bf16.mxu0 0
        %5476 = vmatpush1.bf16.msra.mxu0 %v5380
        %5477 = vmatprep.subr.bf16.mxu0 0
        %5478 = vmatpush1.bf16.msra.mxu0 %v5381
        %5479 = vmatprep.subr.bf16.mxu0 0
        %5480 = vmatpush1.bf16.msra.mxu0 %v5382
        %5481 = vmatprep.subr.bf16.mxu0 0
        %5482 = vmatpush1.bf16.msra.mxu0 %v5383
        %5483 = vmatprep.subr.bf16.mxu0 0
        %5484 = vmatpush1.bf16.msra.mxu0 %v5384
        %5485 = vmatprep.subr.bf16.mxu0 0
        %5486 = vmatpush1.bf16.msra.mxu0 %v5385
        %5487 = vmatprep.subr.bf16.mxu0 0
        %5488 = vmatpush1.bf16.msra.mxu0 %v5386
        %5489 = vmatprep.subr.bf16.mxu0 0
        %5490 = vmatpush1.bf16.msra.mxu0 %v5387
        %5491 = vmatprep.subr.bf16.mxu0 0
        %5492 = vmatpush1.bf16.msra.mxu0 %v5388
        %5493 = vmatprep.mubr.bf16.mxu0 %v5163
        %5494 = vmatmul.mubr.bf16.gmra.mrb[0].mxu0 %v5162
        %v5495 = vpop.f32.mrb[0].mxu0
        %v5496 = vadd.f32 %v5456, %v5495
        %v5497 = vpop.f32.mrb[0].mxu0
        %v5498 = vpop.f32.mrb[0].mxu0
        %v5499 = vpop.f32.mrb[0].mxu0
        %5500 = vdwg.mxu0
        %vm5501 = vcmask 16384
        %5502 = vst.msk [vmem:[%s1076] sm:$0x1] %vm5501, %v5496
        %s5503 = sand.u32 %s633, 1
        %s5504 = scalar_lea.sflag [#allocation8], %s5503
        %s5505 = sand.u32 %s633, 1
        %s5506 = scalar_lea.vmem [#allocation35], %s5505
        // Predicated region
        $region201: #{tpu_custom_call.1} parent=127 // pred_check
          %p5507 = pneg %p643
        $region202: #{tpu_custom_call.1} parent=127 // pred_check_branch
          %5509 = sbr.rel (%p5507) target = $region204
        $region203: #{tpu_custom_call.1} parent=127 // pred_region
          %s5511 = ssub.s32 16, 16
          %5512 = vsyncadd %s5504, %s5511
          %s5513 = smul.addr %s53, 16
          %s5514 = scalar_lea.hbm %s27, %s5513
          %s5516 = sshll.u32 %s5506, 4
          %s5517 = int_to_ptr.vmem [resolvable:$true] %s5516
          %5519 = dma.vmem_to_hbm [thread:$0]  %s5517, 16, %s5514, %s5504
        $region204: #{tpu_custom_call.1} parent=127 // pred_fallthru
          _
      $region128: #{tpu_custom_call.1} parent=5 // pred_fallthru
        _
      %p5520 = scmp.le.s32.totalorder 2, %s48
      // Predicated region
      $region205: #{tpu_custom_call.1} parent=5 // pred_check
        %p5521 = pneg %p5520
      $region206: #{tpu_custom_call.1} parent=5 // pred_check_branch
        %5523 = sbr.rel (%p5521) target = $region208
      $region207: #{tpu_custom_call.1} parent=5 // pred_region
        %s5524 = ssub.s32 %s48, 2
        // Predicated region
        $region209: #{tpu_custom_call.1} parent=207 // pred_check
          %p5525 = pneg %p649
        $region210: #{tpu_custom_call.1} parent=207 // pred_check_branch
          %5527 = sbr.rel (%p5525) target = $region212
        $region211: #{tpu_custom_call.1} parent=207 // pred_region
          %s5528 = sand.u32 %s634, 1
          %s5529 = scalar_lea.sflag [#allocation8], %s5528
          %s5530 = sand.u32 %s634, 1
          %s5531 = scalar_lea.vmem [#allocation35], %s5530
          %5532 = dma.done %s5529, 16
        $region212: #{tpu_custom_call.1} parent=207 // pred_fallthru
          _
      $region208: #{tpu_custom_call.1} parent=5 // pred_fallthru
        _
    $region6: #{tpu_custom_call.1} parent=1 // loop_footer
      %s52 = sadd.s32 1, %s48
    $region7: #{tpu_custom_call.1} parent=1 // loop_footer_branch
      %47 = sbr.rel target = $region3
    $region8: #{tpu_custom_call.1} parent=1 // loop_exit
      _
    %5533 = vsyncpa [#allocation7], 1
    %s5534 = scalar_lea.sflag [#allocation7], 1
    %5535 = vsyncpa %s5534, 1
    %5536 = vsyncpa [#allocation10], 1
    %5537 = vsyncpa [#allocation13], 1
    %5538 = vsyncpa [#allocation16], 1
    %5539 = vsyncpa [#allocation19], 1
    %5540 = vsyncpa [#allocation22], 1
    %5541 = vsyncpa [#allocation25], 1
    %5542 = vsyncpa [#allocation28], 1
    %5543 = vsyncpa [#allocation31], 1
    %5544 = vsyncpa [#allocation34], 1
    %5545 = vsyncpa [#allocation8], 1
    %s5546 = scalar_lea.sflag [#allocation8], 1
    %5547 = vsyncpa %s5546, 1

</llo_original>
